<compile_context>
chip_gen: v7x
topology: tpu7x:2x2x1
jax: 0.10.0
libtpu: 0.0.40
codegen_flags: <defaults>
</compile_context>

<pallas_src>
import functools
import math

import jax
import jax.numpy as jnp
from jax.experimental import pallas as pl
from jax.experimental.pallas import tpu as pltpu

LN_EPS = 1e-6


# ----------------------------------------------------------------------------
# Generation-aware VMEM budget + tile selection
# ----------------------------------------------------------------------------
def _vmem_budget_bytes():
    cap = None
    try:
        info = pltpu.get_tpu_info()
        for attr in ("vmem_capacity_bytes", "vmem_size_bytes", "vmem_bytes"):
            cap = getattr(info, attr, None)
            if cap:
                break
    except Exception:
        cap = None
    if not cap:
        cap = 64 * 1024 * 1024          # conservative fallback (safe on v7x)
    # ~75% of physical, capped at 100 MiB: ~96 MiB on v5e/v6e, ~48 MiB on v7x.
    return int(min(int(cap) * 3 // 4, 100 * 1024 * 1024))


def _step_footprint_bytes(wb, ac, n, c, hid, in_itemsize):
    """Estimate per-grid-step VMEM use from the f32 in-kernel intermediates."""
    m, mc = wb * n, ac * n
    blocks = 2 * 2 * m * c * in_itemsize                       # x in + out, 2 buffers each
    weights = 2 * 2 * (c * 3 * c + c * c + c * hid + hid * c)  # bf16 weights, 2 buffers
    temps = (m * c * 4 * 6            # x / xn / attn / ln2 / residual f32 temporaries
             + m * 3 * c * 6          # qkv f32 + compute-dtype copy
             + m * hid * 6            # MLP hidden f32 + compute-dtype copy
             + m * c * 4              # attention accumulator scratch
             + 3 * mc * mc * 4)       # score / prob tiles
    return blocks + weights + temps


def _choose_attn_chunk(wb, n, max_tokens=256):
    """Windows per dense-masked attention chunk (chunk tokens <= ~256)."""
    divs = [d for d in range(1, wb + 1)
            if wb % d == 0 and ((d * n) % 8 == 0 or d == wb)]
    small = [d for d in divs if d * n <= max_tokens]
    pool = small if small else [min(divs)]
    return max(pool)


def _choose_window_batch(nw, n, c, hid, in_itemsize, vmem_budget, token_target):
    """Windows per grid step: biggest divisor of nw that fits the budget,
    preferring >= 2 grid steps (pipeline overlap / megacore)."""
    divs = [d for d in range(1, nw + 1)
            if nw % d == 0 and ((d * n) % 8 == 0 or d == nw)]

    def fits(d):
        return _step_footprint_bytes(d, _choose_attn_chunk(d, n), n, c, hid,
                                     in_itemsize) <= vmem_budget

    ok = [d for d in divs if d * n <= token_target and fits(d)]
    if not ok:
        ok = [d for d in divs if fits(d)] or [min(divs)]
    # TODO(synk): on v7x (2 TCs) a >=4-step grid would balance better; kept at
    # >=2 to avoid shrinking the lane-dense score tiles below ~128 rows.
    multi = [d for d in ok if nw // d >= 2]
    pool = multi if multi else ok
    return max(pool)


# ----------------------------------------------------------------------------
# Fused kernel: LN1 + block-diag dense windowed attention + proj + residual
#               + LN2 + MLP(GELU) + residual
# ----------------------------------------------------------------------------
def _fused_block_kernel(*refs, num_heads, head_dim, m, mc, has_mask,
                        exact_softmax):
    if has_mask:
        (x_ref, mask_ref, bias_ref, ln1w_ref, ln1b_ref, wqkv_ref, bqkv_ref,
         wproj_ref, bproj_ref, ln2w_ref, ln2b_ref, w1_ref, b1_ref,
         w2_ref, b2_ref, o_ref, acc_ref) = refs
    else:
        (x_ref, bias_ref, ln1w_ref, ln1b_ref, wqkv_ref, bqkv_ref,
         wproj_ref, bproj_ref, ln2w_ref, ln2b_ref, w1_ref, b1_ref,
         w2_ref, b2_ref, o_ref, acc_ref) = refs
        mask_ref = None

    c = num_heads * head_dim
    cdt = wqkv_ref.dtype                       # MXU compute dtype (bf16 / f32)
    f32 = jnp.float32

    def _layernorm(val, wgt, bias):
        mu = jnp.mean(val, axis=-1, keepdims=True)
        ctr = val - mu
        var = jnp.mean(ctr * ctr, axis=-1, keepdims=True)
        return ctr * jax.lax.rsqrt(var + LN_EPS) * wgt + bias

    x = x_ref[...].astype(f32)                                   # (m, C)

    # --- fused pre-attention LayerNorm (f32 statistics) ---
    xn = _layernorm(x, ln1w_ref[...].astype(f32), ln1b_ref[...].astype(f32))
    if mask_ref is not None:
        # Zero padded tokens AFTER LayerNorm ("LayerNorm, then zero-pad").
        # NOTE: the QKV bias below is added after this masking on purpose —
        # padded tokens must still contribute k = b_k, v = b_v (reference
        # semantics).  Do not reorder.
        xn = xn * mask_ref[...].astype(f32)

    # --- single fused QKV projection (f32 accumulation, cast immediately) ---
    qkv = jnp.dot(xn.astype(cdt), wqkv_ref[...], preferred_element_type=f32)
    qkv = (qkv + bqkv_ref[...]).astype(cdt)                      # (m, 3C)

    wproj = wproj_ref[...]
    blk_bias = bias_ref[...]            # (mc, mc): 0 same-window / -1e30 cross
    scale = 1.0 / math.sqrt(head_dim)

    # --- block-diagonal dense masked attention, chunked over windows ---
    num_chunks = m // mc
    for ci in range(num_chunks):
        r0 = ci * mc
        qkv_c = qkv[r0:r0 + mc, :]
        chunk_acc = None
        for h in range(num_heads):
            lo = h * head_dim
            q = qkv_c[:, lo:lo + head_dim]
            k = qkv_c[:, c + lo:c + lo + head_dim]
            v = qkv_c[:, 2 * c + lo:2 * c + lo + head_dim]
            # q @ k^T, lane-dense (mc, mc) scores
            s = jax.lax.dot_general(q, k, (((1,), (1,)), ((), ())),
                                    preferred_element_type=f32)
            s = s * scale + blk_bias
            s = s - jnp.max(s, axis=-1, keepdims=True)
            p = jnp.exp(s)
            den = jnp.sum(p, axis=-1, keepdims=True)
            if exact_softmax:
                p = p / den
            else:
                p = p * pl.reciprocal(den, approx=True)
            ctx = jnp.dot(p.astype(cdt), v, preferred_element_type=f32)
            # accumulated per-head output projection (no lane-axis concat)
            part = jnp.dot(ctx.astype(cdt), wproj[lo:lo + head_dim, :],
                           preferred_element_type=f32)
            chunk_acc = part if chunk_acc is None else chunk_acc + part
        acc_ref[pl.ds(r0, mc), :] = chunk_acc

    # --- residual 1 + LayerNorm-2 + MLP + residual 2 (all fused, f32) ---
    attn = acc_ref[...] + bproj_ref[...] + x
    ln2 = _layernorm(attn, ln2w_ref[...].astype(f32), ln2b_ref[...].astype(f32))
    hmid = jnp.dot(ln2.astype(cdt), w1_ref[...], preferred_element_type=f32)
    hmid = hmid + b1_ref[...]
    # exact (erf-based) GELU, matching torch.nn.GELU default
    hmid = 0.5 * hmid * (1.0 + jax.lax.erf(hmid * (1.0 / math.sqrt(2.0))))
    out = jnp.dot(hmid.astype(cdt), w2_ref[...], preferred_element_type=f32)
    out = out + b2_ref[...] + attn
    o_ref[...] = out.astype(o_ref.dtype)


# ----------------------------------------------------------------------------
# Parameter prep (weight casts hoisted out of the per-forward path)
# ----------------------------------------------------------------------------
def prepare_params(params, compute_dtype=jnp.bfloat16):
    c = params["ln1_w"].shape[0]
    hid = params["w1"].shape[1]
    f32 = jnp.float32
    return {
        "ln1_w": params["ln1_w"].reshape(1, c).astype(f32),
        "ln1_b": params["ln1_b"].reshape(1, c).astype(f32),
        "wqkv": params["wqkv"].astype(compute_dtype),
        "bqkv": params["bqkv"].reshape(1, 3 * c).astype(f32),
        "wproj": params["wproj"].astype(compute_dtype),
        "bproj": params["bproj"].reshape(1, c).astype(f32),
        "ln2_w": params["ln2_w"].reshape(1, c).astype(f32),
        "ln2_b": params["ln2_b"].reshape(1, c).astype(f32),
        "w1": params["w1"].astype(compute_dtype),
        "b1": params["b1"].reshape(1, hid).astype(f32),
        "w2": params["w2"].astype(compute_dtype),
        "b2": params["b2"].reshape(1, c).astype(f32),
    }


# ----------------------------------------------------------------------------
# Glue: window partition / un-partition (reshape + pad + permute only)
# ----------------------------------------------------------------------------
def window_partition(imagelike_bhwc, window_size):
    b, h, w, c = imagelike_bhwc.shape
    h_pad = (window_size - h % window_size) % window_size
    w_pad = (window_size - w % window_size) % window_size
    if h_pad > 0 or w_pad > 0:
        imagelike_bhwc = jnp.pad(imagelike_bhwc,
                                 ((0, 0), (0, h_pad), (0, w_pad), (0, 0)))
    ph, pw = h + h_pad, w + w_pad
    ny, nx = ph // window_size, pw // window_size
    tiles = imagelike_bhwc.reshape(b, ny, window_size, nx, window_size, c)
    tiles = tiles.transpose(0, 1, 3, 2, 4, 5).reshape(-1, window_size,
                                                      window_size, c)
    return tiles, (nx, ny)


def window_unpartition(window_tiles, original_shape, window_size, num_windows_xy):
    b, h, w, c = original_shape
    nx, ny = num_windows_xy
    ph, pw = ny * window_size, nx * window_size
    tiles = window_tiles.reshape(b, ny, nx, window_size, window_size, c)
    img = tiles.transpose(0, 1, 3, 2, 4, 5).reshape(b, ph, pw, c)
    if ph > h or pw > w:
        img = img[:, :h, :w, :]
    return img


# ----------------------------------------------------------------------------
# Full WindowedBlock forward (one fused Pallas kernel + JAX glue)
# ----------------------------------------------------------------------------
def windowed_block_pallas(x_bhwc, prepared_params, num_heads, window_size,
                          *, exact_softmax=False):
    p = prepared_params
    b, h, w, c = x_bhwc.shape
    ws = window_size
    n = ws * ws
    hid = p["w1"].shape[1]
    head_dim = c // num_heads

    # Partition the RAW input once; LN1 / masking happen inside the kernel.
    win, num_windows_xy = window_partition(x_bhwc, ws)
    nw = win.shape[0]
    t = nw * n
    x_tok = win.reshape(t, c)

    has_pad = (h % ws != 0) or (w % ws != 0)
    budget = _vmem_budget_bytes()
    token_target = 1024 if budget >= 80 * 1024 * 1024 else 512
    wb = _choose_window_batch(nw, n, c, hid, x_tok.dtype.itemsize,
                              budget, token_target)
    m = wb * n
    ac = _choose_attn_chunk(wb, n)
    mc = ac * n

    # Block-diagonal softmax bias for one attention chunk (host-built const).
    win_ids = jnp.repeat(jnp.arange(ac, dtype=jnp.int32), n)
    same = win_ids[:, None] == win_ids[None, :]
    attn_bias = jnp.where(same, 0.0, -1e30).astype(jnp.float32)   # (mc, mc)

    args = [x_tok]
    in_specs = [pl.BlockSpec((m, c), lambda i: (i, 0))]
    if has_pad:
        ones = jnp.ones((b, h, w, 1), jnp.float32)
        mask_win, _ = window_partition(ones, ws)
        args.append(mask_win.reshape(t, 1))
        in_specs.append(pl.BlockSpec((m, 1), lambda i: (i, 0)))

    args += [attn_bias,
             p["ln1_w"], p["ln1_b"], p["wqkv"], p["bqkv"],
             p["wproj"], p["bproj"], p["ln2_w"], p["ln2_b"],
             p["w1"], p["b1"], p["w2"], p["b2"]]
    const = lambda i: (0, 0)
    in_specs += [
        pl.BlockSpec((mc, mc), const),
        pl.BlockSpec((1, c), const), pl.BlockSpec((1, c), const),
        pl.BlockSpec((c, 3 * c), const), pl.BlockSpec((1, 3 * c), const),
        pl.BlockSpec((c, c), const), pl.BlockSpec((1, c), const),
        pl.BlockSpec((1, c), const), pl.BlockSpec((1, c), const),
        pl.BlockSpec((c, hid), const), pl.BlockSpec((1, hid), const),
        pl.BlockSpec((hid, c), const), pl.BlockSpec((1, c), const),
    ]

    kernel = functools.partial(
        _fused_block_kernel, num_heads=num_heads, head_dim=head_dim,
        m=m, mc=mc, has_mask=has_pad, exact_softmax=exact_softmax)

    out_tok = pl.pallas_call(
        kernel,
        out_shape=jax.ShapeDtypeStruct((t, c), x_tok.dtype),
        grid=(t // m,),
        in_specs=in_specs,
        out_specs=pl.BlockSpec((m, c), lambda i: (i, 0)),
        scratch_shapes=[pltpu.VMEM((m, c), jnp.float32)],
        compiler_params=pltpu.CompilerParams(
            dimension_semantics=("parallel",),
            vmem_limit_bytes=int(budget)),
    )(*args)

    out_win = out_tok.reshape(nw, ws, ws, c)
    return window_unpartition(out_win, (b, h, w, c), ws, num_windows_xy)


# ----------------------------------------------------------------------------
# Pure-JAX reference (mirrors the PyTorch forward exactly) for a sanity check
# ----------------------------------------------------------------------------
def _ref_layernorm(x, w, b):
    mu = jnp.mean(x, axis=-1, keepdims=True)
    var = jnp.mean((x - mu) ** 2, axis=-1, keepdims=True)
    return (x - mu) / jnp.sqrt(var + LN_EPS) * w + b


def windowed_block_ref(x, p, num_heads, window_size):
    b, h, w, c = x.shape
    hd = c // num_heads
    normed = _ref_layernorm(x, p["ln1_w"], p["ln1_b"])
    win, nxy = window_partition(normed, window_size)
    nw = win.shape[0]
    t = win.reshape(nw, window_size * window_size, c)
    qkv = t @ p["wqkv"] + p["bqkv"]
    qkv = qkv.reshape(nw, -1, 3, num_heads, hd).transpose(0, 2, 3, 1, 4)
    q, k, v = qkv[:, 0], qkv[:, 1], qkv[:, 2]
    s = jnp.einsum("bhnd,bhmd->bhnm", q, k) / math.sqrt(hd)
    pa = jax.nn.softmax(s, axis=-1)
    o = jnp.einsum("bhnm,bhmd->bhnd", pa, v)
    o = o.transpose(0, 2, 1, 3).reshape(nw, -1, c)
    o = o @ p["wproj"] + p["bproj"]
    o = o.reshape(nw, window_size, window_size, c)
    attn = window_unpartition(o, (b, h, w, c), window_size, nxy) + x
    ln = _ref_layernorm(attn, p["ln2_w"], p["ln2_b"])
    hdn = ln @ p["w1"] + p["b1"]
    hdn = 0.5 * hdn * (1.0 + jax.lax.erf(hdn / math.sqrt(2.0)))
    return hdn @ p["w2"] + p["b2"] + attn


# ----------------------------------------------------------------------------
def make_params(key, c, mlp_ratio=4.0):
    hid = int(round(mlp_ratio * c))
    ks = jax.random.split(key, 10)
    f32 = jnp.float32
    return {
        "ln1_w": 1.0 + 0.1 * jax.random.normal(ks[0], (c,), f32),
        "ln1_b": 0.1 * jax.random.normal(ks[1], (c,), f32),
        "wqkv": 0.05 * jax.random.normal(ks[2], (c, 3 * c), f32),
        "bqkv": 0.02 * jax.random.normal(ks[3], (3 * c,), f32),
        "wproj": 0.05 * jax.random.normal(ks[4], (c, c), f32),
        "bproj": 0.02 * jax.random.normal(ks[5], (c,), f32),
        "ln2_w": 1.0 + 0.1 * jax.random.normal(ks[6], (c,), f32),
        "ln2_b": 0.1 * jax.random.normal(ks[7], (c,), f32),
        "w1": (1.0 / math.sqrt(c)) * jax.random.normal(ks[8], (c, hid), f32),
        "b1": jnp.zeros((hid,), f32),
        "w2": (1.0 / math.sqrt(hid)) * jax.random.normal(ks[9], (hid, c), f32),
        "b2": jnp.zeros((c,), f32),
    }


if __name__ == "__main__":
    # H not divisible by the window size -> exercises the padded-token path.
    B, H, W, C = 2, 10, 12, 128
    NUM_HEADS = 4
    WINDOW_SIZE = 4

    key = jax.random.PRNGKey(0)
    k_x, k_p = jax.random.split(key)
    x = jax.random.normal(k_x, (B, H, W, C), jnp.float32)
    params = make_params(k_p, C)

    # Default path: bf16 operands into the MXU, f32 accumulation; weights are
    # cast ONCE here (not per forward).
    params_bf16 = prepare_params(params, jnp.bfloat16)
    out_bf16 = jax.block_until_ready(
        windowed_block_pallas(x, params_bf16, NUM_HEADS, WINDOW_SIZE))

    # f32 compute path with exact softmax division for a tight structural check.
    params_f32 = prepare_params(params, jnp.float32)
    out_f32 = jax.block_until_ready(
        windowed_block_pallas(x, params_f32, NUM_HEADS, WINDOW_SIZE,
                              exact_softmax=True))

    ref = windowed_block_ref(x, params, NUM_HEADS, WINDOW_SIZE)
    d_f32 = float(jnp.max(jnp.abs(out_f32 - ref)))
    d_bf16 = float(jnp.max(jnp.abs(out_bf16 - ref)))

    assert out_bf16.shape == (B, H, W, C)
    assert out_f32.shape == (B, H, W, C)
    assert d_f32 < 2e-2, f"f32-path mismatch vs reference: {d_f32}"
    assert d_bf16 < 1e-1, f"bf16-path mismatch vs reference: {d_bf16}"
    print("KERNEL_OK")
</pallas_src>

<mosaic_0001>
module attributes {stable_mosaic.version = 11 : i64} {
  func.func @_fused_block_kernel(%arg0: i32, %arg1: memref<144x128xf32, #tpu.memory_space<vmem>>, %arg2: memref<144x1xf32, #tpu.memory_space<vmem>>, %arg3: memref<144x144xf32, #tpu.memory_space<vmem>>, %arg4: memref<1x128xf32, #tpu.memory_space<vmem>>, %arg5: memref<1x128xf32, #tpu.memory_space<vmem>>, %arg6: memref<128x384xbf16, #tpu.memory_space<vmem>>, %arg7: memref<1x384xf32, #tpu.memory_space<vmem>>, %arg8: memref<128x128xbf16, #tpu.memory_space<vmem>>, %arg9: memref<1x128xf32, #tpu.memory_space<vmem>>, %arg10: memref<1x128xf32, #tpu.memory_space<vmem>>, %arg11: memref<1x128xf32, #tpu.memory_space<vmem>>, %arg12: memref<128x512xbf16, #tpu.memory_space<vmem>>, %arg13: memref<1x512xf32, #tpu.memory_space<vmem>>, %arg14: memref<512x128xbf16, #tpu.memory_space<vmem>>, %arg15: memref<1x128xf32, #tpu.memory_space<vmem>>, %arg16: memref<144x128xf32, #tpu.memory_space<vmem>>, %arg17: memref<144x128xf32, #tpu.memory_space<vmem>>) attributes {dimension_semantics = [#tpu.dimension_semantics<parallel>], iteration_bounds = array<i64: 2>, scalar_prefetch = 0 : i64, scratch_operands = 1 : i64, tpu.core_type = #tpu.core_type<tc>, window_params = [{transform_indices = @transform_0, window_bounds = array<i64: 144, 128>}, {transform_indices = @transform_1, window_bounds = array<i64: 144, 1>}, {pipeline_mode = #tpu.pipeline_mode<synchronous>, transform_indices = @transform_2, window_bounds = array<i64: 144, 144>}, {pipeline_mode = #tpu.pipeline_mode<synchronous>, transform_indices = @transform_3, window_bounds = array<i64: 1, 128>}, {pipeline_mode = #tpu.pipeline_mode<synchronous>, transform_indices = @transform_4, window_bounds = array<i64: 1, 128>}, {pipeline_mode = #tpu.pipeline_mode<synchronous>, transform_indices = @transform_5, window_bounds = array<i64: 128, 384>}, {pipeline_mode = #tpu.pipeline_mode<synchronous>, transform_indices = @transform_6, window_bounds = array<i64: 1, 384>}, {pipeline_mode = #tpu.pipeline_mode<synchronous>, transform_indices = @transform_7, window_bounds = array<i64: 128, 128>}, {pipeline_mode = #tpu.pipeline_mode<synchronous>, transform_indices = @transform_8, window_bounds = array<i64: 1, 128>}, {pipeline_mode = #tpu.pipeline_mode<synchronous>, transform_indices = @transform_9, window_bounds = array<i64: 1, 128>}, {pipeline_mode = #tpu.pipeline_mode<synchronous>, transform_indices = @transform_10, window_bounds = array<i64: 1, 128>}, {pipeline_mode = #tpu.pipeline_mode<synchronous>, transform_indices = @transform_11, window_bounds = array<i64: 128, 512>}, {pipeline_mode = #tpu.pipeline_mode<synchronous>, transform_indices = @transform_12, window_bounds = array<i64: 1, 512>}, {pipeline_mode = #tpu.pipeline_mode<synchronous>, transform_indices = @transform_13, window_bounds = array<i64: 512, 128>}, {pipeline_mode = #tpu.pipeline_mode<synchronous>, transform_indices = @transform_14, window_bounds = array<i64: 1, 128>}, {transform_indices = @transform_15, window_bounds = array<i64: 144, 128>}]} {
    %c0 = arith.constant 0 : index
    %c0_0 = arith.constant 0 : index
    %0 = vector.load %arg1[%c0, %c0_0] : memref<144x128xf32, #tpu.memory_space<vmem>>, vector<144x128xf32>
    %c0_1 = arith.constant 0 : index
    %c0_2 = arith.constant 0 : index
    %1 = vector.load %arg4[%c0_1, %c0_2] : memref<1x128xf32, #tpu.memory_space<vmem>>, vector<1x128xf32>
    %c0_3 = arith.constant 0 : index
    %c0_4 = arith.constant 0 : index
    %2 = vector.load %arg5[%c0_3, %c0_4] : memref<1x128xf32, #tpu.memory_space<vmem>>, vector<1x128xf32>
    %cst = arith.constant dense<0.000000e+00> : vector<144xf32>
    %3 = vector.multi_reduction <add>, %0, %cst [1] : vector<144x128xf32> to vector<144xf32>
    %4 = vector.shape_cast %3 : vector<144xf32> to vector<144x1xf32>
    %cst_5 = arith.constant 1.280000e+02 : f32
    %5 = vector.broadcast %cst_5 : f32 to vector<144x1xf32>
    %6 = arith.divf %4, %5 : vector<144x1xf32>
    %7 = vector.broadcast %6 : vector<144x1xf32> to vector<144x128xf32>
    %8 = arith.subf %0, %7 : vector<144x128xf32>
    %9 = arith.mulf %8, %8 : vector<144x128xf32>
    %cst_6 = arith.constant dense<0.000000e+00> : vector<144xf32>
    %10 = vector.multi_reduction <add>, %9, %cst_6 [1] : vector<144x128xf32> to vector<144xf32>
    %11 = vector.shape_cast %10 : vector<144xf32> to vector<144x1xf32>
    %cst_7 = arith.constant 1.280000e+02 : f32
    %12 = vector.broadcast %cst_7 : f32 to vector<144x1xf32>
    %13 = arith.divf %11, %12 : vector<144x1xf32>
    %cst_8 = arith.constant 9.99999997E-7 : f32
    %14 = vector.broadcast %cst_8 : f32 to vector<144x1xf32>
    %15 = arith.addf %13, %14 : vector<144x1xf32>
    %16 = math.rsqrt %15 : vector<144x1xf32>
    %17 = vector.broadcast %16 : vector<144x1xf32> to vector<144x128xf32>
    %18 = arith.mulf %8, %17 : vector<144x128xf32>
    %19 = vector.broadcast %1 : vector<1x128xf32> to vector<144x128xf32>
    %20 = arith.mulf %18, %19 : vector<144x128xf32>
    %21 = vector.broadcast %2 : vector<1x128xf32> to vector<144x128xf32>
    %22 = arith.addf %20, %21 : vector<144x128xf32>
    %c0_9 = arith.constant 0 : index
    %c0_10 = arith.constant 0 : index
    %23 = vector.load %arg2[%c0_9, %c0_10] : memref<144x1xf32, #tpu.memory_space<vmem>>, vector<144x1xf32>
    %24 = vector.broadcast %23 : vector<144x1xf32> to vector<144x128xf32>
    %25 = arith.mulf %22, %24 : vector<144x128xf32>
    %26 = arith.truncf %25 : vector<144x128xf32> to vector<144x128xbf16>
    %c0_11 = arith.constant 0 : index
    %c0_12 = arith.constant 0 : index
    %27 = vector.load %arg6[%c0_11, %c0_12] : memref<128x384xbf16, #tpu.memory_space<vmem>>, vector<128x384xbf16>
    %cst_13 = arith.constant dense<0.000000e+00> : vector<144x384xf32>
    %28 = tpu.matmul %26, %27, %cst_13 {dimension_numbers = #tpu.dot_dimension_numbers<[1], [0], [0], [1], [0, 0, 1, 1], [], []>} : vector<144x128xbf16>, vector<128x384xbf16>, vector<144x384xf32> -> vector<144x384xf32>
    %c0_14 = arith.constant 0 : index
    %c0_15 = arith.constant 0 : index
    %29 = vector.load %arg7[%c0_14, %c0_15] : memref<1x384xf32, #tpu.memory_space<vmem>>, vector<1x384xf32>
    %30 = vector.broadcast %29 : vector<1x384xf32> to vector<144x384xf32>
    %31 = arith.addf %28, %30 : vector<144x384xf32>
    %32 = arith.truncf %31 : vector<144x384xf32> to vector<144x384xbf16>
    %c0_16 = arith.constant 0 : index
    %c0_17 = arith.constant 0 : index
    %33 = vector.load %arg8[%c0_16, %c0_17] : memref<128x128xbf16, #tpu.memory_space<vmem>>, vector<128x128xbf16>
    %c0_18 = arith.constant 0 : index
    %c0_19 = arith.constant 0 : index
    %34 = vector.load %arg3[%c0_18, %c0_19] : memref<144x144xf32, #tpu.memory_space<vmem>>, vector<144x144xf32>
    %35 = vector.extract_strided_slice %32 {offsets = [0, 0], sizes = [144, 32], strides = [1, 1]} : vector<144x384xbf16> to vector<144x32xbf16>
    %36 = vector.extract_strided_slice %32 {offsets = [0, 128], sizes = [144, 32], strides = [1, 1]} : vector<144x384xbf16> to vector<144x32xbf16>
    %37 = vector.extract_strided_slice %32 {offsets = [0, 256], sizes = [144, 32], strides = [1, 1]} : vector<144x384xbf16> to vector<144x32xbf16>
    %cst_20 = arith.constant dense<0.000000e+00> : vector<144x144xf32>
    %38 = tpu.matmul %35, %36, %cst_20 {dimension_numbers = #tpu.dot_dimension_numbers<[1], [1], [0], [0], [0, 0, 1, 0], [], []>} : vector<144x32xbf16>, vector<144x32xbf16>, vector<144x144xf32> -> vector<144x144xf32>
    %cst_21 = arith.constant 0.176776692 : f32
    %39 = vector.broadcast %cst_21 : f32 to vector<144x144xf32>
    %40 = arith.mulf %38, %39 : vector<144x144xf32>
    %41 = arith.addf %40, %34 : vector<144x144xf32>
    %cst_22 = arith.constant dense<0xFF800000> : vector<144xf32>
    %42 = vector.multi_reduction <maximumf>, %41, %cst_22 [1] : vector<144x144xf32> to vector<144xf32>
    %43 = vector.shape_cast %42 : vector<144xf32> to vector<144x1xf32>
    %44 = vector.broadcast %43 : vector<144x1xf32> to vector<144x144xf32>
    %45 = arith.subf %41, %44 : vector<144x144xf32>
    %46 = math.exp %45 : vector<144x144xf32>
    %cst_23 = arith.constant dense<0.000000e+00> : vector<144xf32>
    %47 = vector.multi_reduction <add>, %46, %cst_23 [1] : vector<144x144xf32> to vector<144xf32>
    %48 = vector.shape_cast %47 : vector<144xf32> to vector<144x1xf32>
    %49 = tpu.reciprocal %48 {approx = true} : vector<144x1xf32> -> vector<144x1xf32>
    %50 = vector.broadcast %49 : vector<144x1xf32> to vector<144x144xf32>
    %51 = arith.mulf %46, %50 : vector<144x144xf32>
    %52 = arith.truncf %51 : vector<144x144xf32> to vector<144x144xbf16>
    %cst_24 = arith.constant dense<0.000000e+00> : vector<144x32xf32>
    %53 = tpu.matmul %52, %37, %cst_24 {dimension_numbers = #tpu.dot_dimension_numbers<[1], [0], [0], [1], [0, 0, 1, 1], [], []>} : vector<144x144xbf16>, vector<144x32xbf16>, vector<144x32xf32> -> vector<144x32xf32>
    %54 = arith.truncf %53 : vector<144x32xf32> to vector<144x32xbf16>
    %55 = vector.extract_strided_slice %33 {offsets = [0, 0], sizes = [32, 128], strides = [1, 1]} : vector<128x128xbf16> to vector<32x128xbf16>
    %cst_25 = arith.constant dense<0.000000e+00> : vector<144x128xf32>
    %56 = tpu.matmul %54, %55, %cst_25 {dimension_numbers = #tpu.dot_dimension_numbers<[1], [0], [0], [1], [0, 0, 1, 1], [], []>} : vector<144x32xbf16>, vector<32x128xbf16>, vector<144x128xf32> -> vector<144x128xf32>
    %57 = vector.extract_strided_slice %32 {offsets = [0, 32], sizes = [144, 32], strides = [1, 1]} : vector<144x384xbf16> to vector<144x32xbf16>
    %58 = vector.extract_strided_slice %32 {offsets = [0, 160], sizes = [144, 32], strides = [1, 1]} : vector<144x384xbf16> to vector<144x32xbf16>
    %59 = vector.extract_strided_slice %32 {offsets = [0, 288], sizes = [144, 32], strides = [1, 1]} : vector<144x384xbf16> to vector<144x32xbf16>
    %cst_26 = arith.constant dense<0.000000e+00> : vector<144x144xf32>
    %60 = tpu.matmul %57, %58, %cst_26 {dimension_numbers = #tpu.dot_dimension_numbers<[1], [1], [0], [0], [0, 0, 1, 0], [], []>} : vector<144x32xbf16>, vector<144x32xbf16>, vector<144x144xf32> -> vector<144x144xf32>
    %cst_27 = arith.constant 0.176776692 : f32
    %61 = vector.broadcast %cst_27 : f32 to vector<144x144xf32>
    %62 = arith.mulf %60, %61 : vector<144x144xf32>
    %63 = arith.addf %62, %34 : vector<144x144xf32>
    %cst_28 = arith.constant dense<0xFF800000> : vector<144xf32>
    %64 = vector.multi_reduction <maximumf>, %63, %cst_28 [1] : vector<144x144xf32> to vector<144xf32>
    %65 = vector.shape_cast %64 : vector<144xf32> to vector<144x1xf32>
    %66 = vector.broadcast %65 : vector<144x1xf32> to vector<144x144xf32>
    %67 = arith.subf %63, %66 : vector<144x144xf32>
    %68 = math.exp %67 : vector<144x144xf32>
    %cst_29 = arith.constant dense<0.000000e+00> : vector<144xf32>
    %69 = vector.multi_reduction <add>, %68, %cst_29 [1] : vector<144x144xf32> to vector<144xf32>
    %70 = vector.shape_cast %69 : vector<144xf32> to vector<144x1xf32>
    %71 = tpu.reciprocal %70 {approx = true} : vector<144x1xf32> -> vector<144x1xf32>
    %72 = vector.broadcast %71 : vector<144x1xf32> to vector<144x144xf32>
    %73 = arith.mulf %68, %72 : vector<144x144xf32>
    %74 = arith.truncf %73 : vector<144x144xf32> to vector<144x144xbf16>
    %cst_30 = arith.constant dense<0.000000e+00> : vector<144x32xf32>
    %75 = tpu.matmul %74, %59, %cst_30 {dimension_numbers = #tpu.dot_dimension_numbers<[1], [0], [0], [1], [0, 0, 1, 1], [], []>} : vector<144x144xbf16>, vector<144x32xbf16>, vector<144x32xf32> -> vector<144x32xf32>
    %76 = arith.truncf %75 : vector<144x32xf32> to vector<144x32xbf16>
    %77 = vector.extract_strided_slice %33 {offsets = [32, 0], sizes = [32, 128], strides = [1, 1]} : vector<128x128xbf16> to vector<32x128xbf16>
    %cst_31 = arith.constant dense<0.000000e+00> : vector<144x128xf32>
    %78 = tpu.matmul %76, %77, %cst_31 {dimension_numbers = #tpu.dot_dimension_numbers<[1], [0], [0], [1], [0, 0, 1, 1], [], []>} : vector<144x32xbf16>, vector<32x128xbf16>, vector<144x128xf32> -> vector<144x128xf32>
    %79 = arith.addf %56, %78 : vector<144x128xf32>
    %80 = vector.extract_strided_slice %32 {offsets = [0, 64], sizes = [144, 32], strides = [1, 1]} : vector<144x384xbf16> to vector<144x32xbf16>
    %81 = vector.extract_strided_slice %32 {offsets = [0, 192], sizes = [144, 32], strides = [1, 1]} : vector<144x384xbf16> to vector<144x32xbf16>
    %82 = vector.extract_strided_slice %32 {offsets = [0, 320], sizes = [144, 32], strides = [1, 1]} : vector<144x384xbf16> to vector<144x32xbf16>
    %cst_32 = arith.constant dense<0.000000e+00> : vector<144x144xf32>
    %83 = tpu.matmul %80, %81, %cst_32 {dimension_numbers = #tpu.dot_dimension_numbers<[1], [1], [0], [0], [0, 0, 1, 0], [], []>} : vector<144x32xbf16>, vector<144x32xbf16>, vector<144x144xf32> -> vector<144x144xf32>
    %cst_33 = arith.constant 0.176776692 : f32
    %84 = vector.broadcast %cst_33 : f32 to vector<144x144xf32>
    %85 = arith.mulf %83, %84 : vector<144x144xf32>
    %86 = arith.addf %85, %34 : vector<144x144xf32>
    %cst_34 = arith.constant dense<0xFF800000> : vector<144xf32>
    %87 = vector.multi_reduction <maximumf>, %86, %cst_34 [1] : vector<144x144xf32> to vector<144xf32>
    %88 = vector.shape_cast %87 : vector<144xf32> to vector<144x1xf32>
    %89 = vector.broadcast %88 : vector<144x1xf32> to vector<144x144xf32>
    %90 = arith.subf %86, %89 : vector<144x144xf32>
    %91 = math.exp %90 : vector<144x144xf32>
    %cst_35 = arith.constant dense<0.000000e+00> : vector<144xf32>
    %92 = vector.multi_reduction <add>, %91, %cst_35 [1] : vector<144x144xf32> to vector<144xf32>
    %93 = vector.shape_cast %92 : vector<144xf32> to vector<144x1xf32>
    %94 = tpu.reciprocal %93 {approx = true} : vector<144x1xf32> -> vector<144x1xf32>
    %95 = vector.broadcast %94 : vector<144x1xf32> to vector<144x144xf32>
    %96 = arith.mulf %91, %95 : vector<144x144xf32>
    %97 = arith.truncf %96 : vector<144x144xf32> to vector<144x144xbf16>
    %cst_36 = arith.constant dense<0.000000e+00> : vector<144x32xf32>
    %98 = tpu.matmul %97, %82, %cst_36 {dimension_numbers = #tpu.dot_dimension_numbers<[1], [0], [0], [1], [0, 0, 1, 1], [], []>} : vector<144x144xbf16>, vector<144x32xbf16>, vector<144x32xf32> -> vector<144x32xf32>
    %99 = arith.truncf %98 : vector<144x32xf32> to vector<144x32xbf16>
    %100 = vector.extract_strided_slice %33 {offsets = [64, 0], sizes = [32, 128], strides = [1, 1]} : vector<128x128xbf16> to vector<32x128xbf16>
    %cst_37 = arith.constant dense<0.000000e+00> : vector<144x128xf32>
    %101 = tpu.matmul %99, %100, %cst_37 {dimension_numbers = #tpu.dot_dimension_numbers<[1], [0], [0], [1], [0, 0, 1, 1], [], []>} : vector<144x32xbf16>, vector<32x128xbf16>, vector<144x128xf32> -> vector<144x128xf32>
    %102 = arith.addf %79, %101 : vector<144x128xf32>
    %103 = vector.extract_strided_slice %32 {offsets = [0, 96], sizes = [144, 32], strides = [1, 1]} : vector<144x384xbf16> to vector<144x32xbf16>
    %104 = vector.extract_strided_slice %32 {offsets = [0, 224], sizes = [144, 32], strides = [1, 1]} : vector<144x384xbf16> to vector<144x32xbf16>
    %105 = vector.extract_strided_slice %32 {offsets = [0, 352], sizes = [144, 32], strides = [1, 1]} : vector<144x384xbf16> to vector<144x32xbf16>
    %cst_38 = arith.constant dense<0.000000e+00> : vector<144x144xf32>
    %106 = tpu.matmul %103, %104, %cst_38 {dimension_numbers = #tpu.dot_dimension_numbers<[1], [1], [0], [0], [0, 0, 1, 0], [], []>} : vector<144x32xbf16>, vector<144x32xbf16>, vector<144x144xf32> -> vector<144x144xf32>
    %cst_39 = arith.constant 0.176776692 : f32
    %107 = vector.broadcast %cst_39 : f32 to vector<144x144xf32>
    %108 = arith.mulf %106, %107 : vector<144x144xf32>
    %109 = arith.addf %108, %34 : vector<144x144xf32>
    %cst_40 = arith.constant dense<0xFF800000> : vector<144xf32>
    %110 = vector.multi_reduction <maximumf>, %109, %cst_40 [1] : vector<144x144xf32> to vector<144xf32>
    %111 = vector.shape_cast %110 : vector<144xf32> to vector<144x1xf32>
    %112 = vector.broadcast %111 : vector<144x1xf32> to vector<144x144xf32>
    %113 = arith.subf %109, %112 : vector<144x144xf32>
    %114 = math.exp %113 : vector<144x144xf32>
    %cst_41 = arith.constant dense<0.000000e+00> : vector<144xf32>
    %115 = vector.multi_reduction <add>, %114, %cst_41 [1] : vector<144x144xf32> to vector<144xf32>
    %116 = vector.shape_cast %115 : vector<144xf32> to vector<144x1xf32>
    %117 = tpu.reciprocal %116 {approx = true} : vector<144x1xf32> -> vector<144x1xf32>
    %118 = vector.broadcast %117 : vector<144x1xf32> to vector<144x144xf32>
    %119 = arith.mulf %114, %118 : vector<144x144xf32>
    %120 = arith.truncf %119 : vector<144x144xf32> to vector<144x144xbf16>
    %cst_42 = arith.constant dense<0.000000e+00> : vector<144x32xf32>
    %121 = tpu.matmul %120, %105, %cst_42 {dimension_numbers = #tpu.dot_dimension_numbers<[1], [0], [0], [1], [0, 0, 1, 1], [], []>} : vector<144x144xbf16>, vector<144x32xbf16>, vector<144x32xf32> -> vector<144x32xf32>
    %122 = arith.truncf %121 : vector<144x32xf32> to vector<144x32xbf16>
    %123 = vector.extract_strided_slice %33 {offsets = [96, 0], sizes = [32, 128], strides = [1, 1]} : vector<128x128xbf16> to vector<32x128xbf16>
    %cst_43 = arith.constant dense<0.000000e+00> : vector<144x128xf32>
    %124 = tpu.matmul %122, %123, %cst_43 {dimension_numbers = #tpu.dot_dimension_numbers<[1], [0], [0], [1], [0, 0, 1, 1], [], []>} : vector<144x32xbf16>, vector<32x128xbf16>, vector<144x128xf32> -> vector<144x128xf32>
    %125 = arith.addf %102, %124 : vector<144x128xf32>
    %c0_44 = arith.constant 0 : index
    %c0_45 = arith.constant 0 : index
    %126 = vector.load %arg17[%c0_44, %c0_45] : memref<144x128xf32, #tpu.memory_space<vmem>>, vector<144x128xf32>
    tpu.vector_store %arg17[%c0_44, %c0_45], %125 {strides = array<i32>} : memref<144x128xf32, #tpu.memory_space<vmem>>, vector<144x128xf32>,
    %c0_46 = arith.constant 0 : index
    %c0_47 = arith.constant 0 : index
    %127 = vector.load %arg17[%c0_46, %c0_47] : memref<144x128xf32, #tpu.memory_space<vmem>>, vector<144x128xf32>
    %c0_48 = arith.constant 0 : index
    %c0_49 = arith.constant 0 : index
    %128 = vector.load %arg9[%c0_48, %c0_49] : memref<1x128xf32, #tpu.memory_space<vmem>>, vector<1x128xf32>
    %129 = vector.broadcast %128 : vector<1x128xf32> to vector<144x128xf32>
    %130 = arith.addf %127, %129 : vector<144x128xf32>
    %131 = arith.addf %130, %0 : vector<144x128xf32>
    %c0_50 = arith.constant 0 : index
    %c0_51 = arith.constant 0 : index
    %132 = vector.load %arg10[%c0_50, %c0_51] : memref<1x128xf32, #tpu.memory_space<vmem>>, vector<1x128xf32>
    %c0_52 = arith.constant 0 : index
    %c0_53 = arith.constant 0 : index
    %133 = vector.load %arg11[%c0_52, %c0_53] : memref<1x128xf32, #tpu.memory_space<vmem>>, vector<1x128xf32>
    %cst_54 = arith.constant dense<0.000000e+00> : vector<144xf32>
    %134 = vector.multi_reduction <add>, %131, %cst_54 [1] : vector<144x128xf32> to vector<144xf32>
    %135 = vector.shape_cast %134 : vector<144xf32> to vector<144x1xf32>
    %cst_55 = arith.constant 1.280000e+02 : f32
    %136 = vector.broadcast %cst_55 : f32 to vector<144x1xf32>
    %137 = arith.divf %135, %136 : vector<144x1xf32>
    %138 = vector.broadcast %137 : vector<144x1xf32> to vector<144x128xf32>
    %139 = arith.subf %131, %138 : vector<144x128xf32>
    %140 = arith.mulf %139, %139 : vector<144x128xf32>
    %cst_56 = arith.constant dense<0.000000e+00> : vector<144xf32>
    %141 = vector.multi_reduction <add>, %140, %cst_56 [1] : vector<144x128xf32> to vector<144xf32>
    %142 = vector.shape_cast %141 : vector<144xf32> to vector<144x1xf32>
    %cst_57 = arith.constant 1.280000e+02 : f32
    %143 = vector.broadcast %cst_57 : f32 to vector<144x1xf32>
    %144 = arith.divf %142, %143 : vector<144x1xf32>
    %cst_58 = arith.constant 9.99999997E-7 : f32
    %145 = vector.broadcast %cst_58 : f32 to vector<144x1xf32>
    %146 = arith.addf %144, %145 : vector<144x1xf32>
    %147 = math.rsqrt %146 : vector<144x1xf32>
    %148 = vector.broadcast %147 : vector<144x1xf32> to vector<144x128xf32>
    %149 = arith.mulf %139, %148 : vector<144x128xf32>
    %150 = vector.broadcast %132 : vector<1x128xf32> to vector<144x128xf32>
    %151 = arith.mulf %149, %150 : vector<144x128xf32>
    %152 = vector.broadcast %133 : vector<1x128xf32> to vector<144x128xf32>
    %153 = arith.addf %151, %152 : vector<144x128xf32>
    %154 = arith.truncf %153 : vector<144x128xf32> to vector<144x128xbf16>
    %c0_59 = arith.constant 0 : index
    %c0_60 = arith.constant 0 : index
    %155 = vector.load %arg12[%c0_59, %c0_60] : memref<128x512xbf16, #tpu.memory_space<vmem>>, vector<128x512xbf16>
    %cst_61 = arith.constant dense<0.000000e+00> : vector<144x512xf32>
    %156 = tpu.matmul %154, %155, %cst_61 {dimension_numbers = #tpu.dot_dimension_numbers<[1], [0], [0], [1], [0, 0, 1, 1], [], []>} : vector<144x128xbf16>, vector<128x512xbf16>, vector<144x512xf32> -> vector<144x512xf32>
    %c0_62 = arith.constant 0 : index
    %c0_63 = arith.constant 0 : index
    %157 = vector.load %arg13[%c0_62, %c0_63] : memref<1x512xf32, #tpu.memory_space<vmem>>, vector<1x512xf32>
    %158 = vector.broadcast %157 : vector<1x512xf32> to vector<144x512xf32>
    %159 = arith.addf %156, %158 : vector<144x512xf32>
    %cst_64 = arith.constant 5.000000e-01 : f32
    %160 = vector.broadcast %cst_64 : f32 to vector<144x512xf32>
    %161 = arith.mulf %160, %159 : vector<144x512xf32>
    %cst_65 = arith.constant 0.707106769 : f32
    %162 = vector.broadcast %cst_65 : f32 to vector<144x512xf32>
    %163 = arith.mulf %159, %162 : vector<144x512xf32>
    %164 = math.erf %163 : vector<144x512xf32>
    %cst_66 = arith.constant 1.000000e+00 : f32
    %165 = vector.broadcast %cst_66 : f32 to vector<144x512xf32>
    %166 = arith.addf %165, %164 : vector<144x512xf32>
    %167 = arith.mulf %161, %166 : vector<144x512xf32>
    %168 = arith.truncf %167 : vector<144x512xf32> to vector<144x512xbf16>
    %c0_67 = arith.constant 0 : index
    %c0_68 = arith.constant 0 : index
    %169 = vector.load %arg14[%c0_67, %c0_68] : memref<512x128xbf16, #tpu.memory_space<vmem>>, vector<512x128xbf16>
    %cst_69 = arith.constant dense<0.000000e+00> : vector<144x128xf32>
    %170 = tpu.matmul %168, %169, %cst_69 {dimension_numbers = #tpu.dot_dimension_numbers<[1], [0], [0], [1], [0, 0, 1, 1], [], []>} : vector<144x512xbf16>, vector<512x128xbf16>, vector<144x128xf32> -> vector<144x128xf32>
    %c0_70 = arith.constant 0 : index
    %c0_71 = arith.constant 0 : index
    %171 = vector.load %arg15[%c0_70, %c0_71] : memref<1x128xf32, #tpu.memory_space<vmem>>, vector<1x128xf32>
    %172 = vector.broadcast %171 : vector<1x128xf32> to vector<144x128xf32>
    %173 = arith.addf %170, %172 : vector<144x128xf32>
    %174 = arith.addf %173, %131 : vector<144x128xf32>
    %c0_72 = arith.constant 0 : index
    %c0_73 = arith.constant 0 : index
    %175 = vector.load %arg16[%c0_72, %c0_73] : memref<144x128xf32, #tpu.memory_space<vmem>>, vector<144x128xf32>
    tpu.vector_store %arg16[%c0_72, %c0_73], %174 {strides = array<i32>} : memref<144x128xf32, #tpu.memory_space<vmem>>, vector<144x128xf32>,
    return
  }
  func.func @transform_0(%arg0: i32) -> (i32, i32) {
    %c0_i32 = arith.constant 0 : i32
    %c0_i32_0 = arith.constant 0 : i32
    return %arg0, %c0_i32 : i32, i32
  }
  func.func @transform_1(%arg0: i32) -> (i32, i32) {
    %c0_i32 = arith.constant 0 : i32
    %c0_i32_0 = arith.constant 0 : i32
    return %arg0, %c0_i32 : i32, i32
  }
  func.func @transform_2(%arg0: i32) -> (i32, i32) {
    %c0_i32 = arith.constant 0 : i32
    %c0_i32_0 = arith.constant 0 : i32
    %c0_i32_1 = arith.constant 0 : i32
    return %c0_i32, %c0_i32_0 : i32, i32
  }
  func.func @transform_3(%arg0: i32) -> (i32, i32) {
    %c0_i32 = arith.constant 0 : i32
    %c0_i32_0 = arith.constant 0 : i32
    %c0_i32_1 = arith.constant 0 : i32
    return %c0_i32, %c0_i32_0 : i32, i32
  }
  func.func @transform_4(%arg0: i32) -> (i32, i32) {
    %c0_i32 = arith.constant 0 : i32
    %c0_i32_0 = arith.constant 0 : i32
    %c0_i32_1 = arith.constant 0 : i32
    return %c0_i32, %c0_i32_0 : i32, i32
  }
  func.func @transform_5(%arg0: i32) -> (i32, i32) {
    %c0_i32 = arith.constant 0 : i32
    %c0_i32_0 = arith.constant 0 : i32
    %c0_i32_1 = arith.constant 0 : i32
    return %c0_i32, %c0_i32_0 : i32, i32
  }
  func.func @transform_6(%arg0: i32) -> (i32, i32) {
    %c0_i32 = arith.constant 0 : i32
    %c0_i32_0 = arith.constant 0 : i32
    %c0_i32_1 = arith.constant 0 : i32
    return %c0_i32, %c0_i32_0 : i32, i32
  }
  func.func @transform_7(%arg0: i32) -> (i32, i32) {
    %c0_i32 = arith.constant 0 : i32
    %c0_i32_0 = arith.constant 0 : i32
    %c0_i32_1 = arith.constant 0 : i32
    return %c0_i32, %c0_i32_0 : i32, i32
  }
  func.func @transform_8(%arg0: i32) -> (i32, i32) {
    %c0_i32 = arith.constant 0 : i32
    %c0_i32_0 = arith.constant 0 : i32
    %c0_i32_1 = arith.constant 0 : i32
    return %c0_i32, %c0_i32_0 : i32, i32
  }
  func.func @transform_9(%arg0: i32) -> (i32, i32) {
    %c0_i32 = arith.constant 0 : i32
    %c0_i32_0 = arith.constant 0 : i32
    %c0_i32_1 = arith.constant 0 : i32
    return %c0_i32, %c0_i32_0 : i32, i32
  }
  func.func @transform_10(%arg0: i32) -> (i32, i32) {
    %c0_i32 = arith.constant 0 : i32
    %c0_i32_0 = arith.constant 0 : i32
    %c0_i32_1 = arith.constant 0 : i32
    return %c0_i32, %c0_i32_0 : i32, i32
  }
  func.func @transform_11(%arg0: i32) -> (i32, i32) {
    %c0_i32 = arith.constant 0 : i32
    %c0_i32_0 = arith.constant 0 : i32
    %c0_i32_1 = arith.constant 0 : i32
    return %c0_i32, %c0_i32_0 : i32, i32
  }
  func.func @transform_12(%arg0: i32) -> (i32, i32) {
    %c0_i32 = arith.constant 0 : i32
    %c0_i32_0 = arith.constant 0 : i32
    %c0_i32_1 = arith.constant 0 : i32
    return %c0_i32, %c0_i32_0 : i32, i32
  }
  func.func @transform_13(%arg0: i32) -> (i32, i32) {
    %c0_i32 = arith.constant 0 : i32
    %c0_i32_0 = arith.constant 0 : i32
    %c0_i32_1 = arith.constant 0 : i32
    return %c0_i32, %c0_i32_0 : i32, i32
  }
  func.func @transform_14(%arg0: i32) -> (i32, i32) {
    %c0_i32 = arith.constant 0 : i32
    %c0_i32_0 = arith.constant 0 : i32
    %c0_i32_1 = arith.constant 0 : i32
    return %c0_i32, %c0_i32_0 : i32, i32
  }
  func.func @transform_15(%arg0: i32) -> (i32, i32) {
    %c0_i32 = arith.constant 0 : i32
    %c0_i32_0 = arith.constant 0 : i32
    return %arg0, %c0_i32 : i32, i32
  }
}

</mosaic_0001>

<llo_original>
// kernel: tpu_custom_call.1
$region0: #{tpu_custom_call.1}
  #allocation0 [shape = 'u32[]', space=smem, size = 0x4, offset = 0x4, fixed_abs, tag = 'smem constant byte address 0x4 - core index']
  #allocation1 [shape = 'u32[144,128]{1,0:T(1,128)}', space=vmem, size = 0x12000, scoped, tag = 'internal scratch']
  #allocation2 [shape = 'f32[144,128]{1,0:T(8,128)}', space=vmem, size = 0x12000, scoped, tag = 'scratch operand']
  %s0 = inlined_call_operand.vmem [shape: f32[288,128], index: 0, kind: input, shape index: {}]
  %s1 = inlined_call_operand.vmem [shape: f32[288,1], index: 1, kind: input, shape index: {}]
  %s2 = inlined_call_operand.hbm [shape: f32[144,144], index: 2, kind: input, shape index: {}]
  %s3 = inlined_call_operand.vmem [shape: f32[1,128], index: 3, kind: input, shape index: {}]
  %s4 = inlined_call_operand.vmem [shape: f32[1,128], index: 4, kind: input, shape index: {}]
  %s5 = inlined_call_operand.hbm [shape: bf16[128,384], index: 5, kind: input, shape index: {}]
  %s6 = inlined_call_operand.vmem [shape: f32[1,384], index: 6, kind: input, shape index: {}]
  %s7 = inlined_call_operand.hbm [shape: bf16[128,128], index: 7, kind: input, shape index: {}]
  %s8 = inlined_call_operand.vmem [shape: f32[1,128], index: 8, kind: input, shape index: {}]
  %s9 = inlined_call_operand.vmem [shape: f32[1,128], index: 9, kind: input, shape index: {}]
  %s10 = inlined_call_operand.vmem [shape: f32[1,128], index: 10, kind: input, shape index: {}]
  %s11 = inlined_call_operand.hbm [shape: bf16[128,512], index: 11, kind: input, shape index: {}]
  %s12 = inlined_call_operand.vmem [shape: f32[1,512], index: 12, kind: input, shape index: {}]
  %s13 = inlined_call_operand.hbm [shape: bf16[512,128], index: 13, kind: input, shape index: {}]
  %s14 = inlined_call_operand.vmem [shape: f32[1,128], index: 14, kind: input, shape index: {}]
  %s15 = inlined_call_operand.hbm [shape: f32[288,128], index: 15, kind: output, shape index: {}]
  %s16 = sld [smem:[#allocation0]]
  $region113: #{tpu_custom_call.1} parent=0
    _
  %s18 = ssub.s32 1, %s16
  %s19 = scalar_select 0, %s18, %s16
  $region1: #{tpu_custom_call.1} parent=0
    #allocation3 [shape = 'u8[147456]{0}', space=vmem, size = 0x24000, scoped, tag = 'input window, operand 2, single buffered']
    #allocation4 [shape = 's32[2]{0}', space=sflag, size = 0x8, scoped, tag = 'scoped memory for tpu_custom_call.1']
    #allocation5 [shape = 's32[2]{0}', space=sflag, size = 0x8, scoped, tag = 'scoped memory for tpu_custom_call.1']
    #allocation6 [shape = 'u8[98304]{0}', space=vmem, size = 0x18000, scoped, tag = 'input window, operand 5, single buffered']
    #allocation7 [shape = 's32[1]{0}', space=sflag, size = 0x4, scoped, tag = 'scoped memory for tpu_custom_call.1']
    #allocation8 [shape = 'u8[32768]{0}', space=vmem, size = 0x8000, scoped, tag = 'input window, operand 7, single buffered']
    #allocation9 [shape = 'u8[131072]{0}', space=vmem, size = 0x20000, scoped, tag = 'input window, operand 11, single buffered']
    #allocation10 [shape = 's32[1]{0}', space=sflag, size = 0x4, scoped, tag = 'scoped memory for tpu_custom_call.1']
    #allocation11 [shape = 'u8[131072]{0}', space=vmem, size = 0x20000, scoped, tag = 'input window, operand 13, single buffered']
    #allocation12 [shape = 'u8[147456]{0}', space=vmem, size = 0x24000, scoped, tag = 'output window, operand 0']
    %20 = vsyncpa [#allocation4], 0
    %21 = vsyncpa [#allocation7], 0
    %22 = vsyncpa [#allocation10], 0
    %23 = vsyncpa [#allocation5], 0
    %s24 = scalar_lea.sflag [#allocation5], 1
    %25 = vsyncpa %s24, 0
    loop: start=0, step=1, limit=4
    $region2: #{tpu_custom_call.1} parent=1 // loop_pre_header
      _
    $region3: #{tpu_custom_call.1} parent=1 // loop_header
      %s27 = sphi 0, %s31
      %p28 = scmp.ge.s32.totalorder %s27, 4
      %s37 = sphi 0, %s39
      %s40 = sphi 0, %s37
      %s41 = sphi 0, %s40
      %s57 = sphi 0, %s41
      %s63 = sphi 0, %s65
      %s66 = sphi 0, %s63
      %s67 = sphi 0, %s66
      %s83 = sphi 0, %s67
      %s87 = sphi 0, %s87
      %s89 = sphi 0, %s87
      %s90 = sphi 0, %s89
      %s104 = sphi 0, %s90
      %s108 = sphi 0, %s108
      %s110 = sphi 0, %s108
      %s111 = sphi 0, %s110
      %s125 = sphi 0, %s111
      %s129 = sphi 0, %s129
      %s131 = sphi 0, %s129
      %s132 = sphi 0, %s131
      %s146 = sphi 0, %s132
      %s150 = sphi 0, %s150
      %s152 = sphi 0, %s150
      %s153 = sphi 0, %s152
      %s167 = sphi 0, %s153
      %s171 = sphi 0, %s171
      %s173 = sphi 0, %s171
      %s174 = sphi 0, %s173
      %s188 = sphi 0, %s174
      %s192 = sphi 0, %s192
      %s194 = sphi 0, %s192
      %s195 = sphi 0, %s194
      %s209 = sphi 0, %s195
      %s213 = sphi 0, %s213
      %s215 = sphi 0, %s213
      %s216 = sphi 0, %s215
      %s230 = sphi 0, %s216
      %s234 = sphi 0, %s234
      %s236 = sphi 0, %s234
      %s237 = sphi 0, %s236
      %s251 = sphi 0, %s237
      %s255 = sphi 0, %s255
      %s257 = sphi 0, %s255
      %s258 = sphi 0, %s257
      %s272 = sphi 0, %s258
      %s276 = sphi 0, %s276
      %s278 = sphi 0, %s276
      %s279 = sphi 0, %s278
      %s293 = sphi 0, %s279
      %s297 = sphi 0, %s297
      %s299 = sphi 0, %s297
      %s300 = sphi 0, %s299
      %s314 = sphi 0, %s300
      %s318 = sphi 0, %s318
      %s320 = sphi 0, %s318
      %s321 = sphi 0, %s320
      %s335 = sphi 0, %s321
      %s339 = sphi 0, %s339
      %s341 = sphi 0, %s339
      %s342 = sphi 0, %s341
      %s356 = sphi 0, %s342
      %s362 = sphi 0, %s364
      %s365 = sphi 0, %s362
      %s366 = sphi 0, %s365
      %s382 = sphi 0, %s366
    $region4: #{tpu_custom_call.1} parent=1 // loop_header_branch
      %30 = sbr.rel (%p28) target = $region8
    $region5: #{tpu_custom_call.1} parent=1 // loop_body
      %s32 = ssub.s32 %s27, 1
      %s33 = ssub.s32 %s27, 2
      %s34 = sadd.s32 %s27, 1
      %s35 = ssub.s32 %s27, %s34
      %p36 = scmp.eq.s32.totalorder %s35, 0
      %s38 = sadd.s32 %s37, 1
      %s39 = scalar_select %p36, %s37, %s38
      %p42 = pneg %p36
      %p43 = scmp.eq.s32.totalorder %s27, 1
      %p44 = por %p42, %p43
      %p45 = scmp.ne.s32.totalorder %s37, %s40
      %p46 = scmp.eq.s32.totalorder %s27, 0
      %p47 = por %p45, %p46
      %p48 = scmp.ne.s32.totalorder %s37, %s40
      %p49 = scmp.eq.s32.totalorder %s32, 1
      %p50 = por %p48, %p49
      %p51 = scmp.ne.s32.totalorder %s40, %s41
      %p52 = scmp.eq.s32.totalorder %s32, 0
      %p53 = por %p51, %p52
      %p54 = scmp.ne.s32.totalorder %s40, %s41
      %p55 = scmp.eq.s32.totalorder %s33, 1
      %p56 = por %p54, %p55
      %p58 = scmp.ne.s32.totalorder %s41, %s57
      %p59 = scmp.eq.s32.totalorder %s33, 0
      %p60 = por %p58, %p59
      %s61 = ssub.s32 %s27, %s34
      %p62 = scmp.eq.s32.totalorder %s61, 0
      %s64 = sadd.s32 %s63, 1
      %s65 = scalar_select %p62, %s63, %s64
      %p68 = pneg %p62
      %p69 = scmp.eq.s32.totalorder %s27, 1
      %p70 = por %p68, %p69
      %p71 = scmp.ne.s32.totalorder %s63, %s66
      %p72 = scmp.eq.s32.totalorder %s27, 0
      %p73 = por %p71, %p72
      %p74 = scmp.ne.s32.totalorder %s63, %s66
      %p75 = scmp.eq.s32.totalorder %s32, 1
      %p76 = por %p74, %p75
      %p77 = scmp.ne.s32.totalorder %s66, %s67
      %p78 = scmp.eq.s32.totalorder %s32, 0
      %p79 = por %p77, %p78
      %p80 = scmp.ne.s32.totalorder %s66, %s67
      %p81 = scmp.eq.s32.totalorder %s33, 1
      %p82 = por %p80, %p81
      %p84 = scmp.ne.s32.totalorder %s67, %s83
      %p85 = scmp.eq.s32.totalorder %s33, 0
      %p86 = por %p84, %p85
      %s88 = sadd.s32 %s87, 1
      %p91 = scmp.eq.s32.totalorder %s27, 1
      %p92 = scmp.ne.s32.totalorder %s87, %s89
      %p93 = scmp.eq.s32.totalorder %s27, 0
      %p94 = por %p92, %p93
      %p95 = scmp.ne.s32.totalorder %s87, %s89
      %p96 = scmp.eq.s32.totalorder %s32, 1
      %p97 = por %p95, %p96
      %p98 = scmp.ne.s32.totalorder %s89, %s90
      %p99 = scmp.eq.s32.totalorder %s32, 0
      %p100 = por %p98, %p99
      %p101 = scmp.ne.s32.totalorder %s89, %s90
      %p102 = scmp.eq.s32.totalorder %s33, 1
      %p103 = por %p101, %p102
      %p105 = scmp.ne.s32.totalorder %s90, %s104
      %p106 = scmp.eq.s32.totalorder %s33, 0
      %p107 = por %p105, %p106
      %s109 = sadd.s32 %s108, 1
      %p112 = scmp.eq.s32.totalorder %s27, 1
      %p113 = scmp.ne.s32.totalorder %s108, %s110
      %p114 = scmp.eq.s32.totalorder %s27, 0
      %p115 = por %p113, %p114
      %p116 = scmp.ne.s32.totalorder %s108, %s110
      %p117 = scmp.eq.s32.totalorder %s32, 1
      %p118 = por %p116, %p117
      %p119 = scmp.ne.s32.totalorder %s110, %s111
      %p120 = scmp.eq.s32.totalorder %s32, 0
      %p121 = por %p119, %p120
      %p122 = scmp.ne.s32.totalorder %s110, %s111
      %p123 = scmp.eq.s32.totalorder %s33, 1
      %p124 = por %p122, %p123
      %p126 = scmp.ne.s32.totalorder %s111, %s125
      %p127 = scmp.eq.s32.totalorder %s33, 0
      %p128 = por %p126, %p127
      %s130 = sadd.s32 %s129, 1
      %p133 = scmp.eq.s32.totalorder %s27, 1
      %p134 = scmp.ne.s32.totalorder %s129, %s131
      %p135 = scmp.eq.s32.totalorder %s27, 0
      %p136 = por %p134, %p135
      %p137 = scmp.ne.s32.totalorder %s129, %s131
      %p138 = scmp.eq.s32.totalorder %s32, 1
      %p139 = por %p137, %p138
      %p140 = scmp.ne.s32.totalorder %s131, %s132
      %p141 = scmp.eq.s32.totalorder %s32, 0
      %p142 = por %p140, %p141
      %p143 = scmp.ne.s32.totalorder %s131, %s132
      %p144 = scmp.eq.s32.totalorder %s33, 1
      %p145 = por %p143, %p144
      %p147 = scmp.ne.s32.totalorder %s132, %s146
      %p148 = scmp.eq.s32.totalorder %s33, 0
      %p149 = por %p147, %p148
      %s151 = sadd.s32 %s150, 1
      %p154 = scmp.eq.s32.totalorder %s27, 1
      %p155 = scmp.ne.s32.totalorder %s150, %s152
      %p156 = scmp.eq.s32.totalorder %s27, 0
      %p157 = por %p155, %p156
      %p158 = scmp.ne.s32.totalorder %s150, %s152
      %p159 = scmp.eq.s32.totalorder %s32, 1
      %p160 = por %p158, %p159
      %p161 = scmp.ne.s32.totalorder %s152, %s153
      %p162 = scmp.eq.s32.totalorder %s32, 0
      %p163 = por %p161, %p162
      %p164 = scmp.ne.s32.totalorder %s152, %s153
      %p165 = scmp.eq.s32.totalorder %s33, 1
      %p166 = por %p164, %p165
      %p168 = scmp.ne.s32.totalorder %s153, %s167
      %p169 = scmp.eq.s32.totalorder %s33, 0
      %p170 = por %p168, %p169
      %s172 = sadd.s32 %s171, 1
      %p175 = scmp.eq.s32.totalorder %s27, 1
      %p176 = scmp.ne.s32.totalorder %s171, %s173
      %p177 = scmp.eq.s32.totalorder %s27, 0
      %p178 = por %p176, %p177
      %p179 = scmp.ne.s32.totalorder %s171, %s173
      %p180 = scmp.eq.s32.totalorder %s32, 1
      %p181 = por %p179, %p180
      %p182 = scmp.ne.s32.totalorder %s173, %s174
      %p183 = scmp.eq.s32.totalorder %s32, 0
      %p184 = por %p182, %p183
      %p185 = scmp.ne.s32.totalorder %s173, %s174
      %p186 = scmp.eq.s32.totalorder %s33, 1
      %p187 = por %p185, %p186
      %p189 = scmp.ne.s32.totalorder %s174, %s188
      %p190 = scmp.eq.s32.totalorder %s33, 0
      %p191 = por %p189, %p190
      %s193 = sadd.s32 %s192, 1
      %p196 = scmp.eq.s32.totalorder %s27, 1
      %p197 = scmp.ne.s32.totalorder %s192, %s194
      %p198 = scmp.eq.s32.totalorder %s27, 0
      %p199 = por %p197, %p198
      %p200 = scmp.ne.s32.totalorder %s192, %s194
      %p201 = scmp.eq.s32.totalorder %s32, 1
      %p202 = por %p200, %p201
      %p203 = scmp.ne.s32.totalorder %s194, %s195
      %p204 = scmp.eq.s32.totalorder %s32, 0
      %p205 = por %p203, %p204
      %p206 = scmp.ne.s32.totalorder %s194, %s195
      %p207 = scmp.eq.s32.totalorder %s33, 1
      %p208 = por %p206, %p207
      %p210 = scmp.ne.s32.totalorder %s195, %s209
      %p211 = scmp.eq.s32.totalorder %s33, 0
      %p212 = por %p210, %p211
      %s214 = sadd.s32 %s213, 1
      %p217 = scmp.eq.s32.totalorder %s27, 1
      %p218 = scmp.ne.s32.totalorder %s213, %s215
      %p219 = scmp.eq.s32.totalorder %s27, 0
      %p220 = por %p218, %p219
      %p221 = scmp.ne.s32.totalorder %s213, %s215
      %p222 = scmp.eq.s32.totalorder %s32, 1
      %p223 = por %p221, %p222
      %p224 = scmp.ne.s32.totalorder %s215, %s216
      %p225 = scmp.eq.s32.totalorder %s32, 0
      %p226 = por %p224, %p225
      %p227 = scmp.ne.s32.totalorder %s215, %s216
      %p228 = scmp.eq.s32.totalorder %s33, 1
      %p229 = por %p227, %p228
      %p231 = scmp.ne.s32.totalorder %s216, %s230
      %p232 = scmp.eq.s32.totalorder %s33, 0
      %p233 = por %p231, %p232
      %s235 = sadd.s32 %s234, 1
      %p238 = scmp.eq.s32.totalorder %s27, 1
      %p239 = scmp.ne.s32.totalorder %s234, %s236
      %p240 = scmp.eq.s32.totalorder %s27, 0
      %p241 = por %p239, %p240
      %p242 = scmp.ne.s32.totalorder %s234, %s236
      %p243 = scmp.eq.s32.totalorder %s32, 1
      %p244 = por %p242, %p243
      %p245 = scmp.ne.s32.totalorder %s236, %s237
      %p246 = scmp.eq.s32.totalorder %s32, 0
      %p247 = por %p245, %p246
      %p248 = scmp.ne.s32.totalorder %s236, %s237
      %p249 = scmp.eq.s32.totalorder %s33, 1
      %p250 = por %p248, %p249
      %p252 = scmp.ne.s32.totalorder %s237, %s251
      %p253 = scmp.eq.s32.totalorder %s33, 0
      %p254 = por %p252, %p253
      %s256 = sadd.s32 %s255, 1
      %p259 = scmp.eq.s32.totalorder %s27, 1
      %p260 = scmp.ne.s32.totalorder %s255, %s257
      %p261 = scmp.eq.s32.totalorder %s27, 0
      %p262 = por %p260, %p261
      %p263 = scmp.ne.s32.totalorder %s255, %s257
      %p264 = scmp.eq.s32.totalorder %s32, 1
      %p265 = por %p263, %p264
      %p266 = scmp.ne.s32.totalorder %s257, %s258
      %p267 = scmp.eq.s32.totalorder %s32, 0
      %p268 = por %p266, %p267
      %p269 = scmp.ne.s32.totalorder %s257, %s258
      %p270 = scmp.eq.s32.totalorder %s33, 1
      %p271 = por %p269, %p270
      %p273 = scmp.ne.s32.totalorder %s258, %s272
      %p274 = scmp.eq.s32.totalorder %s33, 0
      %p275 = por %p273, %p274
      %s277 = sadd.s32 %s276, 1
      %p280 = scmp.eq.s32.totalorder %s27, 1
      %p281 = scmp.ne.s32.totalorder %s276, %s278
      %p282 = scmp.eq.s32.totalorder %s27, 0
      %p283 = por %p281, %p282
      %p284 = scmp.ne.s32.totalorder %s276, %s278
      %p285 = scmp.eq.s32.totalorder %s32, 1
      %p286 = por %p284, %p285
      %p287 = scmp.ne.s32.totalorder %s278, %s279
      %p288 = scmp.eq.s32.totalorder %s32, 0
      %p289 = por %p287, %p288
      %p290 = scmp.ne.s32.totalorder %s278, %s279
      %p291 = scmp.eq.s32.totalorder %s33, 1
      %p292 = por %p290, %p291
      %p294 = scmp.ne.s32.totalorder %s279, %s293
      %p295 = scmp.eq.s32.totalorder %s33, 0
      %p296 = por %p294, %p295
      %s298 = sadd.s32 %s297, 1
      %p301 = scmp.eq.s32.totalorder %s27, 1
      %p302 = scmp.ne.s32.totalorder %s297, %s299
      %p303 = scmp.eq.s32.totalorder %s27, 0
      %p304 = por %p302, %p303
      %p305 = scmp.ne.s32.totalorder %s297, %s299
      %p306 = scmp.eq.s32.totalorder %s32, 1
      %p307 = por %p305, %p306
      %p308 = scmp.ne.s32.totalorder %s299, %s300
      %p309 = scmp.eq.s32.totalorder %s32, 0
      %p310 = por %p308, %p309
      %p311 = scmp.ne.s32.totalorder %s299, %s300
      %p312 = scmp.eq.s32.totalorder %s33, 1
      %p313 = por %p311, %p312
      %p315 = scmp.ne.s32.totalorder %s300, %s314
      %p316 = scmp.eq.s32.totalorder %s33, 0
      %p317 = por %p315, %p316
      %s319 = sadd.s32 %s318, 1
      %p322 = scmp.eq.s32.totalorder %s27, 1
      %p323 = scmp.ne.s32.totalorder %s318, %s320
      %p324 = scmp.eq.s32.totalorder %s27, 0
      %p325 = por %p323, %p324
      %p326 = scmp.ne.s32.totalorder %s318, %s320
      %p327 = scmp.eq.s32.totalorder %s32, 1
      %p328 = por %p326, %p327
      %p329 = scmp.ne.s32.totalorder %s320, %s321
      %p330 = scmp.eq.s32.totalorder %s32, 0
      %p331 = por %p329, %p330
      %p332 = scmp.ne.s32.totalorder %s320, %s321
      %p333 = scmp.eq.s32.totalorder %s33, 1
      %p334 = por %p332, %p333
      %p336 = scmp.ne.s32.totalorder %s321, %s335
      %p337 = scmp.eq.s32.totalorder %s33, 0
      %p338 = por %p336, %p337
      %s340 = sadd.s32 %s339, 1
      %p343 = scmp.eq.s32.totalorder %s27, 1
      %p344 = scmp.ne.s32.totalorder %s339, %s341
      %p345 = scmp.eq.s32.totalorder %s27, 0
      %p346 = por %p344, %p345
      %p347 = scmp.ne.s32.totalorder %s339, %s341
      %p348 = scmp.eq.s32.totalorder %s32, 1
      %p349 = por %p347, %p348
      %p350 = scmp.ne.s32.totalorder %s341, %s342
      %p351 = scmp.eq.s32.totalorder %s32, 0
      %p352 = por %p350, %p351
      %p353 = scmp.ne.s32.totalorder %s341, %s342
      %p354 = scmp.eq.s32.totalorder %s33, 1
      %p355 = por %p353, %p354
      %p357 = scmp.ne.s32.totalorder %s342, %s356
      %p358 = scmp.eq.s32.totalorder %s33, 0
      %p359 = por %p357, %p358
      %s360 = ssub.s32 %s27, %s34
      %p361 = scmp.eq.s32.totalorder %s360, 0
      %s363 = sadd.s32 %s362, 1
      %s364 = scalar_select %p361, %s362, %s363
      %p367 = pneg %p361
      %p368 = scmp.eq.s32.totalorder %s27, 1
      %p369 = por %p367, %p368
      %p370 = scmp.ne.s32.totalorder %s362, %s365
      %p371 = scmp.eq.s32.totalorder %s27, 0
      %p372 = por %p370, %p371
      %p373 = scmp.ne.s32.totalorder %s362, %s365
      %p374 = scmp.eq.s32.totalorder %s32, 1
      %p375 = por %p373, %p374
      %p376 = scmp.ne.s32.totalorder %s365, %s366
      %p377 = scmp.eq.s32.totalorder %s32, 0
      %p378 = por %p376, %p377
      %p379 = scmp.ne.s32.totalorder %s365, %s366
      %p380 = scmp.eq.s32.totalorder %s33, 1
      %p381 = por %p379, %p380
      %p383 = scmp.ne.s32.totalorder %s366, %s382
      %p384 = scmp.eq.s32.totalorder %s33, 0
      %p385 = por %p383, %p384
      %p386 = scmp.le.s32.totalorder 1, %s27
      %p387 = scmp.lt.s32.totalorder %s27, 3
      %p388 = pnand %p386, %p387
      %p389 = pneg %p388
      // Predicated region
      $region9: #{tpu_custom_call.1} parent=5 // pred_check
        _
      $region10: #{tpu_custom_call.1} parent=5 // pred_check_branch
        %391 = sbr.rel (%p388) target = $region12
      $region11: #{tpu_custom_call.1} parent=5 // pred_region
        %s392 = ssub.s32 %s27, 1
        // Predicated region
        $region13: #{tpu_custom_call.1} parent=11 // pred_check
          %p393 = pneg %p100
        $region14: #{tpu_custom_call.1} parent=11 // pred_check_branch
          %395 = sbr.rel (%p393) target = $region16
        $region15: #{tpu_custom_call.1} parent=11 // pred_region
          %s397 = ssub.s32 4608, 4608
          %398 = vsyncadd [#allocation4], %s397
          %s399 = sshll.u32 [#allocation3], 4
          %s400 = int_to_ptr.vmem [resolvable:$true] %s399
          %405 = dma.hbm_to_vmem [thread:$0]  %s2, 4608, %s400, [#allocation4], 256, 256, 16
        $region16: #{tpu_custom_call.1} parent=11 // pred_fallthru
          _
        // Predicated region
        $region17: #{tpu_custom_call.1} parent=11 // pred_check
          %p406 = pneg %p121
        $region18: #{tpu_custom_call.1} parent=11 // pred_check_branch
          %408 = sbr.rel (%p406) target = $region20
        $region19: #{tpu_custom_call.1} parent=11 // pred_region
          _
        $region20: #{tpu_custom_call.1} parent=11 // pred_fallthru
          _
        // Predicated region
        $region21: #{tpu_custom_call.1} parent=11 // pred_check
          %p409 = pneg %p142
        $region22: #{tpu_custom_call.1} parent=11 // pred_check_branch
          %411 = sbr.rel (%p409) target = $region24
        $region23: #{tpu_custom_call.1} parent=11 // pred_region
          _
        $region24: #{tpu_custom_call.1} parent=11 // pred_fallthru
          _
        // Predicated region
        $region25: #{tpu_custom_call.1} parent=11 // pred_check
          %p412 = pneg %p163
        $region26: #{tpu_custom_call.1} parent=11 // pred_check_branch
          %414 = sbr.rel (%p412) target = $region28
        $region27: #{tpu_custom_call.1} parent=11 // pred_region
          %s416 = ssub.s32 3072, 3072
          %417 = vsyncadd [#allocation7], %s416
          %s418 = sshll.u32 [#allocation6], 4
          %s419 = int_to_ptr.vmem [resolvable:$true] %s418
          %424 = dma.hbm_to_vmem [thread:$0]  %s5, 3072, %s419, [#allocation7], 192, 192, 12
        $region28: #{tpu_custom_call.1} parent=11 // pred_fallthru
          _
        // Predicated region
        $region29: #{tpu_custom_call.1} parent=11 // pred_check
          %p425 = pneg %p184
        $region30: #{tpu_custom_call.1} parent=11 // pred_check_branch
          %427 = sbr.rel (%p425) target = $region32
        $region31: #{tpu_custom_call.1} parent=11 // pred_region
          _
        $region32: #{tpu_custom_call.1} parent=11 // pred_fallthru
          _
        // Predicated region
        $region33: #{tpu_custom_call.1} parent=11 // pred_check
          %p428 = pneg %p205
        $region34: #{tpu_custom_call.1} parent=11 // pred_check_branch
          %430 = sbr.rel (%p428) target = $region36
        $region35: #{tpu_custom_call.1} parent=11 // pred_region
          %s432 = ssub.s32 1024, 1024
          %433 = vsyncadd [#allocation7], %s432
          %s434 = sshll.u32 [#allocation8], 4
          %s435 = int_to_ptr.vmem [resolvable:$true] %s434
          %440 = dma.hbm_to_vmem [thread:$0]  %s7, 1024, %s435, [#allocation7], 64, 64, 4
        $region36: #{tpu_custom_call.1} parent=11 // pred_fallthru
          _
        // Predicated region
        $region37: #{tpu_custom_call.1} parent=11 // pred_check
          %p441 = pneg %p226
        $region38: #{tpu_custom_call.1} parent=11 // pred_check_branch
          %443 = sbr.rel (%p441) target = $region40
        $region39: #{tpu_custom_call.1} parent=11 // pred_region
          _
        $region40: #{tpu_custom_call.1} parent=11 // pred_fallthru
          _
        // Predicated region
        $region41: #{tpu_custom_call.1} parent=11 // pred_check
          %p444 = pneg %p247
        $region42: #{tpu_custom_call.1} parent=11 // pred_check_branch
          %446 = sbr.rel (%p444) target = $region44
        $region43: #{tpu_custom_call.1} parent=11 // pred_region
          _
        $region44: #{tpu_custom_call.1} parent=11 // pred_fallthru
          _
        // Predicated region
        $region45: #{tpu_custom_call.1} parent=11 // pred_check
          %p447 = pneg %p268
        $region46: #{tpu_custom_call.1} parent=11 // pred_check_branch
          %449 = sbr.rel (%p447) target = $region48
        $region47: #{tpu_custom_call.1} parent=11 // pred_region
          _
        $region48: #{tpu_custom_call.1} parent=11 // pred_fallthru
          _
        // Predicated region
        $region49: #{tpu_custom_call.1} parent=11 // pred_check
          %p450 = pneg %p289
        $region50: #{tpu_custom_call.1} parent=11 // pred_check_branch
          %452 = sbr.rel (%p450) target = $region52
        $region51: #{tpu_custom_call.1} parent=11 // pred_region
          %s454 = ssub.s32 4096, 4096
          %455 = vsyncadd [#allocation10], %s454
          %s456 = sshll.u32 [#allocation9], 4
          %s457 = int_to_ptr.vmem [resolvable:$true] %s456
          %462 = dma.hbm_to_vmem [thread:$0]  %s11, 4096, %s457, [#allocation10], 256, 256, 16
        $region52: #{tpu_custom_call.1} parent=11 // pred_fallthru
          _
        // Predicated region
        $region53: #{tpu_custom_call.1} parent=11 // pred_check
          %p463 = pneg %p310
        $region54: #{tpu_custom_call.1} parent=11 // pred_check_branch
          %465 = sbr.rel (%p463) target = $region56
        $region55: #{tpu_custom_call.1} parent=11 // pred_region
          _
        $region56: #{tpu_custom_call.1} parent=11 // pred_fallthru
          _
        // Predicated region
        $region57: #{tpu_custom_call.1} parent=11 // pred_check
          %p466 = pneg %p331
        $region58: #{tpu_custom_call.1} parent=11 // pred_check_branch
          %468 = sbr.rel (%p466) target = $region60
        $region59: #{tpu_custom_call.1} parent=11 // pred_region
          %s470 = ssub.s32 4096, 4096
          %471 = vsyncadd [#allocation10], %s470
          %s472 = sshll.u32 [#allocation11], 4
          %s473 = int_to_ptr.vmem [resolvable:$true] %s472
          %478 = dma.hbm_to_vmem [thread:$0]  %s13, 4096, %s473, [#allocation10], 64, 64, 4
        $region60: #{tpu_custom_call.1} parent=11 // pred_fallthru
          _
        // Predicated region
        $region61: #{tpu_custom_call.1} parent=11 // pred_check
          %p479 = pneg %p352
        $region62: #{tpu_custom_call.1} parent=11 // pred_check_branch
          %481 = sbr.rel (%p479) target = $region64
        $region63: #{tpu_custom_call.1} parent=11 // pred_region
          _
        $region64: #{tpu_custom_call.1} parent=11 // pred_fallthru
          _
      $region12: #{tpu_custom_call.1} parent=5 // pred_fallthru
        _
      %p482 = scmp.lt.s32.totalorder %s27, 2
      // Predicated region
      $region65: #{tpu_custom_call.1} parent=5 // pred_check
        %p483 = pneg %p482
      $region66: #{tpu_custom_call.1} parent=5 // pred_check_branch
        %485 = sbr.rel (%p483) target = $region68
      $region67: #{tpu_custom_call.1} parent=5 // pred_region
        // Predicated region
        $region69: #{tpu_custom_call.1} parent=67 // pred_check
          %p486 = pneg %p47
        $region70: #{tpu_custom_call.1} parent=67 // pred_check_branch
          %488 = sbr.rel (%p486) target = $region72
        $region71: #{tpu_custom_call.1} parent=67 // pred_region
          %s489 = smul.u32 18, %s27
          %p490 = scmp.lt.s32.totalorder %s489, 35
          %s491 = scalar_select %p490, %s489, 35
          %s492 = smul.addr %s491, 8
          %s493 = scalar_lea.vmem %s0, %s492
          %s494 = smul.u32 18, %s27
        $region72: #{tpu_custom_call.1} parent=67 // pred_fallthru
          _
        // Predicated region
        $region73: #{tpu_custom_call.1} parent=67 // pred_check
          %p495 = pneg %p73
        $region74: #{tpu_custom_call.1} parent=67 // pred_check_branch
          %497 = sbr.rel (%p495) target = $region76
        $region75: #{tpu_custom_call.1} parent=67 // pred_region
          %s498 = smul.u32 18, %s27
          %p499 = scmp.lt.s32.totalorder %s498, 35
          %s500 = scalar_select %p499, %s498, 35
          %s501 = smul.addr %s500, 8
          %s502 = scalar_lea.vmem %s1, %s501
          %s503 = smul.u32 18, %s27
        $region76: #{tpu_custom_call.1} parent=67 // pred_fallthru
          _
      $region68: #{tpu_custom_call.1} parent=5 // pred_fallthru
        _
      %p504 = scmp.le.s32.totalorder 1, %s27
      %p505 = scmp.lt.s32.totalorder %s27, 3
      %p506 = pnand %p504, %p505
      %p507 = pneg %p506
      // Predicated region
      $region77: #{tpu_custom_call.1} parent=5 // pred_check
        _
      $region78: #{tpu_custom_call.1} parent=5 // pred_check_branch
        %509 = sbr.rel (%p506) target = $region80
      $region79: #{tpu_custom_call.1} parent=5 // pred_region
        %s510 = ssub.s32 %s27, 1
        // Predicated region
        $region81: #{tpu_custom_call.1} parent=79 // pred_check
          %p511 = pneg %p100
        $region82: #{tpu_custom_call.1} parent=79 // pred_check_branch
          %513 = sbr.rel (%p511) target = $region84
        $region83: #{tpu_custom_call.1} parent=79 // pred_region
          %514 = dma.done [#allocation4], 4608
        $region84: #{tpu_custom_call.1} parent=79 // pred_fallthru
          _
        // Predicated region
        $region85: #{tpu_custom_call.1} parent=79 // pred_check
          %p515 = pneg %p163
        $region86: #{tpu_custom_call.1} parent=79 // pred_check_branch
          %517 = sbr.rel (%p515) target = $region88
        $region87: #{tpu_custom_call.1} parent=79 // pred_region
          %518 = dma.done [#allocation7], 3072
        $region88: #{tpu_custom_call.1} parent=79 // pred_fallthru
          _
        // Predicated region
        $region89: #{tpu_custom_call.1} parent=79 // pred_check
          %p519 = pneg %p205
        $region90: #{tpu_custom_call.1} parent=79 // pred_check_branch
          %521 = sbr.rel (%p519) target = $region92
        $region91: #{tpu_custom_call.1} parent=79 // pred_region
          %522 = dma.done [#allocation7], 1024
        $region92: #{tpu_custom_call.1} parent=79 // pred_fallthru
          _
        // Predicated region
        $region93: #{tpu_custom_call.1} parent=79 // pred_check
          %p523 = pneg %p289
        $region94: #{tpu_custom_call.1} parent=79 // pred_check_branch
          %525 = sbr.rel (%p523) target = $region96
        $region95: #{tpu_custom_call.1} parent=79 // pred_region
          %526 = dma.done [#allocation10], 4096
        $region96: #{tpu_custom_call.1} parent=79 // pred_fallthru
          _
        // Predicated region
        $region97: #{tpu_custom_call.1} parent=79 // pred_check
          %p527 = pneg %p331
        $region98: #{tpu_custom_call.1} parent=79 // pred_check_branch
          %529 = sbr.rel (%p527) target = $region100
        $region99: #{tpu_custom_call.1} parent=79 // pred_region
          %530 = dma.done [#allocation10], 4096
        $region100: #{tpu_custom_call.1} parent=79 // pred_fallthru
          _
        %s531 = smul.u32 18, %s32
        %p532 = scmp.lt.s32.totalorder %s531, 35
        %s533 = scalar_select %p532, %s531, 35
        %s534 = smul.addr %s533, 8
        %s535 = scalar_lea.vmem %s0, %s534
        %p536 = pneg %p53
        %p537 = pneg %p50
        %s538 = smul.u32 18, %s32
        %p539 = scmp.lt.s32.totalorder %s538, 35
        %s540 = scalar_select %p539, %s538, 35
        %s541 = smul.addr %s540, 8
        %s542 = scalar_lea.vmem %s1, %s541
        %p543 = pneg %p79
        %p544 = pneg %p76
        %p545 = pneg %p100
        %p546 = pneg %p97
        %p547 = pneg %p121
        %p548 = pneg %p118
        %p549 = pneg %p142
        %p550 = pneg %p139
        %p551 = pneg %p163
        %p552 = pneg %p160
        %p553 = pneg %p184
        %p554 = pneg %p181
        %p555 = pneg %p205
        %p556 = pneg %p202
        %p557 = pneg %p226
        %p558 = pneg %p223
        %p559 = pneg %p247
        %p560 = pneg %p244
        %p561 = pneg %p268
        %p562 = pneg %p265
        %p563 = pneg %p289
        %p564 = pneg %p286
        %p565 = pneg %p310
        %p566 = pneg %p307
        %p567 = pneg %p331
        %p568 = pneg %p328
        %p569 = pneg %p352
        %p570 = pneg %p349
        %p571 = pneg %p378
        %p572 = pneg %p375
        %s573 = sand.u32 %s365, 1
        %s574 = scalar_lea.sflag [#allocation5], %s573
        %s575 = sand.u32 %s365, 1
        %s576 = smul.addr %s575, 144
        %s577 = scalar_lea.vmem [#allocation12], %s576
        %s578 = smul.u32 18, %s32
        %p579 = scmp.lt.s32.totalorder %s578, 35
        %s580 = scalar_select %p579, %s578, 35
        %s581 = smul.addr %s580, 8
        %s582 = scalar_lea.vmem %s0, %s581
        %s583 = smul.u32 18, %s32
        %s584 = smul.u32 18, %s32
        %p585 = scmp.lt.s32.totalorder %s584, 35
        %s586 = scalar_select %p585, %s584, 35
        %s587 = smul.addr %s586, 8
        %s588 = scalar_lea.vmem %s1, %s587
        %s589 = smul.u32 18, %s32
        %s590 = smul.u32 18, %s32
        %v592 = vld [vmem:[%s582] sm:$0xff]
        %v593 = vld [vmem:[%s582 + $0x8] sm:$0xff]
        %v594 = vld [vmem:[%s582 + $0x10] sm:$0xff]
        %v595 = vld [vmem:[%s582 + $0x18] sm:$0xff]
        %v596 = vld [vmem:[%s582 + $0x20] sm:$0xff]
        %v597 = vld [vmem:[%s582 + $0x28] sm:$0xff]
        %v598 = vld [vmem:[%s582 + $0x30] sm:$0xff]
        %v599 = vld [vmem:[%s582 + $0x38] sm:$0xff]
        %v600 = vld [vmem:[%s582 + $0x40] sm:$0xff]
        %v601 = vld [vmem:[%s582 + $0x48] sm:$0xff]
        %v602 = vld [vmem:[%s582 + $0x50] sm:$0xff]
        %v603 = vld [vmem:[%s582 + $0x58] sm:$0xff]
        %v604 = vld [vmem:[%s582 + $0x60] sm:$0xff]
        %v605 = vld [vmem:[%s582 + $0x68] sm:$0xff]
        %v606 = vld [vmem:[%s582 + $0x70] sm:$0xff]
        %v607 = vld [vmem:[%s582 + $0x78] sm:$0xff]
        %v608 = vld [vmem:[%s582 + $0x80] sm:$0xff]
        %v609 = vld [vmem:[%s582 + $0x88] sm:$0xff]
        %v610 = vld [vmem:[%s3] sm:$0x1]
        %v611 = vld [vmem:[%s4] sm:$0x1]
        %612 = vadd.xlane.f32.xlu0 %v592
        %v613 = vpop.xlane.xlu0 %612
        %614 = vadd.xlane.f32.xlu0 %v593
        %v615 = vpop.xlane.xlu0 %614
        %616 = vadd.xlane.f32.xlu0 %v594
        %v617 = vpop.xlane.xlu0 %616
        %618 = vadd.xlane.f32.xlu0 %v595
        %v619 = vpop.xlane.xlu0 %618
        %620 = vadd.xlane.f32.xlu0 %v596
        %v621 = vpop.xlane.xlu0 %620
        %622 = vadd.xlane.f32.xlu0 %v597
        %v623 = vpop.xlane.xlu0 %622
        %624 = vadd.xlane.f32.xlu0 %v598
        %v625 = vpop.xlane.xlu0 %624
        %626 = vadd.xlane.f32.xlu0 %v599
        %v627 = vpop.xlane.xlu0 %626
        %628 = vadd.xlane.f32.xlu0 %v600
        %v629 = vpop.xlane.xlu0 %628
        %630 = vadd.xlane.f32.xlu0 %v601
        %v631 = vpop.xlane.xlu0 %630
        %632 = vadd.xlane.f32.xlu0 %v602
        %v633 = vpop.xlane.xlu0 %632
        %634 = vadd.xlane.f32.xlu0 %v603
        %v635 = vpop.xlane.xlu0 %634
        %636 = vadd.xlane.f32.xlu0 %v604
        %v637 = vpop.xlane.xlu0 %636
        %638 = vadd.xlane.f32.xlu0 %v605
        %v639 = vpop.xlane.xlu0 %638
        %640 = vadd.xlane.f32.xlu0 %v606
        %v641 = vpop.xlane.xlu0 %640
        %642 = vadd.xlane.f32.xlu0 %v607
        %v643 = vpop.xlane.xlu0 %642
        %644 = vadd.xlane.f32.xlu0 %v608
        %v645 = vpop.xlane.xlu0 %644
        %646 = vadd.xlane.f32.xlu0 %v609
        %v647 = vpop.xlane.xlu0 %646
        %v648 = vrcp.pop 128.0
        %v649 = vmul.f32 %v613, %v648
        %v650 = vmul.f32 %v615, %v648
        %v651 = vmul.f32 %v617, %v648
        %v652 = vmul.f32 %v619, %v648
        %v653 = vmul.f32 %v621, %v648
        %v654 = vmul.f32 %v623, %v648
        %v655 = vmul.f32 %v625, %v648
        %v656 = vmul.f32 %v627, %v648
        %v657 = vmul.f32 %v629, %v648
        %v658 = vmul.f32 %v631, %v648
        %v659 = vmul.f32 %v633, %v648
        %v660 = vmul.f32 %v635, %v648
        %v661 = vmul.f32 %v637, %v648
        %v662 = vmul.f32 %v639, %v648
        %v663 = vmul.f32 %v641, %v648
        %v664 = vmul.f32 %v643, %v648
        %v665 = vmul.f32 %v645, %v648
        %v666 = vmul.f32 %v647, %v648
        %v667 = vsub.f32 %v592, %v649
        %v668 = vsub.f32 %v593, %v650
        %v669 = vsub.f32 %v594, %v651
        %v670 = vsub.f32 %v595, %v652
        %v671 = vsub.f32 %v596, %v653
        %v672 = vsub.f32 %v597, %v654
        %v673 = vsub.f32 %v598, %v655
        %v674 = vsub.f32 %v599, %v656
        %v675 = vsub.f32 %v600, %v657
        %v676 = vsub.f32 %v601, %v658
        %v677 = vsub.f32 %v602, %v659
        %v678 = vsub.f32 %v603, %v660
        %v679 = vsub.f32 %v604, %v661
        %v680 = vsub.f32 %v605, %v662
        %v681 = vsub.f32 %v606, %v663
        %v682 = vsub.f32 %v607, %v664
        %v683 = vsub.f32 %v608, %v665
        %v684 = vsub.f32 %v609, %v666
        %v685 = vmul.f32 %v667, %v667
        %v686 = vmul.f32 %v668, %v668
        %v687 = vmul.f32 %v669, %v669
        %v688 = vmul.f32 %v670, %v670
        %v689 = vmul.f32 %v671, %v671
        %v690 = vmul.f32 %v672, %v672
        %v691 = vmul.f32 %v673, %v673
        %v692 = vmul.f32 %v674, %v674
        %v693 = vmul.f32 %v675, %v675
        %v694 = vmul.f32 %v676, %v676
        %v695 = vmul.f32 %v677, %v677
        %v696 = vmul.f32 %v678, %v678
        %v697 = vmul.f32 %v679, %v679
        %v698 = vmul.f32 %v680, %v680
        %v699 = vmul.f32 %v681, %v681
        %v700 = vmul.f32 %v682, %v682
        %v701 = vmul.f32 %v683, %v683
        %v702 = vmul.f32 %v684, %v684
        %703 = vadd.xlane.f32.xlu0 %v685
        %v704 = vpop.xlane.xlu0 %703
        %705 = vadd.xlane.f32.xlu0 %v686
        %v706 = vpop.xlane.xlu0 %705
        %707 = vadd.xlane.f32.xlu0 %v687
        %v708 = vpop.xlane.xlu0 %707
        %709 = vadd.xlane.f32.xlu0 %v688
        %v710 = vpop.xlane.xlu0 %709
        %711 = vadd.xlane.f32.xlu0 %v689
        %v712 = vpop.xlane.xlu0 %711
        %713 = vadd.xlane.f32.xlu0 %v690
        %v714 = vpop.xlane.xlu0 %713
        %715 = vadd.xlane.f32.xlu0 %v691
        %v716 = vpop.xlane.xlu0 %715
        %717 = vadd.xlane.f32.xlu0 %v692
        %v718 = vpop.xlane.xlu0 %717
        %719 = vadd.xlane.f32.xlu0 %v693
        %v720 = vpop.xlane.xlu0 %719
        %721 = vadd.xlane.f32.xlu0 %v694
        %v722 = vpop.xlane.xlu0 %721
        %723 = vadd.xlane.f32.xlu0 %v695
        %v724 = vpop.xlane.xlu0 %723
        %725 = vadd.xlane.f32.xlu0 %v696
        %v726 = vpop.xlane.xlu0 %725
        %727 = vadd.xlane.f32.xlu0 %v697
        %v728 = vpop.xlane.xlu0 %727
        %729 = vadd.xlane.f32.xlu0 %v698
        %v730 = vpop.xlane.xlu0 %729
        %731 = vadd.xlane.f32.xlu0 %v699
        %v732 = vpop.xlane.xlu0 %731
        %733 = vadd.xlane.f32.xlu0 %v700
        %v734 = vpop.xlane.xlu0 %733
        %735 = vadd.xlane.f32.xlu0 %v701
        %v736 = vpop.xlane.xlu0 %735
        %737 = vadd.xlane.f32.xlu0 %v702
        %v738 = vpop.xlane.xlu0 %737
        %v739 = vmul.f32 %v704, %v648
        %v740 = vmul.f32 %v706, %v648
        %v741 = vmul.f32 %v708, %v648
        %v742 = vmul.f32 %v710, %v648
        %v743 = vmul.f32 %v712, %v648
        %v744 = vmul.f32 %v714, %v648
        %v745 = vmul.f32 %v716, %v648
        %v746 = vmul.f32 %v718, %v648
        %v747 = vmul.f32 %v720, %v648
        %v748 = vmul.f32 %v722, %v648
        %v749 = vmul.f32 %v724, %v648
        %v750 = vmul.f32 %v726, %v648
        %v751 = vmul.f32 %v728, %v648
        %v752 = vmul.f32 %v730, %v648
        %v753 = vmul.f32 %v732, %v648
        %v754 = vmul.f32 %v734, %v648
        %v755 = vmul.f32 %v736, %v648
        %v756 = vmul.f32 %v738, %v648
        %v757 = vadd.f32 %v739, 1e-06
        %v758 = vadd.f32 %v740, 1e-06
        %v759 = vadd.f32 %v741, 1e-06
        %v760 = vadd.f32 %v742, 1e-06
        %v761 = vadd.f32 %v743, 1e-06
        %v762 = vadd.f32 %v744, 1e-06
        %v763 = vadd.f32 %v745, 1e-06
        %v764 = vadd.f32 %v746, 1e-06
        %v765 = vadd.f32 %v747, 1e-06
        %v766 = vadd.f32 %v748, 1e-06
        %v767 = vadd.f32 %v749, 1e-06
        %v768 = vadd.f32 %v750, 1e-06
        %v769 = vadd.f32 %v751, 1e-06
        %v770 = vadd.f32 %v752, 1e-06
        %v771 = vadd.f32 %v753, 1e-06
        %v772 = vadd.f32 %v754, 1e-06
        %v773 = vadd.f32 %v755, 1e-06
        %v774 = vadd.f32 %v756, 1e-06
        %v775 = vrsqrt.pop %v757
        %v776 = vrsqrt.pop %v758
        %v777 = vrsqrt.pop %v759
        %v778 = vrsqrt.pop %v760
        %v779 = vrsqrt.pop %v761
        %v780 = vrsqrt.pop %v762
        %v781 = vrsqrt.pop %v763
        %v782 = vrsqrt.pop %v764
        %v783 = vrsqrt.pop %v765
        %v784 = vrsqrt.pop %v766
        %v785 = vrsqrt.pop %v767
        %v786 = vrsqrt.pop %v768
        %v787 = vrsqrt.pop %v769
        %v788 = vrsqrt.pop %v770
        %v789 = vrsqrt.pop %v771
        %v790 = vrsqrt.pop %v772
        %v791 = vrsqrt.pop %v773
        %v792 = vrsqrt.pop %v774
        %v793 = vmul.f32 %v667, %v775
        %v794 = vmul.f32 %v668, %v776
        %v795 = vmul.f32 %v669, %v777
        %v796 = vmul.f32 %v670, %v778
        %v797 = vmul.f32 %v671, %v779
        %v798 = vmul.f32 %v672, %v780
        %v799 = vmul.f32 %v673, %v781
        %v800 = vmul.f32 %v674, %v782
        %v801 = vmul.f32 %v675, %v783
        %v802 = vmul.f32 %v676, %v784
        %v803 = vmul.f32 %v677, %v785
        %v804 = vmul.f32 %v678, %v786
        %v805 = vmul.f32 %v679, %v787
        %v806 = vmul.f32 %v680, %v788
        %v807 = vmul.f32 %v681, %v789
        %v808 = vmul.f32 %v682, %v790
        %v809 = vmul.f32 %v683, %v791
        %v810 = vmul.f32 %v684, %v792
        %v812 = vlaneseq
        %v813 = vshrl.u32 %v812, 7
        %v814 = vsub.s32 0, %v813
        %v815 = vrot.slane %v610, %v814
        %v817 = vmul.f32 %v793, %v815
        %v818 = vmul.f32 %v794, %v815
        %v819 = vmul.f32 %v795, %v815
        %v820 = vmul.f32 %v796, %v815
        %v821 = vmul.f32 %v797, %v815
        %v822 = vmul.f32 %v798, %v815
        %v823 = vmul.f32 %v799, %v815
        %v824 = vmul.f32 %v800, %v815
        %v825 = vmul.f32 %v801, %v815
        %v826 = vmul.f32 %v802, %v815
        %v827 = vmul.f32 %v803, %v815
        %v828 = vmul.f32 %v804, %v815
        %v829 = vmul.f32 %v805, %v815
        %v830 = vmul.f32 %v806, %v815
        %v831 = vmul.f32 %v807, %v815
        %v832 = vmul.f32 %v808, %v815
        %v833 = vmul.f32 %v809, %v815
        %v834 = vmul.f32 %v810, %v815
        %v836 = vlaneseq
        %v837 = vshrl.u32 %v836, 7
        %v838 = vsub.s32 0, %v837
        %v839 = vrot.slane %v611, %v838
        %v841 = vadd.f32 %v817, %v839
        %v842 = vadd.f32 %v818, %v839
        %v843 = vadd.f32 %v819, %v839
        %v844 = vadd.f32 %v820, %v839
        %v845 = vadd.f32 %v821, %v839
        %v846 = vadd.f32 %v822, %v839
        %v847 = vadd.f32 %v823, %v839
        %v848 = vadd.f32 %v824, %v839
        %v849 = vadd.f32 %v825, %v839
        %v850 = vadd.f32 %v826, %v839
        %v851 = vadd.f32 %v827, %v839
        %v852 = vadd.f32 %v828, %v839
        %v853 = vadd.f32 %v829, %v839
        %v854 = vadd.f32 %v830, %v839
        %v855 = vadd.f32 %v831, %v839
        %v856 = vadd.f32 %v832, %v839
        %v857 = vadd.f32 %v833, %v839
        %v858 = vadd.f32 %v834, %v839
        %v859 = vld [vmem:[%s588] sm:$0xff]
        %v860 = vld [vmem:[%s588 + $0x8] sm:$0xff]
        %v861 = vld [vmem:[%s588 + $0x10] sm:$0xff]
        %v862 = vld [vmem:[%s588 + $0x18] sm:$0xff]
        %v863 = vld [vmem:[%s588 + $0x20] sm:$0xff]
        %v864 = vld [vmem:[%s588 + $0x28] sm:$0xff]
        %v865 = vld [vmem:[%s588 + $0x30] sm:$0xff]
        %v866 = vld [vmem:[%s588 + $0x38] sm:$0xff]
        %v867 = vld [vmem:[%s588 + $0x40] sm:$0xff]
        %v868 = vld [vmem:[%s588 + $0x48] sm:$0xff]
        %v869 = vld [vmem:[%s588 + $0x50] sm:$0xff]
        %v870 = vld [vmem:[%s588 + $0x58] sm:$0xff]
        %v871 = vld [vmem:[%s588 + $0x60] sm:$0xff]
        %v872 = vld [vmem:[%s588 + $0x68] sm:$0xff]
        %v873 = vld [vmem:[%s588 + $0x70] sm:$0xff]
        %v874 = vld [vmem:[%s588 + $0x78] sm:$0xff]
        %v875 = vld [vmem:[%s588 + $0x80] sm:$0xff]
        %v876 = vld [vmem:[%s588 + $0x88] sm:$0xff]
        %878 = vset.pattern.permute.xlu0 0
        %879 = vperm.xlu0 %878, %v859
        %v880 = vpop.permute.xlu0 %879
        %883 = vset.pattern.permute.xlu0 0
        %884 = vperm.xlu0 %883, %v860
        %v885 = vpop.permute.xlu0 %884
        %888 = vset.pattern.permute.xlu0 0
        %889 = vperm.xlu0 %888, %v861
        %v890 = vpop.permute.xlu0 %889
        %893 = vset.pattern.permute.xlu0 0
        %894 = vperm.xlu0 %893, %v862
        %v895 = vpop.permute.xlu0 %894
        %898 = vset.pattern.permute.xlu0 0
        %899 = vperm.xlu0 %898, %v863
        %v900 = vpop.permute.xlu0 %899
        %903 = vset.pattern.permute.xlu0 0
        %904 = vperm.xlu0 %903, %v864
        %v905 = vpop.permute.xlu0 %904
        %908 = vset.pattern.permute.xlu0 0
        %909 = vperm.xlu0 %908, %v865
        %v910 = vpop.permute.xlu0 %909
        %913 = vset.pattern.permute.xlu0 0
        %914 = vperm.xlu0 %913, %v866
        %v915 = vpop.permute.xlu0 %914
        %918 = vset.pattern.permute.xlu0 0
        %919 = vperm.xlu0 %918, %v867
        %v920 = vpop.permute.xlu0 %919
        %923 = vset.pattern.permute.xlu0 0
        %924 = vperm.xlu0 %923, %v868
        %v925 = vpop.permute.xlu0 %924
        %928 = vset.pattern.permute.xlu0 0
        %929 = vperm.xlu0 %928, %v869
        %v930 = vpop.permute.xlu0 %929
        %933 = vset.pattern.permute.xlu0 0
        %934 = vperm.xlu0 %933, %v870
        %v935 = vpop.permute.xlu0 %934
        %938 = vset.pattern.permute.xlu0 0
        %939 = vperm.xlu0 %938, %v871
        %v940 = vpop.permute.xlu0 %939
        %943 = vset.pattern.permute.xlu0 0
        %944 = vperm.xlu0 %943, %v872
        %v945 = vpop.permute.xlu0 %944
        %948 = vset.pattern.permute.xlu0 0
        %949 = vperm.xlu0 %948, %v873
        %v950 = vpop.permute.xlu0 %949
        %953 = vset.pattern.permute.xlu0 0
        %954 = vperm.xlu0 %953, %v874
        %v955 = vpop.permute.xlu0 %954
        %958 = vset.pattern.permute.xlu0 0
        %959 = vperm.xlu0 %958, %v875
        %v960 = vpop.permute.xlu0 %959
        %963 = vset.pattern.permute.xlu0 0
        %964 = vperm.xlu0 %963, %v876
        %v965 = vpop.permute.xlu0 %964
        %v967 = vmul.f32 %v841, %v880
        %v968 = vmul.f32 %v842, %v885
        %v969 = vmul.f32 %v843, %v890
        %v970 = vmul.f32 %v844, %v895
        %v971 = vmul.f32 %v845, %v900
        %v972 = vmul.f32 %v846, %v905
        %v973 = vmul.f32 %v847, %v910
        %v974 = vmul.f32 %v848, %v915
        %v975 = vmul.f32 %v849, %v920
        %v976 = vmul.f32 %v850, %v925
        %v977 = vmul.f32 %v851, %v930
        %v978 = vmul.f32 %v852, %v935
        %v979 = vmul.f32 %v853, %v940
        %v980 = vmul.f32 %v854, %v945
        %v981 = vmul.f32 %v855, %v950
        %v982 = vmul.f32 %v856, %v955
        %v983 = vmul.f32 %v857, %v960
        %v984 = vmul.f32 %v858, %v965
        %v985 = vpack.c.bf16 %v968, %v967
        %v986 = vpack.c.bf16 %v970, %v969
        %v987 = vpack.c.bf16 %v972, %v971
        %v988 = vpack.c.bf16 %v974, %v973
        %v989 = vpack.c.bf16 %v976, %v975
        %v990 = vpack.c.bf16 %v978, %v977
        %v991 = vpack.c.bf16 %v980, %v979
        %v992 = vpack.c.bf16 %v982, %v981
        %v993 = vpack.c.bf16 %v984, %v983
        %v994 = vld [vmem:[#allocation6] sm:$0xff]
        %v995 = vld [vmem:[#allocation6 + $0x8] sm:$0xf]
        %v996 = vld [vmem:[#allocation6 + $0xc] sm:$0xff]
        %v997 = vld [vmem:[#allocation6 + $0x14] sm:$0xf]
        %v998 = vld [vmem:[#allocation6 + $0x18] sm:$0xff]
        %v999 = vld [vmem:[#allocation6 + $0x20] sm:$0xf]
        %v1000 = vld [vmem:[#allocation6 + $0x24] sm:$0xff]
        %v1001 = vld [vmem:[#allocation6 + $0x2c] sm:$0xf]
        %v1002 = vld [vmem:[#allocation6 + $0x30] sm:$0xff]
        %v1003 = vld [vmem:[#allocation6 + $0x38] sm:$0xf]
        %v1004 = vld [vmem:[#allocation6 + $0x3c] sm:$0xff]
        %v1005 = vld [vmem:[#allocation6 + $0x44] sm:$0xf]
        %v1006 = vld [vmem:[#allocation6 + $0x48] sm:$0xff]
        %v1007 = vld [vmem:[#allocation6 + $0x50] sm:$0xf]
        %v1008 = vld [vmem:[#allocation6 + $0x54] sm:$0xff]
        %v1009 = vld [vmem:[#allocation6 + $0x5c] sm:$0xf]
        %v1010 = vld [vmem:[#allocation6 + $0x60] sm:$0xff]
        %v1011 = vld [vmem:[#allocation6 + $0x68] sm:$0xf]
        %v1012 = vld [vmem:[#allocation6 + $0x6c] sm:$0xff]
        %v1013 = vld [vmem:[#allocation6 + $0x74] sm:$0xf]
        %v1014 = vld [vmem:[#allocation6 + $0x78] sm:$0xff]
        %v1015 = vld [vmem:[#allocation6 + $0x80] sm:$0xf]
        %v1016 = vld [vmem:[#allocation6 + $0x84] sm:$0xff]
        %v1017 = vld [vmem:[#allocation6 + $0x8c] sm:$0xf]
        %v1018 = vld [vmem:[#allocation6 + $0x90] sm:$0xff]
        %v1019 = vld [vmem:[#allocation6 + $0x98] sm:$0xf]
        %v1020 = vld [vmem:[#allocation6 + $0x9c] sm:$0xff]
        %v1021 = vld [vmem:[#allocation6 + $0xa4] sm:$0xf]
        %v1022 = vld [vmem:[#allocation6 + $0xa8] sm:$0xff]
        %v1023 = vld [vmem:[#allocation6 + $0xb0] sm:$0xf]
        %v1024 = vld [vmem:[#allocation6 + $0xb4] sm:$0xff]
        %v1025 = vld [vmem:[#allocation6 + $0xbc] sm:$0xf]
        %v1026 = vld [vmem:[%s6] sm:$0x7]
        %v1028 = vlaneseq
        %v1029 = vshrl.u32 %v1028, 7
        %v1030 = vsub.s32 0, %v1029
        %v1031 = vrot.slane %v1026, %v1030
        %v1032 = vlaneseq
        %v1033 = vshrl.u32 %v1032, 7
        %v1034 = vsub.s32 1, %v1033
        %v1035 = vrot.slane %v1026, %v1034
        %v1036 = vlaneseq
        %v1037 = vshrl.u32 %v1036, 7
        %v1038 = vsub.s32 2, %v1037
        %v1039 = vrot.slane %v1026, %v1038
        %v1075 = vunpack.c.l.b16 %v994
        %v1076 = vunpack.c.h.b16 %v994
        %v1077 = vunpack.c.l.b16 %v995
        %v1078 = vunpack.c.l.b16 %v996
        %v1079 = vunpack.c.h.b16 %v996
        %v1080 = vunpack.c.l.b16 %v997
        %v1081 = vunpack.c.l.b16 %v998
        %v1082 = vunpack.c.h.b16 %v998
        %v1083 = vunpack.c.l.b16 %v999
        %v1084 = vunpack.c.l.b16 %v1000
        %v1085 = vunpack.c.h.b16 %v1000
        %v1086 = vunpack.c.l.b16 %v1001
        %v1087 = vunpack.c.l.b16 %v1002
        %v1088 = vunpack.c.h.b16 %v1002
        %v1089 = vunpack.c.l.b16 %v1003
        %v1090 = vunpack.c.l.b16 %v1004
        %v1091 = vunpack.c.h.b16 %v1004
        %v1092 = vunpack.c.l.b16 %v1005
        %v1093 = vunpack.c.l.b16 %v1006
        %v1094 = vunpack.c.h.b16 %v1006
        %v1095 = vunpack.c.l.b16 %v1007
        %v1096 = vunpack.c.l.b16 %v1008
        %v1097 = vunpack.c.h.b16 %v1008
        %v1098 = vunpack.c.l.b16 %v1009
        %v1099 = vunpack.c.l.b16 %v1010
        %v1100 = vunpack.c.h.b16 %v1010
        %v1101 = vunpack.c.l.b16 %v1011
        %v1102 = vunpack.c.l.b16 %v1012
        %v1103 = vunpack.c.h.b16 %v1012
        %v1104 = vunpack.c.l.b16 %v1013
        %v1105 = vunpack.c.l.b16 %v1014
        %v1106 = vunpack.c.h.b16 %v1014
        %v1107 = vunpack.c.l.b16 %v1015
        %v1108 = vunpack.c.l.b16 %v1016
        %v1109 = vunpack.c.h.b16 %v1016
        %v1110 = vunpack.c.l.b16 %v1017
        %v1111 = vunpack.c.l.b16 %v1018
        %v1112 = vunpack.c.h.b16 %v1018
        %v1113 = vunpack.c.l.b16 %v1019
        %v1114 = vunpack.c.l.b16 %v1020
        %v1115 = vunpack.c.h.b16 %v1020
        %v1116 = vunpack.c.l.b16 %v1021
        %v1117 = vunpack.c.l.b16 %v1022
        %v1118 = vunpack.c.h.b16 %v1022
        %v1119 = vunpack.c.l.b16 %v1023
        %v1120 = vunpack.c.l.b16 %v1024
        %v1121 = vunpack.c.h.b16 %v1024
        %v1122 = vunpack.c.l.b16 %v1025
        %v1123 = vpack.c.b16 %v1078, %v1075
        %v1124 = vpack.c.b16 %v1079, %v1076
        %v1125 = vpack.c.b16 %v1080, %v1077
        %v1126 = vpack.c.b16 %v1084, %v1081
        %v1127 = vpack.c.b16 %v1085, %v1082
        %v1128 = vpack.c.b16 %v1086, %v1083
        %v1129 = vpack.c.b16 %v1090, %v1087
        %v1130 = vpack.c.b16 %v1091, %v1088
        %v1131 = vpack.c.b16 %v1092, %v1089
        %v1132 = vpack.c.b16 %v1096, %v1093
        %v1133 = vpack.c.b16 %v1097, %v1094
        %v1134 = vpack.c.b16 %v1098, %v1095
        %v1135 = vpack.c.b16 %v1102, %v1099
        %v1136 = vpack.c.b16 %v1103, %v1100
        %v1137 = vpack.c.b16 %v1104, %v1101
        %v1138 = vpack.c.b16 %v1108, %v1105
        %v1139 = vpack.c.b16 %v1109, %v1106
        %v1140 = vpack.c.b16 %v1110, %v1107
        %v1141 = vpack.c.b16 %v1114, %v1111
        %v1142 = vpack.c.b16 %v1115, %v1112
        %v1143 = vpack.c.b16 %v1116, %v1113
        %v1144 = vpack.c.b16 %v1120, %v1117
        %v1145 = vpack.c.b16 %v1121, %v1118
        %v1146 = vpack.c.b16 %v1122, %v1119
        %1171 = vmatprep.subr.bf16.mxu0 %v1124
        %1172 = vmatpush1.bf16.msra.mxu0 %v1123
        %1173 = vmatprep.subr.bf16.mxu0 %v1127
        %1174 = vmatpush1.bf16.msra.mxu0 %v1126
        %1175 = vmatprep.subr.bf16.mxu0 %v1130
        %1176 = vmatpush1.bf16.msra.mxu0 %v1129
        %1177 = vmatprep.subr.bf16.mxu0 %v1133
        %1178 = vmatpush1.bf16.msra.mxu0 %v1132
        %1179 = vmatprep.subr.bf16.mxu0 %v1136
        %1180 = vmatpush1.bf16.msra.mxu0 %v1135
        %1181 = vmatprep.subr.bf16.mxu0 %v1139
        %1182 = vmatpush1.bf16.msra.mxu0 %v1138
        %1183 = vmatprep.subr.bf16.mxu0 %v1142
        %1184 = vmatpush1.bf16.msra.mxu0 %v1141
        %1185 = vmatprep.subr.bf16.mxu0 %v1145
        %1186 = vmatpush1.bf16.msra.mxu0 %v1144
        %1187 = vmatprep.subr.bf16.mxu0 0
        %1188 = vmatpush1.bf16.msra.mxu0 0
        %1189 = vmatprep.subr.bf16.mxu0 0
        %1190 = vmatpush1.bf16.msra.mxu0 0
        %1191 = vmatprep.subr.bf16.mxu0 0
        %1192 = vmatpush1.bf16.msra.mxu0 0
        %1193 = vmatprep.subr.bf16.mxu0 0
        %1194 = vmatpush1.bf16.msra.mxu0 0
        %1195 = vmatprep.subr.bf16.mxu0 0
        %1196 = vmatpush1.bf16.msra.mxu0 0
        %1197 = vmatprep.subr.bf16.mxu0 0
        %1198 = vmatpush1.bf16.msra.mxu0 0
        %1199 = vmatprep.subr.bf16.mxu0 0
        %1200 = vmatpush1.bf16.msra.mxu0 0
        %1201 = vmatprep.subr.bf16.mxu0 0
        %1202 = vmatpush1.bf16.msra.mxu0 0
        %1203 = vmatprep.mubr.bf16.mxu0 0
        %1204 = vmatmul.mubr.bf16.gmra.mrb[0].mxu0 %v985
        %v1205 = vpop.f32.mrb[0].mxu0
        %v1206 = vadd.f32 %v1031, %v1205
        %v1207 = vpop.f32.mrb[0].mxu0
        %v1208 = vadd.f32 %v1035, %v1207
        %v1209 = vpop.f32.mrb[0].mxu0
        %v1210 = vadd.f32 %v1031, %v1209
        %v1211 = vpop.f32.mrb[0].mxu0
        %v1212 = vadd.f32 %v1035, %v1211
        %1213 = vmatprep.mubr.bf16.mxu0 0
        %1214 = vmatmul.mubr.bf16.gmra.mrb[0].mxu0 %v986
        %v1215 = vpop.f32.mrb[0].mxu0
        %v1216 = vadd.f32 %v1031, %v1215
        %v1217 = vpop.f32.mrb[0].mxu0
        %v1218 = vadd.f32 %v1035, %v1217
        %v1219 = vpop.f32.mrb[0].mxu0
        %v1220 = vadd.f32 %v1031, %v1219
        %v1221 = vpop.f32.mrb[0].mxu0
        %v1222 = vadd.f32 %v1035, %v1221
        %1223 = vmatprep.mubr.bf16.mxu0 0
        %1224 = vmatmul.mubr.bf16.gmra.mrb[0].mxu0 %v987
        %v1225 = vpop.f32.mrb[0].mxu0
        %v1226 = vadd.f32 %v1031, %v1225
        %v1227 = vpop.f32.mrb[0].mxu0
        %v1228 = vadd.f32 %v1035, %v1227
        %v1229 = vpop.f32.mrb[0].mxu0
        %v1230 = vadd.f32 %v1031, %v1229
        %v1231 = vpop.f32.mrb[0].mxu0
        %v1232 = vadd.f32 %v1035, %v1231
        %1233 = vmatprep.mubr.bf16.mxu0 0
        %1234 = vmatmul.mubr.bf16.gmra.mrb[0].mxu0 %v988
        %v1235 = vpop.f32.mrb[0].mxu0
        %v1236 = vadd.f32 %v1031, %v1235
        %v1237 = vpop.f32.mrb[0].mxu0
        %v1238 = vadd.f32 %v1035, %v1237
        %v1239 = vpop.f32.mrb[0].mxu0
        %v1240 = vadd.f32 %v1031, %v1239
        %v1241 = vpop.f32.mrb[0].mxu0
        %v1242 = vadd.f32 %v1035, %v1241
        %1243 = vmatprep.mubr.bf16.mxu0 0
        %1244 = vmatmul.mubr.bf16.gmra.mrb[0].mxu0 %v989
        %v1245 = vpop.f32.mrb[0].mxu0
        %v1246 = vadd.f32 %v1031, %v1245
        %v1247 = vpop.f32.mrb[0].mxu0
        %v1248 = vadd.f32 %v1035, %v1247
        %v1249 = vpop.f32.mrb[0].mxu0
        %v1250 = vadd.f32 %v1031, %v1249
        %v1251 = vpop.f32.mrb[0].mxu0
        %v1252 = vadd.f32 %v1035, %v1251
        %1253 = vmatprep.mubr.bf16.mxu0 0
        %1254 = vmatmul.mubr.bf16.gmra.mrb[0].mxu0 %v990
        %v1255 = vpop.f32.mrb[0].mxu0
        %v1256 = vadd.f32 %v1031, %v1255
        %v1257 = vpop.f32.mrb[0].mxu0
        %v1258 = vadd.f32 %v1035, %v1257
        %v1259 = vpop.f32.mrb[0].mxu0
        %v1260 = vadd.f32 %v1031, %v1259
        %v1261 = vpop.f32.mrb[0].mxu0
        %v1262 = vadd.f32 %v1035, %v1261
        %1263 = vmatprep.mubr.bf16.mxu0 0
        %1264 = vmatmul.mubr.bf16.gmra.mrb[0].mxu0 %v991
        %v1265 = vpop.f32.mrb[0].mxu0
        %v1266 = vadd.f32 %v1031, %v1265
        %v1267 = vpop.f32.mrb[0].mxu0
        %v1268 = vadd.f32 %v1035, %v1267
        %v1269 = vpop.f32.mrb[0].mxu0
        %v1270 = vadd.f32 %v1031, %v1269
        %v1271 = vpop.f32.mrb[0].mxu0
        %v1272 = vadd.f32 %v1035, %v1271
        %1273 = vmatprep.mubr.bf16.mxu0 0
        %1274 = vmatmul.mubr.bf16.gmra.mrb[0].mxu0 %v992
        %v1275 = vpop.f32.mrb[0].mxu0
        %v1276 = vadd.f32 %v1031, %v1275
        %v1277 = vpop.f32.mrb[0].mxu0
        %v1278 = vadd.f32 %v1035, %v1277
        %v1279 = vpop.f32.mrb[0].mxu0
        %v1280 = vadd.f32 %v1031, %v1279
        %v1281 = vpop.f32.mrb[0].mxu0
        %v1282 = vadd.f32 %v1035, %v1281
        %1283 = vmatprep.mubr.bf16.mxu0 0
        %1284 = vmatmul.mubr.bf16.gmra.mrb[0].mxu0 %v993
        %v1285 = vpop.f32.mrb[0].mxu0
        %v1286 = vadd.f32 %v1031, %v1285
        %v1287 = vpop.f32.mrb[0].mxu0
        %v1288 = vadd.f32 %v1035, %v1287
        %v1289 = vpop.f32.mrb[0].mxu0
        %v1290 = vadd.f32 %v1031, %v1289
        %v1291 = vpop.f32.mrb[0].mxu0
        %v1292 = vadd.f32 %v1035, %v1291
        %1293 = vdwg.mxu0
        %1294 = vmatprep.subr.bf16.mxu0 0
        %1295 = vmatpush1.bf16.msra.mxu0 %v1125
        %1296 = vmatprep.subr.bf16.mxu0 0
        %1297 = vmatpush1.bf16.msra.mxu0 %v1128
        %1298 = vmatprep.subr.bf16.mxu0 0
        %1299 = vmatpush1.bf16.msra.mxu0 %v1131
        %1300 = vmatprep.subr.bf16.mxu0 0
        %1301 = vmatpush1.bf16.msra.mxu0 %v1134
        %1302 = vmatprep.subr.bf16.mxu0 0
        %1303 = vmatpush1.bf16.msra.mxu0 %v1137
        %1304 = vmatprep.subr.bf16.mxu0 0
        %1305 = vmatpush1.bf16.msra.mxu0 %v1140
        %1306 = vmatprep.subr.bf16.mxu0 0
        %1307 = vmatpush1.bf16.msra.mxu0 %v1143
        %1308 = vmatprep.subr.bf16.mxu0 0
        %1309 = vmatpush1.bf16.msra.mxu0 %v1146
        %1310 = vmatprep.subr.bf16.mxu0 0
        %1311 = vmatpush1.bf16.msra.mxu0 0
        %1312 = vmatprep.subr.bf16.mxu0 0
        %1313 = vmatpush1.bf16.msra.mxu0 0
        %1314 = vmatprep.subr.bf16.mxu0 0
        %1315 = vmatpush1.bf16.msra.mxu0 0
        %1316 = vmatprep.subr.bf16.mxu0 0
        %1317 = vmatpush1.bf16.msra.mxu0 0
        %1318 = vmatprep.subr.bf16.mxu0 0
        %1319 = vmatpush1.bf16.msra.mxu0 0
        %1320 = vmatprep.subr.bf16.mxu0 0
        %1321 = vmatpush1.bf16.msra.mxu0 0
        %1322 = vmatprep.subr.bf16.mxu0 0
        %1323 = vmatpush1.bf16.msra.mxu0 0
        %1324 = vmatprep.subr.bf16.mxu0 0
        %1325 = vmatpush1.bf16.msra.mxu0 0
        %1326 = vmatprep.mubr.bf16.mxu0 0
        %1327 = vmatmul.mubr.bf16.gmra.mrb[0].mxu0 %v985
        %v1328 = vpop.f32.mrb[0].mxu0
        %v1329 = vadd.f32 %v1039, %v1328
        %v1330 = vpop.f32.mrb[0].mxu0
        %v1331 = vpop.f32.mrb[0].mxu0
        %v1332 = vadd.f32 %v1039, %v1331
        %v1333 = vpop.f32.mrb[0].mxu0
        %1334 = vmatprep.mubr.bf16.mxu0 0
        %1335 = vmatmul.mubr.bf16.gmra.mrb[0].mxu0 %v986
        %v1336 = vpop.f32.mrb[0].mxu0
        %v1337 = vadd.f32 %v1039, %v1336
        %v1338 = vpop.f32.mrb[0].mxu0
        %v1339 = vpop.f32.mrb[0].mxu0
        %v1340 = vadd.f32 %v1039, %v1339
        %v1341 = vpop.f32.mrb[0].mxu0
        %1342 = vmatprep.mubr.bf16.mxu0 0
        %1343 = vmatmul.mubr.bf16.gmra.mrb[0].mxu0 %v987
        %v1344 = vpop.f32.mrb[0].mxu0
        %v1345 = vadd.f32 %v1039, %v1344
        %v1346 = vpop.f32.mrb[0].mxu0
        %v1347 = vpop.f32.mrb[0].mxu0
        %v1348 = vadd.f32 %v1039, %v1347
        %v1349 = vpop.f32.mrb[0].mxu0
        %1350 = vmatprep.mubr.bf16.mxu0 0
        %1351 = vmatmul.mubr.bf16.gmra.mrb[0].mxu0 %v988
        %v1352 = vpop.f32.mrb[0].mxu0
        %v1353 = vadd.f32 %v1039, %v1352
        %v1354 = vpop.f32.mrb[0].mxu0
        %v1355 = vpop.f32.mrb[0].mxu0
        %v1356 = vadd.f32 %v1039, %v1355
        %v1357 = vpop.f32.mrb[0].mxu0
        %1358 = vmatprep.mubr.bf16.mxu0 0
        %1359 = vmatmul.mubr.bf16.gmra.mrb[0].mxu0 %v989
        %v1360 = vpop.f32.mrb[0].mxu0
        %v1361 = vadd.f32 %v1039, %v1360
        %v1362 = vpop.f32.mrb[0].mxu0
        %v1363 = vpop.f32.mrb[0].mxu0
        %v1364 = vadd.f32 %v1039, %v1363
        %v1365 = vpop.f32.mrb[0].mxu0
        %1366 = vmatprep.mubr.bf16.mxu0 0
        %1367 = vmatmul.mubr.bf16.gmra.mrb[0].mxu0 %v990
        %v1368 = vpop.f32.mrb[0].mxu0
        %v1369 = vadd.f32 %v1039, %v1368
        %v1370 = vpop.f32.mrb[0].mxu0
        %v1371 = vpop.f32.mrb[0].mxu0
        %v1372 = vadd.f32 %v1039, %v1371
        %v1373 = vpop.f32.mrb[0].mxu0
        %1374 = vmatprep.mubr.bf16.mxu0 0
        %1375 = vmatmul.mubr.bf16.gmra.mrb[0].mxu0 %v991
        %v1376 = vpop.f32.mrb[0].mxu0
        %v1377 = vadd.f32 %v1039, %v1376
        %v1378 = vpop.f32.mrb[0].mxu0
        %v1379 = vpop.f32.mrb[0].mxu0
        %v1380 = vadd.f32 %v1039, %v1379
        %v1381 = vpop.f32.mrb[0].mxu0
        %1382 = vmatprep.mubr.bf16.mxu0 0
        %1383 = vmatmul.mubr.bf16.gmra.mrb[0].mxu0 %v992
        %v1384 = vpop.f32.mrb[0].mxu0
        %v1385 = vadd.f32 %v1039, %v1384
        %v1386 = vpop.f32.mrb[0].mxu0
        %v1387 = vpop.f32.mrb[0].mxu0
        %v1388 = vadd.f32 %v1039, %v1387
        %v1389 = vpop.f32.mrb[0].mxu0
        %1390 = vmatprep.mubr.bf16.mxu0 0
        %1391 = vmatmul.mubr.bf16.gmra.mrb[0].mxu0 %v993
        %v1392 = vpop.f32.mrb[0].mxu0
        %v1393 = vadd.f32 %v1039, %v1392
        %v1394 = vpop.f32.mrb[0].mxu0
        %v1395 = vpop.f32.mrb[0].mxu0
        %v1396 = vadd.f32 %v1039, %v1395
        %v1397 = vpop.f32.mrb[0].mxu0
        %1398 = vdwg.mxu0
        %v1399 = vpack.c.bf16 %v1210, %v1206
        %v1400 = vpack.c.bf16 %v1212, %v1208
        %v1401 = vpack.c.bf16 %v1332, %v1329
        %v1402 = vpack.c.bf16 %v1220, %v1216
        %v1403 = vpack.c.bf16 %v1222, %v1218
        %v1404 = vpack.c.bf16 %v1340, %v1337
        %v1405 = vpack.c.bf16 %v1230, %v1226
        %v1406 = vpack.c.bf16 %v1232, %v1228
        %v1407 = vpack.c.bf16 %v1348, %v1345
        %v1408 = vpack.c.bf16 %v1240, %v1236
        %v1409 = vpack.c.bf16 %v1242, %v1238
        %v1410 = vpack.c.bf16 %v1356, %v1353
        %v1411 = vpack.c.bf16 %v1250, %v1246
        %v1412 = vpack.c.bf16 %v1252, %v1248
        %v1413 = vpack.c.bf16 %v1364, %v1361
        %v1414 = vpack.c.bf16 %v1260, %v1256
        %v1415 = vpack.c.bf16 %v1262, %v1258
        %v1416 = vpack.c.bf16 %v1372, %v1369
        %v1417 = vpack.c.bf16 %v1270, %v1266
        %v1418 = vpack.c.bf16 %v1272, %v1268
        %v1419 = vpack.c.bf16 %v1380, %v1377
        %v1420 = vpack.c.bf16 %v1280, %v1276
        %v1421 = vpack.c.bf16 %v1282, %v1278
        %v1422 = vpack.c.bf16 %v1388, %v1385
        %v1423 = vpack.c.bf16 %v1290, %v1286
        %v1424 = vpack.c.bf16 %v1292, %v1288
        %v1425 = vpack.c.bf16 %v1396, %v1393
        %v1426 = vld [vmem:[#allocation8] sm:$0xf]
        %v1427 = vld [vmem:[#allocation8 + $0x4] sm:$0xf]
        %v1428 = vld [vmem:[#allocation8 + $0x8] sm:$0xf]
        %v1429 = vld [vmem:[#allocation8 + $0xc] sm:$0xf]
        %v1430 = vld [vmem:[#allocation8 + $0x10] sm:$0xf]
        %v1431 = vld [vmem:[#allocation8 + $0x14] sm:$0xf]
        %v1432 = vld [vmem:[#allocation8 + $0x18] sm:$0xf]
        %v1433 = vld [vmem:[#allocation8 + $0x1c] sm:$0xf]
        %v1434 = vld [vmem:[#allocation8 + $0x20] sm:$0xf]
        %v1435 = vld [vmem:[#allocation8 + $0x24] sm:$0xf]
        %v1436 = vld [vmem:[#allocation8 + $0x28] sm:$0xf]
        %v1437 = vld [vmem:[#allocation8 + $0x2c] sm:$0xf]
        %v1438 = vld [vmem:[#allocation8 + $0x30] sm:$0xf]
        %v1439 = vld [vmem:[#allocation8 + $0x34] sm:$0xf]
        %v1440 = vld [vmem:[#allocation8 + $0x38] sm:$0xf]
        %v1441 = vld [vmem:[#allocation8 + $0x3c] sm:$0xf]
        %v1442 = vld [vmem:[#allocation3] sm:$0xff]
        %v1443 = vld [vmem:[#allocation3 + $0x8] sm:$0xff]
        %v1444 = vld [vmem:[#allocation3 + $0x10] sm:$0xff]
        %v1445 = vld [vmem:[#allocation3 + $0x18] sm:$0xff]
        %v1446 = vld [vmem:[#allocation3 + $0x20] sm:$0xff]
        %v1447 = vld [vmem:[#allocation3 + $0x28] sm:$0xff]
        %v1448 = vld [vmem:[#allocation3 + $0x30] sm:$0xff]
        %v1449 = vld [vmem:[#allocation3 + $0x38] sm:$0xff]
        %v1450 = vld [vmem:[#allocation3 + $0x40] sm:$0xff]
        %v1451 = vld [vmem:[#allocation3 + $0x48] sm:$0xff]
        %v1452 = vld [vmem:[#allocation3 + $0x50] sm:$0xff]
        %v1453 = vld [vmem:[#allocation3 + $0x58] sm:$0xff]
        %v1454 = vld [vmem:[#allocation3 + $0x60] sm:$0xff]
        %v1455 = vld [vmem:[#allocation3 + $0x68] sm:$0xff]
        %v1456 = vld [vmem:[#allocation3 + $0x70] sm:$0xff]
        %v1457 = vld [vmem:[#allocation3 + $0x78] sm:$0xff]
        %v1458 = vld [vmem:[#allocation3 + $0x80] sm:$0xff]
        %v1459 = vld [vmem:[#allocation3 + $0x88] sm:$0xff]
        %v1460 = vld [vmem:[#allocation3 + $0x90] sm:$0xff]
        %v1461 = vld [vmem:[#allocation3 + $0x98] sm:$0xff]
        %v1462 = vld [vmem:[#allocation3 + $0xa0] sm:$0xff]
        %v1463 = vld [vmem:[#allocation3 + $0xa8] sm:$0xff]
        %v1464 = vld [vmem:[#allocation3 + $0xb0] sm:$0xff]
        %v1465 = vld [vmem:[#allocation3 + $0xb8] sm:$0xff]
        %v1466 = vld [vmem:[#allocation3 + $0xc0] sm:$0xff]
        %v1467 = vld [vmem:[#allocation3 + $0xc8] sm:$0xff]
        %v1468 = vld [vmem:[#allocation3 + $0xd0] sm:$0xff]
        %v1469 = vld [vmem:[#allocation3 + $0xd8] sm:$0xff]
        %v1470 = vld [vmem:[#allocation3 + $0xe0] sm:$0xff]
        %v1471 = vld [vmem:[#allocation3 + $0xe8] sm:$0xff]
        %v1472 = vld [vmem:[#allocation3 + $0xf0] sm:$0xff]
        %v1473 = vld [vmem:[#allocation3 + $0xf8] sm:$0xff]
        %v1474 = vld [vmem:[#allocation3 + $0x100] sm:$0xff]
        %v1475 = vld [vmem:[#allocation3 + $0x108] sm:$0xff]
        %v1476 = vld [vmem:[#allocation3 + $0x110] sm:$0xff]
        %v1477 = vld [vmem:[#allocation3 + $0x118] sm:$0xff]
        %vm1478 = vcmask 261120
        %v1480 = vsel %vm1478, %v1399, 0
        %v1483 = vsel %vm1478, %v1402, 0
        %v1486 = vsel %vm1478, %v1405, 0
        %v1489 = vsel %vm1478, %v1408, 0
        %v1492 = vsel %vm1478, %v1411, 0
        %v1495 = vsel %vm1478, %v1414, 0
        %v1498 = vsel %vm1478, %v1417, 0
        %v1501 = vsel %vm1478, %v1420, 0
        %v1504 = vsel %vm1478, %v1423, 0
        %v1507 = vsel %vm1478, %v1400, 0
        %v1510 = vsel %vm1478, %v1403, 0
        %v1513 = vsel %vm1478, %v1406, 0
        %v1516 = vsel %vm1478, %v1409, 0
        %v1519 = vsel %vm1478, %v1412, 0
        %v1522 = vsel %vm1478, %v1415, 0
        %v1525 = vsel %vm1478, %v1418, 0
        %v1528 = vsel %vm1478, %v1421, 0
        %v1531 = vsel %vm1478, %v1424, 0
        %1533 = vmatprep.subr.bf16.mxu0 0
        %1534 = vmatpush1.bf16.xpose.msra.mxu0 %v1507
        %1535 = vmatprep.subr.bf16.mxu0 0
        %1536 = vmatpush1.bf16.xpose.msra.mxu0 %v1510
        %1537 = vmatprep.subr.bf16.mxu0 0
        %1538 = vmatpush1.bf16.xpose.msra.mxu0 %v1513
        %1539 = vmatprep.subr.bf16.mxu0 0
        %1540 = vmatpush1.bf16.xpose.msra.mxu0 %v1516
        %1541 = vmatprep.subr.bf16.mxu0 0
        %1542 = vmatpush1.bf16.xpose.msra.mxu0 %v1519
        %1543 = vmatprep.subr.bf16.mxu0 0
        %1544 = vmatpush1.bf16.xpose.msra.mxu0 %v1522
        %1545 = vmatprep.subr.bf16.mxu0 0
        %1546 = vmatpush1.bf16.xpose.msra.mxu0 %v1525
        %1547 = vmatprep.subr.bf16.mxu0 0
        %1548 = vmatpush1.bf16.xpose.msra.mxu0 %v1528
        %1549 = vmatprep.subr.bf16.mxu0 0
        %1550 = vmatpush1.bf16.xpose.msra.mxu0 %v1531
        %1551 = vmatprep.subr.bf16.mxu0 0
        %1552 = vmatpush1.bf16.xpose.msra.mxu0 0
        %1553 = vmatprep.subr.bf16.mxu0 0
        %1554 = vmatpush1.bf16.xpose.msra.mxu0 0
        %1555 = vmatprep.subr.bf16.mxu0 0
        %1556 = vmatpush1.bf16.xpose.msra.mxu0 0
        %1557 = vmatprep.subr.bf16.mxu0 0
        %1558 = vmatpush1.bf16.xpose.msra.mxu0 0
        %1559 = vmatprep.subr.bf16.mxu0 0
        %1560 = vmatpush1.bf16.xpose.msra.mxu0 0
        %1561 = vmatprep.subr.bf16.mxu0 0
        %1562 = vmatpush1.bf16.xpose.msra.mxu0 0
        %1563 = vmatprep.subr.bf16.mxu0 0
        %1564 = vmatpush1.bf16.xpose.msra.mxu0 0
        %1565 = vmatprep.mubr.bf16.mxu0 0
        %1566 = vmatmul.mubr.bf16.gmra.mrb[0].mxu0 %v1480
        %v1567 = vpop.f32.mrb[0].mxu0
        %v1568 = vadd.f32 0.0, %v1567
        %v1569 = vpop.f32.mrb[0].mxu0
        %v1570 = vadd.f32 0.0, %v1569
        %v1571 = vpop.f32.mrb[0].mxu0
        %v1572 = vadd.f32 0.0, %v1571
        %v1573 = vpop.f32.mrb[0].mxu0
        %v1574 = vadd.f32 0.0, %v1573
        %1575 = vmatprep.mubr.bf16.mxu0 0
        %1576 = vmatmul.mubr.bf16.gmra.mrb[0].mxu0 %v1483
        %v1577 = vpop.f32.mrb[0].mxu0
        %v1578 = vadd.f32 0.0, %v1577
        %v1579 = vpop.f32.mrb[0].mxu0
        %v1580 = vadd.f32 0.0, %v1579
        %v1581 = vpop.f32.mrb[0].mxu0
        %v1582 = vadd.f32 0.0, %v1581
        %v1583 = vpop.f32.mrb[0].mxu0
        %v1584 = vadd.f32 0.0, %v1583
        %1585 = vmatprep.mubr.bf16.mxu0 0
        %1586 = vmatmul.mubr.bf16.gmra.mrb[0].mxu0 %v1486
        %v1587 = vpop.f32.mrb[0].mxu0
        %v1588 = vadd.f32 0.0, %v1587
        %v1589 = vpop.f32.mrb[0].mxu0
        %v1590 = vadd.f32 0.0, %v1589
        %v1591 = vpop.f32.mrb[0].mxu0
        %v1592 = vadd.f32 0.0, %v1591
        %v1593 = vpop.f32.mrb[0].mxu0
        %v1594 = vadd.f32 0.0, %v1593
        %1595 = vmatprep.mubr.bf16.mxu0 0
        %1596 = vmatmul.mubr.bf16.gmra.mrb[0].mxu0 %v1489
        %v1597 = vpop.f32.mrb[0].mxu0
        %v1598 = vadd.f32 0.0, %v1597
        %v1599 = vpop.f32.mrb[0].mxu0
        %v1600 = vadd.f32 0.0, %v1599
        %v1601 = vpop.f32.mrb[0].mxu0
        %v1602 = vadd.f32 0.0, %v1601
        %v1603 = vpop.f32.mrb[0].mxu0
        %v1604 = vadd.f32 0.0, %v1603
        %1605 = vmatprep.mubr.bf16.mxu0 0
        %1606 = vmatmul.mubr.bf16.gmra.mrb[0].mxu0 %v1492
        %v1607 = vpop.f32.mrb[0].mxu0
        %v1608 = vadd.f32 0.0, %v1607
        %v1609 = vpop.f32.mrb[0].mxu0
        %v1610 = vadd.f32 0.0, %v1609
        %v1611 = vpop.f32.mrb[0].mxu0
        %v1612 = vadd.f32 0.0, %v1611
        %v1613 = vpop.f32.mrb[0].mxu0
        %v1614 = vadd.f32 0.0, %v1613
        %1615 = vmatprep.mubr.bf16.mxu0 0
        %1616 = vmatmul.mubr.bf16.gmra.mrb[0].mxu0 %v1495
        %v1617 = vpop.f32.mrb[0].mxu0
        %v1618 = vadd.f32 0.0, %v1617
        %v1619 = vpop.f32.mrb[0].mxu0
        %v1620 = vadd.f32 0.0, %v1619
        %v1621 = vpop.f32.mrb[0].mxu0
        %v1622 = vadd.f32 0.0, %v1621
        %v1623 = vpop.f32.mrb[0].mxu0
        %v1624 = vadd.f32 0.0, %v1623
        %1625 = vmatprep.mubr.bf16.mxu0 0
        %1626 = vmatmul.mubr.bf16.gmra.mrb[0].mxu0 %v1498
        %v1627 = vpop.f32.mrb[0].mxu0
        %v1628 = vadd.f32 0.0, %v1627
        %v1629 = vpop.f32.mrb[0].mxu0
        %v1630 = vadd.f32 0.0, %v1629
        %v1631 = vpop.f32.mrb[0].mxu0
        %v1632 = vadd.f32 0.0, %v1631
        %v1633 = vpop.f32.mrb[0].mxu0
        %v1634 = vadd.f32 0.0, %v1633
        %1635 = vmatprep.mubr.bf16.mxu0 0
        %1636 = vmatmul.mubr.bf16.gmra.mrb[0].mxu0 %v1501
        %v1637 = vpop.f32.mrb[0].mxu0
        %v1638 = vadd.f32 0.0, %v1637
        %v1639 = vpop.f32.mrb[0].mxu0
        %v1640 = vadd.f32 0.0, %v1639
        %v1641 = vpop.f32.mrb[0].mxu0
        %v1642 = vadd.f32 0.0, %v1641
        %v1643 = vpop.f32.mrb[0].mxu0
        %v1644 = vadd.f32 0.0, %v1643
        %1645 = vmatprep.mubr.bf16.mxu0 0
        %1646 = vmatmul.mubr.bf16.gmra.mrb[0].mxu0 %v1504
        %v1647 = vpop.f32.mrb[0].mxu0
        %v1648 = vadd.f32 0.0, %v1647
        %v1649 = vpop.f32.mrb[0].mxu0
        %v1650 = vadd.f32 0.0, %v1649
        %v1651 = vpop.f32.mrb[0].mxu0
        %v1652 = vadd.f32 0.0, %v1651
        %v1653 = vpop.f32.mrb[0].mxu0
        %v1654 = vadd.f32 0.0, %v1653
        %1655 = vdwg.mxu0
        %v1656 = vmul.f32 %v1568, 0.17677669
        %v1657 = vmul.f32 %v1570, 0.17677669
        %v1658 = vmul.f32 %v1572, 0.17677669
        %v1659 = vmul.f32 %v1574, 0.17677669
        %v1660 = vmul.f32 %v1578, 0.17677669
        %v1661 = vmul.f32 %v1580, 0.17677669
        %v1662 = vmul.f32 %v1582, 0.17677669
        %v1663 = vmul.f32 %v1584, 0.17677669
        %v1664 = vmul.f32 %v1588, 0.17677669
        %v1665 = vmul.f32 %v1590, 0.17677669
        %v1666 = vmul.f32 %v1592, 0.17677669
        %v1667 = vmul.f32 %v1594, 0.17677669
        %v1668 = vmul.f32 %v1598, 0.17677669
        %v1669 = vmul.f32 %v1600, 0.17677669
        %v1670 = vmul.f32 %v1602, 0.17677669
        %v1671 = vmul.f32 %v1604, 0.17677669
        %v1672 = vmul.f32 %v1608, 0.17677669
        %v1673 = vmul.f32 %v1610, 0.17677669
        %v1674 = vmul.f32 %v1612, 0.17677669
        %v1675 = vmul.f32 %v1614, 0.17677669
        %v1676 = vmul.f32 %v1618, 0.17677669
        %v1677 = vmul.f32 %v1620, 0.17677669
        %v1678 = vmul.f32 %v1622, 0.17677669
        %v1679 = vmul.f32 %v1624, 0.17677669
        %v1680 = vmul.f32 %v1628, 0.17677669
        %v1681 = vmul.f32 %v1630, 0.17677669
        %v1682 = vmul.f32 %v1632, 0.17677669
        %v1683 = vmul.f32 %v1634, 0.17677669
        %v1684 = vmul.f32 %v1638, 0.17677669
        %v1685 = vmul.f32 %v1640, 0.17677669
        %v1686 = vmul.f32 %v1642, 0.17677669
        %v1687 = vmul.f32 %v1644, 0.17677669
        %v1688 = vmul.f32 %v1648, 0.17677669
        %v1689 = vmul.f32 %v1650, 0.17677669
        %v1690 = vmul.f32 %v1652, 0.17677669
        %v1691 = vmul.f32 %v1654, 0.17677669
        %v1692 = vadd.f32 %v1656, %v1442
        %v1693 = vadd.f32 %v1657, %v1443
        %v1694 = vadd.f32 %v1658, %v1444
        %v1695 = vadd.f32 %v1659, %v1445
        %v1696 = vadd.f32 %v1660, %v1446
        %v1697 = vadd.f32 %v1661, %v1447
        %v1698 = vadd.f32 %v1662, %v1448
        %v1699 = vadd.f32 %v1663, %v1449
        %v1700 = vadd.f32 %v1664, %v1450
        %v1701 = vadd.f32 %v1665, %v1451
        %v1702 = vadd.f32 %v1666, %v1452
        %v1703 = vadd.f32 %v1667, %v1453
        %v1704 = vadd.f32 %v1668, %v1454
        %v1705 = vadd.f32 %v1669, %v1455
        %v1706 = vadd.f32 %v1670, %v1456
        %v1707 = vadd.f32 %v1671, %v1457
        %v1708 = vadd.f32 %v1672, %v1458
        %v1709 = vadd.f32 %v1673, %v1459
        %v1710 = vadd.f32 %v1674, %v1460
        %v1711 = vadd.f32 %v1675, %v1461
        %v1712 = vadd.f32 %v1676, %v1462
        %v1713 = vadd.f32 %v1677, %v1463
        %v1714 = vadd.f32 %v1678, %v1464
        %v1715 = vadd.f32 %v1679, %v1465
        %v1716 = vadd.f32 %v1680, %v1466
        %v1717 = vadd.f32 %v1681, %v1467
        %v1718 = vadd.f32 %v1682, %v1468
        %v1719 = vadd.f32 %v1683, %v1469
        %v1720 = vadd.f32 %v1684, %v1470
        %v1721 = vadd.f32 %v1685, %v1471
        %v1722 = vadd.f32 %v1686, %v1472
        %v1723 = vadd.f32 %v1687, %v1473
        %v1724 = vadd.f32 %v1688, %v1474
        %v1725 = vadd.f32 %v1689, %v1475
        %v1726 = vadd.f32 %v1690, %v1476
        %v1727 = vadd.f32 %v1691, %v1477
        %vm1728 = vcmask 130048
        %v1729 = vsel %vm1728, %v1693, -inf
        %v1730 = vmax.f32 %v1692, %v1729
        %1731 = vmax.xlane.f32.xlu0 %v1730
        %v1732 = vpop.xlane.xlu0 %1731
        %v1733 = vsel %vm1728, %v1695, -inf
        %v1734 = vmax.f32 %v1694, %v1733
        %1735 = vmax.xlane.f32.xlu0 %v1734
        %v1736 = vpop.xlane.xlu0 %1735
        %v1737 = vsel %vm1728, %v1697, -inf
        %v1738 = vmax.f32 %v1696, %v1737
        %1739 = vmax.xlane.f32.xlu0 %v1738
        %v1740 = vpop.xlane.xlu0 %1739
        %v1741 = vsel %vm1728, %v1699, -inf
        %v1742 = vmax.f32 %v1698, %v1741
        %1743 = vmax.xlane.f32.xlu0 %v1742
        %v1744 = vpop.xlane.xlu0 %1743
        %v1745 = vsel %vm1728, %v1701, -inf
        %v1746 = vmax.f32 %v1700, %v1745
        %1747 = vmax.xlane.f32.xlu0 %v1746
        %v1748 = vpop.xlane.xlu0 %1747
        %v1749 = vsel %vm1728, %v1703, -inf
        %v1750 = vmax.f32 %v1702, %v1749
        %1751 = vmax.xlane.f32.xlu0 %v1750
        %v1752 = vpop.xlane.xlu0 %1751
        %v1753 = vsel %vm1728, %v1705, -inf
        %v1754 = vmax.f32 %v1704, %v1753
        %1755 = vmax.xlane.f32.xlu0 %v1754
        %v1756 = vpop.xlane.xlu0 %1755
        %v1757 = vsel %vm1728, %v1707, -inf
        %v1758 = vmax.f32 %v1706, %v1757
        %1759 = vmax.xlane.f32.xlu0 %v1758
        %v1760 = vpop.xlane.xlu0 %1759
        %v1761 = vsel %vm1728, %v1709, -inf
        %v1762 = vmax.f32 %v1708, %v1761
        %1763 = vmax.xlane.f32.xlu0 %v1762
        %v1764 = vpop.xlane.xlu0 %1763
        %v1765 = vsel %vm1728, %v1711, -inf
        %v1766 = vmax.f32 %v1710, %v1765
        %1767 = vmax.xlane.f32.xlu0 %v1766
        %v1768 = vpop.xlane.xlu0 %1767
        %v1769 = vsel %vm1728, %v1713, -inf
        %v1770 = vmax.f32 %v1712, %v1769
        %1771 = vmax.xlane.f32.xlu0 %v1770
        %v1772 = vpop.xlane.xlu0 %1771
        %v1773 = vsel %vm1728, %v1715, -inf
        %v1774 = vmax.f32 %v1714, %v1773
        %1775 = vmax.xlane.f32.xlu0 %v1774
        %v1776 = vpop.xlane.xlu0 %1775
        %v1777 = vsel %vm1728, %v1717, -inf
        %v1778 = vmax.f32 %v1716, %v1777
        %1779 = vmax.xlane.f32.xlu0 %v1778
        %v1780 = vpop.xlane.xlu0 %1779
        %v1781 = vsel %vm1728, %v1719, -inf
        %v1782 = vmax.f32 %v1718, %v1781
        %1783 = vmax.xlane.f32.xlu0 %v1782
        %v1784 = vpop.xlane.xlu0 %1783
        %v1785 = vsel %vm1728, %v1721, -inf
        %v1786 = vmax.f32 %v1720, %v1785
        %1787 = vmax.xlane.f32.xlu0 %v1786
        %v1788 = vpop.xlane.xlu0 %1787
        %v1789 = vsel %vm1728, %v1723, -inf
        %v1790 = vmax.f32 %v1722, %v1789
        %1791 = vmax.xlane.f32.xlu0 %v1790
        %v1792 = vpop.xlane.xlu0 %1791
        %v1793 = vsel %vm1728, %v1725, -inf
        %v1794 = vmax.f32 %v1724, %v1793
        %1795 = vmax.xlane.f32.xlu0 %v1794
        %v1796 = vpop.xlane.xlu0 %1795
        %v1797 = vsel %vm1728, %v1727, -inf
        %v1798 = vmax.f32 %v1726, %v1797
        %1799 = vmax.xlane.f32.xlu0 %v1798
        %v1800 = vpop.xlane.xlu0 %1799
        %v1801 = vsub.f32 %v1692, %v1732
        %v1802 = vsub.f32 %v1693, %v1732
        %v1803 = vsub.f32 %v1694, %v1736
        %v1804 = vsub.f32 %v1695, %v1736
        %v1805 = vsub.f32 %v1696, %v1740
        %v1806 = vsub.f32 %v1697, %v1740
        %v1807 = vsub.f32 %v1698, %v1744
        %v1808 = vsub.f32 %v1699, %v1744
        %v1809 = vsub.f32 %v1700, %v1748
        %v1810 = vsub.f32 %v1701, %v1748
        %v1811 = vsub.f32 %v1702, %v1752
        %v1812 = vsub.f32 %v1703, %v1752
        %v1813 = vsub.f32 %v1704, %v1756
        %v1814 = vsub.f32 %v1705, %v1756
        %v1815 = vsub.f32 %v1706, %v1760
        %v1816 = vsub.f32 %v1707, %v1760
        %v1817 = vsub.f32 %v1708, %v1764
        %v1818 = vsub.f32 %v1709, %v1764
        %v1819 = vsub.f32 %v1710, %v1768
        %v1820 = vsub.f32 %v1711, %v1768
        %v1821 = vsub.f32 %v1712, %v1772
        %v1822 = vsub.f32 %v1713, %v1772
        %v1823 = vsub.f32 %v1714, %v1776
        %v1824 = vsub.f32 %v1715, %v1776
        %v1825 = vsub.f32 %v1716, %v1780
        %v1826 = vsub.f32 %v1717, %v1780
        %v1827 = vsub.f32 %v1718, %v1784
        %v1828 = vsub.f32 %v1719, %v1784
        %v1829 = vsub.f32 %v1720, %v1788
        %v1830 = vsub.f32 %v1721, %v1788
        %v1831 = vsub.f32 %v1722, %v1792
        %v1832 = vsub.f32 %v1723, %v1792
        %v1833 = vsub.f32 %v1724, %v1796
        %v1834 = vsub.f32 %v1725, %v1796
        %v1835 = vsub.f32 %v1726, %v1800
        %v1836 = vsub.f32 %v1727, %v1800
        %v1837 = vmul.f32 %v1801, 1.442695
        %v1838 = vpow.pop %v1837
        %v1839 = vmul.f32 %v1802, 1.442695
        %v1840 = vpow.pop %v1839
        %v1841 = vmul.f32 %v1803, 1.442695
        %v1842 = vpow.pop %v1841
        %v1843 = vmul.f32 %v1804, 1.442695
        %v1844 = vpow.pop %v1843
        %v1845 = vmul.f32 %v1805, 1.442695
        %v1846 = vpow.pop %v1845
        %v1847 = vmul.f32 %v1806, 1.442695
        %v1848 = vpow.pop %v1847
        %v1849 = vmul.f32 %v1807, 1.442695
        %v1850 = vpow.pop %v1849
        %v1851 = vmul.f32 %v1808, 1.442695
        %v1852 = vpow.pop %v1851
        %v1853 = vmul.f32 %v1809, 1.442695
        %v1854 = vpow.pop %v1853
        %v1855 = vmul.f32 %v1810, 1.442695
        %v1856 = vpow.pop %v1855
        %v1857 = vmul.f32 %v1811, 1.442695
        %v1858 = vpow.pop %v1857
        %v1859 = vmul.f32 %v1812, 1.442695
        %v1860 = vpow.pop %v1859
        %v1861 = vmul.f32 %v1813, 1.442695
        %v1862 = vpow.pop %v1861
        %v1863 = vmul.f32 %v1814, 1.442695
        %v1864 = vpow.pop %v1863
        %v1865 = vmul.f32 %v1815, 1.442695
        %v1866 = vpow.pop %v1865
        %v1867 = vmul.f32 %v1816, 1.442695
        %v1868 = vpow.pop %v1867
        %v1869 = vmul.f32 %v1817, 1.442695
        %v1870 = vpow.pop %v1869
        %v1871 = vmul.f32 %v1818, 1.442695
        %v1872 = vpow.pop %v1871
        %v1873 = vmul.f32 %v1819, 1.442695
        %v1874 = vpow.pop %v1873
        %v1875 = vmul.f32 %v1820, 1.442695
        %v1876 = vpow.pop %v1875
        %v1877 = vmul.f32 %v1821, 1.442695
        %v1878 = vpow.pop %v1877
        %v1879 = vmul.f32 %v1822, 1.442695
        %v1880 = vpow.pop %v1879
        %v1881 = vmul.f32 %v1823, 1.442695
        %v1882 = vpow.pop %v1881
        %v1883 = vmul.f32 %v1824, 1.442695
        %v1884 = vpow.pop %v1883
        %v1885 = vmul.f32 %v1825, 1.442695
        %v1886 = vpow.pop %v1885
        %v1887 = vmul.f32 %v1826, 1.442695
        %v1888 = vpow.pop %v1887
        %v1889 = vmul.f32 %v1827, 1.442695
        %v1890 = vpow.pop %v1889
        %v1891 = vmul.f32 %v1828, 1.442695
        %v1892 = vpow.pop %v1891
        %v1893 = vmul.f32 %v1829, 1.442695
        %v1894 = vpow.pop %v1893
        %v1895 = vmul.f32 %v1830, 1.442695
        %v1896 = vpow.pop %v1895
        %v1897 = vmul.f32 %v1831, 1.442695
        %v1898 = vpow.pop %v1897
        %v1899 = vmul.f32 %v1832, 1.442695
        %v1900 = vpow.pop %v1899
        %v1901 = vmul.f32 %v1833, 1.442695
        %v1902 = vpow.pop %v1901
        %v1903 = vmul.f32 %v1834, 1.442695
        %v1904 = vpow.pop %v1903
        %v1905 = vmul.f32 %v1835, 1.442695
        %v1906 = vpow.pop %v1905
        %v1907 = vmul.f32 %v1836, 1.442695
        %v1908 = vpow.pop %v1907
        %v1909 = vsel %vm1728, %v1840, 0.0
        %v1910 = vadd.f32 %v1838, %v1909
        %1911 = vadd.xlane.f32.xlu0 %v1910
        %v1912 = vpop.xlane.xlu0 %1911
        %v1913 = vsel %vm1728, %v1844, 0.0
        %v1914 = vadd.f32 %v1842, %v1913
        %1915 = vadd.xlane.f32.xlu0 %v1914
        %v1916 = vpop.xlane.xlu0 %1915
        %v1917 = vsel %vm1728, %v1848, 0.0
        %v1918 = vadd.f32 %v1846, %v1917
        %1919 = vadd.xlane.f32.xlu0 %v1918
        %v1920 = vpop.xlane.xlu0 %1919
        %v1921 = vsel %vm1728, %v1852, 0.0
        %v1922 = vadd.f32 %v1850, %v1921
        %1923 = vadd.xlane.f32.xlu0 %v1922
        %v1924 = vpop.xlane.xlu0 %1923
        %v1925 = vsel %vm1728, %v1856, 0.0
        %v1926 = vadd.f32 %v1854, %v1925
        %1927 = vadd.xlane.f32.xlu0 %v1926
        %v1928 = vpop.xlane.xlu0 %1927
        %v1929 = vsel %vm1728, %v1860, 0.0
        %v1930 = vadd.f32 %v1858, %v1929
        %1931 = vadd.xlane.f32.xlu0 %v1930
        %v1932 = vpop.xlane.xlu0 %1931
        %v1933 = vsel %vm1728, %v1864, 0.0
        %v1934 = vadd.f32 %v1862, %v1933
        %1935 = vadd.xlane.f32.xlu0 %v1934
        %v1936 = vpop.xlane.xlu0 %1935
        %v1937 = vsel %vm1728, %v1868, 0.0
        %v1938 = vadd.f32 %v1866, %v1937
        %1939 = vadd.xlane.f32.xlu0 %v1938
        %v1940 = vpop.xlane.xlu0 %1939
        %v1941 = vsel %vm1728, %v1872, 0.0
        %v1942 = vadd.f32 %v1870, %v1941
        %1943 = vadd.xlane.f32.xlu0 %v1942
        %v1944 = vpop.xlane.xlu0 %1943
        %v1945 = vsel %vm1728, %v1876, 0.0
        %v1946 = vadd.f32 %v1874, %v1945
        %1947 = vadd.xlane.f32.xlu0 %v1946
        %v1948 = vpop.xlane.xlu0 %1947
        %v1949 = vsel %vm1728, %v1880, 0.0
        %v1950 = vadd.f32 %v1878, %v1949
        %1951 = vadd.xlane.f32.xlu0 %v1950
        %v1952 = vpop.xlane.xlu0 %1951
        %v1953 = vsel %vm1728, %v1884, 0.0
        %v1954 = vadd.f32 %v1882, %v1953
        %1955 = vadd.xlane.f32.xlu0 %v1954
        %v1956 = vpop.xlane.xlu0 %1955
        %v1957 = vsel %vm1728, %v1888, 0.0
        %v1958 = vadd.f32 %v1886, %v1957
        %1959 = vadd.xlane.f32.xlu0 %v1958
        %v1960 = vpop.xlane.xlu0 %1959
        %v1961 = vsel %vm1728, %v1892, 0.0
        %v1962 = vadd.f32 %v1890, %v1961
        %1963 = vadd.xlane.f32.xlu0 %v1962
        %v1964 = vpop.xlane.xlu0 %1963
        %v1965 = vsel %vm1728, %v1896, 0.0
        %v1966 = vadd.f32 %v1894, %v1965
        %1967 = vadd.xlane.f32.xlu0 %v1966
        %v1968 = vpop.xlane.xlu0 %1967
        %v1969 = vsel %vm1728, %v1900, 0.0
        %v1970 = vadd.f32 %v1898, %v1969
        %1971 = vadd.xlane.f32.xlu0 %v1970
        %v1972 = vpop.xlane.xlu0 %1971
        %v1973 = vsel %vm1728, %v1904, 0.0
        %v1974 = vadd.f32 %v1902, %v1973
        %1975 = vadd.xlane.f32.xlu0 %v1974
        %v1976 = vpop.xlane.xlu0 %1975
        %v1977 = vsel %vm1728, %v1908, 0.0
        %v1978 = vadd.f32 %v1906, %v1977
        %1979 = vadd.xlane.f32.xlu0 %v1978
        %v1980 = vpop.xlane.xlu0 %1979
        %v1981 = vrcp.pop %v1912
        %v1982 = vrcp.pop %v1916
        %v1983 = vrcp.pop %v1920
        %v1984 = vrcp.pop %v1924
        %v1985 = vrcp.pop %v1928
        %v1986 = vrcp.pop %v1932
        %v1987 = vrcp.pop %v1936
        %v1988 = vrcp.pop %v1940
        %v1989 = vrcp.pop %v1944
        %v1990 = vrcp.pop %v1948
        %v1991 = vrcp.pop %v1952
        %v1992 = vrcp.pop %v1956
        %v1993 = vrcp.pop %v1960
        %v1994 = vrcp.pop %v1964
        %v1995 = vrcp.pop %v1968
        %v1996 = vrcp.pop %v1972
        %v1997 = vrcp.pop %v1976
        %v1998 = vrcp.pop %v1980
        %v1999 = vmul.f32 %v1838, %v1981
        %v2000 = vmul.f32 %v1840, %v1981
        %v2001 = vmul.f32 %v1842, %v1982
        %v2002 = vmul.f32 %v1844, %v1982
        %v2003 = vmul.f32 %v1846, %v1983
        %v2004 = vmul.f32 %v1848, %v1983
        %v2005 = vmul.f32 %v1850, %v1984
        %v2006 = vmul.f32 %v1852, %v1984
        %v2007 = vmul.f32 %v1854, %v1985
        %v2008 = vmul.f32 %v1856, %v1985
        %v2009 = vmul.f32 %v1858, %v1986
        %v2010 = vmul.f32 %v1860, %v1986
        %v2011 = vmul.f32 %v1862, %v1987
        %v2012 = vmul.f32 %v1864, %v1987
        %v2013 = vmul.f32 %v1866, %v1988
        %v2014 = vmul.f32 %v1868, %v1988
        %v2015 = vmul.f32 %v1870, %v1989
        %v2016 = vmul.f32 %v1872, %v1989
        %v2017 = vmul.f32 %v1874, %v1990
        %v2018 = vmul.f32 %v1876, %v1990
        %v2019 = vmul.f32 %v1878, %v1991
        %v2020 = vmul.f32 %v1880, %v1991
        %v2021 = vmul.f32 %v1882, %v1992
        %v2022 = vmul.f32 %v1884, %v1992
        %v2023 = vmul.f32 %v1886, %v1993
        %v2024 = vmul.f32 %v1888, %v1993
        %v2025 = vmul.f32 %v1890, %v1994
        %v2026 = vmul.f32 %v1892, %v1994
        %v2027 = vmul.f32 %v1894, %v1995
        %v2028 = vmul.f32 %v1896, %v1995
        %v2029 = vmul.f32 %v1898, %v1996
        %v2030 = vmul.f32 %v1900, %v1996
        %v2031 = vmul.f32 %v1902, %v1997
        %v2032 = vmul.f32 %v1904, %v1997
        %v2033 = vmul.f32 %v1906, %v1998
        %v2034 = vmul.f32 %v1908, %v1998
        %v2035 = vpack.c.bf16 %v2001, %v1999
        %v2036 = vpack.c.bf16 %v2002, %v2000
        %v2037 = vpack.c.bf16 %v2005, %v2003
        %v2038 = vpack.c.bf16 %v2006, %v2004
        %v2039 = vpack.c.bf16 %v2009, %v2007
        %v2040 = vpack.c.bf16 %v2010, %v2008
        %v2041 = vpack.c.bf16 %v2013, %v2011
        %v2042 = vpack.c.bf16 %v2014, %v2012
        %v2043 = vpack.c.bf16 %v2017, %v2015
        %v2044 = vpack.c.bf16 %v2018, %v2016
        %v2045 = vpack.c.bf16 %v2021, %v2019
        %v2046 = vpack.c.bf16 %v2022, %v2020
        %v2047 = vpack.c.bf16 %v2025, %v2023
        %v2048 = vpack.c.bf16 %v2026, %v2024
        %v2049 = vpack.c.bf16 %v2029, %v2027
        %v2050 = vpack.c.bf16 %v2030, %v2028
        %v2051 = vpack.c.bf16 %v2033, %v2031
        %v2052 = vpack.c.bf16 %v2034, %v2032
        %v2054 = vsel %vm1728, %v2036, 0
        %v2057 = vsel %vm1728, %v2038, 0
        %v2060 = vsel %vm1728, %v2040, 0
        %v2063 = vsel %vm1728, %v2042, 0
        %v2066 = vsel %vm1728, %v2044, 0
        %v2069 = vsel %vm1728, %v2046, 0
        %v2072 = vsel %vm1728, %v2048, 0
        %v2075 = vsel %vm1728, %v2050, 0
        %v2078 = vsel %vm1728, %v2052, 0
        %2080 = vmatprep.subr.bf16.mxu0 0
        %2081 = vmatpush1.bf16.msra.mxu0 %v1401
        %2082 = vmatprep.subr.bf16.mxu0 0
        %2083 = vmatpush1.bf16.msra.mxu0 %v1404
        %2084 = vmatprep.subr.bf16.mxu0 0
        %2085 = vmatpush1.bf16.msra.mxu0 %v1407
        %2086 = vmatprep.subr.bf16.mxu0 0
        %2087 = vmatpush1.bf16.msra.mxu0 %v1410
        %2088 = vmatprep.subr.bf16.mxu0 0
        %2089 = vmatpush1.bf16.msra.mxu0 %v1413
        %2090 = vmatprep.subr.bf16.mxu0 0
        %2091 = vmatpush1.bf16.msra.mxu0 %v1416
        %2092 = vmatprep.subr.bf16.mxu0 0
        %2093 = vmatpush1.bf16.msra.mxu0 %v1419
        %2094 = vmatprep.subr.bf16.mxu0 0
        %2095 = vmatpush1.bf16.msra.mxu0 %v1422
        %2096 = vmatprep.subr.bf16.mxu0 0
        %2097 = vmatpush1.bf16.msra.mxu0 %v1425
        %2098 = vmatprep.subr.bf16.mxu0 0
        %2099 = vmatpush1.bf16.msra.mxu0 0
        %2100 = vmatprep.subr.bf16.mxu0 0
        %2101 = vmatpush1.bf16.msra.mxu0 0
        %2102 = vmatprep.subr.bf16.mxu0 0
        %2103 = vmatpush1.bf16.msra.mxu0 0
        %2104 = vmatprep.subr.bf16.mxu0 0
        %2105 = vmatpush1.bf16.msra.mxu0 0
        %2106 = vmatprep.subr.bf16.mxu0 0
        %2107 = vmatpush1.bf16.msra.mxu0 0
        %2108 = vmatprep.subr.bf16.mxu0 0
        %2109 = vmatpush1.bf16.msra.mxu0 0
        %2110 = vmatprep.subr.bf16.mxu0 0
        %2111 = vmatpush1.bf16.msra.mxu0 0
        %2112 = vmatprep.mubr.bf16.mxu0 %v2054
        %2113 = vmatmul.mubr.bf16.gmra.mrb[0].mxu0 %v2035
        %v2114 = vpop.f32.mrb[0].mxu0
        %v2115 = vadd.f32 0.0, %v2114
        %v2116 = vpop.f32.mrb[0].mxu0
        %v2117 = vpop.f32.mrb[0].mxu0
        %v2118 = vadd.f32 0.0, %v2117
        %v2119 = vpop.f32.mrb[0].mxu0
        %2120 = vmatprep.mubr.bf16.mxu0 %v2057
        %2121 = vmatmul.mubr.bf16.gmra.mrb[0].mxu0 %v2037
        %v2122 = vpop.f32.mrb[0].mxu0
        %v2123 = vadd.f32 0.0, %v2122
        %v2124 = vpop.f32.mrb[0].mxu0
        %v2125 = vpop.f32.mrb[0].mxu0
        %v2126 = vadd.f32 0.0, %v2125
        %v2127 = vpop.f32.mrb[0].mxu0
        %2128 = vmatprep.mubr.bf16.mxu0 %v2060
        %2129 = vmatmul.mubr.bf16.gmra.mrb[0].mxu0 %v2039
        %v2130 = vpop.f32.mrb[0].mxu0
        %v2131 = vadd.f32 0.0, %v2130
        %v2132 = vpop.f32.mrb[0].mxu0
        %v2133 = vpop.f32.mrb[0].mxu0
        %v2134 = vadd.f32 0.0, %v2133
        %v2135 = vpop.f32.mrb[0].mxu0
        %2136 = vmatprep.mubr.bf16.mxu0 %v2063
        %2137 = vmatmul.mubr.bf16.gmra.mrb[0].mxu0 %v2041
        %v2138 = vpop.f32.mrb[0].mxu0
        %v2139 = vadd.f32 0.0, %v2138
        %v2140 = vpop.f32.mrb[0].mxu0
        %v2141 = vpop.f32.mrb[0].mxu0
        %v2142 = vadd.f32 0.0, %v2141
        %v2143 = vpop.f32.mrb[0].mxu0
        %2144 = vmatprep.mubr.bf16.mxu0 %v2066
        %2145 = vmatmul.mubr.bf16.gmra.mrb[0].mxu0 %v2043
        %v2146 = vpop.f32.mrb[0].mxu0
        %v2147 = vadd.f32 0.0, %v2146
        %v2148 = vpop.f32.mrb[0].mxu0
        %v2149 = vpop.f32.mrb[0].mxu0
        %v2150 = vadd.f32 0.0, %v2149
        %v2151 = vpop.f32.mrb[0].mxu0
        %2152 = vmatprep.mubr.bf16.mxu0 %v2069
        %2153 = vmatmul.mubr.bf16.gmra.mrb[0].mxu0 %v2045
        %v2154 = vpop.f32.mrb[0].mxu0
        %v2155 = vadd.f32 0.0, %v2154
        %v2156 = vpop.f32.mrb[0].mxu0
        %v2157 = vpop.f32.mrb[0].mxu0
        %v2158 = vadd.f32 0.0, %v2157
        %v2159 = vpop.f32.mrb[0].mxu0
        %2160 = vmatprep.mubr.bf16.mxu0 %v2072
        %2161 = vmatmul.mubr.bf16.gmra.mrb[0].mxu0 %v2047
        %v2162 = vpop.f32.mrb[0].mxu0
        %v2163 = vadd.f32 0.0, %v2162
        %v2164 = vpop.f32.mrb[0].mxu0
        %v2165 = vpop.f32.mrb[0].mxu0
        %v2166 = vadd.f32 0.0, %v2165
        %v2167 = vpop.f32.mrb[0].mxu0
        %2168 = vmatprep.mubr.bf16.mxu0 %v2075
        %2169 = vmatmul.mubr.bf16.gmra.mrb[0].mxu0 %v2049
        %v2170 = vpop.f32.mrb[0].mxu0
        %v2171 = vadd.f32 0.0, %v2170
        %v2172 = vpop.f32.mrb[0].mxu0
        %v2173 = vpop.f32.mrb[0].mxu0
        %v2174 = vadd.f32 0.0, %v2173
        %v2175 = vpop.f32.mrb[0].mxu0
        %2176 = vmatprep.mubr.bf16.mxu0 %v2078
        %2177 = vmatmul.mubr.bf16.gmra.mrb[0].mxu0 %v2051
        %v2178 = vpop.f32.mrb[0].mxu0
        %v2179 = vadd.f32 0.0, %v2178
        %v2180 = vpop.f32.mrb[0].mxu0
        %v2181 = vpop.f32.mrb[0].mxu0
        %v2182 = vadd.f32 0.0, %v2181
        %v2183 = vpop.f32.mrb[0].mxu0
        %2184 = vdwg.mxu0
        %v2185 = vpack.c.bf16 %v2118, %v2115
        %v2186 = vpack.c.bf16 %v2126, %v2123
        %v2187 = vpack.c.bf16 %v2134, %v2131
        %v2188 = vpack.c.bf16 %v2142, %v2139
        %v2189 = vpack.c.bf16 %v2150, %v2147
        %v2190 = vpack.c.bf16 %v2158, %v2155
        %v2191 = vpack.c.bf16 %v2166, %v2163
        %v2192 = vpack.c.bf16 %v2174, %v2171
        %v2193 = vpack.c.bf16 %v2182, %v2179
        %2203 = vrot.lane.b32.xlu0 %v1399, 96
        %v2204 = vpop.permute.xlu0 %2203
        %2205 = vrot.lane.b32.xlu0 %v1402, 96
        %v2206 = vpop.permute.xlu0 %2205
        %2207 = vrot.lane.b32.xlu0 %v1405, 96
        %v2208 = vpop.permute.xlu0 %2207
        %2209 = vrot.lane.b32.xlu0 %v1408, 96
        %v2210 = vpop.permute.xlu0 %2209
        %2211 = vrot.lane.b32.xlu0 %v1411, 96
        %v2212 = vpop.permute.xlu0 %2211
        %2213 = vrot.lane.b32.xlu0 %v1414, 96
        %v2214 = vpop.permute.xlu0 %2213
        %2215 = vrot.lane.b32.xlu0 %v1417, 96
        %v2216 = vpop.permute.xlu0 %2215
        %2217 = vrot.lane.b32.xlu0 %v1420, 96
        %v2218 = vpop.permute.xlu0 %2217
        %2219 = vrot.lane.b32.xlu0 %v1423, 96
        %v2220 = vpop.permute.xlu0 %2219
        %2230 = vrot.lane.b32.xlu0 %v1400, 96
        %v2231 = vpop.permute.xlu0 %2230
        %2232 = vrot.lane.b32.xlu0 %v1403, 96
        %v2233 = vpop.permute.xlu0 %2232
        %2234 = vrot.lane.b32.xlu0 %v1406, 96
        %v2235 = vpop.permute.xlu0 %2234
        %2236 = vrot.lane.b32.xlu0 %v1409, 96
        %v2237 = vpop.permute.xlu0 %2236
        %2238 = vrot.lane.b32.xlu0 %v1412, 96
        %v2239 = vpop.permute.xlu0 %2238
        %2240 = vrot.lane.b32.xlu0 %v1415, 96
        %v2241 = vpop.permute.xlu0 %2240
        %2242 = vrot.lane.b32.xlu0 %v1418, 96
        %v2243 = vpop.permute.xlu0 %2242
        %2244 = vrot.lane.b32.xlu0 %v1421, 96
        %v2245 = vpop.permute.xlu0 %2244
        %2246 = vrot.lane.b32.xlu0 %v1424, 96
        %v2247 = vpop.permute.xlu0 %2246
        %v2249 = vsel %vm1478, %v2204, 0
        %v2252 = vsel %vm1478, %v2206, 0
        %v2255 = vsel %vm1478, %v2208, 0
        %v2258 = vsel %vm1478, %v2210, 0
        %v2261 = vsel %vm1478, %v2212, 0
        %v2264 = vsel %vm1478, %v2214, 0
        %v2267 = vsel %vm1478, %v2216, 0
        %v2270 = vsel %vm1478, %v2218, 0
        %v2273 = vsel %vm1478, %v2220, 0
        %v2276 = vsel %vm1478, %v2231, 0
        %v2279 = vsel %vm1478, %v2233, 0
        %v2282 = vsel %vm1478, %v2235, 0
        %v2285 = vsel %vm1478, %v2237, 0
        %v2288 = vsel %vm1478, %v2239, 0
        %v2291 = vsel %vm1478, %v2241, 0
        %v2294 = vsel %vm1478, %v2243, 0
        %v2297 = vsel %vm1478, %v2245, 0
        %v2300 = vsel %vm1478, %v2247, 0
        %2302 = vmatprep.subr.bf16.mxu0 0
        %2303 = vmatpush1.bf16.xpose.msra.mxu0 %v2276
        %2304 = vmatprep.subr.bf16.mxu0 0
        %2305 = vmatpush1.bf16.xpose.msra.mxu0 %v2279
        %2306 = vmatprep.subr.bf16.mxu0 0
        %2307 = vmatpush1.bf16.xpose.msra.mxu0 %v2282
        %2308 = vmatprep.subr.bf16.mxu0 0
        %2309 = vmatpush1.bf16.xpose.msra.mxu0 %v2285
        %2310 = vmatprep.subr.bf16.mxu0 0
        %2311 = vmatpush1.bf16.xpose.msra.mxu0 %v2288
        %2312 = vmatprep.subr.bf16.mxu0 0
        %2313 = vmatpush1.bf16.xpose.msra.mxu0 %v2291
        %2314 = vmatprep.subr.bf16.mxu0 0
        %2315 = vmatpush1.bf16.xpose.msra.mxu0 %v2294
        %2316 = vmatprep.subr.bf16.mxu0 0
        %2317 = vmatpush1.bf16.xpose.msra.mxu0 %v2297
        %2318 = vmatprep.subr.bf16.mxu0 0
        %2319 = vmatpush1.bf16.xpose.msra.mxu0 %v2300
        %2320 = vmatprep.subr.bf16.mxu0 0
        %2321 = vmatpush1.bf16.xpose.msra.mxu0 0
        %2322 = vmatprep.subr.bf16.mxu0 0
        %2323 = vmatpush1.bf16.xpose.msra.mxu0 0
        %2324 = vmatprep.subr.bf16.mxu0 0
        %2325 = vmatpush1.bf16.xpose.msra.mxu0 0
        %2326 = vmatprep.subr.bf16.mxu0 0
        %2327 = vmatpush1.bf16.xpose.msra.mxu0 0
        %2328 = vmatprep.subr.bf16.mxu0 0
        %2329 = vmatpush1.bf16.xpose.msra.mxu0 0
        %2330 = vmatprep.subr.bf16.mxu0 0
        %2331 = vmatpush1.bf16.xpose.msra.mxu0 0
        %2332 = vmatprep.subr.bf16.mxu0 0
        %2333 = vmatpush1.bf16.xpose.msra.mxu0 0
        %2334 = vmatprep.mubr.bf16.mxu0 0
        %2335 = vmatmul.mubr.bf16.gmra.mrb[0].mxu0 %v2249
        %v2336 = vpop.f32.mrb[0].mxu0
        %v2337 = vadd.f32 0.0, %v2336
        %v2338 = vpop.f32.mrb[0].mxu0
        %v2339 = vadd.f32 0.0, %v2338
        %v2340 = vpop.f32.mrb[0].mxu0
        %v2341 = vadd.f32 0.0, %v2340
        %v2342 = vpop.f32.mrb[0].mxu0
        %v2343 = vadd.f32 0.0, %v2342
        %2344 = vmatprep.mubr.bf16.mxu0 0
        %2345 = vmatmul.mubr.bf16.gmra.mrb[0].mxu0 %v2252
        %v2346 = vpop.f32.mrb[0].mxu0
        %v2347 = vadd.f32 0.0, %v2346
        %v2348 = vpop.f32.mrb[0].mxu0
        %v2349 = vadd.f32 0.0, %v2348
        %v2350 = vpop.f32.mrb[0].mxu0
        %v2351 = vadd.f32 0.0, %v2350
        %v2352 = vpop.f32.mrb[0].mxu0
        %v2353 = vadd.f32 0.0, %v2352
        %2354 = vmatprep.mubr.bf16.mxu0 0
        %2355 = vmatmul.mubr.bf16.gmra.mrb[0].mxu0 %v2255
        %v2356 = vpop.f32.mrb[0].mxu0
        %v2357 = vadd.f32 0.0, %v2356
        %v2358 = vpop.f32.mrb[0].mxu0
        %v2359 = vadd.f32 0.0, %v2358
        %v2360 = vpop.f32.mrb[0].mxu0
        %v2361 = vadd.f32 0.0, %v2360
        %v2362 = vpop.f32.mrb[0].mxu0
        %v2363 = vadd.f32 0.0, %v2362
        %2364 = vmatprep.mubr.bf16.mxu0 0
        %2365 = vmatmul.mubr.bf16.gmra.mrb[0].mxu0 %v2258
        %v2366 = vpop.f32.mrb[0].mxu0
        %v2367 = vadd.f32 0.0, %v2366
        %v2368 = vpop.f32.mrb[0].mxu0
        %v2369 = vadd.f32 0.0, %v2368
        %v2370 = vpop.f32.mrb[0].mxu0
        %v2371 = vadd.f32 0.0, %v2370
        %v2372 = vpop.f32.mrb[0].mxu0
        %v2373 = vadd.f32 0.0, %v2372
        %2374 = vmatprep.mubr.bf16.mxu0 0
        %2375 = vmatmul.mubr.bf16.gmra.mrb[0].mxu0 %v2261
        %v2376 = vpop.f32.mrb[0].mxu0
        %v2377 = vadd.f32 0.0, %v2376
        %v2378 = vpop.f32.mrb[0].mxu0
        %v2379 = vadd.f32 0.0, %v2378
        %v2380 = vpop.f32.mrb[0].mxu0
        %v2381 = vadd.f32 0.0, %v2380
        %v2382 = vpop.f32.mrb[0].mxu0
        %v2383 = vadd.f32 0.0, %v2382
        %2384 = vmatprep.mubr.bf16.mxu0 0
        %2385 = vmatmul.mubr.bf16.gmra.mrb[0].mxu0 %v2264
        %v2386 = vpop.f32.mrb[0].mxu0
        %v2387 = vadd.f32 0.0, %v2386
        %v2388 = vpop.f32.mrb[0].mxu0
        %v2389 = vadd.f32 0.0, %v2388
        %v2390 = vpop.f32.mrb[0].mxu0
        %v2391 = vadd.f32 0.0, %v2390
        %v2392 = vpop.f32.mrb[0].mxu0
        %v2393 = vadd.f32 0.0, %v2392
        %2394 = vmatprep.mubr.bf16.mxu0 0
        %2395 = vmatmul.mubr.bf16.gmra.mrb[0].mxu0 %v2267
        %v2396 = vpop.f32.mrb[0].mxu0
        %v2397 = vadd.f32 0.0, %v2396
        %v2398 = vpop.f32.mrb[0].mxu0
        %v2399 = vadd.f32 0.0, %v2398
        %v2400 = vpop.f32.mrb[0].mxu0
        %v2401 = vadd.f32 0.0, %v2400
        %v2402 = vpop.f32.mrb[0].mxu0
        %v2403 = vadd.f32 0.0, %v2402
        %2404 = vmatprep.mubr.bf16.mxu0 0
        %2405 = vmatmul.mubr.bf16.gmra.mrb[0].mxu0 %v2270
        %v2406 = vpop.f32.mrb[0].mxu0
        %v2407 = vadd.f32 0.0, %v2406
        %v2408 = vpop.f32.mrb[0].mxu0
        %v2409 = vadd.f32 0.0, %v2408
        %v2410 = vpop.f32.mrb[0].mxu0
        %v2411 = vadd.f32 0.0, %v2410
        %v2412 = vpop.f32.mrb[0].mxu0
        %v2413 = vadd.f32 0.0, %v2412
        %2414 = vmatprep.mubr.bf16.mxu0 0
        %2415 = vmatmul.mubr.bf16.gmra.mrb[0].mxu0 %v2273
        %v2416 = vpop.f32.mrb[0].mxu0
        %v2417 = vadd.f32 0.0, %v2416
        %v2418 = vpop.f32.mrb[0].mxu0
        %v2419 = vadd.f32 0.0, %v2418
        %v2420 = vpop.f32.mrb[0].mxu0
        %v2421 = vadd.f32 0.0, %v2420
        %v2422 = vpop.f32.mrb[0].mxu0
        %v2423 = vadd.f32 0.0, %v2422
        %2424 = vdwg.mxu0
        %v2425 = vmul.f32 %v2337, 0.17677669
        %v2426 = vmul.f32 %v2339, 0.17677669
        %v2427 = vmul.f32 %v2341, 0.17677669
        %v2428 = vmul.f32 %v2343, 0.17677669
        %v2429 = vmul.f32 %v2347, 0.17677669
        %v2430 = vmul.f32 %v2349, 0.17677669
        %v2431 = vmul.f32 %v2351, 0.17677669
        %v2432 = vmul.f32 %v2353, 0.17677669
        %v2433 = vmul.f32 %v2357, 0.17677669
        %v2434 = vmul.f32 %v2359, 0.17677669
        %v2435 = vmul.f32 %v2361, 0.17677669
        %v2436 = vmul.f32 %v2363, 0.17677669
        %v2437 = vmul.f32 %v2367, 0.17677669
        %v2438 = vmul.f32 %v2369, 0.17677669
        %v2439 = vmul.f32 %v2371, 0.17677669
        %v2440 = vmul.f32 %v2373, 0.17677669
        %v2441 = vmul.f32 %v2377, 0.17677669
        %v2442 = vmul.f32 %v2379, 0.17677669
        %v2443 = vmul.f32 %v2381, 0.17677669
        %v2444 = vmul.f32 %v2383, 0.17677669
        %v2445 = vmul.f32 %v2387, 0.17677669
        %v2446 = vmul.f32 %v2389, 0.17677669
        %v2447 = vmul.f32 %v2391, 0.17677669
        %v2448 = vmul.f32 %v2393, 0.17677669
        %v2449 = vmul.f32 %v2397, 0.17677669
        %v2450 = vmul.f32 %v2399, 0.17677669
        %v2451 = vmul.f32 %v2401, 0.17677669
        %v2452 = vmul.f32 %v2403, 0.17677669
        %v2453 = vmul.f32 %v2407, 0.17677669
        %v2454 = vmul.f32 %v2409, 0.17677669
        %v2455 = vmul.f32 %v2411, 0.17677669
        %v2456 = vmul.f32 %v2413, 0.17677669
        %v2457 = vmul.f32 %v2417, 0.17677669
        %v2458 = vmul.f32 %v2419, 0.17677669
        %v2459 = vmul.f32 %v2421, 0.17677669
        %v2460 = vmul.f32 %v2423, 0.17677669
        %v2461 = vadd.f32 %v2425, %v1442
        %v2462 = vadd.f32 %v2426, %v1443
        %v2463 = vadd.f32 %v2427, %v1444
        %v2464 = vadd.f32 %v2428, %v1445
        %v2465 = vadd.f32 %v2429, %v1446
        %v2466 = vadd.f32 %v2430, %v1447
        %v2467 = vadd.f32 %v2431, %v1448
        %v2468 = vadd.f32 %v2432, %v1449
        %v2469 = vadd.f32 %v2433, %v1450
        %v2470 = vadd.f32 %v2434, %v1451
        %v2471 = vadd.f32 %v2435, %v1452
        %v2472 = vadd.f32 %v2436, %v1453
        %v2473 = vadd.f32 %v2437, %v1454
        %v2474 = vadd.f32 %v2438, %v1455
        %v2475 = vadd.f32 %v2439, %v1456
        %v2476 = vadd.f32 %v2440, %v1457
        %v2477 = vadd.f32 %v2441, %v1458
        %v2478 = vadd.f32 %v2442, %v1459
        %v2479 = vadd.f32 %v2443, %v1460
        %v2480 = vadd.f32 %v2444, %v1461
        %v2481 = vadd.f32 %v2445, %v1462
        %v2482 = vadd.f32 %v2446, %v1463
        %v2483 = vadd.f32 %v2447, %v1464
        %v2484 = vadd.f32 %v2448, %v1465
        %v2485 = vadd.f32 %v2449, %v1466
        %v2486 = vadd.f32 %v2450, %v1467
        %v2487 = vadd.f32 %v2451, %v1468
        %v2488 = vadd.f32 %v2452, %v1469
        %v2489 = vadd.f32 %v2453, %v1470
        %v2490 = vadd.f32 %v2454, %v1471
        %v2491 = vadd.f32 %v2455, %v1472
        %v2492 = vadd.f32 %v2456, %v1473
        %v2493 = vadd.f32 %v2457, %v1474
        %v2494 = vadd.f32 %v2458, %v1475
        %v2495 = vadd.f32 %v2459, %v1476
        %v2496 = vadd.f32 %v2460, %v1477
        %v2497 = vsel %vm1728, %v2462, -inf
        %v2498 = vmax.f32 %v2461, %v2497
        %2499 = vmax.xlane.f32.xlu0 %v2498
        %v2500 = vpop.xlane.xlu0 %2499
        %v2501 = vsel %vm1728, %v2464, -inf
        %v2502 = vmax.f32 %v2463, %v2501
        %2503 = vmax.xlane.f32.xlu0 %v2502
        %v2504 = vpop.xlane.xlu0 %2503
        %v2505 = vsel %vm1728, %v2466, -inf
        %v2506 = vmax.f32 %v2465, %v2505
        %2507 = vmax.xlane.f32.xlu0 %v2506
        %v2508 = vpop.xlane.xlu0 %2507
        %v2509 = vsel %vm1728, %v2468, -inf
        %v2510 = vmax.f32 %v2467, %v2509
        %2511 = vmax.xlane.f32.xlu0 %v2510
        %v2512 = vpop.xlane.xlu0 %2511
        %v2513 = vsel %vm1728, %v2470, -inf
        %v2514 = vmax.f32 %v2469, %v2513
        %2515 = vmax.xlane.f32.xlu0 %v2514
        %v2516 = vpop.xlane.xlu0 %2515
        %v2517 = vsel %vm1728, %v2472, -inf
        %v2518 = vmax.f32 %v2471, %v2517
        %2519 = vmax.xlane.f32.xlu0 %v2518
        %v2520 = vpop.xlane.xlu0 %2519
        %v2521 = vsel %vm1728, %v2474, -inf
        %v2522 = vmax.f32 %v2473, %v2521
        %2523 = vmax.xlane.f32.xlu0 %v2522
        %v2524 = vpop.xlane.xlu0 %2523
        %v2525 = vsel %vm1728, %v2476, -inf
        %v2526 = vmax.f32 %v2475, %v2525
        %2527 = vmax.xlane.f32.xlu0 %v2526
        %v2528 = vpop.xlane.xlu0 %2527
        %v2529 = vsel %vm1728, %v2478, -inf
        %v2530 = vmax.f32 %v2477, %v2529
        %2531 = vmax.xlane.f32.xlu0 %v2530
        %v2532 = vpop.xlane.xlu0 %2531
        %v2533 = vsel %vm1728, %v2480, -inf
        %v2534 = vmax.f32 %v2479, %v2533
        %2535 = vmax.xlane.f32.xlu0 %v2534
        %v2536 = vpop.xlane.xlu0 %2535
        %v2537 = vsel %vm1728, %v2482, -inf
        %v2538 = vmax.f32 %v2481, %v2537
        %2539 = vmax.xlane.f32.xlu0 %v2538
        %v2540 = vpop.xlane.xlu0 %2539
        %v2541 = vsel %vm1728, %v2484, -inf
        %v2542 = vmax.f32 %v2483, %v2541
        %2543 = vmax.xlane.f32.xlu0 %v2542
        %v2544 = vpop.xlane.xlu0 %2543
        %v2545 = vsel %vm1728, %v2486, -inf
        %v2546 = vmax.f32 %v2485, %v2545
        %2547 = vmax.xlane.f32.xlu0 %v2546
        %v2548 = vpop.xlane.xlu0 %2547
        %v2549 = vsel %vm1728, %v2488, -inf
        %v2550 = vmax.f32 %v2487, %v2549
        %2551 = vmax.xlane.f32.xlu0 %v2550
        %v2552 = vpop.xlane.xlu0 %2551
        %v2553 = vsel %vm1728, %v2490, -inf
        %v2554 = vmax.f32 %v2489, %v2553
        %2555 = vmax.xlane.f32.xlu0 %v2554
        %v2556 = vpop.xlane.xlu0 %2555
        %v2557 = vsel %vm1728, %v2492, -inf
        %v2558 = vmax.f32 %v2491, %v2557
        %2559 = vmax.xlane.f32.xlu0 %v2558
        %v2560 = vpop.xlane.xlu0 %2559
        %v2561 = vsel %vm1728, %v2494, -inf
        %v2562 = vmax.f32 %v2493, %v2561
        %2563 = vmax.xlane.f32.xlu0 %v2562
        %v2564 = vpop.xlane.xlu0 %2563
        %v2565 = vsel %vm1728, %v2496, -inf
        %v2566 = vmax.f32 %v2495, %v2565
        %2567 = vmax.xlane.f32.xlu0 %v2566
        %v2568 = vpop.xlane.xlu0 %2567
        %v2569 = vsub.f32 %v2461, %v2500
        %v2570 = vsub.f32 %v2462, %v2500
        %v2571 = vsub.f32 %v2463, %v2504
        %v2572 = vsub.f32 %v2464, %v2504
        %v2573 = vsub.f32 %v2465, %v2508
        %v2574 = vsub.f32 %v2466, %v2508
        %v2575 = vsub.f32 %v2467, %v2512
        %v2576 = vsub.f32 %v2468, %v2512
        %v2577 = vsub.f32 %v2469, %v2516
        %v2578 = vsub.f32 %v2470, %v2516
        %v2579 = vsub.f32 %v2471, %v2520
        %v2580 = vsub.f32 %v2472, %v2520
        %v2581 = vsub.f32 %v2473, %v2524
        %v2582 = vsub.f32 %v2474, %v2524
        %v2583 = vsub.f32 %v2475, %v2528
        %v2584 = vsub.f32 %v2476, %v2528
        %v2585 = vsub.f32 %v2477, %v2532
        %v2586 = vsub.f32 %v2478, %v2532
        %v2587 = vsub.f32 %v2479, %v2536
        %v2588 = vsub.f32 %v2480, %v2536
        %v2589 = vsub.f32 %v2481, %v2540
        %v2590 = vsub.f32 %v2482, %v2540
        %v2591 = vsub.f32 %v2483, %v2544
        %v2592 = vsub.f32 %v2484, %v2544
        %v2593 = vsub.f32 %v2485, %v2548
        %v2594 = vsub.f32 %v2486, %v2548
        %v2595 = vsub.f32 %v2487, %v2552
        %v2596 = vsub.f32 %v2488, %v2552
        %v2597 = vsub.f32 %v2489, %v2556
        %v2598 = vsub.f32 %v2490, %v2556
        %v2599 = vsub.f32 %v2491, %v2560
        %v2600 = vsub.f32 %v2492, %v2560
        %v2601 = vsub.f32 %v2493, %v2564
        %v2602 = vsub.f32 %v2494, %v2564
        %v2603 = vsub.f32 %v2495, %v2568
        %v2604 = vsub.f32 %v2496, %v2568
        %v2605 = vmul.f32 %v2569, 1.442695
        %v2606 = vpow.pop %v2605
        %v2607 = vmul.f32 %v2570, 1.442695
        %v2608 = vpow.pop %v2607
        %v2609 = vmul.f32 %v2571, 1.442695
        %v2610 = vpow.pop %v2609
        %v2611 = vmul.f32 %v2572, 1.442695
        %v2612 = vpow.pop %v2611
        %v2613 = vmul.f32 %v2573, 1.442695
        %v2614 = vpow.pop %v2613
        %v2615 = vmul.f32 %v2574, 1.442695
        %v2616 = vpow.pop %v2615
        %v2617 = vmul.f32 %v2575, 1.442695
        %v2618 = vpow.pop %v2617
        %v2619 = vmul.f32 %v2576, 1.442695
        %v2620 = vpow.pop %v2619
        %v2621 = vmul.f32 %v2577, 1.442695
        %v2622 = vpow.pop %v2621
        %v2623 = vmul.f32 %v2578, 1.442695
        %v2624 = vpow.pop %v2623
        %v2625 = vmul.f32 %v2579, 1.442695
        %v2626 = vpow.pop %v2625
        %v2627 = vmul.f32 %v2580, 1.442695
        %v2628 = vpow.pop %v2627
        %v2629 = vmul.f32 %v2581, 1.442695
        %v2630 = vpow.pop %v2629
        %v2631 = vmul.f32 %v2582, 1.442695
        %v2632 = vpow.pop %v2631
        %v2633 = vmul.f32 %v2583, 1.442695
        %v2634 = vpow.pop %v2633
        %v2635 = vmul.f32 %v2584, 1.442695
        %v2636 = vpow.pop %v2635
        %v2637 = vmul.f32 %v2585, 1.442695
        %v2638 = vpow.pop %v2637
        %v2639 = vmul.f32 %v2586, 1.442695
        %v2640 = vpow.pop %v2639
        %v2641 = vmul.f32 %v2587, 1.442695
        %v2642 = vpow.pop %v2641
        %v2643 = vmul.f32 %v2588, 1.442695
        %v2644 = vpow.pop %v2643
        %v2645 = vmul.f32 %v2589, 1.442695
        %v2646 = vpow.pop %v2645
        %v2647 = vmul.f32 %v2590, 1.442695
        %v2648 = vpow.pop %v2647
        %v2649 = vmul.f32 %v2591, 1.442695
        %v2650 = vpow.pop %v2649
        %v2651 = vmul.f32 %v2592, 1.442695
        %v2652 = vpow.pop %v2651
        %v2653 = vmul.f32 %v2593, 1.442695
        %v2654 = vpow.pop %v2653
        %v2655 = vmul.f32 %v2594, 1.442695
        %v2656 = vpow.pop %v2655
        %v2657 = vmul.f32 %v2595, 1.442695
        %v2658 = vpow.pop %v2657
        %v2659 = vmul.f32 %v2596, 1.442695
        %v2660 = vpow.pop %v2659
        %v2661 = vmul.f32 %v2597, 1.442695
        %v2662 = vpow.pop %v2661
        %v2663 = vmul.f32 %v2598, 1.442695
        %v2664 = vpow.pop %v2663
        %v2665 = vmul.f32 %v2599, 1.442695
        %v2666 = vpow.pop %v2665
        %v2667 = vmul.f32 %v2600, 1.442695
        %v2668 = vpow.pop %v2667
        %v2669 = vmul.f32 %v2601, 1.442695
        %v2670 = vpow.pop %v2669
        %v2671 = vmul.f32 %v2602, 1.442695
        %v2672 = vpow.pop %v2671
        %v2673 = vmul.f32 %v2603, 1.442695
        %v2674 = vpow.pop %v2673
        %v2675 = vmul.f32 %v2604, 1.442695
        %v2676 = vpow.pop %v2675
        %v2677 = vsel %vm1728, %v2608, 0.0
        %v2678 = vadd.f32 %v2606, %v2677
        %2679 = vadd.xlane.f32.xlu0 %v2678
        %v2680 = vpop.xlane.xlu0 %2679
        %v2681 = vsel %vm1728, %v2612, 0.0
        %v2682 = vadd.f32 %v2610, %v2681
        %2683 = vadd.xlane.f32.xlu0 %v2682
        %v2684 = vpop.xlane.xlu0 %2683
        %v2685 = vsel %vm1728, %v2616, 0.0
        %v2686 = vadd.f32 %v2614, %v2685
        %2687 = vadd.xlane.f32.xlu0 %v2686
        %v2688 = vpop.xlane.xlu0 %2687
        %v2689 = vsel %vm1728, %v2620, 0.0
        %v2690 = vadd.f32 %v2618, %v2689
        %2691 = vadd.xlane.f32.xlu0 %v2690
        %v2692 = vpop.xlane.xlu0 %2691
        %v2693 = vsel %vm1728, %v2624, 0.0
        %v2694 = vadd.f32 %v2622, %v2693
        %2695 = vadd.xlane.f32.xlu0 %v2694
        %v2696 = vpop.xlane.xlu0 %2695
        %v2697 = vsel %vm1728, %v2628, 0.0
        %v2698 = vadd.f32 %v2626, %v2697
        %2699 = vadd.xlane.f32.xlu0 %v2698
        %v2700 = vpop.xlane.xlu0 %2699
        %v2701 = vsel %vm1728, %v2632, 0.0
        %v2702 = vadd.f32 %v2630, %v2701
        %2703 = vadd.xlane.f32.xlu0 %v2702
        %v2704 = vpop.xlane.xlu0 %2703
        %v2705 = vsel %vm1728, %v2636, 0.0
        %v2706 = vadd.f32 %v2634, %v2705
        %2707 = vadd.xlane.f32.xlu0 %v2706
        %v2708 = vpop.xlane.xlu0 %2707
        %v2709 = vsel %vm1728, %v2640, 0.0
        %v2710 = vadd.f32 %v2638, %v2709
        %2711 = vadd.xlane.f32.xlu0 %v2710
        %v2712 = vpop.xlane.xlu0 %2711
        %v2713 = vsel %vm1728, %v2644, 0.0
        %v2714 = vadd.f32 %v2642, %v2713
        %2715 = vadd.xlane.f32.xlu0 %v2714
        %v2716 = vpop.xlane.xlu0 %2715
        %v2717 = vsel %vm1728, %v2648, 0.0
        %v2718 = vadd.f32 %v2646, %v2717
        %2719 = vadd.xlane.f32.xlu0 %v2718
        %v2720 = vpop.xlane.xlu0 %2719
        %v2721 = vsel %vm1728, %v2652, 0.0
        %v2722 = vadd.f32 %v2650, %v2721
        %2723 = vadd.xlane.f32.xlu0 %v2722
        %v2724 = vpop.xlane.xlu0 %2723
        %v2725 = vsel %vm1728, %v2656, 0.0
        %v2726 = vadd.f32 %v2654, %v2725
        %2727 = vadd.xlane.f32.xlu0 %v2726
        %v2728 = vpop.xlane.xlu0 %2727
        %v2729 = vsel %vm1728, %v2660, 0.0
        %v2730 = vadd.f32 %v2658, %v2729
        %2731 = vadd.xlane.f32.xlu0 %v2730
        %v2732 = vpop.xlane.xlu0 %2731
        %v2733 = vsel %vm1728, %v2664, 0.0
        %v2734 = vadd.f32 %v2662, %v2733
        %2735 = vadd.xlane.f32.xlu0 %v2734
        %v2736 = vpop.xlane.xlu0 %2735
        %v2737 = vsel %vm1728, %v2668, 0.0
        %v2738 = vadd.f32 %v2666, %v2737
        %2739 = vadd.xlane.f32.xlu0 %v2738
        %v2740 = vpop.xlane.xlu0 %2739
        %v2741 = vsel %vm1728, %v2672, 0.0
        %v2742 = vadd.f32 %v2670, %v2741
        %2743 = vadd.xlane.f32.xlu0 %v2742
        %v2744 = vpop.xlane.xlu0 %2743
        %v2745 = vsel %vm1728, %v2676, 0.0
        %v2746 = vadd.f32 %v2674, %v2745
        %2747 = vadd.xlane.f32.xlu0 %v2746
        %v2748 = vpop.xlane.xlu0 %2747
        %v2749 = vrcp.pop %v2680
        %v2750 = vrcp.pop %v2684
        %v2751 = vrcp.pop %v2688
        %v2752 = vrcp.pop %v2692
        %v2753 = vrcp.pop %v2696
        %v2754 = vrcp.pop %v2700
        %v2755 = vrcp.pop %v2704
        %v2756 = vrcp.pop %v2708
        %v2757 = vrcp.pop %v2712
        %v2758 = vrcp.pop %v2716
        %v2759 = vrcp.pop %v2720
        %v2760 = vrcp.pop %v2724
        %v2761 = vrcp.pop %v2728
        %v2762 = vrcp.pop %v2732
        %v2763 = vrcp.pop %v2736
        %v2764 = vrcp.pop %v2740
        %v2765 = vrcp.pop %v2744
        %v2766 = vrcp.pop %v2748
        %v2767 = vmul.f32 %v2606, %v2749
        %v2768 = vmul.f32 %v2608, %v2749
        %v2769 = vmul.f32 %v2610, %v2750
        %v2770 = vmul.f32 %v2612, %v2750
        %v2771 = vmul.f32 %v2614, %v2751
        %v2772 = vmul.f32 %v2616, %v2751
        %v2773 = vmul.f32 %v2618, %v2752
        %v2774 = vmul.f32 %v2620, %v2752
        %v2775 = vmul.f32 %v2622, %v2753
        %v2776 = vmul.f32 %v2624, %v2753
        %v2777 = vmul.f32 %v2626, %v2754
        %v2778 = vmul.f32 %v2628, %v2754
        %v2779 = vmul.f32 %v2630, %v2755
        %v2780 = vmul.f32 %v2632, %v2755
        %v2781 = vmul.f32 %v2634, %v2756
        %v2782 = vmul.f32 %v2636, %v2756
        %v2783 = vmul.f32 %v2638, %v2757
        %v2784 = vmul.f32 %v2640, %v2757
        %v2785 = vmul.f32 %v2642, %v2758
        %v2786 = vmul.f32 %v2644, %v2758
        %v2787 = vmul.f32 %v2646, %v2759
        %v2788 = vmul.f32 %v2648, %v2759
        %v2789 = vmul.f32 %v2650, %v2760
        %v2790 = vmul.f32 %v2652, %v2760
        %v2791 = vmul.f32 %v2654, %v2761
        %v2792 = vmul.f32 %v2656, %v2761
        %v2793 = vmul.f32 %v2658, %v2762
        %v2794 = vmul.f32 %v2660, %v2762
        %v2795 = vmul.f32 %v2662, %v2763
        %v2796 = vmul.f32 %v2664, %v2763
        %v2797 = vmul.f32 %v2666, %v2764
        %v2798 = vmul.f32 %v2668, %v2764
        %v2799 = vmul.f32 %v2670, %v2765
        %v2800 = vmul.f32 %v2672, %v2765
        %v2801 = vmul.f32 %v2674, %v2766
        %v2802 = vmul.f32 %v2676, %v2766
        %v2803 = vpack.c.bf16 %v2769, %v2767
        %v2804 = vpack.c.bf16 %v2770, %v2768
        %v2805 = vpack.c.bf16 %v2773, %v2771
        %v2806 = vpack.c.bf16 %v2774, %v2772
        %v2807 = vpack.c.bf16 %v2777, %v2775
        %v2808 = vpack.c.bf16 %v2778, %v2776
        %v2809 = vpack.c.bf16 %v2781, %v2779
        %v2810 = vpack.c.bf16 %v2782, %v2780
        %v2811 = vpack.c.bf16 %v2785, %v2783
        %v2812 = vpack.c.bf16 %v2786, %v2784
        %v2813 = vpack.c.bf16 %v2789, %v2787
        %v2814 = vpack.c.bf16 %v2790, %v2788
        %v2815 = vpack.c.bf16 %v2793, %v2791
        %v2816 = vpack.c.bf16 %v2794, %v2792
        %v2817 = vpack.c.bf16 %v2797, %v2795
        %v2818 = vpack.c.bf16 %v2798, %v2796
        %v2819 = vpack.c.bf16 %v2801, %v2799
        %v2820 = vpack.c.bf16 %v2802, %v2800
        %2830 = vrot.lane.b32.xlu0 %v1401, 96
        %v2831 = vpop.permute.xlu0 %2830
        %2832 = vrot.lane.b32.xlu0 %v1404, 96
        %v2833 = vpop.permute.xlu0 %2832
        %2834 = vrot.lane.b32.xlu0 %v1407, 96
        %v2835 = vpop.permute.xlu0 %2834
        %2836 = vrot.lane.b32.xlu0 %v1410, 96
        %v2837 = vpop.permute.xlu0 %2836
        %2838 = vrot.lane.b32.xlu0 %v1413, 96
        %v2839 = vpop.permute.xlu0 %2838
        %2840 = vrot.lane.b32.xlu0 %v1416, 96
        %v2841 = vpop.permute.xlu0 %2840
        %2842 = vrot.lane.b32.xlu0 %v1419, 96
        %v2843 = vpop.permute.xlu0 %2842
        %2844 = vrot.lane.b32.xlu0 %v1422, 96
        %v2845 = vpop.permute.xlu0 %2844
        %2846 = vrot.lane.b32.xlu0 %v1425, 96
        %v2847 = vpop.permute.xlu0 %2846
        %v2858 = vsel %vm1728, %v2804, 0
        %v2861 = vsel %vm1728, %v2806, 0
        %v2864 = vsel %vm1728, %v2808, 0
        %v2867 = vsel %vm1728, %v2810, 0
        %v2870 = vsel %vm1728, %v2812, 0
        %v2873 = vsel %vm1728, %v2814, 0
        %v2876 = vsel %vm1728, %v2816, 0
        %v2879 = vsel %vm1728, %v2818, 0
        %v2882 = vsel %vm1728, %v2820, 0
        %2884 = vmatprep.subr.bf16.mxu0 0
        %2885 = vmatpush1.bf16.msra.mxu0 %v2831
        %2886 = vmatprep.subr.bf16.mxu0 0
        %2887 = vmatpush1.bf16.msra.mxu0 %v2833
        %2888 = vmatprep.subr.bf16.mxu0 0
        %2889 = vmatpush1.bf16.msra.mxu0 %v2835
        %2890 = vmatprep.subr.bf16.mxu0 0
        %2891 = vmatpush1.bf16.msra.mxu0 %v2837
        %2892 = vmatprep.subr.bf16.mxu0 0
        %2893 = vmatpush1.bf16.msra.mxu0 %v2839
        %2894 = vmatprep.subr.bf16.mxu0 0
        %2895 = vmatpush1.bf16.msra.mxu0 %v2841
        %2896 = vmatprep.subr.bf16.mxu0 0
        %2897 = vmatpush1.bf16.msra.mxu0 %v2843
        %2898 = vmatprep.subr.bf16.mxu0 0
        %2899 = vmatpush1.bf16.msra.mxu0 %v2845
        %2900 = vmatprep.subr.bf16.mxu0 0
        %2901 = vmatpush1.bf16.msra.mxu0 %v2847
        %2902 = vmatprep.subr.bf16.mxu0 0
        %2903 = vmatpush1.bf16.msra.mxu0 0
        %2904 = vmatprep.subr.bf16.mxu0 0
        %2905 = vmatpush1.bf16.msra.mxu0 0
        %2906 = vmatprep.subr.bf16.mxu0 0
        %2907 = vmatpush1.bf16.msra.mxu0 0
        %2908 = vmatprep.subr.bf16.mxu0 0
        %2909 = vmatpush1.bf16.msra.mxu0 0
        %2910 = vmatprep.subr.bf16.mxu0 0
        %2911 = vmatpush1.bf16.msra.mxu0 0
        %2912 = vmatprep.subr.bf16.mxu0 0
        %2913 = vmatpush1.bf16.msra.mxu0 0
        %2914 = vmatprep.subr.bf16.mxu0 0
        %2915 = vmatpush1.bf16.msra.mxu0 0
        %2916 = vmatprep.mubr.bf16.mxu0 %v2858
        %2917 = vmatmul.mubr.bf16.gmra.mrb[0].mxu0 %v2803
        %v2918 = vpop.f32.mrb[0].mxu0
        %v2919 = vadd.f32 0.0, %v2918
        %v2920 = vpop.f32.mrb[0].mxu0
        %v2921 = vpop.f32.mrb[0].mxu0
        %v2922 = vadd.f32 0.0, %v2921
        %v2923 = vpop.f32.mrb[0].mxu0
        %2924 = vmatprep.mubr.bf16.mxu0 %v2861
        %2925 = vmatmul.mubr.bf16.gmra.mrb[0].mxu0 %v2805
        %v2926 = vpop.f32.mrb[0].mxu0
        %v2927 = vadd.f32 0.0, %v2926
        %v2928 = vpop.f32.mrb[0].mxu0
        %v2929 = vpop.f32.mrb[0].mxu0
        %v2930 = vadd.f32 0.0, %v2929
        %v2931 = vpop.f32.mrb[0].mxu0
        %2932 = vmatprep.mubr.bf16.mxu0 %v2864
        %2933 = vmatmul.mubr.bf16.gmra.mrb[0].mxu0 %v2807
        %v2934 = vpop.f32.mrb[0].mxu0
        %v2935 = vadd.f32 0.0, %v2934
        %v2936 = vpop.f32.mrb[0].mxu0
        %v2937 = vpop.f32.mrb[0].mxu0
        %v2938 = vadd.f32 0.0, %v2937
        %v2939 = vpop.f32.mrb[0].mxu0
        %2940 = vmatprep.mubr.bf16.mxu0 %v2867
        %2941 = vmatmul.mubr.bf16.gmra.mrb[0].mxu0 %v2809
        %v2942 = vpop.f32.mrb[0].mxu0
        %v2943 = vadd.f32 0.0, %v2942
        %v2944 = vpop.f32.mrb[0].mxu0
        %v2945 = vpop.f32.mrb[0].mxu0
        %v2946 = vadd.f32 0.0, %v2945
        %v2947 = vpop.f32.mrb[0].mxu0
        %2948 = vmatprep.mubr.bf16.mxu0 %v2870
        %2949 = vmatmul.mubr.bf16.gmra.mrb[0].mxu0 %v2811
        %v2950 = vpop.f32.mrb[0].mxu0
        %v2951 = vadd.f32 0.0, %v2950
        %v2952 = vpop.f32.mrb[0].mxu0
        %v2953 = vpop.f32.mrb[0].mxu0
        %v2954 = vadd.f32 0.0, %v2953
        %v2955 = vpop.f32.mrb[0].mxu0
        %2956 = vmatprep.mubr.bf16.mxu0 %v2873
        %2957 = vmatmul.mubr.bf16.gmra.mrb[0].mxu0 %v2813
        %v2958 = vpop.f32.mrb[0].mxu0
        %v2959 = vadd.f32 0.0, %v2958
        %v2960 = vpop.f32.mrb[0].mxu0
        %v2961 = vpop.f32.mrb[0].mxu0
        %v2962 = vadd.f32 0.0, %v2961
        %v2963 = vpop.f32.mrb[0].mxu0
        %2964 = vmatprep.mubr.bf16.mxu0 %v2876
        %2965 = vmatmul.mubr.bf16.gmra.mrb[0].mxu0 %v2815
        %v2966 = vpop.f32.mrb[0].mxu0
        %v2967 = vadd.f32 0.0, %v2966
        %v2968 = vpop.f32.mrb[0].mxu0
        %v2969 = vpop.f32.mrb[0].mxu0
        %v2970 = vadd.f32 0.0, %v2969
        %v2971 = vpop.f32.mrb[0].mxu0
        %2972 = vmatprep.mubr.bf16.mxu0 %v2879
        %2973 = vmatmul.mubr.bf16.gmra.mrb[0].mxu0 %v2817
        %v2974 = vpop.f32.mrb[0].mxu0
        %v2975 = vadd.f32 0.0, %v2974
        %v2976 = vpop.f32.mrb[0].mxu0
        %v2977 = vpop.f32.mrb[0].mxu0
        %v2978 = vadd.f32 0.0, %v2977
        %v2979 = vpop.f32.mrb[0].mxu0
        %2980 = vmatprep.mubr.bf16.mxu0 %v2882
        %2981 = vmatmul.mubr.bf16.gmra.mrb[0].mxu0 %v2819
        %v2982 = vpop.f32.mrb[0].mxu0
        %v2983 = vadd.f32 0.0, %v2982
        %v2984 = vpop.f32.mrb[0].mxu0
        %v2985 = vpop.f32.mrb[0].mxu0
        %v2986 = vadd.f32 0.0, %v2985
        %v2987 = vpop.f32.mrb[0].mxu0
        %2988 = vdwg.mxu0
        %v2989 = vpack.c.bf16 %v2922, %v2919
        %v2990 = vpack.c.bf16 %v2930, %v2927
        %v2991 = vpack.c.bf16 %v2938, %v2935
        %v2992 = vpack.c.bf16 %v2946, %v2943
        %v2993 = vpack.c.bf16 %v2954, %v2951
        %v2994 = vpack.c.bf16 %v2962, %v2959
        %v2995 = vpack.c.bf16 %v2970, %v2967
        %v2996 = vpack.c.bf16 %v2978, %v2975
        %v2997 = vpack.c.bf16 %v2986, %v2983
        %v3002 = vunpack.c.l.b16 %v1430
        %v3003 = vunpack.c.l.b16 %v1431
        %v3004 = vunpack.c.l.b16 %v1432
        %v3005 = vunpack.c.l.b16 %v1433
        %v3006 = vpack.c.b16 %v3003, %v3002
        %v3007 = vpack.c.b16 %v3005, %v3004
        %v3011 = vsel %vm1478, %v2989, 0
        %v3014 = vsel %vm1478, %v2990, 0
        %v3017 = vsel %vm1478, %v2991, 0
        %v3020 = vsel %vm1478, %v2992, 0
        %v3023 = vsel %vm1478, %v2993, 0
        %v3026 = vsel %vm1478, %v2994, 0
        %v3029 = vsel %vm1478, %v2995, 0
        %v3032 = vsel %vm1478, %v2996, 0
        %v3035 = vsel %vm1478, %v2997, 0
        %3037 = vmatprep.subr.bf16.mxu0 0
        %3038 = vmatpush1.bf16.msra.mxu0 %v3006
        %3039 = vmatprep.subr.bf16.mxu0 0
        %3040 = vmatpush1.bf16.msra.mxu0 %v3007
        %3041 = vmatprep.subr.bf16.mxu0 0
        %3042 = vmatpush1.bf16.msra.mxu0 0
        %3043 = vmatprep.subr.bf16.mxu0 0
        %3044 = vmatpush1.bf16.msra.mxu0 0
        %3045 = vmatprep.subr.bf16.mxu0 0
        %3046 = vmatpush1.bf16.msra.mxu0 0
        %3047 = vmatprep.subr.bf16.mxu0 0
        %3048 = vmatpush1.bf16.msra.mxu0 0
        %3049 = vmatprep.subr.bf16.mxu0 0
        %3050 = vmatpush1.bf16.msra.mxu0 0
        %3051 = vmatprep.subr.bf16.mxu0 0
        %3052 = vmatpush1.bf16.msra.mxu0 0
        %3053 = vmatprep.subr.bf16.mxu0 0
        %3054 = vmatpush1.bf16.msra.mxu0 0
        %3055 = vmatprep.subr.bf16.mxu0 0
        %3056 = vmatpush1.bf16.msra.mxu0 0
        %3057 = vmatprep.subr.bf16.mxu0 0
        %3058 = vmatpush1.bf16.msra.mxu0 0
        %3059 = vmatprep.subr.bf16.mxu0 0
        %3060 = vmatpush1.bf16.msra.mxu0 0
        %3061 = vmatprep.subr.bf16.mxu0 0
        %3062 = vmatpush1.bf16.msra.mxu0 0
        %3063 = vmatprep.subr.bf16.mxu0 0
        %3064 = vmatpush1.bf16.msra.mxu0 0
        %3065 = vmatprep.subr.bf16.mxu0 0
        %3066 = vmatpush1.bf16.msra.mxu0 0
        %3067 = vmatprep.subr.bf16.mxu0 0
        %3068 = vmatpush1.bf16.msra.mxu0 0
        %3069 = vmatprep.mubr.bf16.mxu0 0
        %3070 = vmatmul.mubr.bf16.gmra.mrb[0].mxu0 %v3011
        %v3071 = vpop.f32.mrb[0].mxu0
        %v3072 = vadd.f32 0.0, %v3071
        %v3073 = vpop.f32.mrb[0].mxu0
        %v3074 = vpop.f32.mrb[0].mxu0
        %v3075 = vadd.f32 0.0, %v3074
        %v3076 = vpop.f32.mrb[0].mxu0
        %3077 = vmatprep.mubr.bf16.mxu0 0
        %3078 = vmatmul.mubr.bf16.gmra.mrb[0].mxu0 %v3014
        %v3079 = vpop.f32.mrb[0].mxu0
        %v3080 = vadd.f32 0.0, %v3079
        %v3081 = vpop.f32.mrb[0].mxu0
        %v3082 = vpop.f32.mrb[0].mxu0
        %v3083 = vadd.f32 0.0, %v3082
        %v3084 = vpop.f32.mrb[0].mxu0
        %3085 = vmatprep.mubr.bf16.mxu0 0
        %3086 = vmatmul.mubr.bf16.gmra.mrb[0].mxu0 %v3017
        %v3087 = vpop.f32.mrb[0].mxu0
        %v3088 = vadd.f32 0.0, %v3087
        %v3089 = vpop.f32.mrb[0].mxu0
        %v3090 = vpop.f32.mrb[0].mxu0
        %v3091 = vadd.f32 0.0, %v3090
        %v3092 = vpop.f32.mrb[0].mxu0
        %3093 = vmatprep.mubr.bf16.mxu0 0
        %3094 = vmatmul.mubr.bf16.gmra.mrb[0].mxu0 %v3020
        %v3095 = vpop.f32.mrb[0].mxu0
        %v3096 = vadd.f32 0.0, %v3095
        %v3097 = vpop.f32.mrb[0].mxu0
        %v3098 = vpop.f32.mrb[0].mxu0
        %v3099 = vadd.f32 0.0, %v3098
        %v3100 = vpop.f32.mrb[0].mxu0
        %3101 = vmatprep.mubr.bf16.mxu0 0
        %3102 = vmatmul.mubr.bf16.gmra.mrb[0].mxu0 %v3023
        %v3103 = vpop.f32.mrb[0].mxu0
        %v3104 = vadd.f32 0.0, %v3103
        %v3105 = vpop.f32.mrb[0].mxu0
        %v3106 = vpop.f32.mrb[0].mxu0
        %v3107 = vadd.f32 0.0, %v3106
        %v3108 = vpop.f32.mrb[0].mxu0
        %3109 = vmatprep.mubr.bf16.mxu0 0
        %3110 = vmatmul.mubr.bf16.gmra.mrb[0].mxu0 %v3026
        %v3111 = vpop.f32.mrb[0].mxu0
        %v3112 = vadd.f32 0.0, %v3111
        %v3113 = vpop.f32.mrb[0].mxu0
        %v3114 = vpop.f32.mrb[0].mxu0
        %v3115 = vadd.f32 0.0, %v3114
        %v3116 = vpop.f32.mrb[0].mxu0
        %3117 = vmatprep.mubr.bf16.mxu0 0
        %3118 = vmatmul.mubr.bf16.gmra.mrb[0].mxu0 %v3029
        %v3119 = vpop.f32.mrb[0].mxu0
        %v3120 = vadd.f32 0.0, %v3119
        %v3121 = vpop.f32.mrb[0].mxu0
        %v3122 = vpop.f32.mrb[0].mxu0
        %v3123 = vadd.f32 0.0, %v3122
        %v3124 = vpop.f32.mrb[0].mxu0
        %3125 = vmatprep.mubr.bf16.mxu0 0
        %3126 = vmatmul.mubr.bf16.gmra.mrb[0].mxu0 %v3032
        %v3127 = vpop.f32.mrb[0].mxu0
        %v3128 = vadd.f32 0.0, %v3127
        %v3129 = vpop.f32.mrb[0].mxu0
        %v3130 = vpop.f32.mrb[0].mxu0
        %v3131 = vadd.f32 0.0, %v3130
        %v3132 = vpop.f32.mrb[0].mxu0
        %3133 = vmatprep.mubr.bf16.mxu0 0
        %3134 = vmatmul.mubr.bf16.gmra.mrb[0].mxu0 %v3035
        %v3135 = vpop.f32.mrb[0].mxu0
        %v3136 = vadd.f32 0.0, %v3135
        %v3137 = vpop.f32.mrb[0].mxu0
        %v3138 = vpop.f32.mrb[0].mxu0
        %v3139 = vadd.f32 0.0, %v3138
        %v3140 = vpop.f32.mrb[0].mxu0
        %3141 = vdwg.mxu0
        %v3146 = vunpack.c.l.b16 %v1426
        %v3147 = vunpack.c.l.b16 %v1427
        %v3148 = vunpack.c.l.b16 %v1428
        %v3149 = vunpack.c.l.b16 %v1429
        %v3150 = vpack.c.b16 %v3147, %v3146
        %v3151 = vpack.c.b16 %v3149, %v3148
        %v3155 = vsel %vm1478, %v2185, 0
        %v3158 = vsel %vm1478, %v2186, 0
        %v3161 = vsel %vm1478, %v2187, 0
        %v3164 = vsel %vm1478, %v2188, 0
        %v3167 = vsel %vm1478, %v2189, 0
        %v3170 = vsel %vm1478, %v2190, 0
        %v3173 = vsel %vm1478, %v2191, 0
        %v3176 = vsel %vm1478, %v2192, 0
        %v3179 = vsel %vm1478, %v2193, 0
        %3181 = vmatprep.subr.bf16.mxu0 0
        %3182 = vmatpush1.bf16.msra.mxu0 %v3150
        %3183 = vmatprep.subr.bf16.mxu0 0
        %3184 = vmatpush1.bf16.msra.mxu0 %v3151
        %3185 = vmatprep.subr.bf16.mxu0 0
        %3186 = vmatpush1.bf16.msra.mxu0 0
        %3187 = vmatprep.subr.bf16.mxu0 0
        %3188 = vmatpush1.bf16.msra.mxu0 0
        %3189 = vmatprep.subr.bf16.mxu0 0
        %3190 = vmatpush1.bf16.msra.mxu0 0
        %3191 = vmatprep.subr.bf16.mxu0 0
        %3192 = vmatpush1.bf16.msra.mxu0 0
        %3193 = vmatprep.subr.bf16.mxu0 0
        %3194 = vmatpush1.bf16.msra.mxu0 0
        %3195 = vmatprep.subr.bf16.mxu0 0
        %3196 = vmatpush1.bf16.msra.mxu0 0
        %3197 = vmatprep.subr.bf16.mxu0 0
        %3198 = vmatpush1.bf16.msra.mxu0 0
        %3199 = vmatprep.subr.bf16.mxu0 0
        %3200 = vmatpush1.bf16.msra.mxu0 0
        %3201 = vmatprep.subr.bf16.mxu0 0
        %3202 = vmatpush1.bf16.msra.mxu0 0
        %3203 = vmatprep.subr.bf16.mxu0 0
        %3204 = vmatpush1.bf16.msra.mxu0 0
        %3205 = vmatprep.subr.bf16.mxu0 0
        %3206 = vmatpush1.bf16.msra.mxu0 0
        %3207 = vmatprep.subr.bf16.mxu0 0
        %3208 = vmatpush1.bf16.msra.mxu0 0
        %3209 = vmatprep.subr.bf16.mxu0 0
        %3210 = vmatpush1.bf16.msra.mxu0 0
        %3211 = vmatprep.subr.bf16.mxu0 0
        %3212 = vmatpush1.bf16.msra.mxu0 0
        %3213 = vmatprep.mubr.bf16.mxu0 0
        %3214 = vmatmul.mubr.bf16.gmra.mrb[0].mxu0 %v3155
        %v3215 = vpop.f32.mrb[0].mxu0
        %v3216 = vadd.f32 %v3072, %v3215
        %v3217 = vpop.f32.mrb[0].mxu0
        %v3218 = vpop.f32.mrb[0].mxu0
        %v3219 = vadd.f32 %v3075, %v3218
        %v3220 = vpop.f32.mrb[0].mxu0
        %3221 = vmatprep.mubr.bf16.mxu0 0
        %3222 = vmatmul.mubr.bf16.gmra.mrb[0].mxu0 %v3158
        %v3223 = vpop.f32.mrb[0].mxu0
        %v3224 = vadd.f32 %v3080, %v3223
        %v3225 = vpop.f32.mrb[0].mxu0
        %v3226 = vpop.f32.mrb[0].mxu0
        %v3227 = vadd.f32 %v3083, %v3226
        %v3228 = vpop.f32.mrb[0].mxu0
        %3229 = vmatprep.mubr.bf16.mxu0 0
        %3230 = vmatmul.mubr.bf16.gmra.mrb[0].mxu0 %v3161
        %v3231 = vpop.f32.mrb[0].mxu0
        %v3232 = vadd.f32 %v3088, %v3231
        %v3233 = vpop.f32.mrb[0].mxu0
        %v3234 = vpop.f32.mrb[0].mxu0
        %v3235 = vadd.f32 %v3091, %v3234
        %v3236 = vpop.f32.mrb[0].mxu0
        %3237 = vmatprep.mubr.bf16.mxu0 0
        %3238 = vmatmul.mubr.bf16.gmra.mrb[0].mxu0 %v3164
        %v3239 = vpop.f32.mrb[0].mxu0
        %v3240 = vadd.f32 %v3096, %v3239
        %v3241 = vpop.f32.mrb[0].mxu0
        %v3242 = vpop.f32.mrb[0].mxu0
        %v3243 = vadd.f32 %v3099, %v3242
        %v3244 = vpop.f32.mrb[0].mxu0
        %3245 = vmatprep.mubr.bf16.mxu0 0
        %3246 = vmatmul.mubr.bf16.gmra.mrb[0].mxu0 %v3167
        %v3247 = vpop.f32.mrb[0].mxu0
        %v3248 = vadd.f32 %v3104, %v3247
        %v3249 = vpop.f32.mrb[0].mxu0
        %v3250 = vpop.f32.mrb[0].mxu0
        %v3251 = vadd.f32 %v3107, %v3250
        %v3252 = vpop.f32.mrb[0].mxu0
        %3253 = vmatprep.mubr.bf16.mxu0 0
        %3254 = vmatmul.mubr.bf16.gmra.mrb[0].mxu0 %v3170
        %v3255 = vpop.f32.mrb[0].mxu0
        %v3256 = vadd.f32 %v3112, %v3255
        %v3257 = vpop.f32.mrb[0].mxu0
        %v3258 = vpop.f32.mrb[0].mxu0
        %v3259 = vadd.f32 %v3115, %v3258
        %v3260 = vpop.f32.mrb[0].mxu0
        %3261 = vmatprep.mubr.bf16.mxu0 0
        %3262 = vmatmul.mubr.bf16.gmra.mrb[0].mxu0 %v3173
        %v3263 = vpop.f32.mrb[0].mxu0
        %v3264 = vadd.f32 %v3120, %v3263
        %v3265 = vpop.f32.mrb[0].mxu0
        %v3266 = vpop.f32.mrb[0].mxu0
        %v3267 = vadd.f32 %v3123, %v3266
        %v3268 = vpop.f32.mrb[0].mxu0
        %3269 = vmatprep.mubr.bf16.mxu0 0
        %3270 = vmatmul.mubr.bf16.gmra.mrb[0].mxu0 %v3176
        %v3271 = vpop.f32.mrb[0].mxu0
        %v3272 = vadd.f32 %v3128, %v3271
        %v3273 = vpop.f32.mrb[0].mxu0
        %v3274 = vpop.f32.mrb[0].mxu0
        %v3275 = vadd.f32 %v3131, %v3274
        %v3276 = vpop.f32.mrb[0].mxu0
        %3277 = vmatprep.mubr.bf16.mxu0 0
        %3278 = vmatmul.mubr.bf16.gmra.mrb[0].mxu0 %v3179
        %v3279 = vpop.f32.mrb[0].mxu0
        %v3280 = vadd.f32 %v3136, %v3279
        %v3281 = vpop.f32.mrb[0].mxu0
        %v3282 = vpop.f32.mrb[0].mxu0
        %v3283 = vadd.f32 %v3139, %v3282
        %v3284 = vpop.f32.mrb[0].mxu0
        %3285 = vdwg.mxu0
        %3286 = vrot.lane.b32.xlu0 %v1399, 64
        %v3287 = vpop.permute.xlu0 %3286
        %3288 = vrot.lane.b32.xlu0 %v1402, 64
        %v3289 = vpop.permute.xlu0 %3288
        %3290 = vrot.lane.b32.xlu0 %v1405, 64
        %v3291 = vpop.permute.xlu0 %3290
        %3292 = vrot.lane.b32.xlu0 %v1408, 64
        %v3293 = vpop.permute.xlu0 %3292
        %3294 = vrot.lane.b32.xlu0 %v1411, 64
        %v3295 = vpop.permute.xlu0 %3294
        %3296 = vrot.lane.b32.xlu0 %v1414, 64
        %v3297 = vpop.permute.xlu0 %3296
        %3298 = vrot.lane.b32.xlu0 %v1417, 64
        %v3299 = vpop.permute.xlu0 %3298
        %3300 = vrot.lane.b32.xlu0 %v1420, 64
        %v3301 = vpop.permute.xlu0 %3300
        %3302 = vrot.lane.b32.xlu0 %v1423, 64
        %v3303 = vpop.permute.xlu0 %3302
        %3304 = vrot.lane.b32.xlu0 %v1400, 64
        %v3305 = vpop.permute.xlu0 %3304
        %3306 = vrot.lane.b32.xlu0 %v1403, 64
        %v3307 = vpop.permute.xlu0 %3306
        %3308 = vrot.lane.b32.xlu0 %v1406, 64
        %v3309 = vpop.permute.xlu0 %3308
        %3310 = vrot.lane.b32.xlu0 %v1409, 64
        %v3311 = vpop.permute.xlu0 %3310
        %3312 = vrot.lane.b32.xlu0 %v1412, 64
        %v3313 = vpop.permute.xlu0 %3312
        %3314 = vrot.lane.b32.xlu0 %v1415, 64
        %v3315 = vpop.permute.xlu0 %3314
        %3316 = vrot.lane.b32.xlu0 %v1418, 64
        %v3317 = vpop.permute.xlu0 %3316
        %3318 = vrot.lane.b32.xlu0 %v1421, 64
        %v3319 = vpop.permute.xlu0 %3318
        %3320 = vrot.lane.b32.xlu0 %v1424, 64
        %v3321 = vpop.permute.xlu0 %3320
        %v3323 = vsel %vm1478, %v3287, 0
        %v3326 = vsel %vm1478, %v3289, 0
        %v3329 = vsel %vm1478, %v3291, 0
        %v3332 = vsel %vm1478, %v3293, 0
        %v3335 = vsel %vm1478, %v3295, 0
        %v3338 = vsel %vm1478, %v3297, 0
        %v3341 = vsel %vm1478, %v3299, 0
        %v3344 = vsel %vm1478, %v3301, 0
        %v3347 = vsel %vm1478, %v3303, 0
        %v3350 = vsel %vm1478, %v3305, 0
        %v3353 = vsel %vm1478, %v3307, 0
        %v3356 = vsel %vm1478, %v3309, 0
        %v3359 = vsel %vm1478, %v3311, 0
        %v3362 = vsel %vm1478, %v3313, 0
        %v3365 = vsel %vm1478, %v3315, 0
        %v3368 = vsel %vm1478, %v3317, 0
        %v3371 = vsel %vm1478, %v3319, 0
        %v3374 = vsel %vm1478, %v3321, 0
        %3376 = vmatprep.subr.bf16.mxu0 0
        %3377 = vmatpush1.bf16.xpose.msra.mxu0 %v3350
        %3378 = vmatprep.subr.bf16.mxu0 0
        %3379 = vmatpush1.bf16.xpose.msra.mxu0 %v3353
        %3380 = vmatprep.subr.bf16.mxu0 0
        %3381 = vmatpush1.bf16.xpose.msra.mxu0 %v3356
        %3382 = vmatprep.subr.bf16.mxu0 0
        %3383 = vmatpush1.bf16.xpose.msra.mxu0 %v3359
        %3384 = vmatprep.subr.bf16.mxu0 0
        %3385 = vmatpush1.bf16.xpose.msra.mxu0 %v3362
        %3386 = vmatprep.subr.bf16.mxu0 0
        %3387 = vmatpush1.bf16.xpose.msra.mxu0 %v3365
        %3388 = vmatprep.subr.bf16.mxu0 0
        %3389 = vmatpush1.bf16.xpose.msra.mxu0 %v3368
        %3390 = vmatprep.subr.bf16.mxu0 0
        %3391 = vmatpush1.bf16.xpose.msra.mxu0 %v3371
        %3392 = vmatprep.subr.bf16.mxu0 0
        %3393 = vmatpush1.bf16.xpose.msra.mxu0 %v3374
        %3394 = vmatprep.subr.bf16.mxu0 0
        %3395 = vmatpush1.bf16.xpose.msra.mxu0 0
        %3396 = vmatprep.subr.bf16.mxu0 0
        %3397 = vmatpush1.bf16.xpose.msra.mxu0 0
        %3398 = vmatprep.subr.bf16.mxu0 0
        %3399 = vmatpush1.bf16.xpose.msra.mxu0 0
        %3400 = vmatprep.subr.bf16.mxu0 0
        %3401 = vmatpush1.bf16.xpose.msra.mxu0 0
        %3402 = vmatprep.subr.bf16.mxu0 0
        %3403 = vmatpush1.bf16.xpose.msra.mxu0 0
        %3404 = vmatprep.subr.bf16.mxu0 0
        %3405 = vmatpush1.bf16.xpose.msra.mxu0 0
        %3406 = vmatprep.subr.bf16.mxu0 0
        %3407 = vmatpush1.bf16.xpose.msra.mxu0 0
        %3408 = vmatprep.mubr.bf16.mxu0 0
        %3409 = vmatmul.mubr.bf16.gmra.mrb[0].mxu0 %v3323
        %v3410 = vpop.f32.mrb[0].mxu0
        %v3411 = vadd.f32 0.0, %v3410
        %v3412 = vpop.f32.mrb[0].mxu0
        %v3413 = vadd.f32 0.0, %v3412
        %v3414 = vpop.f32.mrb[0].mxu0
        %v3415 = vadd.f32 0.0, %v3414
        %v3416 = vpop.f32.mrb[0].mxu0
        %v3417 = vadd.f32 0.0, %v3416
        %3418 = vmatprep.mubr.bf16.mxu0 0
        %3419 = vmatmul.mubr.bf16.gmra.mrb[0].mxu0 %v3326
        %v3420 = vpop.f32.mrb[0].mxu0
        %v3421 = vadd.f32 0.0, %v3420
        %v3422 = vpop.f32.mrb[0].mxu0
        %v3423 = vadd.f32 0.0, %v3422
        %v3424 = vpop.f32.mrb[0].mxu0
        %v3425 = vadd.f32 0.0, %v3424
        %v3426 = vpop.f32.mrb[0].mxu0
        %v3427 = vadd.f32 0.0, %v3426
        %3428 = vmatprep.mubr.bf16.mxu0 0
        %3429 = vmatmul.mubr.bf16.gmra.mrb[0].mxu0 %v3329
        %v3430 = vpop.f32.mrb[0].mxu0
        %v3431 = vadd.f32 0.0, %v3430
        %v3432 = vpop.f32.mrb[0].mxu0
        %v3433 = vadd.f32 0.0, %v3432
        %v3434 = vpop.f32.mrb[0].mxu0
        %v3435 = vadd.f32 0.0, %v3434
        %v3436 = vpop.f32.mrb[0].mxu0
        %v3437 = vadd.f32 0.0, %v3436
        %3438 = vmatprep.mubr.bf16.mxu0 0
        %3439 = vmatmul.mubr.bf16.gmra.mrb[0].mxu0 %v3332
        %v3440 = vpop.f32.mrb[0].mxu0
        %v3441 = vadd.f32 0.0, %v3440
        %v3442 = vpop.f32.mrb[0].mxu0
        %v3443 = vadd.f32 0.0, %v3442
        %v3444 = vpop.f32.mrb[0].mxu0
        %v3445 = vadd.f32 0.0, %v3444
        %v3446 = vpop.f32.mrb[0].mxu0
        %v3447 = vadd.f32 0.0, %v3446
        %3448 = vmatprep.mubr.bf16.mxu0 0
        %3449 = vmatmul.mubr.bf16.gmra.mrb[0].mxu0 %v3335
        %v3450 = vpop.f32.mrb[0].mxu0
        %v3451 = vadd.f32 0.0, %v3450
        %v3452 = vpop.f32.mrb[0].mxu0
        %v3453 = vadd.f32 0.0, %v3452
        %v3454 = vpop.f32.mrb[0].mxu0
        %v3455 = vadd.f32 0.0, %v3454
        %v3456 = vpop.f32.mrb[0].mxu0
        %v3457 = vadd.f32 0.0, %v3456
        %3458 = vmatprep.mubr.bf16.mxu0 0
        %3459 = vmatmul.mubr.bf16.gmra.mrb[0].mxu0 %v3338
        %v3460 = vpop.f32.mrb[0].mxu0
        %v3461 = vadd.f32 0.0, %v3460
        %v3462 = vpop.f32.mrb[0].mxu0
        %v3463 = vadd.f32 0.0, %v3462
        %v3464 = vpop.f32.mrb[0].mxu0
        %v3465 = vadd.f32 0.0, %v3464
        %v3466 = vpop.f32.mrb[0].mxu0
        %v3467 = vadd.f32 0.0, %v3466
        %3468 = vmatprep.mubr.bf16.mxu0 0
        %3469 = vmatmul.mubr.bf16.gmra.mrb[0].mxu0 %v3341
        %v3470 = vpop.f32.mrb[0].mxu0
        %v3471 = vadd.f32 0.0, %v3470
        %v3472 = vpop.f32.mrb[0].mxu0
        %v3473 = vadd.f32 0.0, %v3472
        %v3474 = vpop.f32.mrb[0].mxu0
        %v3475 = vadd.f32 0.0, %v3474
        %v3476 = vpop.f32.mrb[0].mxu0
        %v3477 = vadd.f32 0.0, %v3476
        %3478 = vmatprep.mubr.bf16.mxu0 0
        %3479 = vmatmul.mubr.bf16.gmra.mrb[0].mxu0 %v3344
        %v3480 = vpop.f32.mrb[0].mxu0
        %v3481 = vadd.f32 0.0, %v3480
        %v3482 = vpop.f32.mrb[0].mxu0
        %v3483 = vadd.f32 0.0, %v3482
        %v3484 = vpop.f32.mrb[0].mxu0
        %v3485 = vadd.f32 0.0, %v3484
        %v3486 = vpop.f32.mrb[0].mxu0
        %v3487 = vadd.f32 0.0, %v3486
        %3488 = vmatprep.mubr.bf16.mxu0 0
        %3489 = vmatmul.mubr.bf16.gmra.mrb[0].mxu0 %v3347
        %v3490 = vpop.f32.mrb[0].mxu0
        %v3491 = vadd.f32 0.0, %v3490
        %v3492 = vpop.f32.mrb[0].mxu0
        %v3493 = vadd.f32 0.0, %v3492
        %v3494 = vpop.f32.mrb[0].mxu0
        %v3495 = vadd.f32 0.0, %v3494
        %v3496 = vpop.f32.mrb[0].mxu0
        %v3497 = vadd.f32 0.0, %v3496
        %3498 = vdwg.mxu0
        %v3499 = vmul.f32 %v3411, 0.17677669
        %v3500 = vmul.f32 %v3413, 0.17677669
        %v3501 = vmul.f32 %v3415, 0.17677669
        %v3502 = vmul.f32 %v3417, 0.17677669
        %v3503 = vmul.f32 %v3421, 0.17677669
        %v3504 = vmul.f32 %v3423, 0.17677669
        %v3505 = vmul.f32 %v3425, 0.17677669
        %v3506 = vmul.f32 %v3427, 0.17677669
        %v3507 = vmul.f32 %v3431, 0.17677669
        %v3508 = vmul.f32 %v3433, 0.17677669
        %v3509 = vmul.f32 %v3435, 0.17677669
        %v3510 = vmul.f32 %v3437, 0.17677669
        %v3511 = vmul.f32 %v3441, 0.17677669
        %v3512 = vmul.f32 %v3443, 0.17677669
        %v3513 = vmul.f32 %v3445, 0.17677669
        %v3514 = vmul.f32 %v3447, 0.17677669
        %v3515 = vmul.f32 %v3451, 0.17677669
        %v3516 = vmul.f32 %v3453, 0.17677669
        %v3517 = vmul.f32 %v3455, 0.17677669
        %v3518 = vmul.f32 %v3457, 0.17677669
        %v3519 = vmul.f32 %v3461, 0.17677669
        %v3520 = vmul.f32 %v3463, 0.17677669
        %v3521 = vmul.f32 %v3465, 0.17677669
        %v3522 = vmul.f32 %v3467, 0.17677669
        %v3523 = vmul.f32 %v3471, 0.17677669
        %v3524 = vmul.f32 %v3473, 0.17677669
        %v3525 = vmul.f32 %v3475, 0.17677669
        %v3526 = vmul.f32 %v3477, 0.17677669
        %v3527 = vmul.f32 %v3481, 0.17677669
        %v3528 = vmul.f32 %v3483, 0.17677669
        %v3529 = vmul.f32 %v3485, 0.17677669
        %v3530 = vmul.f32 %v3487, 0.17677669
        %v3531 = vmul.f32 %v3491, 0.17677669
        %v3532 = vmul.f32 %v3493, 0.17677669
        %v3533 = vmul.f32 %v3495, 0.17677669
        %v3534 = vmul.f32 %v3497, 0.17677669
        %v3535 = vadd.f32 %v3499, %v1442
        %v3536 = vadd.f32 %v3500, %v1443
        %v3537 = vadd.f32 %v3501, %v1444
        %v3538 = vadd.f32 %v3502, %v1445
        %v3539 = vadd.f32 %v3503, %v1446
        %v3540 = vadd.f32 %v3504, %v1447
        %v3541 = vadd.f32 %v3505, %v1448
        %v3542 = vadd.f32 %v3506, %v1449
        %v3543 = vadd.f32 %v3507, %v1450
        %v3544 = vadd.f32 %v3508, %v1451
        %v3545 = vadd.f32 %v3509, %v1452
        %v3546 = vadd.f32 %v3510, %v1453
        %v3547 = vadd.f32 %v3511, %v1454
        %v3548 = vadd.f32 %v3512, %v1455
        %v3549 = vadd.f32 %v3513, %v1456
        %v3550 = vadd.f32 %v3514, %v1457
        %v3551 = vadd.f32 %v3515, %v1458
        %v3552 = vadd.f32 %v3516, %v1459
        %v3553 = vadd.f32 %v3517, %v1460
        %v3554 = vadd.f32 %v3518, %v1461
        %v3555 = vadd.f32 %v3519, %v1462
        %v3556 = vadd.f32 %v3520, %v1463
        %v3557 = vadd.f32 %v3521, %v1464
        %v3558 = vadd.f32 %v3522, %v1465
        %v3559 = vadd.f32 %v3523, %v1466
        %v3560 = vadd.f32 %v3524, %v1467
        %v3561 = vadd.f32 %v3525, %v1468
        %v3562 = vadd.f32 %v3526, %v1469
        %v3563 = vadd.f32 %v3527, %v1470
        %v3564 = vadd.f32 %v3528, %v1471
        %v3565 = vadd.f32 %v3529, %v1472
        %v3566 = vadd.f32 %v3530, %v1473
        %v3567 = vadd.f32 %v3531, %v1474
        %v3568 = vadd.f32 %v3532, %v1475
        %v3569 = vadd.f32 %v3533, %v1476
        %v3570 = vadd.f32 %v3534, %v1477
        %v3571 = vsel %vm1728, %v3536, -inf
        %v3572 = vmax.f32 %v3535, %v3571
        %3573 = vmax.xlane.f32.xlu0 %v3572
        %v3574 = vpop.xlane.xlu0 %3573
        %v3575 = vsel %vm1728, %v3538, -inf
        %v3576 = vmax.f32 %v3537, %v3575
        %3577 = vmax.xlane.f32.xlu0 %v3576
        %v3578 = vpop.xlane.xlu0 %3577
        %v3579 = vsel %vm1728, %v3540, -inf
        %v3580 = vmax.f32 %v3539, %v3579
        %3581 = vmax.xlane.f32.xlu0 %v3580
        %v3582 = vpop.xlane.xlu0 %3581
        %v3583 = vsel %vm1728, %v3542, -inf
        %v3584 = vmax.f32 %v3541, %v3583
        %3585 = vmax.xlane.f32.xlu0 %v3584
        %v3586 = vpop.xlane.xlu0 %3585
        %v3587 = vsel %vm1728, %v3544, -inf
        %v3588 = vmax.f32 %v3543, %v3587
        %3589 = vmax.xlane.f32.xlu0 %v3588
        %v3590 = vpop.xlane.xlu0 %3589
        %v3591 = vsel %vm1728, %v3546, -inf
        %v3592 = vmax.f32 %v3545, %v3591
        %3593 = vmax.xlane.f32.xlu0 %v3592
        %v3594 = vpop.xlane.xlu0 %3593
        %v3595 = vsel %vm1728, %v3548, -inf
        %v3596 = vmax.f32 %v3547, %v3595
        %3597 = vmax.xlane.f32.xlu0 %v3596
        %v3598 = vpop.xlane.xlu0 %3597
        %v3599 = vsel %vm1728, %v3550, -inf
        %v3600 = vmax.f32 %v3549, %v3599
        %3601 = vmax.xlane.f32.xlu0 %v3600
        %v3602 = vpop.xlane.xlu0 %3601
        %v3603 = vsel %vm1728, %v3552, -inf
        %v3604 = vmax.f32 %v3551, %v3603
        %3605 = vmax.xlane.f32.xlu0 %v3604
        %v3606 = vpop.xlane.xlu0 %3605
        %v3607 = vsel %vm1728, %v3554, -inf
        %v3608 = vmax.f32 %v3553, %v3607
        %3609 = vmax.xlane.f32.xlu0 %v3608
        %v3610 = vpop.xlane.xlu0 %3609
        %v3611 = vsel %vm1728, %v3556, -inf
        %v3612 = vmax.f32 %v3555, %v3611
        %3613 = vmax.xlane.f32.xlu0 %v3612
        %v3614 = vpop.xlane.xlu0 %3613
        %v3615 = vsel %vm1728, %v3558, -inf
        %v3616 = vmax.f32 %v3557, %v3615
        %3617 = vmax.xlane.f32.xlu0 %v3616
        %v3618 = vpop.xlane.xlu0 %3617
        %v3619 = vsel %vm1728, %v3560, -inf
        %v3620 = vmax.f32 %v3559, %v3619
        %3621 = vmax.xlane.f32.xlu0 %v3620
        %v3622 = vpop.xlane.xlu0 %3621
        %v3623 = vsel %vm1728, %v3562, -inf
        %v3624 = vmax.f32 %v3561, %v3623
        %3625 = vmax.xlane.f32.xlu0 %v3624
        %v3626 = vpop.xlane.xlu0 %3625
        %v3627 = vsel %vm1728, %v3564, -inf
        %v3628 = vmax.f32 %v3563, %v3627
        %3629 = vmax.xlane.f32.xlu0 %v3628
        %v3630 = vpop.xlane.xlu0 %3629
        %v3631 = vsel %vm1728, %v3566, -inf
        %v3632 = vmax.f32 %v3565, %v3631
        %3633 = vmax.xlane.f32.xlu0 %v3632
        %v3634 = vpop.xlane.xlu0 %3633
        %v3635 = vsel %vm1728, %v3568, -inf
        %v3636 = vmax.f32 %v3567, %v3635
        %3637 = vmax.xlane.f32.xlu0 %v3636
        %v3638 = vpop.xlane.xlu0 %3637
        %v3639 = vsel %vm1728, %v3570, -inf
        %v3640 = vmax.f32 %v3569, %v3639
        %3641 = vmax.xlane.f32.xlu0 %v3640
        %v3642 = vpop.xlane.xlu0 %3641
        %v3643 = vsub.f32 %v3535, %v3574
        %v3644 = vsub.f32 %v3536, %v3574
        %v3645 = vsub.f32 %v3537, %v3578
        %v3646 = vsub.f32 %v3538, %v3578
        %v3647 = vsub.f32 %v3539, %v3582
        %v3648 = vsub.f32 %v3540, %v3582
        %v3649 = vsub.f32 %v3541, %v3586
        %v3650 = vsub.f32 %v3542, %v3586
        %v3651 = vsub.f32 %v3543, %v3590
        %v3652 = vsub.f32 %v3544, %v3590
        %v3653 = vsub.f32 %v3545, %v3594
        %v3654 = vsub.f32 %v3546, %v3594
        %v3655 = vsub.f32 %v3547, %v3598
        %v3656 = vsub.f32 %v3548, %v3598
        %v3657 = vsub.f32 %v3549, %v3602
        %v3658 = vsub.f32 %v3550, %v3602
        %v3659 = vsub.f32 %v3551, %v3606
        %v3660 = vsub.f32 %v3552, %v3606
        %v3661 = vsub.f32 %v3553, %v3610
        %v3662 = vsub.f32 %v3554, %v3610
        %v3663 = vsub.f32 %v3555, %v3614
        %v3664 = vsub.f32 %v3556, %v3614
        %v3665 = vsub.f32 %v3557, %v3618
        %v3666 = vsub.f32 %v3558, %v3618
        %v3667 = vsub.f32 %v3559, %v3622
        %v3668 = vsub.f32 %v3560, %v3622
        %v3669 = vsub.f32 %v3561, %v3626
        %v3670 = vsub.f32 %v3562, %v3626
        %v3671 = vsub.f32 %v3563, %v3630
        %v3672 = vsub.f32 %v3564, %v3630
        %v3673 = vsub.f32 %v3565, %v3634
        %v3674 = vsub.f32 %v3566, %v3634
        %v3675 = vsub.f32 %v3567, %v3638
        %v3676 = vsub.f32 %v3568, %v3638
        %v3677 = vsub.f32 %v3569, %v3642
        %v3678 = vsub.f32 %v3570, %v3642
        %v3679 = vmul.f32 %v3643, 1.442695
        %v3680 = vpow.pop %v3679
        %v3681 = vmul.f32 %v3644, 1.442695
        %v3682 = vpow.pop %v3681
        %v3683 = vmul.f32 %v3645, 1.442695
        %v3684 = vpow.pop %v3683
        %v3685 = vmul.f32 %v3646, 1.442695
        %v3686 = vpow.pop %v3685
        %v3687 = vmul.f32 %v3647, 1.442695
        %v3688 = vpow.pop %v3687
        %v3689 = vmul.f32 %v3648, 1.442695
        %v3690 = vpow.pop %v3689
        %v3691 = vmul.f32 %v3649, 1.442695
        %v3692 = vpow.pop %v3691
        %v3693 = vmul.f32 %v3650, 1.442695
        %v3694 = vpow.pop %v3693
        %v3695 = vmul.f32 %v3651, 1.442695
        %v3696 = vpow.pop %v3695
        %v3697 = vmul.f32 %v3652, 1.442695
        %v3698 = vpow.pop %v3697
        %v3699 = vmul.f32 %v3653, 1.442695
        %v3700 = vpow.pop %v3699
        %v3701 = vmul.f32 %v3654, 1.442695
        %v3702 = vpow.pop %v3701
        %v3703 = vmul.f32 %v3655, 1.442695
        %v3704 = vpow.pop %v3703
        %v3705 = vmul.f32 %v3656, 1.442695
        %v3706 = vpow.pop %v3705
        %v3707 = vmul.f32 %v3657, 1.442695
        %v3708 = vpow.pop %v3707
        %v3709 = vmul.f32 %v3658, 1.442695
        %v3710 = vpow.pop %v3709
        %v3711 = vmul.f32 %v3659, 1.442695
        %v3712 = vpow.pop %v3711
        %v3713 = vmul.f32 %v3660, 1.442695
        %v3714 = vpow.pop %v3713
        %v3715 = vmul.f32 %v3661, 1.442695
        %v3716 = vpow.pop %v3715
        %v3717 = vmul.f32 %v3662, 1.442695
        %v3718 = vpow.pop %v3717
        %v3719 = vmul.f32 %v3663, 1.442695
        %v3720 = vpow.pop %v3719
        %v3721 = vmul.f32 %v3664, 1.442695
        %v3722 = vpow.pop %v3721
        %v3723 = vmul.f32 %v3665, 1.442695
        %v3724 = vpow.pop %v3723
        %v3725 = vmul.f32 %v3666, 1.442695
        %v3726 = vpow.pop %v3725
        %v3727 = vmul.f32 %v3667, 1.442695
        %v3728 = vpow.pop %v3727
        %v3729 = vmul.f32 %v3668, 1.442695
        %v3730 = vpow.pop %v3729
        %v3731 = vmul.f32 %v3669, 1.442695
        %v3732 = vpow.pop %v3731
        %v3733 = vmul.f32 %v3670, 1.442695
        %v3734 = vpow.pop %v3733
        %v3735 = vmul.f32 %v3671, 1.442695
        %v3736 = vpow.pop %v3735
        %v3737 = vmul.f32 %v3672, 1.442695
        %v3738 = vpow.pop %v3737
        %v3739 = vmul.f32 %v3673, 1.442695
        %v3740 = vpow.pop %v3739
        %v3741 = vmul.f32 %v3674, 1.442695
        %v3742 = vpow.pop %v3741
        %v3743 = vmul.f32 %v3675, 1.442695
        %v3744 = vpow.pop %v3743
        %v3745 = vmul.f32 %v3676, 1.442695
        %v3746 = vpow.pop %v3745
        %v3747 = vmul.f32 %v3677, 1.442695
        %v3748 = vpow.pop %v3747
        %v3749 = vmul.f32 %v3678, 1.442695
        %v3750 = vpow.pop %v3749
        %v3751 = vsel %vm1728, %v3682, 0.0
        %v3752 = vadd.f32 %v3680, %v3751
        %3753 = vadd.xlane.f32.xlu0 %v3752
        %v3754 = vpop.xlane.xlu0 %3753
        %v3755 = vsel %vm1728, %v3686, 0.0
        %v3756 = vadd.f32 %v3684, %v3755
        %3757 = vadd.xlane.f32.xlu0 %v3756
        %v3758 = vpop.xlane.xlu0 %3757
        %v3759 = vsel %vm1728, %v3690, 0.0
        %v3760 = vadd.f32 %v3688, %v3759
        %3761 = vadd.xlane.f32.xlu0 %v3760
        %v3762 = vpop.xlane.xlu0 %3761
        %v3763 = vsel %vm1728, %v3694, 0.0
        %v3764 = vadd.f32 %v3692, %v3763
        %3765 = vadd.xlane.f32.xlu0 %v3764
        %v3766 = vpop.xlane.xlu0 %3765
        %v3767 = vsel %vm1728, %v3698, 0.0
        %v3768 = vadd.f32 %v3696, %v3767
        %3769 = vadd.xlane.f32.xlu0 %v3768
        %v3770 = vpop.xlane.xlu0 %3769
        %v3771 = vsel %vm1728, %v3702, 0.0
        %v3772 = vadd.f32 %v3700, %v3771
        %3773 = vadd.xlane.f32.xlu0 %v3772
        %v3774 = vpop.xlane.xlu0 %3773
        %v3775 = vsel %vm1728, %v3706, 0.0
        %v3776 = vadd.f32 %v3704, %v3775
        %3777 = vadd.xlane.f32.xlu0 %v3776
        %v3778 = vpop.xlane.xlu0 %3777
        %v3779 = vsel %vm1728, %v3710, 0.0
        %v3780 = vadd.f32 %v3708, %v3779
        %3781 = vadd.xlane.f32.xlu0 %v3780
        %v3782 = vpop.xlane.xlu0 %3781
        %v3783 = vsel %vm1728, %v3714, 0.0
        %v3784 = vadd.f32 %v3712, %v3783
        %3785 = vadd.xlane.f32.xlu0 %v3784
        %v3786 = vpop.xlane.xlu0 %3785
        %v3787 = vsel %vm1728, %v3718, 0.0
        %v3788 = vadd.f32 %v3716, %v3787
        %3789 = vadd.xlane.f32.xlu0 %v3788
        %v3790 = vpop.xlane.xlu0 %3789
        %v3791 = vsel %vm1728, %v3722, 0.0
        %v3792 = vadd.f32 %v3720, %v3791
        %3793 = vadd.xlane.f32.xlu0 %v3792
        %v3794 = vpop.xlane.xlu0 %3793
        %v3795 = vsel %vm1728, %v3726, 0.0
        %v3796 = vadd.f32 %v3724, %v3795
        %3797 = vadd.xlane.f32.xlu0 %v3796
        %v3798 = vpop.xlane.xlu0 %3797
        %v3799 = vsel %vm1728, %v3730, 0.0
        %v3800 = vadd.f32 %v3728, %v3799
        %3801 = vadd.xlane.f32.xlu0 %v3800
        %v3802 = vpop.xlane.xlu0 %3801
        %v3803 = vsel %vm1728, %v3734, 0.0
        %v3804 = vadd.f32 %v3732, %v3803
        %3805 = vadd.xlane.f32.xlu0 %v3804
        %v3806 = vpop.xlane.xlu0 %3805
        %v3807 = vsel %vm1728, %v3738, 0.0
        %v3808 = vadd.f32 %v3736, %v3807
        %3809 = vadd.xlane.f32.xlu0 %v3808
        %v3810 = vpop.xlane.xlu0 %3809
        %v3811 = vsel %vm1728, %v3742, 0.0
        %v3812 = vadd.f32 %v3740, %v3811
        %3813 = vadd.xlane.f32.xlu0 %v3812
        %v3814 = vpop.xlane.xlu0 %3813
        %v3815 = vsel %vm1728, %v3746, 0.0
        %v3816 = vadd.f32 %v3744, %v3815
        %3817 = vadd.xlane.f32.xlu0 %v3816
        %v3818 = vpop.xlane.xlu0 %3817
        %v3819 = vsel %vm1728, %v3750, 0.0
        %v3820 = vadd.f32 %v3748, %v3819
        %3821 = vadd.xlane.f32.xlu0 %v3820
        %v3822 = vpop.xlane.xlu0 %3821
        %v3823 = vrcp.pop %v3754
        %v3824 = vrcp.pop %v3758
        %v3825 = vrcp.pop %v3762
        %v3826 = vrcp.pop %v3766
        %v3827 = vrcp.pop %v3770
        %v3828 = vrcp.pop %v3774
        %v3829 = vrcp.pop %v3778
        %v3830 = vrcp.pop %v3782
        %v3831 = vrcp.pop %v3786
        %v3832 = vrcp.pop %v3790
        %v3833 = vrcp.pop %v3794
        %v3834 = vrcp.pop %v3798
        %v3835 = vrcp.pop %v3802
        %v3836 = vrcp.pop %v3806
        %v3837 = vrcp.pop %v3810
        %v3838 = vrcp.pop %v3814
        %v3839 = vrcp.pop %v3818
        %v3840 = vrcp.pop %v3822
        %v3841 = vmul.f32 %v3680, %v3823
        %v3842 = vmul.f32 %v3682, %v3823
        %v3843 = vmul.f32 %v3684, %v3824
        %v3844 = vmul.f32 %v3686, %v3824
        %v3845 = vmul.f32 %v3688, %v3825
        %v3846 = vmul.f32 %v3690, %v3825
        %v3847 = vmul.f32 %v3692, %v3826
        %v3848 = vmul.f32 %v3694, %v3826
        %v3849 = vmul.f32 %v3696, %v3827
        %v3850 = vmul.f32 %v3698, %v3827
        %v3851 = vmul.f32 %v3700, %v3828
        %v3852 = vmul.f32 %v3702, %v3828
        %v3853 = vmul.f32 %v3704, %v3829
        %v3854 = vmul.f32 %v3706, %v3829
        %v3855 = vmul.f32 %v3708, %v3830
        %v3856 = vmul.f32 %v3710, %v3830
        %v3857 = vmul.f32 %v3712, %v3831
        %v3858 = vmul.f32 %v3714, %v3831
        %v3859 = vmul.f32 %v3716, %v3832
        %v3860 = vmul.f32 %v3718, %v3832
        %v3861 = vmul.f32 %v3720, %v3833
        %v3862 = vmul.f32 %v3722, %v3833
        %v3863 = vmul.f32 %v3724, %v3834
        %v3864 = vmul.f32 %v3726, %v3834
        %v3865 = vmul.f32 %v3728, %v3835
        %v3866 = vmul.f32 %v3730, %v3835
        %v3867 = vmul.f32 %v3732, %v3836
        %v3868 = vmul.f32 %v3734, %v3836
        %v3869 = vmul.f32 %v3736, %v3837
        %v3870 = vmul.f32 %v3738, %v3837
        %v3871 = vmul.f32 %v3740, %v3838
        %v3872 = vmul.f32 %v3742, %v3838
        %v3873 = vmul.f32 %v3744, %v3839
        %v3874 = vmul.f32 %v3746, %v3839
        %v3875 = vmul.f32 %v3748, %v3840
        %v3876 = vmul.f32 %v3750, %v3840
        %v3877 = vpack.c.bf16 %v3843, %v3841
        %v3878 = vpack.c.bf16 %v3844, %v3842
        %v3879 = vpack.c.bf16 %v3847, %v3845
        %v3880 = vpack.c.bf16 %v3848, %v3846
        %v3881 = vpack.c.bf16 %v3851, %v3849
        %v3882 = vpack.c.bf16 %v3852, %v3850
        %v3883 = vpack.c.bf16 %v3855, %v3853
        %v3884 = vpack.c.bf16 %v3856, %v3854
        %v3885 = vpack.c.bf16 %v3859, %v3857
        %v3886 = vpack.c.bf16 %v3860, %v3858
        %v3887 = vpack.c.bf16 %v3863, %v3861
        %v3888 = vpack.c.bf16 %v3864, %v3862
        %v3889 = vpack.c.bf16 %v3867, %v3865
        %v3890 = vpack.c.bf16 %v3868, %v3866
        %v3891 = vpack.c.bf16 %v3871, %v3869
        %v3892 = vpack.c.bf16 %v3872, %v3870
        %v3893 = vpack.c.bf16 %v3875, %v3873
        %v3894 = vpack.c.bf16 %v3876, %v3874
        %3895 = vrot.lane.b32.xlu0 %v1401, 64
        %v3896 = vpop.permute.xlu0 %3895
        %3897 = vrot.lane.b32.xlu0 %v1404, 64
        %v3898 = vpop.permute.xlu0 %3897
        %3899 = vrot.lane.b32.xlu0 %v1407, 64
        %v3900 = vpop.permute.xlu0 %3899
        %3901 = vrot.lane.b32.xlu0 %v1410, 64
        %v3902 = vpop.permute.xlu0 %3901
        %3903 = vrot.lane.b32.xlu0 %v1413, 64
        %v3904 = vpop.permute.xlu0 %3903
        %3905 = vrot.lane.b32.xlu0 %v1416, 64
        %v3906 = vpop.permute.xlu0 %3905
        %3907 = vrot.lane.b32.xlu0 %v1419, 64
        %v3908 = vpop.permute.xlu0 %3907
        %3909 = vrot.lane.b32.xlu0 %v1422, 64
        %v3910 = vpop.permute.xlu0 %3909
        %3911 = vrot.lane.b32.xlu0 %v1425, 64
        %v3912 = vpop.permute.xlu0 %3911
        %v3923 = vsel %vm1728, %v3878, 0
        %v3926 = vsel %vm1728, %v3880, 0
        %v3929 = vsel %vm1728, %v3882, 0
        %v3932 = vsel %vm1728, %v3884, 0
        %v3935 = vsel %vm1728, %v3886, 0
        %v3938 = vsel %vm1728, %v3888, 0
        %v3941 = vsel %vm1728, %v3890, 0
        %v3944 = vsel %vm1728, %v3892, 0
        %v3947 = vsel %vm1728, %v3894, 0
        %3949 = vmatprep.subr.bf16.mxu0 0
        %3950 = vmatpush1.bf16.msra.mxu0 %v3896
        %3951 = vmatprep.subr.bf16.mxu0 0
        %3952 = vmatpush1.bf16.msra.mxu0 %v3898
        %3953 = vmatprep.subr.bf16.mxu0 0
        %3954 = vmatpush1.bf16.msra.mxu0 %v3900
        %3955 = vmatprep.subr.bf16.mxu0 0
        %3956 = vmatpush1.bf16.msra.mxu0 %v3902
        %3957 = vmatprep.subr.bf16.mxu0 0
        %3958 = vmatpush1.bf16.msra.mxu0 %v3904
        %3959 = vmatprep.subr.bf16.mxu0 0
        %3960 = vmatpush1.bf16.msra.mxu0 %v3906
        %3961 = vmatprep.subr.bf16.mxu0 0
        %3962 = vmatpush1.bf16.msra.mxu0 %v3908
        %3963 = vmatprep.subr.bf16.mxu0 0
        %3964 = vmatpush1.bf16.msra.mxu0 %v3910
        %3965 = vmatprep.subr.bf16.mxu0 0
        %3966 = vmatpush1.bf16.msra.mxu0 %v3912
        %3967 = vmatprep.subr.bf16.mxu0 0
        %3968 = vmatpush1.bf16.msra.mxu0 0
        %3969 = vmatprep.subr.bf16.mxu0 0
        %3970 = vmatpush1.bf16.msra.mxu0 0
        %3971 = vmatprep.subr.bf16.mxu0 0
        %3972 = vmatpush1.bf16.msra.mxu0 0
        %3973 = vmatprep.subr.bf16.mxu0 0
        %3974 = vmatpush1.bf16.msra.mxu0 0
        %3975 = vmatprep.subr.bf16.mxu0 0
        %3976 = vmatpush1.bf16.msra.mxu0 0
        %3977 = vmatprep.subr.bf16.mxu0 0
        %3978 = vmatpush1.bf16.msra.mxu0 0
        %3979 = vmatprep.subr.bf16.mxu0 0
        %3980 = vmatpush1.bf16.msra.mxu0 0
        %3981 = vmatprep.mubr.bf16.mxu0 %v3923
        %3982 = vmatmul.mubr.bf16.gmra.mrb[0].mxu0 %v3877
        %v3983 = vpop.f32.mrb[0].mxu0
        %v3984 = vadd.f32 0.0, %v3983
        %v3985 = vpop.f32.mrb[0].mxu0
        %v3986 = vpop.f32.mrb[0].mxu0
        %v3987 = vadd.f32 0.0, %v3986
        %v3988 = vpop.f32.mrb[0].mxu0
        %3989 = vmatprep.mubr.bf16.mxu0 %v3926
        %3990 = vmatmul.mubr.bf16.gmra.mrb[0].mxu0 %v3879
        %v3991 = vpop.f32.mrb[0].mxu0
        %v3992 = vadd.f32 0.0, %v3991
        %v3993 = vpop.f32.mrb[0].mxu0
        %v3994 = vpop.f32.mrb[0].mxu0
        %v3995 = vadd.f32 0.0, %v3994
        %v3996 = vpop.f32.mrb[0].mxu0
        %3997 = vmatprep.mubr.bf16.mxu0 %v3929
        %3998 = vmatmul.mubr.bf16.gmra.mrb[0].mxu0 %v3881
        %v3999 = vpop.f32.mrb[0].mxu0
        %v4000 = vadd.f32 0.0, %v3999
        %v4001 = vpop.f32.mrb[0].mxu0
        %v4002 = vpop.f32.mrb[0].mxu0
        %v4003 = vadd.f32 0.0, %v4002
        %v4004 = vpop.f32.mrb[0].mxu0
        %4005 = vmatprep.mubr.bf16.mxu0 %v3932
        %4006 = vmatmul.mubr.bf16.gmra.mrb[0].mxu0 %v3883
        %v4007 = vpop.f32.mrb[0].mxu0
        %v4008 = vadd.f32 0.0, %v4007
        %v4009 = vpop.f32.mrb[0].mxu0
        %v4010 = vpop.f32.mrb[0].mxu0
        %v4011 = vadd.f32 0.0, %v4010
        %v4012 = vpop.f32.mrb[0].mxu0
        %4013 = vmatprep.mubr.bf16.mxu0 %v3935
        %4014 = vmatmul.mubr.bf16.gmra.mrb[0].mxu0 %v3885
        %v4015 = vpop.f32.mrb[0].mxu0
        %v4016 = vadd.f32 0.0, %v4015
        %v4017 = vpop.f32.mrb[0].mxu0
        %v4018 = vpop.f32.mrb[0].mxu0
        %v4019 = vadd.f32 0.0, %v4018
        %v4020 = vpop.f32.mrb[0].mxu0
        %4021 = vmatprep.mubr.bf16.mxu0 %v3938
        %4022 = vmatmul.mubr.bf16.gmra.mrb[0].mxu0 %v3887
        %v4023 = vpop.f32.mrb[0].mxu0
        %v4024 = vadd.f32 0.0, %v4023
        %v4025 = vpop.f32.mrb[0].mxu0
        %v4026 = vpop.f32.mrb[0].mxu0
        %v4027 = vadd.f32 0.0, %v4026
        %v4028 = vpop.f32.mrb[0].mxu0
        %4029 = vmatprep.mubr.bf16.mxu0 %v3941
        %4030 = vmatmul.mubr.bf16.gmra.mrb[0].mxu0 %v3889
        %v4031 = vpop.f32.mrb[0].mxu0
        %v4032 = vadd.f32 0.0, %v4031
        %v4033 = vpop.f32.mrb[0].mxu0
        %v4034 = vpop.f32.mrb[0].mxu0
        %v4035 = vadd.f32 0.0, %v4034
        %v4036 = vpop.f32.mrb[0].mxu0
        %4037 = vmatprep.mubr.bf16.mxu0 %v3944
        %4038 = vmatmul.mubr.bf16.gmra.mrb[0].mxu0 %v3891
        %v4039 = vpop.f32.mrb[0].mxu0
        %v4040 = vadd.f32 0.0, %v4039
        %v4041 = vpop.f32.mrb[0].mxu0
        %v4042 = vpop.f32.mrb[0].mxu0
        %v4043 = vadd.f32 0.0, %v4042
        %v4044 = vpop.f32.mrb[0].mxu0
        %4045 = vmatprep.mubr.bf16.mxu0 %v3947
        %4046 = vmatmul.mubr.bf16.gmra.mrb[0].mxu0 %v3893
        %v4047 = vpop.f32.mrb[0].mxu0
        %v4048 = vadd.f32 0.0, %v4047
        %v4049 = vpop.f32.mrb[0].mxu0
        %v4050 = vpop.f32.mrb[0].mxu0
        %v4051 = vadd.f32 0.0, %v4050
        %v4052 = vpop.f32.mrb[0].mxu0
        %4053 = vdwg.mxu0
        %v4054 = vpack.c.bf16 %v3987, %v3984
        %v4055 = vpack.c.bf16 %v3995, %v3992
        %v4056 = vpack.c.bf16 %v4003, %v4000
        %v4057 = vpack.c.bf16 %v4011, %v4008
        %v4058 = vpack.c.bf16 %v4019, %v4016
        %v4059 = vpack.c.bf16 %v4027, %v4024
        %v4060 = vpack.c.bf16 %v4035, %v4032
        %v4061 = vpack.c.bf16 %v4043, %v4040
        %v4062 = vpack.c.bf16 %v4051, %v4048
        %v4067 = vunpack.c.l.b16 %v1434
        %v4068 = vunpack.c.l.b16 %v1435
        %v4069 = vunpack.c.l.b16 %v1436
        %v4070 = vunpack.c.l.b16 %v1437
        %v4071 = vpack.c.b16 %v4068, %v4067
        %v4072 = vpack.c.b16 %v4070, %v4069
        %v4076 = vsel %vm1478, %v4054, 0
        %v4079 = vsel %vm1478, %v4055, 0
        %v4082 = vsel %vm1478, %v4056, 0
        %v4085 = vsel %vm1478, %v4057, 0
        %v4088 = vsel %vm1478, %v4058, 0
        %v4091 = vsel %vm1478, %v4059, 0
        %v4094 = vsel %vm1478, %v4060, 0
        %v4097 = vsel %vm1478, %v4061, 0
        %v4100 = vsel %vm1478, %v4062, 0
        %4102 = vmatprep.subr.bf16.mxu0 0
        %4103 = vmatpush1.bf16.msra.mxu0 %v4071
        %4104 = vmatprep.subr.bf16.mxu0 0
        %4105 = vmatpush1.bf16.msra.mxu0 %v4072
        %4106 = vmatprep.subr.bf16.mxu0 0
        %4107 = vmatpush1.bf16.msra.mxu0 0
        %4108 = vmatprep.subr.bf16.mxu0 0
        %4109 = vmatpush1.bf16.msra.mxu0 0
        %4110 = vmatprep.subr.bf16.mxu0 0
        %4111 = vmatpush1.bf16.msra.mxu0 0
        %4112 = vmatprep.subr.bf16.mxu0 0
        %4113 = vmatpush1.bf16.msra.mxu0 0
        %4114 = vmatprep.subr.bf16.mxu0 0
        %4115 = vmatpush1.bf16.msra.mxu0 0
        %4116 = vmatprep.subr.bf16.mxu0 0
        %4117 = vmatpush1.bf16.msra.mxu0 0
        %4118 = vmatprep.subr.bf16.mxu0 0
        %4119 = vmatpush1.bf16.msra.mxu0 0
        %4120 = vmatprep.subr.bf16.mxu0 0
        %4121 = vmatpush1.bf16.msra.mxu0 0
        %4122 = vmatprep.subr.bf16.mxu0 0
        %4123 = vmatpush1.bf16.msra.mxu0 0
        %4124 = vmatprep.subr.bf16.mxu0 0
        %4125 = vmatpush1.bf16.msra.mxu0 0
        %4126 = vmatprep.subr.bf16.mxu0 0
        %4127 = vmatpush1.bf16.msra.mxu0 0
        %4128 = vmatprep.subr.bf16.mxu0 0
        %4129 = vmatpush1.bf16.msra.mxu0 0
        %4130 = vmatprep.subr.bf16.mxu0 0
        %4131 = vmatpush1.bf16.msra.mxu0 0
        %4132 = vmatprep.subr.bf16.mxu0 0
        %4133 = vmatpush1.bf16.msra.mxu0 0
        %4134 = vmatprep.mubr.bf16.mxu0 0
        %4135 = vmatmul.mubr.bf16.gmra.mrb[0].mxu0 %v4076
        %v4136 = vpop.f32.mrb[0].mxu0
        %v4137 = vadd.f32 0.0, %v4136
        %v4138 = vpop.f32.mrb[0].mxu0
        %v4139 = vpop.f32.mrb[0].mxu0
        %v4140 = vadd.f32 0.0, %v4139
        %v4141 = vpop.f32.mrb[0].mxu0
        %4142 = vmatprep.mubr.bf16.mxu0 0
        %4143 = vmatmul.mubr.bf16.gmra.mrb[0].mxu0 %v4079
        %v4144 = vpop.f32.mrb[0].mxu0
        %v4145 = vadd.f32 0.0, %v4144
        %v4146 = vpop.f32.mrb[0].mxu0
        %v4147 = vpop.f32.mrb[0].mxu0
        %v4148 = vadd.f32 0.0, %v4147
        %v4149 = vpop.f32.mrb[0].mxu0
        %4150 = vmatprep.mubr.bf16.mxu0 0
        %4151 = vmatmul.mubr.bf16.gmra.mrb[0].mxu0 %v4082
        %v4152 = vpop.f32.mrb[0].mxu0
        %v4153 = vadd.f32 0.0, %v4152
        %v4154 = vpop.f32.mrb[0].mxu0
        %v4155 = vpop.f32.mrb[0].mxu0
        %v4156 = vadd.f32 0.0, %v4155
        %v4157 = vpop.f32.mrb[0].mxu0
        %4158 = vmatprep.mubr.bf16.mxu0 0
        %4159 = vmatmul.mubr.bf16.gmra.mrb[0].mxu0 %v4085
        %v4160 = vpop.f32.mrb[0].mxu0
        %v4161 = vadd.f32 0.0, %v4160
        %v4162 = vpop.f32.mrb[0].mxu0
        %v4163 = vpop.f32.mrb[0].mxu0
        %v4164 = vadd.f32 0.0, %v4163
        %v4165 = vpop.f32.mrb[0].mxu0
        %4166 = vmatprep.mubr.bf16.mxu0 0
        %4167 = vmatmul.mubr.bf16.gmra.mrb[0].mxu0 %v4088
        %v4168 = vpop.f32.mrb[0].mxu0
        %v4169 = vadd.f32 0.0, %v4168
        %v4170 = vpop.f32.mrb[0].mxu0
        %v4171 = vpop.f32.mrb[0].mxu0
        %v4172 = vadd.f32 0.0, %v4171
        %v4173 = vpop.f32.mrb[0].mxu0
        %4174 = vmatprep.mubr.bf16.mxu0 0
        %4175 = vmatmul.mubr.bf16.gmra.mrb[0].mxu0 %v4091
        %v4176 = vpop.f32.mrb[0].mxu0
        %v4177 = vadd.f32 0.0, %v4176
        %v4178 = vpop.f32.mrb[0].mxu0
        %v4179 = vpop.f32.mrb[0].mxu0
        %v4180 = vadd.f32 0.0, %v4179
        %v4181 = vpop.f32.mrb[0].mxu0
        %4182 = vmatprep.mubr.bf16.mxu0 0
        %4183 = vmatmul.mubr.bf16.gmra.mrb[0].mxu0 %v4094
        %v4184 = vpop.f32.mrb[0].mxu0
        %v4185 = vadd.f32 0.0, %v4184
        %v4186 = vpop.f32.mrb[0].mxu0
        %v4187 = vpop.f32.mrb[0].mxu0
        %v4188 = vadd.f32 0.0, %v4187
        %v4189 = vpop.f32.mrb[0].mxu0
        %4190 = vmatprep.mubr.bf16.mxu0 0
        %4191 = vmatmul.mubr.bf16.gmra.mrb[0].mxu0 %v4097
        %v4192 = vpop.f32.mrb[0].mxu0
        %v4193 = vadd.f32 0.0, %v4192
        %v4194 = vpop.f32.mrb[0].mxu0
        %v4195 = vpop.f32.mrb[0].mxu0
        %v4196 = vadd.f32 0.0, %v4195
        %v4197 = vpop.f32.mrb[0].mxu0
        %4198 = vmatprep.mubr.bf16.mxu0 0
        %4199 = vmatmul.mubr.bf16.gmra.mrb[0].mxu0 %v4100
        %v4200 = vpop.f32.mrb[0].mxu0
        %v4201 = vadd.f32 0.0, %v4200
        %v4202 = vpop.f32.mrb[0].mxu0
        %v4203 = vpop.f32.mrb[0].mxu0
        %v4204 = vadd.f32 0.0, %v4203
        %v4205 = vpop.f32.mrb[0].mxu0
        %4206 = vdwg.mxu0
        %v4207 = vadd.f32 %v3216, %v4137
        %v4208 = vadd.f32 %v3219, %v4140
        %v4209 = vadd.f32 %v3224, %v4145
        %v4210 = vadd.f32 %v3227, %v4148
        %v4211 = vadd.f32 %v3232, %v4153
        %v4212 = vadd.f32 %v3235, %v4156
        %v4213 = vadd.f32 %v3240, %v4161
        %v4214 = vadd.f32 %v3243, %v4164
        %v4215 = vadd.f32 %v3248, %v4169
        %v4216 = vadd.f32 %v3251, %v4172
        %v4217 = vadd.f32 %v3256, %v4177
        %v4218 = vadd.f32 %v3259, %v4180
        %v4219 = vadd.f32 %v3264, %v4185
        %v4220 = vadd.f32 %v3267, %v4188
        %v4221 = vadd.f32 %v3272, %v4193
        %v4222 = vadd.f32 %v3275, %v4196
        %v4223 = vadd.f32 %v3280, %v4201
        %v4224 = vadd.f32 %v3283, %v4204
        %4225 = vrot.lane.b32.xlu0 %v1399, 32
        %v4226 = vpop.permute.xlu0 %4225
        %4227 = vrot.lane.b32.xlu0 %v1402, 32
        %v4228 = vpop.permute.xlu0 %4227
        %4229 = vrot.lane.b32.xlu0 %v1405, 32
        %v4230 = vpop.permute.xlu0 %4229
        %4231 = vrot.lane.b32.xlu0 %v1408, 32
        %v4232 = vpop.permute.xlu0 %4231
        %4233 = vrot.lane.b32.xlu0 %v1411, 32
        %v4234 = vpop.permute.xlu0 %4233
        %4235 = vrot.lane.b32.xlu0 %v1414, 32
        %v4236 = vpop.permute.xlu0 %4235
        %4237 = vrot.lane.b32.xlu0 %v1417, 32
        %v4238 = vpop.permute.xlu0 %4237
        %4239 = vrot.lane.b32.xlu0 %v1420, 32
        %v4240 = vpop.permute.xlu0 %4239
        %4241 = vrot.lane.b32.xlu0 %v1423, 32
        %v4242 = vpop.permute.xlu0 %4241
        %4243 = vrot.lane.b32.xlu0 %v1400, 32
        %v4244 = vpop.permute.xlu0 %4243
        %4245 = vrot.lane.b32.xlu0 %v1403, 32
        %v4246 = vpop.permute.xlu0 %4245
        %4247 = vrot.lane.b32.xlu0 %v1406, 32
        %v4248 = vpop.permute.xlu0 %4247
        %4249 = vrot.lane.b32.xlu0 %v1409, 32
        %v4250 = vpop.permute.xlu0 %4249
        %4251 = vrot.lane.b32.xlu0 %v1412, 32
        %v4252 = vpop.permute.xlu0 %4251
        %4253 = vrot.lane.b32.xlu0 %v1415, 32
        %v4254 = vpop.permute.xlu0 %4253
        %4255 = vrot.lane.b32.xlu0 %v1418, 32
        %v4256 = vpop.permute.xlu0 %4255
        %4257 = vrot.lane.b32.xlu0 %v1421, 32
        %v4258 = vpop.permute.xlu0 %4257
        %4259 = vrot.lane.b32.xlu0 %v1424, 32
        %v4260 = vpop.permute.xlu0 %4259
        %v4262 = vsel %vm1478, %v4226, 0
        %v4265 = vsel %vm1478, %v4228, 0
        %v4268 = vsel %vm1478, %v4230, 0
        %v4271 = vsel %vm1478, %v4232, 0
        %v4274 = vsel %vm1478, %v4234, 0
        %v4277 = vsel %vm1478, %v4236, 0
        %v4280 = vsel %vm1478, %v4238, 0
        %v4283 = vsel %vm1478, %v4240, 0
        %v4286 = vsel %vm1478, %v4242, 0
        %v4289 = vsel %vm1478, %v4244, 0
        %v4292 = vsel %vm1478, %v4246, 0
        %v4295 = vsel %vm1478, %v4248, 0
        %v4298 = vsel %vm1478, %v4250, 0
        %v4301 = vsel %vm1478, %v4252, 0
        %v4304 = vsel %vm1478, %v4254, 0
        %v4307 = vsel %vm1478, %v4256, 0
        %v4310 = vsel %vm1478, %v4258, 0
        %v4313 = vsel %vm1478, %v4260, 0
        %4315 = vmatprep.subr.bf16.mxu0 0
        %4316 = vmatpush1.bf16.xpose.msra.mxu0 %v4289
        %4317 = vmatprep.subr.bf16.mxu0 0
        %4318 = vmatpush1.bf16.xpose.msra.mxu0 %v4292
        %4319 = vmatprep.subr.bf16.mxu0 0
        %4320 = vmatpush1.bf16.xpose.msra.mxu0 %v4295
        %4321 = vmatprep.subr.bf16.mxu0 0
        %4322 = vmatpush1.bf16.xpose.msra.mxu0 %v4298
        %4323 = vmatprep.subr.bf16.mxu0 0
        %4324 = vmatpush1.bf16.xpose.msra.mxu0 %v4301
        %4325 = vmatprep.subr.bf16.mxu0 0
        %4326 = vmatpush1.bf16.xpose.msra.mxu0 %v4304
        %4327 = vmatprep.subr.bf16.mxu0 0
        %4328 = vmatpush1.bf16.xpose.msra.mxu0 %v4307
        %4329 = vmatprep.subr.bf16.mxu0 0
        %4330 = vmatpush1.bf16.xpose.msra.mxu0 %v4310
        %4331 = vmatprep.subr.bf16.mxu0 0
        %4332 = vmatpush1.bf16.xpose.msra.mxu0 %v4313
        %4333 = vmatprep.subr.bf16.mxu0 0
        %4334 = vmatpush1.bf16.xpose.msra.mxu0 0
        %4335 = vmatprep.subr.bf16.mxu0 0
        %4336 = vmatpush1.bf16.xpose.msra.mxu0 0
        %4337 = vmatprep.subr.bf16.mxu0 0
        %4338 = vmatpush1.bf16.xpose.msra.mxu0 0
        %4339 = vmatprep.subr.bf16.mxu0 0
        %4340 = vmatpush1.bf16.xpose.msra.mxu0 0
        %4341 = vmatprep.subr.bf16.mxu0 0
        %4342 = vmatpush1.bf16.xpose.msra.mxu0 0
        %4343 = vmatprep.subr.bf16.mxu0 0
        %4344 = vmatpush1.bf16.xpose.msra.mxu0 0
        %4345 = vmatprep.subr.bf16.mxu0 0
        %4346 = vmatpush1.bf16.xpose.msra.mxu0 0
        %4347 = vmatprep.mubr.bf16.mxu0 0
        %4348 = vmatmul.mubr.bf16.gmra.mrb[0].mxu0 %v4262
        %v4349 = vpop.f32.mrb[0].mxu0
        %v4350 = vadd.f32 0.0, %v4349
        %v4351 = vpop.f32.mrb[0].mxu0
        %v4352 = vadd.f32 0.0, %v4351
        %v4353 = vpop.f32.mrb[0].mxu0
        %v4354 = vadd.f32 0.0, %v4353
        %v4355 = vpop.f32.mrb[0].mxu0
        %v4356 = vadd.f32 0.0, %v4355
        %4357 = vmatprep.mubr.bf16.mxu0 0
        %4358 = vmatmul.mubr.bf16.gmra.mrb[0].mxu0 %v4265
        %v4359 = vpop.f32.mrb[0].mxu0
        %v4360 = vadd.f32 0.0, %v4359
        %v4361 = vpop.f32.mrb[0].mxu0
        %v4362 = vadd.f32 0.0, %v4361
        %v4363 = vpop.f32.mrb[0].mxu0
        %v4364 = vadd.f32 0.0, %v4363
        %v4365 = vpop.f32.mrb[0].mxu0
        %v4366 = vadd.f32 0.0, %v4365
        %4367 = vmatprep.mubr.bf16.mxu0 0
        %4368 = vmatmul.mubr.bf16.gmra.mrb[0].mxu0 %v4268
        %v4369 = vpop.f32.mrb[0].mxu0
        %v4370 = vadd.f32 0.0, %v4369
        %v4371 = vpop.f32.mrb[0].mxu0
        %v4372 = vadd.f32 0.0, %v4371
        %v4373 = vpop.f32.mrb[0].mxu0
        %v4374 = vadd.f32 0.0, %v4373
        %v4375 = vpop.f32.mrb[0].mxu0
        %v4376 = vadd.f32 0.0, %v4375
        %4377 = vmatprep.mubr.bf16.mxu0 0
        %4378 = vmatmul.mubr.bf16.gmra.mrb[0].mxu0 %v4271
        %v4379 = vpop.f32.mrb[0].mxu0
        %v4380 = vadd.f32 0.0, %v4379
        %v4381 = vpop.f32.mrb[0].mxu0
        %v4382 = vadd.f32 0.0, %v4381
        %v4383 = vpop.f32.mrb[0].mxu0
        %v4384 = vadd.f32 0.0, %v4383
        %v4385 = vpop.f32.mrb[0].mxu0
        %v4386 = vadd.f32 0.0, %v4385
        %4387 = vmatprep.mubr.bf16.mxu0 0
        %4388 = vmatmul.mubr.bf16.gmra.mrb[0].mxu0 %v4274
        %v4389 = vpop.f32.mrb[0].mxu0
        %v4390 = vadd.f32 0.0, %v4389
        %v4391 = vpop.f32.mrb[0].mxu0
        %v4392 = vadd.f32 0.0, %v4391
        %v4393 = vpop.f32.mrb[0].mxu0
        %v4394 = vadd.f32 0.0, %v4393
        %v4395 = vpop.f32.mrb[0].mxu0
        %v4396 = vadd.f32 0.0, %v4395
        %4397 = vmatprep.mubr.bf16.mxu0 0
        %4398 = vmatmul.mubr.bf16.gmra.mrb[0].mxu0 %v4277
        %v4399 = vpop.f32.mrb[0].mxu0
        %v4400 = vadd.f32 0.0, %v4399
        %v4401 = vpop.f32.mrb[0].mxu0
        %v4402 = vadd.f32 0.0, %v4401
        %v4403 = vpop.f32.mrb[0].mxu0
        %v4404 = vadd.f32 0.0, %v4403
        %v4405 = vpop.f32.mrb[0].mxu0
        %v4406 = vadd.f32 0.0, %v4405
        %4407 = vmatprep.mubr.bf16.mxu0 0
        %4408 = vmatmul.mubr.bf16.gmra.mrb[0].mxu0 %v4280
        %v4409 = vpop.f32.mrb[0].mxu0
        %v4410 = vadd.f32 0.0, %v4409
        %v4411 = vpop.f32.mrb[0].mxu0
        %v4412 = vadd.f32 0.0, %v4411
        %v4413 = vpop.f32.mrb[0].mxu0
        %v4414 = vadd.f32 0.0, %v4413
        %v4415 = vpop.f32.mrb[0].mxu0
        %v4416 = vadd.f32 0.0, %v4415
        %4417 = vmatprep.mubr.bf16.mxu0 0
        %4418 = vmatmul.mubr.bf16.gmra.mrb[0].mxu0 %v4283
        %v4419 = vpop.f32.mrb[0].mxu0
        %v4420 = vadd.f32 0.0, %v4419
        %v4421 = vpop.f32.mrb[0].mxu0
        %v4422 = vadd.f32 0.0, %v4421
        %v4423 = vpop.f32.mrb[0].mxu0
        %v4424 = vadd.f32 0.0, %v4423
        %v4425 = vpop.f32.mrb[0].mxu0
        %v4426 = vadd.f32 0.0, %v4425
        %4427 = vmatprep.mubr.bf16.mxu0 0
        %4428 = vmatmul.mubr.bf16.gmra.mrb[0].mxu0 %v4286
        %v4429 = vpop.f32.mrb[0].mxu0
        %v4430 = vadd.f32 0.0, %v4429
        %v4431 = vpop.f32.mrb[0].mxu0
        %v4432 = vadd.f32 0.0, %v4431
        %v4433 = vpop.f32.mrb[0].mxu0
        %v4434 = vadd.f32 0.0, %v4433
        %v4435 = vpop.f32.mrb[0].mxu0
        %v4436 = vadd.f32 0.0, %v4435
        %4437 = vdwg.mxu0
        %v4438 = vmul.f32 %v4350, 0.17677669
        %v4439 = vmul.f32 %v4352, 0.17677669
        %v4440 = vmul.f32 %v4354, 0.17677669
        %v4441 = vmul.f32 %v4356, 0.17677669
        %v4442 = vmul.f32 %v4360, 0.17677669
        %v4443 = vmul.f32 %v4362, 0.17677669
        %v4444 = vmul.f32 %v4364, 0.17677669
        %v4445 = vmul.f32 %v4366, 0.17677669
        %v4446 = vmul.f32 %v4370, 0.17677669
        %v4447 = vmul.f32 %v4372, 0.17677669
        %v4448 = vmul.f32 %v4374, 0.17677669
        %v4449 = vmul.f32 %v4376, 0.17677669
        %v4450 = vmul.f32 %v4380, 0.17677669
        %v4451 = vmul.f32 %v4382, 0.17677669
        %v4452 = vmul.f32 %v4384, 0.17677669
        %v4453 = vmul.f32 %v4386, 0.17677669
        %v4454 = vmul.f32 %v4390, 0.17677669
        %v4455 = vmul.f32 %v4392, 0.17677669
        %v4456 = vmul.f32 %v4394, 0.17677669
        %v4457 = vmul.f32 %v4396, 0.17677669
        %v4458 = vmul.f32 %v4400, 0.17677669
        %v4459 = vmul.f32 %v4402, 0.17677669
        %v4460 = vmul.f32 %v4404, 0.17677669
        %v4461 = vmul.f32 %v4406, 0.17677669
        %v4462 = vmul.f32 %v4410, 0.17677669
        %v4463 = vmul.f32 %v4412, 0.17677669
        %v4464 = vmul.f32 %v4414, 0.17677669
        %v4465 = vmul.f32 %v4416, 0.17677669
        %v4466 = vmul.f32 %v4420, 0.17677669
        %v4467 = vmul.f32 %v4422, 0.17677669
        %v4468 = vmul.f32 %v4424, 0.17677669
        %v4469 = vmul.f32 %v4426, 0.17677669
        %v4470 = vmul.f32 %v4430, 0.17677669
        %v4471 = vmul.f32 %v4432, 0.17677669
        %v4472 = vmul.f32 %v4434, 0.17677669
        %v4473 = vmul.f32 %v4436, 0.17677669
        %v4474 = vadd.f32 %v4438, %v1442
        %v4475 = vadd.f32 %v4439, %v1443
        %v4476 = vadd.f32 %v4440, %v1444
        %v4477 = vadd.f32 %v4441, %v1445
        %v4478 = vadd.f32 %v4442, %v1446
        %v4479 = vadd.f32 %v4443, %v1447
        %v4480 = vadd.f32 %v4444, %v1448
        %v4481 = vadd.f32 %v4445, %v1449
        %v4482 = vadd.f32 %v4446, %v1450
        %v4483 = vadd.f32 %v4447, %v1451
        %v4484 = vadd.f32 %v4448, %v1452
        %v4485 = vadd.f32 %v4449, %v1453
        %v4486 = vadd.f32 %v4450, %v1454
        %v4487 = vadd.f32 %v4451, %v1455
        %v4488 = vadd.f32 %v4452, %v1456
        %v4489 = vadd.f32 %v4453, %v1457
        %v4490 = vadd.f32 %v4454, %v1458
        %v4491 = vadd.f32 %v4455, %v1459
        %v4492 = vadd.f32 %v4456, %v1460
        %v4493 = vadd.f32 %v4457, %v1461
        %v4494 = vadd.f32 %v4458, %v1462
        %v4495 = vadd.f32 %v4459, %v1463
        %v4496 = vadd.f32 %v4460, %v1464
        %v4497 = vadd.f32 %v4461, %v1465
        %v4498 = vadd.f32 %v4462, %v1466
        %v4499 = vadd.f32 %v4463, %v1467
        %v4500 = vadd.f32 %v4464, %v1468
        %v4501 = vadd.f32 %v4465, %v1469
        %v4502 = vadd.f32 %v4466, %v1470
        %v4503 = vadd.f32 %v4467, %v1471
        %v4504 = vadd.f32 %v4468, %v1472
        %v4505 = vadd.f32 %v4469, %v1473
        %v4506 = vadd.f32 %v4470, %v1474
        %v4507 = vadd.f32 %v4471, %v1475
        %v4508 = vadd.f32 %v4472, %v1476
        %v4509 = vadd.f32 %v4473, %v1477
        %v4510 = vsel %vm1728, %v4475, -inf
        %v4511 = vmax.f32 %v4474, %v4510
        %4512 = vmax.xlane.f32.xlu0 %v4511
        %v4513 = vpop.xlane.xlu0 %4512
        %v4514 = vsel %vm1728, %v4477, -inf
        %v4515 = vmax.f32 %v4476, %v4514
        %4516 = vmax.xlane.f32.xlu0 %v4515
        %v4517 = vpop.xlane.xlu0 %4516
        %v4518 = vsel %vm1728, %v4479, -inf
        %v4519 = vmax.f32 %v4478, %v4518
        %4520 = vmax.xlane.f32.xlu0 %v4519
        %v4521 = vpop.xlane.xlu0 %4520
        %v4522 = vsel %vm1728, %v4481, -inf
        %v4523 = vmax.f32 %v4480, %v4522
        %4524 = vmax.xlane.f32.xlu0 %v4523
        %v4525 = vpop.xlane.xlu0 %4524
        %v4526 = vsel %vm1728, %v4483, -inf
        %v4527 = vmax.f32 %v4482, %v4526
        %4528 = vmax.xlane.f32.xlu0 %v4527
        %v4529 = vpop.xlane.xlu0 %4528
        %v4530 = vsel %vm1728, %v4485, -inf
        %v4531 = vmax.f32 %v4484, %v4530
        %4532 = vmax.xlane.f32.xlu0 %v4531
        %v4533 = vpop.xlane.xlu0 %4532
        %v4534 = vsel %vm1728, %v4487, -inf
        %v4535 = vmax.f32 %v4486, %v4534
        %4536 = vmax.xlane.f32.xlu0 %v4535
        %v4537 = vpop.xlane.xlu0 %4536
        %v4538 = vsel %vm1728, %v4489, -inf
        %v4539 = vmax.f32 %v4488, %v4538
        %4540 = vmax.xlane.f32.xlu0 %v4539
        %v4541 = vpop.xlane.xlu0 %4540
        %v4542 = vsel %vm1728, %v4491, -inf
        %v4543 = vmax.f32 %v4490, %v4542
        %4544 = vmax.xlane.f32.xlu0 %v4543
        %v4545 = vpop.xlane.xlu0 %4544
        %v4546 = vsel %vm1728, %v4493, -inf
        %v4547 = vmax.f32 %v4492, %v4546
        %4548 = vmax.xlane.f32.xlu0 %v4547
        %v4549 = vpop.xlane.xlu0 %4548
        %v4550 = vsel %vm1728, %v4495, -inf
        %v4551 = vmax.f32 %v4494, %v4550
        %4552 = vmax.xlane.f32.xlu0 %v4551
        %v4553 = vpop.xlane.xlu0 %4552
        %v4554 = vsel %vm1728, %v4497, -inf
        %v4555 = vmax.f32 %v4496, %v4554
        %4556 = vmax.xlane.f32.xlu0 %v4555
        %v4557 = vpop.xlane.xlu0 %4556
        %v4558 = vsel %vm1728, %v4499, -inf
        %v4559 = vmax.f32 %v4498, %v4558
        %4560 = vmax.xlane.f32.xlu0 %v4559
        %v4561 = vpop.xlane.xlu0 %4560
        %v4562 = vsel %vm1728, %v4501, -inf
        %v4563 = vmax.f32 %v4500, %v4562
        %4564 = vmax.xlane.f32.xlu0 %v4563
        %v4565 = vpop.xlane.xlu0 %4564
        %v4566 = vsel %vm1728, %v4503, -inf
        %v4567 = vmax.f32 %v4502, %v4566
        %4568 = vmax.xlane.f32.xlu0 %v4567
        %v4569 = vpop.xlane.xlu0 %4568
        %v4570 = vsel %vm1728, %v4505, -inf
        %v4571 = vmax.f32 %v4504, %v4570
        %4572 = vmax.xlane.f32.xlu0 %v4571
        %v4573 = vpop.xlane.xlu0 %4572
        %v4574 = vsel %vm1728, %v4507, -inf
        %v4575 = vmax.f32 %v4506, %v4574
        %4576 = vmax.xlane.f32.xlu0 %v4575
        %v4577 = vpop.xlane.xlu0 %4576
        %v4578 = vsel %vm1728, %v4509, -inf
        %v4579 = vmax.f32 %v4508, %v4578
        %4580 = vmax.xlane.f32.xlu0 %v4579
        %v4581 = vpop.xlane.xlu0 %4580
        %v4582 = vsub.f32 %v4474, %v4513
        %v4583 = vsub.f32 %v4475, %v4513
        %v4584 = vsub.f32 %v4476, %v4517
        %v4585 = vsub.f32 %v4477, %v4517
        %v4586 = vsub.f32 %v4478, %v4521
        %v4587 = vsub.f32 %v4479, %v4521
        %v4588 = vsub.f32 %v4480, %v4525
        %v4589 = vsub.f32 %v4481, %v4525
        %v4590 = vsub.f32 %v4482, %v4529
        %v4591 = vsub.f32 %v4483, %v4529
        %v4592 = vsub.f32 %v4484, %v4533
        %v4593 = vsub.f32 %v4485, %v4533
        %v4594 = vsub.f32 %v4486, %v4537
        %v4595 = vsub.f32 %v4487, %v4537
        %v4596 = vsub.f32 %v4488, %v4541
        %v4597 = vsub.f32 %v4489, %v4541
        %v4598 = vsub.f32 %v4490, %v4545
        %v4599 = vsub.f32 %v4491, %v4545
        %v4600 = vsub.f32 %v4492, %v4549
        %v4601 = vsub.f32 %v4493, %v4549
        %v4602 = vsub.f32 %v4494, %v4553
        %v4603 = vsub.f32 %v4495, %v4553
        %v4604 = vsub.f32 %v4496, %v4557
        %v4605 = vsub.f32 %v4497, %v4557
        %v4606 = vsub.f32 %v4498, %v4561
        %v4607 = vsub.f32 %v4499, %v4561
        %v4608 = vsub.f32 %v4500, %v4565
        %v4609 = vsub.f32 %v4501, %v4565
        %v4610 = vsub.f32 %v4502, %v4569
        %v4611 = vsub.f32 %v4503, %v4569
        %v4612 = vsub.f32 %v4504, %v4573
        %v4613 = vsub.f32 %v4505, %v4573
        %v4614 = vsub.f32 %v4506, %v4577
        %v4615 = vsub.f32 %v4507, %v4577
        %v4616 = vsub.f32 %v4508, %v4581
        %v4617 = vsub.f32 %v4509, %v4581
        %v4618 = vmul.f32 %v4582, 1.442695
        %v4619 = vpow.pop %v4618
        %v4620 = vmul.f32 %v4583, 1.442695
        %v4621 = vpow.pop %v4620
        %v4622 = vmul.f32 %v4584, 1.442695
        %v4623 = vpow.pop %v4622
        %v4624 = vmul.f32 %v4585, 1.442695
        %v4625 = vpow.pop %v4624
        %v4626 = vmul.f32 %v4586, 1.442695
        %v4627 = vpow.pop %v4626
        %v4628 = vmul.f32 %v4587, 1.442695
        %v4629 = vpow.pop %v4628
        %v4630 = vmul.f32 %v4588, 1.442695
        %v4631 = vpow.pop %v4630
        %v4632 = vmul.f32 %v4589, 1.442695
        %v4633 = vpow.pop %v4632
        %v4634 = vmul.f32 %v4590, 1.442695
        %v4635 = vpow.pop %v4634
        %v4636 = vmul.f32 %v4591, 1.442695
        %v4637 = vpow.pop %v4636
        %v4638 = vmul.f32 %v4592, 1.442695
        %v4639 = vpow.pop %v4638
        %v4640 = vmul.f32 %v4593, 1.442695
        %v4641 = vpow.pop %v4640
        %v4642 = vmul.f32 %v4594, 1.442695
        %v4643 = vpow.pop %v4642
        %v4644 = vmul.f32 %v4595, 1.442695
        %v4645 = vpow.pop %v4644
        %v4646 = vmul.f32 %v4596, 1.442695
        %v4647 = vpow.pop %v4646
        %v4648 = vmul.f32 %v4597, 1.442695
        %v4649 = vpow.pop %v4648
        %v4650 = vmul.f32 %v4598, 1.442695
        %v4651 = vpow.pop %v4650
        %v4652 = vmul.f32 %v4599, 1.442695
        %v4653 = vpow.pop %v4652
        %v4654 = vmul.f32 %v4600, 1.442695
        %v4655 = vpow.pop %v4654
        %v4656 = vmul.f32 %v4601, 1.442695
        %v4657 = vpow.pop %v4656
        %v4658 = vmul.f32 %v4602, 1.442695
        %v4659 = vpow.pop %v4658
        %v4660 = vmul.f32 %v4603, 1.442695
        %v4661 = vpow.pop %v4660
        %v4662 = vmul.f32 %v4604, 1.442695
        %v4663 = vpow.pop %v4662
        %v4664 = vmul.f32 %v4605, 1.442695
        %v4665 = vpow.pop %v4664
        %v4666 = vmul.f32 %v4606, 1.442695
        %v4667 = vpow.pop %v4666
        %v4668 = vmul.f32 %v4607, 1.442695
        %v4669 = vpow.pop %v4668
        %v4670 = vmul.f32 %v4608, 1.442695
        %v4671 = vpow.pop %v4670
        %v4672 = vmul.f32 %v4609, 1.442695
        %v4673 = vpow.pop %v4672
        %v4674 = vmul.f32 %v4610, 1.442695
        %v4675 = vpow.pop %v4674
        %v4676 = vmul.f32 %v4611, 1.442695
        %v4677 = vpow.pop %v4676
        %v4678 = vmul.f32 %v4612, 1.442695
        %v4679 = vpow.pop %v4678
        %v4680 = vmul.f32 %v4613, 1.442695
        %v4681 = vpow.pop %v4680
        %v4682 = vmul.f32 %v4614, 1.442695
        %v4683 = vpow.pop %v4682
        %v4684 = vmul.f32 %v4615, 1.442695
        %v4685 = vpow.pop %v4684
        %v4686 = vmul.f32 %v4616, 1.442695
        %v4687 = vpow.pop %v4686
        %v4688 = vmul.f32 %v4617, 1.442695
        %v4689 = vpow.pop %v4688
        %v4690 = vsel %vm1728, %v4621, 0.0
        %v4691 = vadd.f32 %v4619, %v4690
        %4692 = vadd.xlane.f32.xlu0 %v4691
        %v4693 = vpop.xlane.xlu0 %4692
        %v4694 = vsel %vm1728, %v4625, 0.0
        %v4695 = vadd.f32 %v4623, %v4694
        %4696 = vadd.xlane.f32.xlu0 %v4695
        %v4697 = vpop.xlane.xlu0 %4696
        %v4698 = vsel %vm1728, %v4629, 0.0
        %v4699 = vadd.f32 %v4627, %v4698
        %4700 = vadd.xlane.f32.xlu0 %v4699
        %v4701 = vpop.xlane.xlu0 %4700
        %v4702 = vsel %vm1728, %v4633, 0.0
        %v4703 = vadd.f32 %v4631, %v4702
        %4704 = vadd.xlane.f32.xlu0 %v4703
        %v4705 = vpop.xlane.xlu0 %4704
        %v4706 = vsel %vm1728, %v4637, 0.0
        %v4707 = vadd.f32 %v4635, %v4706
        %4708 = vadd.xlane.f32.xlu0 %v4707
        %v4709 = vpop.xlane.xlu0 %4708
        %v4710 = vsel %vm1728, %v4641, 0.0
        %v4711 = vadd.f32 %v4639, %v4710
        %4712 = vadd.xlane.f32.xlu0 %v4711
        %v4713 = vpop.xlane.xlu0 %4712
        %v4714 = vsel %vm1728, %v4645, 0.0
        %v4715 = vadd.f32 %v4643, %v4714
        %4716 = vadd.xlane.f32.xlu0 %v4715
        %v4717 = vpop.xlane.xlu0 %4716
        %v4718 = vsel %vm1728, %v4649, 0.0
        %v4719 = vadd.f32 %v4647, %v4718
        %4720 = vadd.xlane.f32.xlu0 %v4719
        %v4721 = vpop.xlane.xlu0 %4720
        %v4722 = vsel %vm1728, %v4653, 0.0
        %v4723 = vadd.f32 %v4651, %v4722
        %4724 = vadd.xlane.f32.xlu0 %v4723
        %v4725 = vpop.xlane.xlu0 %4724
        %v4726 = vsel %vm1728, %v4657, 0.0
        %v4727 = vadd.f32 %v4655, %v4726
        %4728 = vadd.xlane.f32.xlu0 %v4727
        %v4729 = vpop.xlane.xlu0 %4728
        %v4730 = vsel %vm1728, %v4661, 0.0
        %v4731 = vadd.f32 %v4659, %v4730
        %4732 = vadd.xlane.f32.xlu0 %v4731
        %v4733 = vpop.xlane.xlu0 %4732
        %v4734 = vsel %vm1728, %v4665, 0.0
        %v4735 = vadd.f32 %v4663, %v4734
        %4736 = vadd.xlane.f32.xlu0 %v4735
        %v4737 = vpop.xlane.xlu0 %4736
        %v4738 = vsel %vm1728, %v4669, 0.0
        %v4739 = vadd.f32 %v4667, %v4738
        %4740 = vadd.xlane.f32.xlu0 %v4739
        %v4741 = vpop.xlane.xlu0 %4740
        %v4742 = vsel %vm1728, %v4673, 0.0
        %v4743 = vadd.f32 %v4671, %v4742
        %4744 = vadd.xlane.f32.xlu0 %v4743
        %v4745 = vpop.xlane.xlu0 %4744
        %v4746 = vsel %vm1728, %v4677, 0.0
        %v4747 = vadd.f32 %v4675, %v4746
        %4748 = vadd.xlane.f32.xlu0 %v4747
        %v4749 = vpop.xlane.xlu0 %4748
        %v4750 = vsel %vm1728, %v4681, 0.0
        %v4751 = vadd.f32 %v4679, %v4750
        %4752 = vadd.xlane.f32.xlu0 %v4751
        %v4753 = vpop.xlane.xlu0 %4752
        %v4754 = vsel %vm1728, %v4685, 0.0
        %v4755 = vadd.f32 %v4683, %v4754
        %4756 = vadd.xlane.f32.xlu0 %v4755
        %v4757 = vpop.xlane.xlu0 %4756
        %v4758 = vsel %vm1728, %v4689, 0.0
        %v4759 = vadd.f32 %v4687, %v4758
        %4760 = vadd.xlane.f32.xlu0 %v4759
        %v4761 = vpop.xlane.xlu0 %4760
        %v4762 = vrcp.pop %v4693
        %v4763 = vrcp.pop %v4697
        %v4764 = vrcp.pop %v4701
        %v4765 = vrcp.pop %v4705
        %v4766 = vrcp.pop %v4709
        %v4767 = vrcp.pop %v4713
        %v4768 = vrcp.pop %v4717
        %v4769 = vrcp.pop %v4721
        %v4770 = vrcp.pop %v4725
        %v4771 = vrcp.pop %v4729
        %v4772 = vrcp.pop %v4733
        %v4773 = vrcp.pop %v4737
        %v4774 = vrcp.pop %v4741
        %v4775 = vrcp.pop %v4745
        %v4776 = vrcp.pop %v4749
        %v4777 = vrcp.pop %v4753
        %v4778 = vrcp.pop %v4757
        %v4779 = vrcp.pop %v4761
        %v4780 = vmul.f32 %v4619, %v4762
        %v4781 = vmul.f32 %v4621, %v4762
        %v4782 = vmul.f32 %v4623, %v4763
        %v4783 = vmul.f32 %v4625, %v4763
        %v4784 = vmul.f32 %v4627, %v4764
        %v4785 = vmul.f32 %v4629, %v4764
        %v4786 = vmul.f32 %v4631, %v4765
        %v4787 = vmul.f32 %v4633, %v4765
        %v4788 = vmul.f32 %v4635, %v4766
        %v4789 = vmul.f32 %v4637, %v4766
        %v4790 = vmul.f32 %v4639, %v4767
        %v4791 = vmul.f32 %v4641, %v4767
        %v4792 = vmul.f32 %v4643, %v4768
        %v4793 = vmul.f32 %v4645, %v4768
        %v4794 = vmul.f32 %v4647, %v4769
        %v4795 = vmul.f32 %v4649, %v4769
        %v4796 = vmul.f32 %v4651, %v4770
        %v4797 = vmul.f32 %v4653, %v4770
        %v4798 = vmul.f32 %v4655, %v4771
        %v4799 = vmul.f32 %v4657, %v4771
        %v4800 = vmul.f32 %v4659, %v4772
        %v4801 = vmul.f32 %v4661, %v4772
        %v4802 = vmul.f32 %v4663, %v4773
        %v4803 = vmul.f32 %v4665, %v4773
        %v4804 = vmul.f32 %v4667, %v4774
        %v4805 = vmul.f32 %v4669, %v4774
        %v4806 = vmul.f32 %v4671, %v4775
        %v4807 = vmul.f32 %v4673, %v4775
        %v4808 = vmul.f32 %v4675, %v4776
        %v4809 = vmul.f32 %v4677, %v4776
        %v4810 = vmul.f32 %v4679, %v4777
        %v4811 = vmul.f32 %v4681, %v4777
        %v4812 = vmul.f32 %v4683, %v4778
        %v4813 = vmul.f32 %v4685, %v4778
        %v4814 = vmul.f32 %v4687, %v4779
        %v4815 = vmul.f32 %v4689, %v4779
        %v4816 = vpack.c.bf16 %v4782, %v4780
        %v4817 = vpack.c.bf16 %v4783, %v4781
        %v4818 = vpack.c.bf16 %v4786, %v4784
        %v4819 = vpack.c.bf16 %v4787, %v4785
        %v4820 = vpack.c.bf16 %v4790, %v4788
        %v4821 = vpack.c.bf16 %v4791, %v4789
        %v4822 = vpack.c.bf16 %v4794, %v4792
        %v4823 = vpack.c.bf16 %v4795, %v4793
        %v4824 = vpack.c.bf16 %v4798, %v4796
        %v4825 = vpack.c.bf16 %v4799, %v4797
        %v4826 = vpack.c.bf16 %v4802, %v4800
        %v4827 = vpack.c.bf16 %v4803, %v4801
        %v4828 = vpack.c.bf16 %v4806, %v4804
        %v4829 = vpack.c.bf16 %v4807, %v4805
        %v4830 = vpack.c.bf16 %v4810, %v4808
        %v4831 = vpack.c.bf16 %v4811, %v4809
        %v4832 = vpack.c.bf16 %v4814, %v4812
        %v4833 = vpack.c.bf16 %v4815, %v4813
        %4834 = vrot.lane.b32.xlu0 %v1401, 32
        %v4835 = vpop.permute.xlu0 %4834
        %4836 = vrot.lane.b32.xlu0 %v1404, 32
        %v4837 = vpop.permute.xlu0 %4836
        %4838 = vrot.lane.b32.xlu0 %v1407, 32
        %v4839 = vpop.permute.xlu0 %4838
        %4840 = vrot.lane.b32.xlu0 %v1410, 32
        %v4841 = vpop.permute.xlu0 %4840
        %4842 = vrot.lane.b32.xlu0 %v1413, 32
        %v4843 = vpop.permute.xlu0 %4842
        %4844 = vrot.lane.b32.xlu0 %v1416, 32
        %v4845 = vpop.permute.xlu0 %4844
        %4846 = vrot.lane.b32.xlu0 %v1419, 32
        %v4847 = vpop.permute.xlu0 %4846
        %4848 = vrot.lane.b32.xlu0 %v1422, 32
        %v4849 = vpop.permute.xlu0 %4848
        %4850 = vrot.lane.b32.xlu0 %v1425, 32
        %v4851 = vpop.permute.xlu0 %4850
        %v4862 = vsel %vm1728, %v4817, 0
        %v4865 = vsel %vm1728, %v4819, 0
        %v4868 = vsel %vm1728, %v4821, 0
        %v4871 = vsel %vm1728, %v4823, 0
        %v4874 = vsel %vm1728, %v4825, 0
        %v4877 = vsel %vm1728, %v4827, 0
        %v4880 = vsel %vm1728, %v4829, 0
        %v4883 = vsel %vm1728, %v4831, 0
        %v4886 = vsel %vm1728, %v4833, 0
        %4888 = vmatprep.subr.bf16.mxu0 0
        %4889 = vmatpush1.bf16.msra.mxu0 %v4835
        %4890 = vmatprep.subr.bf16.mxu0 0
        %4891 = vmatpush1.bf16.msra.mxu0 %v4837
        %4892 = vmatprep.subr.bf16.mxu0 0
        %4893 = vmatpush1.bf16.msra.mxu0 %v4839
        %4894 = vmatprep.subr.bf16.mxu0 0
        %4895 = vmatpush1.bf16.msra.mxu0 %v4841
        %4896 = vmatprep.subr.bf16.mxu0 0
        %4897 = vmatpush1.bf16.msra.mxu0 %v4843
        %4898 = vmatprep.subr.bf16.mxu0 0
        %4899 = vmatpush1.bf16.msra.mxu0 %v4845
        %4900 = vmatprep.subr.bf16.mxu0 0
        %4901 = vmatpush1.bf16.msra.mxu0 %v4847
        %4902 = vmatprep.subr.bf16.mxu0 0
        %4903 = vmatpush1.bf16.msra.mxu0 %v4849
        %4904 = vmatprep.subr.bf16.mxu0 0
        %4905 = vmatpush1.bf16.msra.mxu0 %v4851
        %4906 = vmatprep.subr.bf16.mxu0 0
        %4907 = vmatpush1.bf16.msra.mxu0 0
        %4908 = vmatprep.subr.bf16.mxu0 0
        %4909 = vmatpush1.bf16.msra.mxu0 0
        %4910 = vmatprep.subr.bf16.mxu0 0
        %4911 = vmatpush1.bf16.msra.mxu0 0
        %4912 = vmatprep.subr.bf16.mxu0 0
        %4913 = vmatpush1.bf16.msra.mxu0 0
        %4914 = vmatprep.subr.bf16.mxu0 0
        %4915 = vmatpush1.bf16.msra.mxu0 0
        %4916 = vmatprep.subr.bf16.mxu0 0
        %4917 = vmatpush1.bf16.msra.mxu0 0
        %4918 = vmatprep.subr.bf16.mxu0 0
        %4919 = vmatpush1.bf16.msra.mxu0 0
        %4920 = vmatprep.mubr.bf16.mxu0 %v4862
        %4921 = vmatmul.mubr.bf16.gmra.mrb[0].mxu0 %v4816
        %v4922 = vpop.f32.mrb[0].mxu0
        %v4923 = vadd.f32 0.0, %v4922
        %v4924 = vpop.f32.mrb[0].mxu0
        %v4925 = vpop.f32.mrb[0].mxu0
        %v4926 = vadd.f32 0.0, %v4925
        %v4927 = vpop.f32.mrb[0].mxu0
        %4928 = vmatprep.mubr.bf16.mxu0 %v4865
        %4929 = vmatmul.mubr.bf16.gmra.mrb[0].mxu0 %v4818
        %v4930 = vpop.f32.mrb[0].mxu0
        %v4931 = vadd.f32 0.0, %v4930
        %v4932 = vpop.f32.mrb[0].mxu0
        %v4933 = vpop.f32.mrb[0].mxu0
        %v4934 = vadd.f32 0.0, %v4933
        %v4935 = vpop.f32.mrb[0].mxu0
        %4936 = vmatprep.mubr.bf16.mxu0 %v4868
        %4937 = vmatmul.mubr.bf16.gmra.mrb[0].mxu0 %v4820
        %v4938 = vpop.f32.mrb[0].mxu0
        %v4939 = vadd.f32 0.0, %v4938
        %v4940 = vpop.f32.mrb[0].mxu0
        %v4941 = vpop.f32.mrb[0].mxu0
        %v4942 = vadd.f32 0.0, %v4941
        %v4943 = vpop.f32.mrb[0].mxu0
        %4944 = vmatprep.mubr.bf16.mxu0 %v4871
        %4945 = vmatmul.mubr.bf16.gmra.mrb[0].mxu0 %v4822
        %v4946 = vpop.f32.mrb[0].mxu0
        %v4947 = vadd.f32 0.0, %v4946
        %v4948 = vpop.f32.mrb[0].mxu0
        %v4949 = vpop.f32.mrb[0].mxu0
        %v4950 = vadd.f32 0.0, %v4949
        %v4951 = vpop.f32.mrb[0].mxu0
        %4952 = vmatprep.mubr.bf16.mxu0 %v4874
        %4953 = vmatmul.mubr.bf16.gmra.mrb[0].mxu0 %v4824
        %v4954 = vpop.f32.mrb[0].mxu0
        %v4955 = vadd.f32 0.0, %v4954
        %v4956 = vpop.f32.mrb[0].mxu0
        %v4957 = vpop.f32.mrb[0].mxu0
        %v4958 = vadd.f32 0.0, %v4957
        %v4959 = vpop.f32.mrb[0].mxu0
        %4960 = vmatprep.mubr.bf16.mxu0 %v4877
        %4961 = vmatmul.mubr.bf16.gmra.mrb[0].mxu0 %v4826
        %v4962 = vpop.f32.mrb[0].mxu0
        %v4963 = vadd.f32 0.0, %v4962
        %v4964 = vpop.f32.mrb[0].mxu0
        %v4965 = vpop.f32.mrb[0].mxu0
        %v4966 = vadd.f32 0.0, %v4965
        %v4967 = vpop.f32.mrb[0].mxu0
        %4968 = vmatprep.mubr.bf16.mxu0 %v4880
        %4969 = vmatmul.mubr.bf16.gmra.mrb[0].mxu0 %v4828
        %v4970 = vpop.f32.mrb[0].mxu0
        %v4971 = vadd.f32 0.0, %v4970
        %v4972 = vpop.f32.mrb[0].mxu0
        %v4973 = vpop.f32.mrb[0].mxu0
        %v4974 = vadd.f32 0.0, %v4973
        %v4975 = vpop.f32.mrb[0].mxu0
        %4976 = vmatprep.mubr.bf16.mxu0 %v4883
        %4977 = vmatmul.mubr.bf16.gmra.mrb[0].mxu0 %v4830
        %v4978 = vpop.f32.mrb[0].mxu0
        %v4979 = vadd.f32 0.0, %v4978
        %v4980 = vpop.f32.mrb[0].mxu0
        %v4981 = vpop.f32.mrb[0].mxu0
        %v4982 = vadd.f32 0.0, %v4981
        %v4983 = vpop.f32.mrb[0].mxu0
        %4984 = vmatprep.mubr.bf16.mxu0 %v4886
        %4985 = vmatmul.mubr.bf16.gmra.mrb[0].mxu0 %v4832
        %v4986 = vpop.f32.mrb[0].mxu0
        %v4987 = vadd.f32 0.0, %v4986
        %v4988 = vpop.f32.mrb[0].mxu0
        %v4989 = vpop.f32.mrb[0].mxu0
        %v4990 = vadd.f32 0.0, %v4989
        %v4991 = vpop.f32.mrb[0].mxu0
        %4992 = vdwg.mxu0
        %v4993 = vpack.c.bf16 %v4926, %v4923
        %v4994 = vpack.c.bf16 %v4934, %v4931
        %v4995 = vpack.c.bf16 %v4942, %v4939
        %v4996 = vpack.c.bf16 %v4950, %v4947
        %v4997 = vpack.c.bf16 %v4958, %v4955
        %v4998 = vpack.c.bf16 %v4966, %v4963
        %v4999 = vpack.c.bf16 %v4974, %v4971
        %v5000 = vpack.c.bf16 %v4982, %v4979
        %v5001 = vpack.c.bf16 %v4990, %v4987
        %v5006 = vunpack.c.l.b16 %v1438
        %v5007 = vunpack.c.l.b16 %v1439
        %v5008 = vunpack.c.l.b16 %v1440
        %v5009 = vunpack.c.l.b16 %v1441
        %v5010 = vpack.c.b16 %v5007, %v5006
        %v5011 = vpack.c.b16 %v5009, %v5008
        %v5015 = vsel %vm1478, %v4993, 0
        %v5018 = vsel %vm1478, %v4994, 0
        %v5021 = vsel %vm1478, %v4995, 0
        %v5024 = vsel %vm1478, %v4996, 0
        %v5027 = vsel %vm1478, %v4997, 0
        %v5030 = vsel %vm1478, %v4998, 0
        %v5033 = vsel %vm1478, %v4999, 0
        %v5036 = vsel %vm1478, %v5000, 0
        %v5039 = vsel %vm1478, %v5001, 0
        %5041 = vmatprep.subr.bf16.mxu0 0
        %5042 = vmatpush1.bf16.msra.mxu0 %v5010
        %5043 = vmatprep.subr.bf16.mxu0 0
        %5044 = vmatpush1.bf16.msra.mxu0 %v5011
        %5045 = vmatprep.subr.bf16.mxu0 0
        %5046 = vmatpush1.bf16.msra.mxu0 0
        %5047 = vmatprep.subr.bf16.mxu0 0
        %5048 = vmatpush1.bf16.msra.mxu0 0
        %5049 = vmatprep.subr.bf16.mxu0 0
        %5050 = vmatpush1.bf16.msra.mxu0 0
        %5051 = vmatprep.subr.bf16.mxu0 0
        %5052 = vmatpush1.bf16.msra.mxu0 0
        %5053 = vmatprep.subr.bf16.mxu0 0
        %5054 = vmatpush1.bf16.msra.mxu0 0
        %5055 = vmatprep.subr.bf16.mxu0 0
        %5056 = vmatpush1.bf16.msra.mxu0 0
        %5057 = vmatprep.subr.bf16.mxu0 0
        %5058 = vmatpush1.bf16.msra.mxu0 0
        %5059 = vmatprep.subr.bf16.mxu0 0
        %5060 = vmatpush1.bf16.msra.mxu0 0
        %5061 = vmatprep.subr.bf16.mxu0 0
        %5062 = vmatpush1.bf16.msra.mxu0 0
        %5063 = vmatprep.subr.bf16.mxu0 0
        %5064 = vmatpush1.bf16.msra.mxu0 0
        %5065 = vmatprep.subr.bf16.mxu0 0
        %5066 = vmatpush1.bf16.msra.mxu0 0
        %5067 = vmatprep.subr.bf16.mxu0 0
        %5068 = vmatpush1.bf16.msra.mxu0 0
        %5069 = vmatprep.subr.bf16.mxu0 0
        %5070 = vmatpush1.bf16.msra.mxu0 0
        %5071 = vmatprep.subr.bf16.mxu0 0
        %5072 = vmatpush1.bf16.msra.mxu0 0
        %5073 = vmatprep.mubr.bf16.mxu0 0
        %5074 = vmatmul.mubr.bf16.gmra.mrb[0].mxu0 %v5015
        %v5075 = vpop.f32.mrb[0].mxu0
        %v5076 = vadd.f32 0.0, %v5075
        %v5077 = vpop.f32.mrb[0].mxu0
        %v5078 = vpop.f32.mrb[0].mxu0
        %v5079 = vadd.f32 0.0, %v5078
        %v5080 = vpop.f32.mrb[0].mxu0
        %5081 = vmatprep.mubr.bf16.mxu0 0
        %5082 = vmatmul.mubr.bf16.gmra.mrb[0].mxu0 %v5018
        %v5083 = vpop.f32.mrb[0].mxu0
        %v5084 = vadd.f32 0.0, %v5083
        %v5085 = vpop.f32.mrb[0].mxu0
        %v5086 = vpop.f32.mrb[0].mxu0
        %v5087 = vadd.f32 0.0, %v5086
        %v5088 = vpop.f32.mrb[0].mxu0
        %5089 = vmatprep.mubr.bf16.mxu0 0
        %5090 = vmatmul.mubr.bf16.gmra.mrb[0].mxu0 %v5021
        %v5091 = vpop.f32.mrb[0].mxu0
        %v5092 = vadd.f32 0.0, %v5091
        %v5093 = vpop.f32.mrb[0].mxu0
        %v5094 = vpop.f32.mrb[0].mxu0
        %v5095 = vadd.f32 0.0, %v5094
        %v5096 = vpop.f32.mrb[0].mxu0
        %5097 = vmatprep.mubr.bf16.mxu0 0
        %5098 = vmatmul.mubr.bf16.gmra.mrb[0].mxu0 %v5024
        %v5099 = vpop.f32.mrb[0].mxu0
        %v5100 = vadd.f32 0.0, %v5099
        %v5101 = vpop.f32.mrb[0].mxu0
        %v5102 = vpop.f32.mrb[0].mxu0
        %v5103 = vadd.f32 0.0, %v5102
        %v5104 = vpop.f32.mrb[0].mxu0
        %5105 = vmatprep.mubr.bf16.mxu0 0
        %5106 = vmatmul.mubr.bf16.gmra.mrb[0].mxu0 %v5027
        %v5107 = vpop.f32.mrb[0].mxu0
        %v5108 = vadd.f32 0.0, %v5107
        %v5109 = vpop.f32.mrb[0].mxu0
        %v5110 = vpop.f32.mrb[0].mxu0
        %v5111 = vadd.f32 0.0, %v5110
        %v5112 = vpop.f32.mrb[0].mxu0
        %5113 = vmatprep.mubr.bf16.mxu0 0
        %5114 = vmatmul.mubr.bf16.gmra.mrb[0].mxu0 %v5030
        %v5115 = vpop.f32.mrb[0].mxu0
        %v5116 = vadd.f32 0.0, %v5115
        %v5117 = vpop.f32.mrb[0].mxu0
        %v5118 = vpop.f32.mrb[0].mxu0
        %v5119 = vadd.f32 0.0, %v5118
        %v5120 = vpop.f32.mrb[0].mxu0
        %5121 = vmatprep.mubr.bf16.mxu0 0
        %5122 = vmatmul.mubr.bf16.gmra.mrb[0].mxu0 %v5033
        %v5123 = vpop.f32.mrb[0].mxu0
        %v5124 = vadd.f32 0.0, %v5123
        %v5125 = vpop.f32.mrb[0].mxu0
        %v5126 = vpop.f32.mrb[0].mxu0
        %v5127 = vadd.f32 0.0, %v5126
        %v5128 = vpop.f32.mrb[0].mxu0
        %5129 = vmatprep.mubr.bf16.mxu0 0
        %5130 = vmatmul.mubr.bf16.gmra.mrb[0].mxu0 %v5036
        %v5131 = vpop.f32.mrb[0].mxu0
        %v5132 = vadd.f32 0.0, %v5131
        %v5133 = vpop.f32.mrb[0].mxu0
        %v5134 = vpop.f32.mrb[0].mxu0
        %v5135 = vadd.f32 0.0, %v5134
        %v5136 = vpop.f32.mrb[0].mxu0
        %5137 = vmatprep.mubr.bf16.mxu0 0
        %5138 = vmatmul.mubr.bf16.gmra.mrb[0].mxu0 %v5039
        %v5139 = vpop.f32.mrb[0].mxu0
        %v5140 = vadd.f32 0.0, %v5139
        %v5141 = vpop.f32.mrb[0].mxu0
        %v5142 = vpop.f32.mrb[0].mxu0
        %v5143 = vadd.f32 0.0, %v5142
        %v5144 = vpop.f32.mrb[0].mxu0
        %5145 = vdwg.mxu0
        %v5146 = vadd.f32 %v4207, %v5076
        %v5147 = vadd.f32 %v4208, %v5079
        %v5148 = vadd.f32 %v4209, %v5084
        %v5149 = vadd.f32 %v4210, %v5087
        %v5150 = vadd.f32 %v4211, %v5092
        %v5151 = vadd.f32 %v4212, %v5095
        %v5152 = vadd.f32 %v4213, %v5100
        %v5153 = vadd.f32 %v4214, %v5103
        %v5154 = vadd.f32 %v4215, %v5108
        %v5155 = vadd.f32 %v4216, %v5111
        %v5156 = vadd.f32 %v4217, %v5116
        %v5157 = vadd.f32 %v4218, %v5119
        %v5158 = vadd.f32 %v4219, %v5124
        %v5159 = vadd.f32 %v4220, %v5127
        %v5160 = vadd.f32 %v4221, %v5132
        %v5161 = vadd.f32 %v4222, %v5135
        %v5162 = vadd.f32 %v4223, %v5140
        %v5163 = vadd.f32 %v4224, %v5143
        %5164 = vst [vmem:[#allocation2] sm:$0xff] %v5146
        %5165 = vst [vmem:[#allocation2 + $0x8] sm:$0xff] %v5147
        %5166 = vst [vmem:[#allocation2 + $0x10] sm:$0xff] %v5148
        %5167 = vst [vmem:[#allocation2 + $0x18] sm:$0xff] %v5149
        %5168 = vst [vmem:[#allocation2 + $0x20] sm:$0xff] %v5150
        %5169 = vst [vmem:[#allocation2 + $0x28] sm:$0xff] %v5151
        %5170 = vst [vmem:[#allocation2 + $0x30] sm:$0xff] %v5152
        %5171 = vst [vmem:[#allocation2 + $0x38] sm:$0xff] %v5153
        %5172 = vst [vmem:[#allocation2 + $0x40] sm:$0xff] %v5154
        %5173 = vst [vmem:[#allocation2 + $0x48] sm:$0xff] %v5155
        %5174 = vst [vmem:[#allocation2 + $0x50] sm:$0xff] %v5156
        %5175 = vst [vmem:[#allocation2 + $0x58] sm:$0xff] %v5157
        %5176 = vst [vmem:[#allocation2 + $0x60] sm:$0xff] %v5158
        %5177 = vst [vmem:[#allocation2 + $0x68] sm:$0xff] %v5159
        %5178 = vst [vmem:[#allocation2 + $0x70] sm:$0xff] %v5160
        %5179 = vst [vmem:[#allocation2 + $0x78] sm:$0xff] %v5161
        %5180 = vst [vmem:[#allocation2 + $0x80] sm:$0xff] %v5162
        %5181 = vst [vmem:[#allocation2 + $0x88] sm:$0xff] %v5163
        %v5182 = vld [vmem:[#allocation2] sm:$0xff]
        %v5183 = vld [vmem:[#allocation2 + $0x8] sm:$0xff]
        %v5184 = vld [vmem:[#allocation2 + $0x10] sm:$0xff]
        %v5185 = vld [vmem:[#allocation2 + $0x18] sm:$0xff]
        %v5186 = vld [vmem:[#allocation2 + $0x20] sm:$0xff]
        %v5187 = vld [vmem:[#allocation2 + $0x28] sm:$0xff]
        %v5188 = vld [vmem:[#allocation2 + $0x30] sm:$0xff]
        %v5189 = vld [vmem:[#allocation2 + $0x38] sm:$0xff]
        %v5190 = vld [vmem:[#allocation2 + $0x40] sm:$0xff]
        %v5191 = vld [vmem:[#allocation2 + $0x48] sm:$0xff]
        %v5192 = vld [vmem:[#allocation2 + $0x50] sm:$0xff]
        %v5193 = vld [vmem:[#allocation2 + $0x58] sm:$0xff]
        %v5194 = vld [vmem:[#allocation2 + $0x60] sm:$0xff]
        %v5195 = vld [vmem:[#allocation2 + $0x68] sm:$0xff]
        %v5196 = vld [vmem:[#allocation2 + $0x70] sm:$0xff]
        %v5197 = vld [vmem:[#allocation2 + $0x78] sm:$0xff]
        %v5198 = vld [vmem:[#allocation2 + $0x80] sm:$0xff]
        %v5199 = vld [vmem:[#allocation2 + $0x88] sm:$0xff]
        %v5200 = vld [vmem:[%s8] sm:$0x1]
        %v5202 = vlaneseq
        %v5203 = vshrl.u32 %v5202, 7
        %v5204 = vsub.s32 0, %v5203
        %v5205 = vrot.slane %v5200, %v5204
        %v5207 = vadd.f32 %v5182, %v5205
        %v5208 = vadd.f32 %v5183, %v5205
        %v5209 = vadd.f32 %v5184, %v5205
        %v5210 = vadd.f32 %v5185, %v5205
        %v5211 = vadd.f32 %v5186, %v5205
        %v5212 = vadd.f32 %v5187, %v5205
        %v5213 = vadd.f32 %v5188, %v5205
        %v5214 = vadd.f32 %v5189, %v5205
        %v5215 = vadd.f32 %v5190, %v5205
        %v5216 = vadd.f32 %v5191, %v5205
        %v5217 = vadd.f32 %v5192, %v5205
        %v5218 = vadd.f32 %v5193, %v5205
        %v5219 = vadd.f32 %v5194, %v5205
        %v5220 = vadd.f32 %v5195, %v5205
        %v5221 = vadd.f32 %v5196, %v5205
        %v5222 = vadd.f32 %v5197, %v5205
        %v5223 = vadd.f32 %v5198, %v5205
        %v5224 = vadd.f32 %v5199, %v5205
        %v5225 = vadd.f32 %v5207, %v592
        %v5226 = vadd.f32 %v5208, %v593
        %v5227 = vadd.f32 %v5209, %v594
        %v5228 = vadd.f32 %v5210, %v595
        %v5229 = vadd.f32 %v5211, %v596
        %v5230 = vadd.f32 %v5212, %v597
        %v5231 = vadd.f32 %v5213, %v598
        %v5232 = vadd.f32 %v5214, %v599
        %v5233 = vadd.f32 %v5215, %v600
        %v5234 = vadd.f32 %v5216, %v601
        %v5235 = vadd.f32 %v5217, %v602
        %v5236 = vadd.f32 %v5218, %v603
        %v5237 = vadd.f32 %v5219, %v604
        %v5238 = vadd.f32 %v5220, %v605
        %v5239 = vadd.f32 %v5221, %v606
        %v5240 = vadd.f32 %v5222, %v607
        %v5241 = vadd.f32 %v5223, %v608
        %v5242 = vadd.f32 %v5224, %v609
        %v5243 = vld [vmem:[%s9] sm:$0x1]
        %v5244 = vld [vmem:[%s10] sm:$0x1]
        %5245 = vadd.xlane.f32.xlu0 %v5225
        %v5246 = vpop.xlane.xlu0 %5245
        %5247 = vadd.xlane.f32.xlu0 %v5226
        %v5248 = vpop.xlane.xlu0 %5247
        %5249 = vadd.xlane.f32.xlu0 %v5227
        %v5250 = vpop.xlane.xlu0 %5249
        %5251 = vadd.xlane.f32.xlu0 %v5228
        %v5252 = vpop.xlane.xlu0 %5251
        %5253 = vadd.xlane.f32.xlu0 %v5229
        %v5254 = vpop.xlane.xlu0 %5253
        %5255 = vadd.xlane.f32.xlu0 %v5230
        %v5256 = vpop.xlane.xlu0 %5255
        %5257 = vadd.xlane.f32.xlu0 %v5231
        %v5258 = vpop.xlane.xlu0 %5257
        %5259 = vadd.xlane.f32.xlu0 %v5232
        %v5260 = vpop.xlane.xlu0 %5259
        %5261 = vadd.xlane.f32.xlu0 %v5233
        %v5262 = vpop.xlane.xlu0 %5261
        %5263 = vadd.xlane.f32.xlu0 %v5234
        %v5264 = vpop.xlane.xlu0 %5263
        %5265 = vadd.xlane.f32.xlu0 %v5235
        %v5266 = vpop.xlane.xlu0 %5265
        %5267 = vadd.xlane.f32.xlu0 %v5236
        %v5268 = vpop.xlane.xlu0 %5267
        %5269 = vadd.xlane.f32.xlu0 %v5237
        %v5270 = vpop.xlane.xlu0 %5269
        %5271 = vadd.xlane.f32.xlu0 %v5238
        %v5272 = vpop.xlane.xlu0 %5271
        %5273 = vadd.xlane.f32.xlu0 %v5239
        %v5274 = vpop.xlane.xlu0 %5273
        %5275 = vadd.xlane.f32.xlu0 %v5240
        %v5276 = vpop.xlane.xlu0 %5275
        %5277 = vadd.xlane.f32.xlu0 %v5241
        %v5278 = vpop.xlane.xlu0 %5277
        %5279 = vadd.xlane.f32.xlu0 %v5242
        %v5280 = vpop.xlane.xlu0 %5279
        %v5281 = vmul.f32 %v5246, %v648
        %v5282 = vmul.f32 %v5248, %v648
        %v5283 = vmul.f32 %v5250, %v648
        %v5284 = vmul.f32 %v5252, %v648
        %v5285 = vmul.f32 %v5254, %v648
        %v5286 = vmul.f32 %v5256, %v648
        %v5287 = vmul.f32 %v5258, %v648
        %v5288 = vmul.f32 %v5260, %v648
        %v5289 = vmul.f32 %v5262, %v648
        %v5290 = vmul.f32 %v5264, %v648
        %v5291 = vmul.f32 %v5266, %v648
        %v5292 = vmul.f32 %v5268, %v648
        %v5293 = vmul.f32 %v5270, %v648
        %v5294 = vmul.f32 %v5272, %v648
        %v5295 = vmul.f32 %v5274, %v648
        %v5296 = vmul.f32 %v5276, %v648
        %v5297 = vmul.f32 %v5278, %v648
        %v5298 = vmul.f32 %v5280, %v648
        %v5299 = vsub.f32 %v5225, %v5281
        %v5300 = vsub.f32 %v5226, %v5282
        %v5301 = vsub.f32 %v5227, %v5283
        %v5302 = vsub.f32 %v5228, %v5284
        %v5303 = vsub.f32 %v5229, %v5285
        %v5304 = vsub.f32 %v5230, %v5286
        %v5305 = vsub.f32 %v5231, %v5287
        %v5306 = vsub.f32 %v5232, %v5288
        %v5307 = vsub.f32 %v5233, %v5289
        %v5308 = vsub.f32 %v5234, %v5290
        %v5309 = vsub.f32 %v5235, %v5291
        %v5310 = vsub.f32 %v5236, %v5292
        %v5311 = vsub.f32 %v5237, %v5293
        %v5312 = vsub.f32 %v5238, %v5294
        %v5313 = vsub.f32 %v5239, %v5295
        %v5314 = vsub.f32 %v5240, %v5296
        %v5315 = vsub.f32 %v5241, %v5297
        %v5316 = vsub.f32 %v5242, %v5298
        %v5317 = vmul.f32 %v5299, %v5299
        %v5318 = vmul.f32 %v5300, %v5300
        %v5319 = vmul.f32 %v5301, %v5301
        %v5320 = vmul.f32 %v5302, %v5302
        %v5321 = vmul.f32 %v5303, %v5303
        %v5322 = vmul.f32 %v5304, %v5304
        %v5323 = vmul.f32 %v5305, %v5305
        %v5324 = vmul.f32 %v5306, %v5306
        %v5325 = vmul.f32 %v5307, %v5307
        %v5326 = vmul.f32 %v5308, %v5308
        %v5327 = vmul.f32 %v5309, %v5309
        %v5328 = vmul.f32 %v5310, %v5310
        %v5329 = vmul.f32 %v5311, %v5311
        %v5330 = vmul.f32 %v5312, %v5312
        %v5331 = vmul.f32 %v5313, %v5313
        %v5332 = vmul.f32 %v5314, %v5314
        %v5333 = vmul.f32 %v5315, %v5315
        %v5334 = vmul.f32 %v5316, %v5316
        %5335 = vadd.xlane.f32.xlu0 %v5317
        %v5336 = vpop.xlane.xlu0 %5335
        %5337 = vadd.xlane.f32.xlu0 %v5318
        %v5338 = vpop.xlane.xlu0 %5337
        %5339 = vadd.xlane.f32.xlu0 %v5319
        %v5340 = vpop.xlane.xlu0 %5339
        %5341 = vadd.xlane.f32.xlu0 %v5320
        %v5342 = vpop.xlane.xlu0 %5341
        %5343 = vadd.xlane.f32.xlu0 %v5321
        %v5344 = vpop.xlane.xlu0 %5343
        %5345 = vadd.xlane.f32.xlu0 %v5322
        %v5346 = vpop.xlane.xlu0 %5345
        %5347 = vadd.xlane.f32.xlu0 %v5323
        %v5348 = vpop.xlane.xlu0 %5347
        %5349 = vadd.xlane.f32.xlu0 %v5324
        %v5350 = vpop.xlane.xlu0 %5349
        %5351 = vadd.xlane.f32.xlu0 %v5325
        %v5352 = vpop.xlane.xlu0 %5351
        %5353 = vadd.xlane.f32.xlu0 %v5326
        %v5354 = vpop.xlane.xlu0 %5353
        %5355 = vadd.xlane.f32.xlu0 %v5327
        %v5356 = vpop.xlane.xlu0 %5355
        %5357 = vadd.xlane.f32.xlu0 %v5328
        %v5358 = vpop.xlane.xlu0 %5357
        %5359 = vadd.xlane.f32.xlu0 %v5329
        %v5360 = vpop.xlane.xlu0 %5359
        %5361 = vadd.xlane.f32.xlu0 %v5330
        %v5362 = vpop.xlane.xlu0 %5361
        %5363 = vadd.xlane.f32.xlu0 %v5331
        %v5364 = vpop.xlane.xlu0 %5363
        %5365 = vadd.xlane.f32.xlu0 %v5332
        %v5366 = vpop.xlane.xlu0 %5365
        %5367 = vadd.xlane.f32.xlu0 %v5333
        %v5368 = vpop.xlane.xlu0 %5367
        %5369 = vadd.xlane.f32.xlu0 %v5334
        %v5370 = vpop.xlane.xlu0 %5369
        %v5371 = vmul.f32 %v5336, %v648
        %v5372 = vmul.f32 %v5338, %v648
        %v5373 = vmul.f32 %v5340, %v648
        %v5374 = vmul.f32 %v5342, %v648
        %v5375 = vmul.f32 %v5344, %v648
        %v5376 = vmul.f32 %v5346, %v648
        %v5377 = vmul.f32 %v5348, %v648
        %v5378 = vmul.f32 %v5350, %v648
        %v5379 = vmul.f32 %v5352, %v648
        %v5380 = vmul.f32 %v5354, %v648
        %v5381 = vmul.f32 %v5356, %v648
        %v5382 = vmul.f32 %v5358, %v648
        %v5383 = vmul.f32 %v5360, %v648
        %v5384 = vmul.f32 %v5362, %v648
        %v5385 = vmul.f32 %v5364, %v648
        %v5386 = vmul.f32 %v5366, %v648
        %v5387 = vmul.f32 %v5368, %v648
        %v5388 = vmul.f32 %v5370, %v648
        %v5389 = vadd.f32 %v5371, 1e-06
        %v5390 = vadd.f32 %v5372, 1e-06
        %v5391 = vadd.f32 %v5373, 1e-06
        %v5392 = vadd.f32 %v5374, 1e-06
        %v5393 = vadd.f32 %v5375, 1e-06
        %v5394 = vadd.f32 %v5376, 1e-06
        %v5395 = vadd.f32 %v5377, 1e-06
        %v5396 = vadd.f32 %v5378, 1e-06
        %v5397 = vadd.f32 %v5379, 1e-06
        %v5398 = vadd.f32 %v5380, 1e-06
        %v5399 = vadd.f32 %v5381, 1e-06
        %v5400 = vadd.f32 %v5382, 1e-06
        %v5401 = vadd.f32 %v5383, 1e-06
        %v5402 = vadd.f32 %v5384, 1e-06
        %v5403 = vadd.f32 %v5385, 1e-06
        %v5404 = vadd.f32 %v5386, 1e-06
        %v5405 = vadd.f32 %v5387, 1e-06
        %v5406 = vadd.f32 %v5388, 1e-06
        %v5407 = vrsqrt.pop %v5389
        %v5408 = vrsqrt.pop %v5390
        %v5409 = vrsqrt.pop %v5391
        %v5410 = vrsqrt.pop %v5392
        %v5411 = vrsqrt.pop %v5393
        %v5412 = vrsqrt.pop %v5394
        %v5413 = vrsqrt.pop %v5395
        %v5414 = vrsqrt.pop %v5396
        %v5415 = vrsqrt.pop %v5397
        %v5416 = vrsqrt.pop %v5398
        %v5417 = vrsqrt.pop %v5399
        %v5418 = vrsqrt.pop %v5400
        %v5419 = vrsqrt.pop %v5401
        %v5420 = vrsqrt.pop %v5402
        %v5421 = vrsqrt.pop %v5403
        %v5422 = vrsqrt.pop %v5404
        %v5423 = vrsqrt.pop %v5405
        %v5424 = vrsqrt.pop %v5406
        %v5425 = vmul.f32 %v5299, %v5407
        %v5426 = vmul.f32 %v5300, %v5408
        %v5427 = vmul.f32 %v5301, %v5409
        %v5428 = vmul.f32 %v5302, %v5410
        %v5429 = vmul.f32 %v5303, %v5411
        %v5430 = vmul.f32 %v5304, %v5412
        %v5431 = vmul.f32 %v5305, %v5413
        %v5432 = vmul.f32 %v5306, %v5414
        %v5433 = vmul.f32 %v5307, %v5415
        %v5434 = vmul.f32 %v5308, %v5416
        %v5435 = vmul.f32 %v5309, %v5417
        %v5436 = vmul.f32 %v5310, %v5418
        %v5437 = vmul.f32 %v5311, %v5419
        %v5438 = vmul.f32 %v5312, %v5420
        %v5439 = vmul.f32 %v5313, %v5421
        %v5440 = vmul.f32 %v5314, %v5422
        %v5441 = vmul.f32 %v5315, %v5423
        %v5442 = vmul.f32 %v5316, %v5424
        %v5444 = vlaneseq
        %v5445 = vshrl.u32 %v5444, 7
        %v5446 = vsub.s32 0, %v5445
        %v5447 = vrot.slane %v5243, %v5446
        %v5449 = vmul.f32 %v5425, %v5447
        %v5450 = vmul.f32 %v5426, %v5447
        %v5451 = vmul.f32 %v5427, %v5447
        %v5452 = vmul.f32 %v5428, %v5447
        %v5453 = vmul.f32 %v5429, %v5447
        %v5454 = vmul.f32 %v5430, %v5447
        %v5455 = vmul.f32 %v5431, %v5447
        %v5456 = vmul.f32 %v5432, %v5447
        %v5457 = vmul.f32 %v5433, %v5447
        %v5458 = vmul.f32 %v5434, %v5447
        %v5459 = vmul.f32 %v5435, %v5447
        %v5460 = vmul.f32 %v5436, %v5447
        %v5461 = vmul.f32 %v5437, %v5447
        %v5462 = vmul.f32 %v5438, %v5447
        %v5463 = vmul.f32 %v5439, %v5447
        %v5464 = vmul.f32 %v5440, %v5447
        %v5465 = vmul.f32 %v5441, %v5447
        %v5466 = vmul.f32 %v5442, %v5447
        %v5468 = vlaneseq
        %v5469 = vshrl.u32 %v5468, 7
        %v5470 = vsub.s32 0, %v5469
        %v5471 = vrot.slane %v5244, %v5470
        %v5473 = vadd.f32 %v5449, %v5471
        %v5474 = vadd.f32 %v5450, %v5471
        %v5475 = vadd.f32 %v5451, %v5471
        %v5476 = vadd.f32 %v5452, %v5471
        %v5477 = vadd.f32 %v5453, %v5471
        %v5478 = vadd.f32 %v5454, %v5471
        %v5479 = vadd.f32 %v5455, %v5471
        %v5480 = vadd.f32 %v5456, %v5471
        %v5481 = vadd.f32 %v5457, %v5471
        %v5482 = vadd.f32 %v5458, %v5471
        %v5483 = vadd.f32 %v5459, %v5471
        %v5484 = vadd.f32 %v5460, %v5471
        %v5485 = vadd.f32 %v5461, %v5471
        %v5486 = vadd.f32 %v5462, %v5471
        %v5487 = vadd.f32 %v5463, %v5471
        %v5488 = vadd.f32 %v5464, %v5471
        %v5489 = vadd.f32 %v5465, %v5471
        %v5490 = vadd.f32 %v5466, %v5471
        %v5491 = vpack.c.bf16 %v5474, %v5473
        %v5492 = vpack.c.bf16 %v5476, %v5475
        %v5493 = vpack.c.bf16 %v5478, %v5477
        %v5494 = vpack.c.bf16 %v5480, %v5479
        %v5495 = vpack.c.bf16 %v5482, %v5481
        %v5496 = vpack.c.bf16 %v5484, %v5483
        %v5497 = vpack.c.bf16 %v5486, %v5485
        %v5498 = vpack.c.bf16 %v5488, %v5487
        %v5499 = vpack.c.bf16 %v5490, %v5489
        %v5500 = vld [vmem:[#allocation9] sm:$0xff]
        %v5501 = vld [vmem:[#allocation9 + $0x8] sm:$0xff]
        %v5502 = vld [vmem:[#allocation9 + $0x10] sm:$0xff]
        %v5503 = vld [vmem:[#allocation9 + $0x18] sm:$0xff]
        %v5504 = vld [vmem:[#allocation9 + $0x20] sm:$0xff]
        %v5505 = vld [vmem:[#allocation9 + $0x28] sm:$0xff]
        %v5506 = vld [vmem:[#allocation9 + $0x30] sm:$0xff]
        %v5507 = vld [vmem:[#allocation9 + $0x38] sm:$0xff]
        %v5508 = vld [vmem:[#allocation9 + $0x40] sm:$0xff]
        %v5509 = vld [vmem:[#allocation9 + $0x48] sm:$0xff]
        %v5510 = vld [vmem:[#allocation9 + $0x50] sm:$0xff]
        %v5511 = vld [vmem:[#allocation9 + $0x58] sm:$0xff]
        %v5512 = vld [vmem:[#allocation9 + $0x60] sm:$0xff]
        %v5513 = vld [vmem:[#allocation9 + $0x68] sm:$0xff]
        %v5514 = vld [vmem:[#allocation9 + $0x70] sm:$0xff]
        %v5515 = vld [vmem:[#allocation9 + $0x78] sm:$0xff]
        %v5516 = vld [vmem:[#allocation9 + $0x80] sm:$0xff]
        %v5517 = vld [vmem:[#allocation9 + $0x88] sm:$0xff]
        %v5518 = vld [vmem:[#allocation9 + $0x90] sm:$0xff]
        %v5519 = vld [vmem:[#allocation9 + $0x98] sm:$0xff]
        %v5520 = vld [vmem:[#allocation9 + $0xa0] sm:$0xff]
        %v5521 = vld [vmem:[#allocation9 + $0xa8] sm:$0xff]
        %v5522 = vld [vmem:[#allocation9 + $0xb0] sm:$0xff]
        %v5523 = vld [vmem:[#allocation9 + $0xb8] sm:$0xff]
        %v5524 = vld [vmem:[#allocation9 + $0xc0] sm:$0xff]
        %v5525 = vld [vmem:[#allocation9 + $0xc8] sm:$0xff]
        %v5526 = vld [vmem:[#allocation9 + $0xd0] sm:$0xff]
        %v5527 = vld [vmem:[#allocation9 + $0xd8] sm:$0xff]
        %v5528 = vld [vmem:[#allocation9 + $0xe0] sm:$0xff]
        %v5529 = vld [vmem:[#allocation9 + $0xe8] sm:$0xff]
        %v5530 = vld [vmem:[#allocation9 + $0xf0] sm:$0xff]
        %v5531 = vld [vmem:[#allocation9 + $0xf8] sm:$0xff]
        %v5532 = vld [vmem:[%s12] sm:$0xf]
        %v5534 = vlaneseq
        %v5535 = vshrl.u32 %v5534, 7
        %v5536 = vsub.s32 0, %v5535
        %v5537 = vrot.slane %v5532, %v5536
        %v5538 = vlaneseq
        %v5539 = vshrl.u32 %v5538, 7
        %v5540 = vsub.s32 1, %v5539
        %v5541 = vrot.slane %v5532, %v5540
        %v5542 = vlaneseq
        %v5543 = vshrl.u32 %v5542, 7
        %v5544 = vsub.s32 2, %v5543
        %v5545 = vrot.slane %v5532, %v5544
        %v5546 = vlaneseq
        %v5547 = vshrl.u32 %v5546, 7
        %v5548 = vsub.s32 3, %v5547
        %v5549 = vrot.slane %v5532, %v5548
        %v5586 = vunpack.c.l.b16 %v5500
        %v5587 = vunpack.c.h.b16 %v5500
        %v5588 = vunpack.c.l.b16 %v5501
        %v5589 = vunpack.c.h.b16 %v5501
        %v5590 = vunpack.c.l.b16 %v5502
        %v5591 = vunpack.c.h.b16 %v5502
        %v5592 = vunpack.c.l.b16 %v5503
        %v5593 = vunpack.c.h.b16 %v5503
        %v5594 = vunpack.c.l.b16 %v5504
        %v5595 = vunpack.c.h.b16 %v5504
        %v5596 = vunpack.c.l.b16 %v5505
        %v5597 = vunpack.c.h.b16 %v5505
        %v5598 = vunpack.c.l.b16 %v5506
        %v5599 = vunpack.c.h.b16 %v5506
        %v5600 = vunpack.c.l.b16 %v5507
        %v5601 = vunpack.c.h.b16 %v5507
        %v5602 = vunpack.c.l.b16 %v5508
        %v5603 = vunpack.c.h.b16 %v5508
        %v5604 = vunpack.c.l.b16 %v5509
        %v5605 = vunpack.c.h.b16 %v5509
        %v5606 = vunpack.c.l.b16 %v5510
        %v5607 = vunpack.c.h.b16 %v5510
        %v5608 = vunpack.c.l.b16 %v5511
        %v5609 = vunpack.c.h.b16 %v5511
        %v5610 = vunpack.c.l.b16 %v5512
        %v5611 = vunpack.c.h.b16 %v5512
        %v5612 = vunpack.c.l.b16 %v5513
        %v5613 = vunpack.c.h.b16 %v5513
        %v5614 = vunpack.c.l.b16 %v5514
        %v5615 = vunpack.c.h.b16 %v5514
        %v5616 = vunpack.c.l.b16 %v5515
        %v5617 = vunpack.c.h.b16 %v5515
        %v5618 = vunpack.c.l.b16 %v5516
        %v5619 = vunpack.c.h.b16 %v5516
        %v5620 = vunpack.c.l.b16 %v5517
        %v5621 = vunpack.c.h.b16 %v5517
        %v5622 = vunpack.c.l.b16 %v5518
        %v5623 = vunpack.c.h.b16 %v5518
        %v5624 = vunpack.c.l.b16 %v5519
        %v5625 = vunpack.c.h.b16 %v5519
        %v5626 = vunpack.c.l.b16 %v5520
        %v5627 = vunpack.c.h.b16 %v5520
        %v5628 = vunpack.c.l.b16 %v5521
        %v5629 = vunpack.c.h.b16 %v5521
        %v5630 = vunpack.c.l.b16 %v5522
        %v5631 = vunpack.c.h.b16 %v5522
        %v5632 = vunpack.c.l.b16 %v5523
        %v5633 = vunpack.c.h.b16 %v5523
        %v5634 = vunpack.c.l.b16 %v5524
        %v5635 = vunpack.c.h.b16 %v5524
        %v5636 = vunpack.c.l.b16 %v5525
        %v5637 = vunpack.c.h.b16 %v5525
        %v5638 = vunpack.c.l.b16 %v5526
        %v5639 = vunpack.c.h.b16 %v5526
        %v5640 = vunpack.c.l.b16 %v5527
        %v5641 = vunpack.c.h.b16 %v5527
        %v5642 = vunpack.c.l.b16 %v5528
        %v5643 = vunpack.c.h.b16 %v5528
        %v5644 = vunpack.c.l.b16 %v5529
        %v5645 = vunpack.c.h.b16 %v5529
        %v5646 = vunpack.c.l.b16 %v5530
        %v5647 = vunpack.c.h.b16 %v5530
        %v5648 = vunpack.c.l.b16 %v5531
        %v5649 = vunpack.c.h.b16 %v5531
        %v5650 = vpack.c.b16 %v5590, %v5586
        %v5651 = vpack.c.b16 %v5591, %v5587
        %v5652 = vpack.c.b16 %v5592, %v5588
        %v5653 = vpack.c.b16 %v5593, %v5589
        %v5654 = vpack.c.b16 %v5598, %v5594
        %v5655 = vpack.c.b16 %v5599, %v5595
        %v5656 = vpack.c.b16 %v5600, %v5596
        %v5657 = vpack.c.b16 %v5601, %v5597
        %v5658 = vpack.c.b16 %v5606, %v5602
        %v5659 = vpack.c.b16 %v5607, %v5603
        %v5660 = vpack.c.b16 %v5608, %v5604
        %v5661 = vpack.c.b16 %v5609, %v5605
        %v5662 = vpack.c.b16 %v5614, %v5610
        %v5663 = vpack.c.b16 %v5615, %v5611
        %v5664 = vpack.c.b16 %v5616, %v5612
        %v5665 = vpack.c.b16 %v5617, %v5613
        %v5666 = vpack.c.b16 %v5622, %v5618
        %v5667 = vpack.c.b16 %v5623, %v5619
        %v5668 = vpack.c.b16 %v5624, %v5620
        %v5669 = vpack.c.b16 %v5625, %v5621
        %v5670 = vpack.c.b16 %v5630, %v5626
        %v5671 = vpack.c.b16 %v5631, %v5627
        %v5672 = vpack.c.b16 %v5632, %v5628
        %v5673 = vpack.c.b16 %v5633, %v5629
        %v5674 = vpack.c.b16 %v5638, %v5634
        %v5675 = vpack.c.b16 %v5639, %v5635
        %v5676 = vpack.c.b16 %v5640, %v5636
        %v5677 = vpack.c.b16 %v5641, %v5637
        %v5678 = vpack.c.b16 %v5646, %v5642
        %v5679 = vpack.c.b16 %v5647, %v5643
        %v5680 = vpack.c.b16 %v5648, %v5644
        %v5681 = vpack.c.b16 %v5649, %v5645
        %5714 = vmatprep.subr.bf16.mxu0 %v5651
        %5715 = vmatpush1.bf16.msra.mxu0 %v5650
        %5716 = vmatprep.subr.bf16.mxu0 %v5655
        %5717 = vmatpush1.bf16.msra.mxu0 %v5654
        %5718 = vmatprep.subr.bf16.mxu0 %v5659
        %5719 = vmatpush1.bf16.msra.mxu0 %v5658
        %5720 = vmatprep.subr.bf16.mxu0 %v5663
        %5721 = vmatpush1.bf16.msra.mxu0 %v5662
        %5722 = vmatprep.subr.bf16.mxu0 %v5667
        %5723 = vmatpush1.bf16.msra.mxu0 %v5666
        %5724 = vmatprep.subr.bf16.mxu0 %v5671
        %5725 = vmatpush1.bf16.msra.mxu0 %v5670
        %5726 = vmatprep.subr.bf16.mxu0 %v5675
        %5727 = vmatpush1.bf16.msra.mxu0 %v5674
        %5728 = vmatprep.subr.bf16.mxu0 %v5679
        %5729 = vmatpush1.bf16.msra.mxu0 %v5678
        %5730 = vmatprep.subr.bf16.mxu0 0
        %5731 = vmatpush1.bf16.msra.mxu0 0
        %5732 = vmatprep.subr.bf16.mxu0 0
        %5733 = vmatpush1.bf16.msra.mxu0 0
        %5734 = vmatprep.subr.bf16.mxu0 0
        %5735 = vmatpush1.bf16.msra.mxu0 0
        %5736 = vmatprep.subr.bf16.mxu0 0
        %5737 = vmatpush1.bf16.msra.mxu0 0
        %5738 = vmatprep.subr.bf16.mxu0 0
        %5739 = vmatpush1.bf16.msra.mxu0 0
        %5740 = vmatprep.subr.bf16.mxu0 0
        %5741 = vmatpush1.bf16.msra.mxu0 0
        %5742 = vmatprep.subr.bf16.mxu0 0
        %5743 = vmatpush1.bf16.msra.mxu0 0
        %5744 = vmatprep.subr.bf16.mxu0 0
        %5745 = vmatpush1.bf16.msra.mxu0 0
        %5746 = vmatprep.mubr.bf16.mxu0 0
        %5747 = vmatmul.mubr.bf16.gmra.mrb[0].mxu0 %v5491
        %v5748 = vpop.f32.mrb[0].mxu0
        %v5749 = vadd.f32 %v5537, %v5748
        %v5750 = vpop.f32.mrb[0].mxu0
        %v5751 = vadd.f32 %v5541, %v5750
        %v5752 = vpop.f32.mrb[0].mxu0
        %v5753 = vadd.f32 %v5537, %v5752
        %v5754 = vpop.f32.mrb[0].mxu0
        %v5755 = vadd.f32 %v5541, %v5754
        %5756 = vmatprep.mubr.bf16.mxu0 0
        %5757 = vmatmul.mubr.bf16.gmra.mrb[0].mxu0 %v5492
        %v5758 = vpop.f32.mrb[0].mxu0
        %v5759 = vadd.f32 %v5537, %v5758
        %v5760 = vpop.f32.mrb[0].mxu0
        %v5761 = vadd.f32 %v5541, %v5760
        %v5762 = vpop.f32.mrb[0].mxu0
        %v5763 = vadd.f32 %v5537, %v5762
        %v5764 = vpop.f32.mrb[0].mxu0
        %v5765 = vadd.f32 %v5541, %v5764
        %5766 = vmatprep.mubr.bf16.mxu0 0
        %5767 = vmatmul.mubr.bf16.gmra.mrb[0].mxu0 %v5493
        %v5768 = vpop.f32.mrb[0].mxu0
        %v5769 = vadd.f32 %v5537, %v5768
        %v5770 = vpop.f32.mrb[0].mxu0
        %v5771 = vadd.f32 %v5541, %v5770
        %v5772 = vpop.f32.mrb[0].mxu0
        %v5773 = vadd.f32 %v5537, %v5772
        %v5774 = vpop.f32.mrb[0].mxu0
        %v5775 = vadd.f32 %v5541, %v5774
        %5776 = vmatprep.mubr.bf16.mxu0 0
        %5777 = vmatmul.mubr.bf16.gmra.mrb[0].mxu0 %v5494
        %v5778 = vpop.f32.mrb[0].mxu0
        %v5779 = vadd.f32 %v5537, %v5778
        %v5780 = vpop.f32.mrb[0].mxu0
        %v5781 = vadd.f32 %v5541, %v5780
        %v5782 = vpop.f32.mrb[0].mxu0
        %v5783 = vadd.f32 %v5537, %v5782
        %v5784 = vpop.f32.mrb[0].mxu0
        %v5785 = vadd.f32 %v5541, %v5784
        %5786 = vmatprep.mubr.bf16.mxu0 0
        %5787 = vmatmul.mubr.bf16.gmra.mrb[0].mxu0 %v5495
        %v5788 = vpop.f32.mrb[0].mxu0
        %v5789 = vadd.f32 %v5537, %v5788
        %v5790 = vpop.f32.mrb[0].mxu0
        %v5791 = vadd.f32 %v5541, %v5790
        %v5792 = vpop.f32.mrb[0].mxu0
        %v5793 = vadd.f32 %v5537, %v5792
        %v5794 = vpop.f32.mrb[0].mxu0
        %v5795 = vadd.f32 %v5541, %v5794
        %5796 = vmatprep.mubr.bf16.mxu0 0
        %5797 = vmatmul.mubr.bf16.gmra.mrb[0].mxu0 %v5496
        %v5798 = vpop.f32.mrb[0].mxu0
        %v5799 = vadd.f32 %v5537, %v5798
        %v5800 = vpop.f32.mrb[0].mxu0
        %v5801 = vadd.f32 %v5541, %v5800
        %v5802 = vpop.f32.mrb[0].mxu0
        %v5803 = vadd.f32 %v5537, %v5802
        %v5804 = vpop.f32.mrb[0].mxu0
        %v5805 = vadd.f32 %v5541, %v5804
        %5806 = vmatprep.mubr.bf16.mxu0 0
        %5807 = vmatmul.mubr.bf16.gmra.mrb[0].mxu0 %v5497
        %v5808 = vpop.f32.mrb[0].mxu0
        %v5809 = vadd.f32 %v5537, %v5808
        %v5810 = vpop.f32.mrb[0].mxu0
        %v5811 = vadd.f32 %v5541, %v5810
        %v5812 = vpop.f32.mrb[0].mxu0
        %v5813 = vadd.f32 %v5537, %v5812
        %v5814 = vpop.f32.mrb[0].mxu0
        %v5815 = vadd.f32 %v5541, %v5814
        %5816 = vmatprep.mubr.bf16.mxu0 0
        %5817 = vmatmul.mubr.bf16.gmra.mrb[0].mxu0 %v5498
        %v5818 = vpop.f32.mrb[0].mxu0
        %v5819 = vadd.f32 %v5537, %v5818
        %v5820 = vpop.f32.mrb[0].mxu0
        %v5821 = vadd.f32 %v5541, %v5820
        %v5822 = vpop.f32.mrb[0].mxu0
        %v5823 = vadd.f32 %v5537, %v5822
        %v5824 = vpop.f32.mrb[0].mxu0
        %v5825 = vadd.f32 %v5541, %v5824
        %5826 = vmatprep.mubr.bf16.mxu0 0
        %5827 = vmatmul.mubr.bf16.gmra.mrb[0].mxu0 %v5499
        %v5828 = vpop.f32.mrb[0].mxu0
        %v5829 = vadd.f32 %v5537, %v5828
        %v5830 = vpop.f32.mrb[0].mxu0
        %v5831 = vadd.f32 %v5541, %v5830
        %v5832 = vpop.f32.mrb[0].mxu0
        %v5833 = vadd.f32 %v5537, %v5832
        %v5834 = vpop.f32.mrb[0].mxu0
        %v5835 = vadd.f32 %v5541, %v5834
        %5836 = vdwg.mxu0
        %5837 = vmatprep.subr.bf16.mxu0 %v5653
        %5838 = vmatpush1.bf16.msra.mxu0 %v5652
        %5839 = vmatprep.subr.bf16.mxu0 %v5657
        %5840 = vmatpush1.bf16.msra.mxu0 %v5656
        %5841 = vmatprep.subr.bf16.mxu0 %v5661
        %5842 = vmatpush1.bf16.msra.mxu0 %v5660
        %5843 = vmatprep.subr.bf16.mxu0 %v5665
        %5844 = vmatpush1.bf16.msra.mxu0 %v5664
        %5845 = vmatprep.subr.bf16.mxu0 %v5669
        %5846 = vmatpush1.bf16.msra.mxu0 %v5668
        %5847 = vmatprep.subr.bf16.mxu0 %v5673
        %5848 = vmatpush1.bf16.msra.mxu0 %v5672
        %5849 = vmatprep.subr.bf16.mxu0 %v5677
        %5850 = vmatpush1.bf16.msra.mxu0 %v5676
        %5851 = vmatprep.subr.bf16.mxu0 %v5681
        %5852 = vmatpush1.bf16.msra.mxu0 %v5680
        %5853 = vmatprep.subr.bf16.mxu0 0
        %5854 = vmatpush1.bf16.msra.mxu0 0
        %5855 = vmatprep.subr.bf16.mxu0 0
        %5856 = vmatpush1.bf16.msra.mxu0 0
        %5857 = vmatprep.subr.bf16.mxu0 0
        %5858 = vmatpush1.bf16.msra.mxu0 0
        %5859 = vmatprep.subr.bf16.mxu0 0
        %5860 = vmatpush1.bf16.msra.mxu0 0
        %5861 = vmatprep.subr.bf16.mxu0 0
        %5862 = vmatpush1.bf16.msra.mxu0 0
        %5863 = vmatprep.subr.bf16.mxu0 0
        %5864 = vmatpush1.bf16.msra.mxu0 0
        %5865 = vmatprep.subr.bf16.mxu0 0
        %5866 = vmatpush1.bf16.msra.mxu0 0
        %5867 = vmatprep.subr.bf16.mxu0 0
        %5868 = vmatpush1.bf16.msra.mxu0 0
        %5869 = vmatprep.mubr.bf16.mxu0 0
        %5870 = vmatmul.mubr.bf16.gmra.mrb[0].mxu0 %v5491
        %v5871 = vpop.f32.mrb[0].mxu0
        %v5872 = vadd.f32 %v5545, %v5871
        %v5873 = vpop.f32.mrb[0].mxu0
        %v5874 = vadd.f32 %v5549, %v5873
        %v5875 = vpop.f32.mrb[0].mxu0
        %v5876 = vadd.f32 %v5545, %v5875
        %v5877 = vpop.f32.mrb[0].mxu0
        %v5878 = vadd.f32 %v5549, %v5877
        %5879 = vmatprep.mubr.bf16.mxu0 0
        %5880 = vmatmul.mubr.bf16.gmra.mrb[0].mxu0 %v5492
        %v5881 = vpop.f32.mrb[0].mxu0
        %v5882 = vadd.f32 %v5545, %v5881
        %v5883 = vpop.f32.mrb[0].mxu0
        %v5884 = vadd.f32 %v5549, %v5883
        %v5885 = vpop.f32.mrb[0].mxu0
        %v5886 = vadd.f32 %v5545, %v5885
        %v5887 = vpop.f32.mrb[0].mxu0
        %v5888 = vadd.f32 %v5549, %v5887
        %5889 = vmatprep.mubr.bf16.mxu0 0
        %5890 = vmatmul.mubr.bf16.gmra.mrb[0].mxu0 %v5493
        %v5891 = vpop.f32.mrb[0].mxu0
        %v5892 = vadd.f32 %v5545, %v5891
        %v5893 = vpop.f32.mrb[0].mxu0
        %v5894 = vadd.f32 %v5549, %v5893
        %v5895 = vpop.f32.mrb[0].mxu0
        %v5896 = vadd.f32 %v5545, %v5895
        %v5897 = vpop.f32.mrb[0].mxu0
        %v5898 = vadd.f32 %v5549, %v5897
        %5899 = vmatprep.mubr.bf16.mxu0 0
        %5900 = vmatmul.mubr.bf16.gmra.mrb[0].mxu0 %v5494
        %v5901 = vpop.f32.mrb[0].mxu0
        %v5902 = vadd.f32 %v5545, %v5901
        %v5903 = vpop.f32.mrb[0].mxu0
        %v5904 = vadd.f32 %v5549, %v5903
        %v5905 = vpop.f32.mrb[0].mxu0
        %v5906 = vadd.f32 %v5545, %v5905
        %v5907 = vpop.f32.mrb[0].mxu0
        %v5908 = vadd.f32 %v5549, %v5907
        %5909 = vmatprep.mubr.bf16.mxu0 0
        %5910 = vmatmul.mubr.bf16.gmra.mrb[0].mxu0 %v5495
        %v5911 = vpop.f32.mrb[0].mxu0
        %v5912 = vadd.f32 %v5545, %v5911
        %v5913 = vpop.f32.mrb[0].mxu0
        %v5914 = vadd.f32 %v5549, %v5913
        %v5915 = vpop.f32.mrb[0].mxu0
        %v5916 = vadd.f32 %v5545, %v5915
        %v5917 = vpop.f32.mrb[0].mxu0
        %v5918 = vadd.f32 %v5549, %v5917
        %5919 = vmatprep.mubr.bf16.mxu0 0
        %5920 = vmatmul.mubr.bf16.gmra.mrb[0].mxu0 %v5496
        %v5921 = vpop.f32.mrb[0].mxu0
        %v5922 = vadd.f32 %v5545, %v5921
        %v5923 = vpop.f32.mrb[0].mxu0
        %v5924 = vadd.f32 %v5549, %v5923
        %v5925 = vpop.f32.mrb[0].mxu0
        %v5926 = vadd.f32 %v5545, %v5925
        %v5927 = vpop.f32.mrb[0].mxu0
        %v5928 = vadd.f32 %v5549, %v5927
        %5929 = vmatprep.mubr.bf16.mxu0 0
        %5930 = vmatmul.mubr.bf16.gmra.mrb[0].mxu0 %v5497
        %v5931 = vpop.f32.mrb[0].mxu0
        %v5932 = vadd.f32 %v5545, %v5931
        %v5933 = vpop.f32.mrb[0].mxu0
        %v5934 = vadd.f32 %v5549, %v5933
        %v5935 = vpop.f32.mrb[0].mxu0
        %v5936 = vadd.f32 %v5545, %v5935
        %v5937 = vpop.f32.mrb[0].mxu0
        %v5938 = vadd.f32 %v5549, %v5937
        %5939 = vmatprep.mubr.bf16.mxu0 0
        %5940 = vmatmul.mubr.bf16.gmra.mrb[0].mxu0 %v5498
        %v5941 = vpop.f32.mrb[0].mxu0
        %v5942 = vadd.f32 %v5545, %v5941
        %v5943 = vpop.f32.mrb[0].mxu0
        %v5944 = vadd.f32 %v5549, %v5943
        %v5945 = vpop.f32.mrb[0].mxu0
        %v5946 = vadd.f32 %v5545, %v5945
        %v5947 = vpop.f32.mrb[0].mxu0
        %v5948 = vadd.f32 %v5549, %v5947
        %5949 = vmatprep.mubr.bf16.mxu0 0
        %5950 = vmatmul.mubr.bf16.gmra.mrb[0].mxu0 %v5499
        %v5951 = vpop.f32.mrb[0].mxu0
        %v5952 = vadd.f32 %v5545, %v5951
        %v5953 = vpop.f32.mrb[0].mxu0
        %v5954 = vadd.f32 %v5549, %v5953
        %v5955 = vpop.f32.mrb[0].mxu0
        %v5956 = vadd.f32 %v5545, %v5955
        %v5957 = vpop.f32.mrb[0].mxu0
        %v5958 = vadd.f32 %v5549, %v5957
        %5959 = vdwg.mxu0
        %v5960 = vmul.f32 %v5749, 0.5
        %v5961 = vmul.f32 %v5751, 0.5
        %v5962 = vmul.f32 %v5872, 0.5
        %v5963 = vmul.f32 %v5874, 0.5
        %v5964 = vmul.f32 %v5753, 0.5
        %v5965 = vmul.f32 %v5755, 0.5
        %v5966 = vmul.f32 %v5876, 0.5
        %v5967 = vmul.f32 %v5878, 0.5
        %v5968 = vmul.f32 %v5759, 0.5
        %v5969 = vmul.f32 %v5761, 0.5
        %v5970 = vmul.f32 %v5882, 0.5
        %v5971 = vmul.f32 %v5884, 0.5
        %v5972 = vmul.f32 %v5763, 0.5
        %v5973 = vmul.f32 %v5765, 0.5
        %v5974 = vmul.f32 %v5886, 0.5
        %v5975 = vmul.f32 %v5888, 0.5
        %v5976 = vmul.f32 %v5769, 0.5
        %v5977 = vmul.f32 %v5771, 0.5
        %v5978 = vmul.f32 %v5892, 0.5
        %v5979 = vmul.f32 %v5894, 0.5
        %v5980 = vmul.f32 %v5773, 0.5
        %v5981 = vmul.f32 %v5775, 0.5
        %v5982 = vmul.f32 %v5896, 0.5
        %v5983 = vmul.f32 %v5898, 0.5
        %v5984 = vmul.f32 %v5779, 0.5
        %v5985 = vmul.f32 %v5781, 0.5
        %v5986 = vmul.f32 %v5902, 0.5
        %v5987 = vmul.f32 %v5904, 0.5
        %v5988 = vmul.f32 %v5783, 0.5
        %v5989 = vmul.f32 %v5785, 0.5
        %v5990 = vmul.f32 %v5906, 0.5
        %v5991 = vmul.f32 %v5908, 0.5
        %v5992 = vmul.f32 %v5789, 0.5
        %v5993 = vmul.f32 %v5791, 0.5
        %v5994 = vmul.f32 %v5912, 0.5
        %v5995 = vmul.f32 %v5914, 0.5
        %v5996 = vmul.f32 %v5793, 0.5
        %v5997 = vmul.f32 %v5795, 0.5
        %v5998 = vmul.f32 %v5916, 0.5
        %v5999 = vmul.f32 %v5918, 0.5
        %v6000 = vmul.f32 %v5799, 0.5
        %v6001 = vmul.f32 %v5801, 0.5
        %v6002 = vmul.f32 %v5922, 0.5
        %v6003 = vmul.f32 %v5924, 0.5
        %v6004 = vmul.f32 %v5803, 0.5
        %v6005 = vmul.f32 %v5805, 0.5
        %v6006 = vmul.f32 %v5926, 0.5
        %v6007 = vmul.f32 %v5928, 0.5
        %v6008 = vmul.f32 %v5809, 0.5
        %v6009 = vmul.f32 %v5811, 0.5
        %v6010 = vmul.f32 %v5932, 0.5
        %v6011 = vmul.f32 %v5934, 0.5
        %v6012 = vmul.f32 %v5813, 0.5
        %v6013 = vmul.f32 %v5815, 0.5
        %v6014 = vmul.f32 %v5936, 0.5
        %v6015 = vmul.f32 %v5938, 0.5
        %v6016 = vmul.f32 %v5819, 0.5
        %v6017 = vmul.f32 %v5821, 0.5
        %v6018 = vmul.f32 %v5942, 0.5
        %v6019 = vmul.f32 %v5944, 0.5
        %v6020 = vmul.f32 %v5823, 0.5
        %v6021 = vmul.f32 %v5825, 0.5
        %v6022 = vmul.f32 %v5946, 0.5
        %v6023 = vmul.f32 %v5948, 0.5
        %v6024 = vmul.f32 %v5829, 0.5
        %v6025 = vmul.f32 %v5831, 0.5
        %v6026 = vmul.f32 %v5952, 0.5
        %v6027 = vmul.f32 %v5954, 0.5
        %v6028 = vmul.f32 %v5833, 0.5
        %v6029 = vmul.f32 %v5835, 0.5
        %v6030 = vmul.f32 %v5956, 0.5
        %v6031 = vmul.f32 %v5958, 0.5
        %v6032 = vmul.f32 %v5749, 0.70710677
        %v6033 = vmul.f32 %v5751, 0.70710677
        %v6034 = vmul.f32 %v5872, 0.70710677
        %v6035 = vmul.f32 %v5874, 0.70710677
        %v6036 = vmul.f32 %v5753, 0.70710677
        %v6037 = vmul.f32 %v5755, 0.70710677
        %v6038 = vmul.f32 %v5876, 0.70710677
        %v6039 = vmul.f32 %v5878, 0.70710677
        %v6040 = vmul.f32 %v5759, 0.70710677
        %v6041 = vmul.f32 %v5761, 0.70710677
        %v6042 = vmul.f32 %v5882, 0.70710677
        %v6043 = vmul.f32 %v5884, 0.70710677
        %v6044 = vmul.f32 %v5763, 0.70710677
        %v6045 = vmul.f32 %v5765, 0.70710677
        %v6046 = vmul.f32 %v5886, 0.70710677
        %v6047 = vmul.f32 %v5888, 0.70710677
        %v6048 = vmul.f32 %v5769, 0.70710677
        %v6049 = vmul.f32 %v5771, 0.70710677
        %v6050 = vmul.f32 %v5892, 0.70710677
        %v6051 = vmul.f32 %v5894, 0.70710677
        %v6052 = vmul.f32 %v5773, 0.70710677
        %v6053 = vmul.f32 %v5775, 0.70710677
        %v6054 = vmul.f32 %v5896, 0.70710677
        %v6055 = vmul.f32 %v5898, 0.70710677
        %v6056 = vmul.f32 %v5779, 0.70710677
        %v6057 = vmul.f32 %v5781, 0.70710677
        %v6058 = vmul.f32 %v5902, 0.70710677
        %v6059 = vmul.f32 %v5904, 0.70710677
        %v6060 = vmul.f32 %v5783, 0.70710677
        %v6061 = vmul.f32 %v5785, 0.70710677
        %v6062 = vmul.f32 %v5906, 0.70710677
        %v6063 = vmul.f32 %v5908, 0.70710677
        %v6064 = vmul.f32 %v5789, 0.70710677
        %v6065 = vmul.f32 %v5791, 0.70710677
        %v6066 = vmul.f32 %v5912, 0.70710677
        %v6067 = vmul.f32 %v5914, 0.70710677
        %v6068 = vmul.f32 %v5793, 0.70710677
        %v6069 = vmul.f32 %v5795, 0.70710677
        %v6070 = vmul.f32 %v5916, 0.70710677
        %v6071 = vmul.f32 %v5918, 0.70710677
        %v6072 = vmul.f32 %v5799, 0.70710677
        %v6073 = vmul.f32 %v5801, 0.70710677
        %v6074 = vmul.f32 %v5922, 0.70710677
        %v6075 = vmul.f32 %v5924, 0.70710677
        %v6076 = vmul.f32 %v5803, 0.70710677
        %v6077 = vmul.f32 %v5805, 0.70710677
        %v6078 = vmul.f32 %v5926, 0.70710677
        %v6079 = vmul.f32 %v5928, 0.70710677
        %v6080 = vmul.f32 %v5809, 0.70710677
        %v6081 = vmul.f32 %v5811, 0.70710677
        %v6082 = vmul.f32 %v5932, 0.70710677
        %v6083 = vmul.f32 %v5934, 0.70710677
        %v6084 = vmul.f32 %v5813, 0.70710677
        %v6085 = vmul.f32 %v5815, 0.70710677
        %v6086 = vmul.f32 %v5936, 0.70710677
        %v6087 = vmul.f32 %v5938, 0.70710677
        %v6088 = vmul.f32 %v5819, 0.70710677
        %v6089 = vmul.f32 %v5821, 0.70710677
        %v6090 = vmul.f32 %v5942, 0.70710677
        %v6091 = vmul.f32 %v5944, 0.70710677
        %v6092 = vmul.f32 %v5823, 0.70710677
        %v6093 = vmul.f32 %v5825, 0.70710677
        %v6094 = vmul.f32 %v5946, 0.70710677
        %v6095 = vmul.f32 %v5948, 0.70710677
        %v6096 = vmul.f32 %v5829, 0.70710677
        %v6097 = vmul.f32 %v5831, 0.70710677
        %v6098 = vmul.f32 %v5952, 0.70710677
        %v6099 = vmul.f32 %v5954, 0.70710677
        %v6100 = vmul.f32 %v5833, 0.70710677
        %v6101 = vmul.f32 %v5835, 0.70710677
        %v6102 = vmul.f32 %v5956, 0.70710677
        %v6103 = vmul.f32 %v5958, 0.70710677
        %v6104 = verf.f32.pop %v6032
        %v6105 = verf.f32.pop %v6033
        %v6106 = verf.f32.pop %v6034
        %v6107 = verf.f32.pop %v6035
        %v6108 = verf.f32.pop %v6036
        %v6109 = verf.f32.pop %v6037
        %v6110 = verf.f32.pop %v6038
        %v6111 = verf.f32.pop %v6039
        %v6112 = verf.f32.pop %v6040
        %v6113 = verf.f32.pop %v6041
        %v6114 = verf.f32.pop %v6042
        %v6115 = verf.f32.pop %v6043
        %v6116 = verf.f32.pop %v6044
        %v6117 = verf.f32.pop %v6045
        %v6118 = verf.f32.pop %v6046
        %v6119 = verf.f32.pop %v6047
        %v6120 = verf.f32.pop %v6048
        %v6121 = verf.f32.pop %v6049
        %v6122 = verf.f32.pop %v6050
        %v6123 = verf.f32.pop %v6051
        %v6124 = verf.f32.pop %v6052
        %v6125 = verf.f32.pop %v6053
        %v6126 = verf.f32.pop %v6054
        %v6127 = verf.f32.pop %v6055
        %v6128 = verf.f32.pop %v6056
        %v6129 = verf.f32.pop %v6057
        %v6130 = verf.f32.pop %v6058
        %v6131 = verf.f32.pop %v6059
        %v6132 = verf.f32.pop %v6060
        %v6133 = verf.f32.pop %v6061
        %v6134 = verf.f32.pop %v6062
        %v6135 = verf.f32.pop %v6063
        %v6136 = verf.f32.pop %v6064
        %v6137 = verf.f32.pop %v6065
        %v6138 = verf.f32.pop %v6066
        %v6139 = verf.f32.pop %v6067
        %v6140 = verf.f32.pop %v6068
        %v6141 = verf.f32.pop %v6069
        %v6142 = verf.f32.pop %v6070
        %v6143 = verf.f32.pop %v6071
        %v6144 = verf.f32.pop %v6072
        %v6145 = verf.f32.pop %v6073
        %v6146 = verf.f32.pop %v6074
        %v6147 = verf.f32.pop %v6075
        %v6148 = verf.f32.pop %v6076
        %v6149 = verf.f32.pop %v6077
        %v6150 = verf.f32.pop %v6078
        %v6151 = verf.f32.pop %v6079
        %v6152 = verf.f32.pop %v6080
        %v6153 = verf.f32.pop %v6081
        %v6154 = verf.f32.pop %v6082
        %v6155 = verf.f32.pop %v6083
        %v6156 = verf.f32.pop %v6084
        %v6157 = verf.f32.pop %v6085
        %v6158 = verf.f32.pop %v6086
        %v6159 = verf.f32.pop %v6087
        %v6160 = verf.f32.pop %v6088
        %v6161 = verf.f32.pop %v6089
        %v6162 = verf.f32.pop %v6090
        %v6163 = verf.f32.pop %v6091
        %v6164 = verf.f32.pop %v6092
        %v6165 = verf.f32.pop %v6093
        %v6166 = verf.f32.pop %v6094
        %v6167 = verf.f32.pop %v6095
        %v6168 = verf.f32.pop %v6096
        %v6169 = verf.f32.pop %v6097
        %v6170 = verf.f32.pop %v6098
        %v6171 = verf.f32.pop %v6099
        %v6172 = verf.f32.pop %v6100
        %v6173 = verf.f32.pop %v6101
        %v6174 = verf.f32.pop %v6102
        %v6175 = verf.f32.pop %v6103
        %v6176 = vadd.f32 %v6104, 1.0
        %v6177 = vadd.f32 %v6105, 1.0
        %v6178 = vadd.f32 %v6106, 1.0
        %v6179 = vadd.f32 %v6107, 1.0
        %v6180 = vadd.f32 %v6108, 1.0
        %v6181 = vadd.f32 %v6109, 1.0
        %v6182 = vadd.f32 %v6110, 1.0
        %v6183 = vadd.f32 %v6111, 1.0
        %v6184 = vadd.f32 %v6112, 1.0
        %v6185 = vadd.f32 %v6113, 1.0
        %v6186 = vadd.f32 %v6114, 1.0
        %v6187 = vadd.f32 %v6115, 1.0
        %v6188 = vadd.f32 %v6116, 1.0
        %v6189 = vadd.f32 %v6117, 1.0
        %v6190 = vadd.f32 %v6118, 1.0
        %v6191 = vadd.f32 %v6119, 1.0
        %v6192 = vadd.f32 %v6120, 1.0
        %v6193 = vadd.f32 %v6121, 1.0
        %v6194 = vadd.f32 %v6122, 1.0
        %v6195 = vadd.f32 %v6123, 1.0
        %v6196 = vadd.f32 %v6124, 1.0
        %v6197 = vadd.f32 %v6125, 1.0
        %v6198 = vadd.f32 %v6126, 1.0
        %v6199 = vadd.f32 %v6127, 1.0
        %v6200 = vadd.f32 %v6128, 1.0
        %v6201 = vadd.f32 %v6129, 1.0
        %v6202 = vadd.f32 %v6130, 1.0
        %v6203 = vadd.f32 %v6131, 1.0
        %v6204 = vadd.f32 %v6132, 1.0
        %v6205 = vadd.f32 %v6133, 1.0
        %v6206 = vadd.f32 %v6134, 1.0
        %v6207 = vadd.f32 %v6135, 1.0
        %v6208 = vadd.f32 %v6136, 1.0
        %v6209 = vadd.f32 %v6137, 1.0
        %v6210 = vadd.f32 %v6138, 1.0
        %v6211 = vadd.f32 %v6139, 1.0
        %v6212 = vadd.f32 %v6140, 1.0
        %v6213 = vadd.f32 %v6141, 1.0
        %v6214 = vadd.f32 %v6142, 1.0
        %v6215 = vadd.f32 %v6143, 1.0
        %v6216 = vadd.f32 %v6144, 1.0
        %v6217 = vadd.f32 %v6145, 1.0
        %v6218 = vadd.f32 %v6146, 1.0
        %v6219 = vadd.f32 %v6147, 1.0
        %v6220 = vadd.f32 %v6148, 1.0
        %v6221 = vadd.f32 %v6149, 1.0
        %v6222 = vadd.f32 %v6150, 1.0
        %v6223 = vadd.f32 %v6151, 1.0
        %v6224 = vadd.f32 %v6152, 1.0
        %v6225 = vadd.f32 %v6153, 1.0
        %v6226 = vadd.f32 %v6154, 1.0
        %v6227 = vadd.f32 %v6155, 1.0
        %v6228 = vadd.f32 %v6156, 1.0
        %v6229 = vadd.f32 %v6157, 1.0
        %v6230 = vadd.f32 %v6158, 1.0
        %v6231 = vadd.f32 %v6159, 1.0
        %v6232 = vadd.f32 %v6160, 1.0
        %v6233 = vadd.f32 %v6161, 1.0
        %v6234 = vadd.f32 %v6162, 1.0
        %v6235 = vadd.f32 %v6163, 1.0
        %v6236 = vadd.f32 %v6164, 1.0
        %v6237 = vadd.f32 %v6165, 1.0
        %v6238 = vadd.f32 %v6166, 1.0
        %v6239 = vadd.f32 %v6167, 1.0
        %v6240 = vadd.f32 %v6168, 1.0
        %v6241 = vadd.f32 %v6169, 1.0
        %v6242 = vadd.f32 %v6170, 1.0
        %v6243 = vadd.f32 %v6171, 1.0
        %v6244 = vadd.f32 %v6172, 1.0
        %v6245 = vadd.f32 %v6173, 1.0
        %v6246 = vadd.f32 %v6174, 1.0
        %v6247 = vadd.f32 %v6175, 1.0
        %v6248 = vmul.f32 %v5960, %v6176
        %v6249 = vmul.f32 %v5961, %v6177
        %v6250 = vmul.f32 %v5962, %v6178
        %v6251 = vmul.f32 %v5963, %v6179
        %v6252 = vmul.f32 %v5964, %v6180
        %v6253 = vmul.f32 %v5965, %v6181
        %v6254 = vmul.f32 %v5966, %v6182
        %v6255 = vmul.f32 %v5967, %v6183
        %v6256 = vmul.f32 %v5968, %v6184
        %v6257 = vmul.f32 %v5969, %v6185
        %v6258 = vmul.f32 %v5970, %v6186
        %v6259 = vmul.f32 %v5971, %v6187
        %v6260 = vmul.f32 %v5972, %v6188
        %v6261 = vmul.f32 %v5973, %v6189
        %v6262 = vmul.f32 %v5974, %v6190
        %v6263 = vmul.f32 %v5975, %v6191
        %v6264 = vmul.f32 %v5976, %v6192
        %v6265 = vmul.f32 %v5977, %v6193
        %v6266 = vmul.f32 %v5978, %v6194
        %v6267 = vmul.f32 %v5979, %v6195
        %v6268 = vmul.f32 %v5980, %v6196
        %v6269 = vmul.f32 %v5981, %v6197
        %v6270 = vmul.f32 %v5982, %v6198
        %v6271 = vmul.f32 %v5983, %v6199
        %v6272 = vmul.f32 %v5984, %v6200
        %v6273 = vmul.f32 %v5985, %v6201
        %v6274 = vmul.f32 %v5986, %v6202
        %v6275 = vmul.f32 %v5987, %v6203
        %v6276 = vmul.f32 %v5988, %v6204
        %v6277 = vmul.f32 %v5989, %v6205
        %v6278 = vmul.f32 %v5990, %v6206
        %v6279 = vmul.f32 %v5991, %v6207
        %v6280 = vmul.f32 %v5992, %v6208
        %v6281 = vmul.f32 %v5993, %v6209
        %v6282 = vmul.f32 %v5994, %v6210
        %v6283 = vmul.f32 %v5995, %v6211
        %v6284 = vmul.f32 %v5996, %v6212
        %v6285 = vmul.f32 %v5997, %v6213
        %v6286 = vmul.f32 %v5998, %v6214
        %v6287 = vmul.f32 %v5999, %v6215
        %v6288 = vmul.f32 %v6000, %v6216
        %v6289 = vmul.f32 %v6001, %v6217
        %v6290 = vmul.f32 %v6002, %v6218
        %v6291 = vmul.f32 %v6003, %v6219
        %v6292 = vmul.f32 %v6004, %v6220
        %v6293 = vmul.f32 %v6005, %v6221
        %v6294 = vmul.f32 %v6006, %v6222
        %v6295 = vmul.f32 %v6007, %v6223
        %v6296 = vmul.f32 %v6008, %v6224
        %v6297 = vmul.f32 %v6009, %v6225
        %v6298 = vmul.f32 %v6010, %v6226
        %v6299 = vmul.f32 %v6011, %v6227
        %v6300 = vmul.f32 %v6012, %v6228
        %v6301 = vmul.f32 %v6013, %v6229
        %v6302 = vmul.f32 %v6014, %v6230
        %v6303 = vmul.f32 %v6015, %v6231
        %v6304 = vmul.f32 %v6016, %v6232
        %v6305 = vmul.f32 %v6017, %v6233
        %v6306 = vmul.f32 %v6018, %v6234
        %v6307 = vmul.f32 %v6019, %v6235
        %v6308 = vmul.f32 %v6020, %v6236
        %v6309 = vmul.f32 %v6021, %v6237
        %v6310 = vmul.f32 %v6022, %v6238
        %v6311 = vmul.f32 %v6023, %v6239
        %v6312 = vmul.f32 %v6024, %v6240
        %v6313 = vmul.f32 %v6025, %v6241
        %v6314 = vmul.f32 %v6026, %v6242
        %v6315 = vmul.f32 %v6027, %v6243
        %v6316 = vmul.f32 %v6028, %v6244
        %v6317 = vmul.f32 %v6029, %v6245
        %v6318 = vmul.f32 %v6030, %v6246
        %v6319 = vmul.f32 %v6031, %v6247
        %v6320 = vpack.c.bf16 %v6252, %v6248
        %v6321 = vpack.c.bf16 %v6253, %v6249
        %v6322 = vpack.c.bf16 %v6254, %v6250
        %v6323 = vpack.c.bf16 %v6255, %v6251
        %v6324 = vpack.c.bf16 %v6260, %v6256
        %v6325 = vpack.c.bf16 %v6261, %v6257
        %v6326 = vpack.c.bf16 %v6262, %v6258
        %v6327 = vpack.c.bf16 %v6263, %v6259
        %v6328 = vpack.c.bf16 %v6268, %v6264
        %v6329 = vpack.c.bf16 %v6269, %v6265
        %v6330 = vpack.c.bf16 %v6270, %v6266
        %v6331 = vpack.c.bf16 %v6271, %v6267
        %v6332 = vpack.c.bf16 %v6276, %v6272
        %v6333 = vpack.c.bf16 %v6277, %v6273
        %v6334 = vpack.c.bf16 %v6278, %v6274
        %v6335 = vpack.c.bf16 %v6279, %v6275
        %v6336 = vpack.c.bf16 %v6284, %v6280
        %v6337 = vpack.c.bf16 %v6285, %v6281
        %v6338 = vpack.c.bf16 %v6286, %v6282
        %v6339 = vpack.c.bf16 %v6287, %v6283
        %v6340 = vpack.c.bf16 %v6292, %v6288
        %v6341 = vpack.c.bf16 %v6293, %v6289
        %v6342 = vpack.c.bf16 %v6294, %v6290
        %v6343 = vpack.c.bf16 %v6295, %v6291
        %v6344 = vpack.c.bf16 %v6300, %v6296
        %v6345 = vpack.c.bf16 %v6301, %v6297
        %v6346 = vpack.c.bf16 %v6302, %v6298
        %v6347 = vpack.c.bf16 %v6303, %v6299
        %v6348 = vpack.c.bf16 %v6308, %v6304
        %v6349 = vpack.c.bf16 %v6309, %v6305
        %v6350 = vpack.c.bf16 %v6310, %v6306
        %v6351 = vpack.c.bf16 %v6311, %v6307
        %v6352 = vpack.c.bf16 %v6316, %v6312
        %v6353 = vpack.c.bf16 %v6317, %v6313
        %v6354 = vpack.c.bf16 %v6318, %v6314
        %v6355 = vpack.c.bf16 %v6319, %v6315
        %v6356 = vld [vmem:[#allocation11] sm:$0xf]
        %v6357 = vld [vmem:[#allocation11 + $0x4] sm:$0xf]
        %v6358 = vld [vmem:[#allocation11 + $0x8] sm:$0xf]
        %v6359 = vld [vmem:[#allocation11 + $0xc] sm:$0xf]
        %v6360 = vld [vmem:[#allocation11 + $0x10] sm:$0xf]
        %v6361 = vld [vmem:[#allocation11 + $0x14] sm:$0xf]
        %v6362 = vld [vmem:[#allocation11 + $0x18] sm:$0xf]
        %v6363 = vld [vmem:[#allocation11 + $0x1c] sm:$0xf]
        %v6364 = vld [vmem:[#allocation11 + $0x20] sm:$0xf]
        %v6365 = vld [vmem:[#allocation11 + $0x24] sm:$0xf]
        %v6366 = vld [vmem:[#allocation11 + $0x28] sm:$0xf]
        %v6367 = vld [vmem:[#allocation11 + $0x2c] sm:$0xf]
        %v6368 = vld [vmem:[#allocation11 + $0x30] sm:$0xf]
        %v6369 = vld [vmem:[#allocation11 + $0x34] sm:$0xf]
        %v6370 = vld [vmem:[#allocation11 + $0x38] sm:$0xf]
        %v6371 = vld [vmem:[#allocation11 + $0x3c] sm:$0xf]
        %v6372 = vld [vmem:[#allocation11 + $0x40] sm:$0xf]
        %v6373 = vld [vmem:[#allocation11 + $0x44] sm:$0xf]
        %v6374 = vld [vmem:[#allocation11 + $0x48] sm:$0xf]
        %v6375 = vld [vmem:[#allocation11 + $0x4c] sm:$0xf]
        %v6376 = vld [vmem:[#allocation11 + $0x50] sm:$0xf]
        %v6377 = vld [vmem:[#allocation11 + $0x54] sm:$0xf]
        %v6378 = vld [vmem:[#allocation11 + $0x58] sm:$0xf]
        %v6379 = vld [vmem:[#allocation11 + $0x5c] sm:$0xf]
        %v6380 = vld [vmem:[#allocation11 + $0x60] sm:$0xf]
        %v6381 = vld [vmem:[#allocation11 + $0x64] sm:$0xf]
        %v6382 = vld [vmem:[#allocation11 + $0x68] sm:$0xf]
        %v6383 = vld [vmem:[#allocation11 + $0x6c] sm:$0xf]
        %v6384 = vld [vmem:[#allocation11 + $0x70] sm:$0xf]
        %v6385 = vld [vmem:[#allocation11 + $0x74] sm:$0xf]
        %v6386 = vld [vmem:[#allocation11 + $0x78] sm:$0xf]
        %v6387 = vld [vmem:[#allocation11 + $0x7c] sm:$0xf]
        %v6388 = vld [vmem:[#allocation11 + $0x80] sm:$0xf]
        %v6389 = vld [vmem:[#allocation11 + $0x84] sm:$0xf]
        %v6390 = vld [vmem:[#allocation11 + $0x88] sm:$0xf]
        %v6391 = vld [vmem:[#allocation11 + $0x8c] sm:$0xf]
        %v6392 = vld [vmem:[#allocation11 + $0x90] sm:$0xf]
        %v6393 = vld [vmem:[#allocation11 + $0x94] sm:$0xf]
        %v6394 = vld [vmem:[#allocation11 + $0x98] sm:$0xf]
        %v6395 = vld [vmem:[#allocation11 + $0x9c] sm:$0xf]
        %v6396 = vld [vmem:[#allocation11 + $0xa0] sm:$0xf]
        %v6397 = vld [vmem:[#allocation11 + $0xa4] sm:$0xf]
        %v6398 = vld [vmem:[#allocation11 + $0xa8] sm:$0xf]
        %v6399 = vld [vmem:[#allocation11 + $0xac] sm:$0xf]
        %v6400 = vld [vmem:[#allocation11 + $0xb0] sm:$0xf]
        %v6401 = vld [vmem:[#allocation11 + $0xb4] sm:$0xf]
        %v6402 = vld [vmem:[#allocation11 + $0xb8] sm:$0xf]
        %v6403 = vld [vmem:[#allocation11 + $0xbc] sm:$0xf]
        %v6404 = vld [vmem:[#allocation11 + $0xc0] sm:$0xf]
        %v6405 = vld [vmem:[#allocation11 + $0xc4] sm:$0xf]
        %v6406 = vld [vmem:[#allocation11 + $0xc8] sm:$0xf]
        %v6407 = vld [vmem:[#allocation11 + $0xcc] sm:$0xf]
        %v6408 = vld [vmem:[#allocation11 + $0xd0] sm:$0xf]
        %v6409 = vld [vmem:[#allocation11 + $0xd4] sm:$0xf]
        %v6410 = vld [vmem:[#allocation11 + $0xd8] sm:$0xf]
        %v6411 = vld [vmem:[#allocation11 + $0xdc] sm:$0xf]
        %v6412 = vld [vmem:[#allocation11 + $0xe0] sm:$0xf]
        %v6413 = vld [vmem:[#allocation11 + $0xe4] sm:$0xf]
        %v6414 = vld [vmem:[#allocation11 + $0xe8] sm:$0xf]
        %v6415 = vld [vmem:[#allocation11 + $0xec] sm:$0xf]
        %v6416 = vld [vmem:[#allocation11 + $0xf0] sm:$0xf]
        %v6417 = vld [vmem:[#allocation11 + $0xf4] sm:$0xf]
        %v6418 = vld [vmem:[#allocation11 + $0xf8] sm:$0xf]
        %v6419 = vld [vmem:[#allocation11 + $0xfc] sm:$0xf]
        %v6420 = vld [vmem:[%s14] sm:$0x1]
        %v6422 = vlaneseq
        %v6423 = vshrl.u32 %v6422, 7
        %v6424 = vsub.s32 0, %v6423
        %v6425 = vrot.slane %v6420, %v6424
        %v6491 = vunpack.c.l.b16 %v6356
        %v6492 = vunpack.c.l.b16 %v6357
        %v6493 = vunpack.c.l.b16 %v6358
        %v6494 = vunpack.c.l.b16 %v6359
        %v6495 = vunpack.c.l.b16 %v6360
        %v6496 = vunpack.c.l.b16 %v6361
        %v6497 = vunpack.c.l.b16 %v6362
        %v6498 = vunpack.c.l.b16 %v6363
        %v6499 = vunpack.c.l.b16 %v6364
        %v6500 = vunpack.c.l.b16 %v6365
        %v6501 = vunpack.c.l.b16 %v6366
        %v6502 = vunpack.c.l.b16 %v6367
        %v6503 = vunpack.c.l.b16 %v6368
        %v6504 = vunpack.c.l.b16 %v6369
        %v6505 = vunpack.c.l.b16 %v6370
        %v6506 = vunpack.c.l.b16 %v6371
        %v6507 = vunpack.c.l.b16 %v6372
        %v6508 = vunpack.c.l.b16 %v6373
        %v6509 = vunpack.c.l.b16 %v6374
        %v6510 = vunpack.c.l.b16 %v6375
        %v6511 = vunpack.c.l.b16 %v6376
        %v6512 = vunpack.c.l.b16 %v6377
        %v6513 = vunpack.c.l.b16 %v6378
        %v6514 = vunpack.c.l.b16 %v6379
        %v6515 = vunpack.c.l.b16 %v6380
        %v6516 = vunpack.c.l.b16 %v6381
        %v6517 = vunpack.c.l.b16 %v6382
        %v6518 = vunpack.c.l.b16 %v6383
        %v6519 = vunpack.c.l.b16 %v6384
        %v6520 = vunpack.c.l.b16 %v6385
        %v6521 = vunpack.c.l.b16 %v6386
        %v6522 = vunpack.c.l.b16 %v6387
        %v6523 = vunpack.c.l.b16 %v6388
        %v6524 = vunpack.c.l.b16 %v6389
        %v6525 = vunpack.c.l.b16 %v6390
        %v6526 = vunpack.c.l.b16 %v6391
        %v6527 = vunpack.c.l.b16 %v6392
        %v6528 = vunpack.c.l.b16 %v6393
        %v6529 = vunpack.c.l.b16 %v6394
        %v6530 = vunpack.c.l.b16 %v6395
        %v6531 = vunpack.c.l.b16 %v6396
        %v6532 = vunpack.c.l.b16 %v6397
        %v6533 = vunpack.c.l.b16 %v6398
        %v6534 = vunpack.c.l.b16 %v6399
        %v6535 = vunpack.c.l.b16 %v6400
        %v6536 = vunpack.c.l.b16 %v6401
        %v6537 = vunpack.c.l.b16 %v6402
        %v6538 = vunpack.c.l.b16 %v6403
        %v6539 = vunpack.c.l.b16 %v6404
        %v6540 = vunpack.c.l.b16 %v6405
        %v6541 = vunpack.c.l.b16 %v6406
        %v6542 = vunpack.c.l.b16 %v6407
        %v6543 = vunpack.c.l.b16 %v6408
        %v6544 = vunpack.c.l.b16 %v6409
        %v6545 = vunpack.c.l.b16 %v6410
        %v6546 = vunpack.c.l.b16 %v6411
        %v6547 = vunpack.c.l.b16 %v6412
        %v6548 = vunpack.c.l.b16 %v6413
        %v6549 = vunpack.c.l.b16 %v6414
        %v6550 = vunpack.c.l.b16 %v6415
        %v6551 = vunpack.c.l.b16 %v6416
        %v6552 = vunpack.c.l.b16 %v6417
        %v6553 = vunpack.c.l.b16 %v6418
        %v6554 = vunpack.c.l.b16 %v6419
        %v6555 = vpack.c.b16 %v6492, %v6491
        %v6556 = vpack.c.b16 %v6494, %v6493
        %v6557 = vpack.c.b16 %v6496, %v6495
        %v6558 = vpack.c.b16 %v6498, %v6497
        %v6559 = vpack.c.b16 %v6500, %v6499
        %v6560 = vpack.c.b16 %v6502, %v6501
        %v6561 = vpack.c.b16 %v6504, %v6503
        %v6562 = vpack.c.b16 %v6506, %v6505
        %v6563 = vpack.c.b16 %v6508, %v6507
        %v6564 = vpack.c.b16 %v6510, %v6509
        %v6565 = vpack.c.b16 %v6512, %v6511
        %v6566 = vpack.c.b16 %v6514, %v6513
        %v6567 = vpack.c.b16 %v6516, %v6515
        %v6568 = vpack.c.b16 %v6518, %v6517
        %v6569 = vpack.c.b16 %v6520, %v6519
        %v6570 = vpack.c.b16 %v6522, %v6521
        %v6571 = vpack.c.b16 %v6524, %v6523
        %v6572 = vpack.c.b16 %v6526, %v6525
        %v6573 = vpack.c.b16 %v6528, %v6527
        %v6574 = vpack.c.b16 %v6530, %v6529
        %v6575 = vpack.c.b16 %v6532, %v6531
        %v6576 = vpack.c.b16 %v6534, %v6533
        %v6577 = vpack.c.b16 %v6536, %v6535
        %v6578 = vpack.c.b16 %v6538, %v6537
        %v6579 = vpack.c.b16 %v6540, %v6539
        %v6580 = vpack.c.b16 %v6542, %v6541
        %v6581 = vpack.c.b16 %v6544, %v6543
        %v6582 = vpack.c.b16 %v6546, %v6545
        %v6583 = vpack.c.b16 %v6548, %v6547
        %v6584 = vpack.c.b16 %v6550, %v6549
        %v6585 = vpack.c.b16 %v6552, %v6551
        %v6586 = vpack.c.b16 %v6554, %v6553
        %6619 = vmatprep.subr.bf16.mxu0 0
        %6620 = vmatpush1.bf16.msra.mxu0 %v6555
        %6621 = vmatprep.subr.bf16.mxu0 0
        %6622 = vmatpush1.bf16.msra.mxu0 %v6556
        %6623 = vmatprep.subr.bf16.mxu0 0
        %6624 = vmatpush1.bf16.msra.mxu0 %v6557
        %6625 = vmatprep.subr.bf16.mxu0 0
        %6626 = vmatpush1.bf16.msra.mxu0 %v6558
        %6627 = vmatprep.subr.bf16.mxu0 0
        %6628 = vmatpush1.bf16.msra.mxu0 %v6559
        %6629 = vmatprep.subr.bf16.mxu0 0
        %6630 = vmatpush1.bf16.msra.mxu0 %v6560
        %6631 = vmatprep.subr.bf16.mxu0 0
        %6632 = vmatpush1.bf16.msra.mxu0 %v6561
        %6633 = vmatprep.subr.bf16.mxu0 0
        %6634 = vmatpush1.bf16.msra.mxu0 %v6562
        %6635 = vmatprep.subr.bf16.mxu0 0
        %6636 = vmatpush1.bf16.msra.mxu0 %v6563
        %6637 = vmatprep.subr.bf16.mxu0 0
        %6638 = vmatpush1.bf16.msra.mxu0 %v6564
        %6639 = vmatprep.subr.bf16.mxu0 0
        %6640 = vmatpush1.bf16.msra.mxu0 %v6565
        %6641 = vmatprep.subr.bf16.mxu0 0
        %6642 = vmatpush1.bf16.msra.mxu0 %v6566
        %6643 = vmatprep.subr.bf16.mxu0 0
        %6644 = vmatpush1.bf16.msra.mxu0 %v6567
        %6645 = vmatprep.subr.bf16.mxu0 0
        %6646 = vmatpush1.bf16.msra.mxu0 %v6568
        %6647 = vmatprep.subr.bf16.mxu0 0
        %6648 = vmatpush1.bf16.msra.mxu0 %v6569
        %6649 = vmatprep.subr.bf16.mxu0 0
        %6650 = vmatpush1.bf16.msra.mxu0 %v6570
        %6651 = vmatprep.mubr.bf16.mxu0 %v6321
        %6652 = vmatmul.mubr.bf16.gmra.mrb[0].mxu0 %v6320
        %v6653 = vpop.f32.mrb[0].mxu0
        %v6654 = vadd.f32 %v6425, %v6653
        %v6655 = vpop.f32.mrb[0].mxu0
        %v6656 = vpop.f32.mrb[0].mxu0
        %v6657 = vadd.f32 %v6425, %v6656
        %v6658 = vpop.f32.mrb[0].mxu0
        %6659 = vmatprep.mubr.bf16.mxu0 %v6325
        %6660 = vmatmul.mubr.bf16.gmra.mrb[0].mxu0 %v6324
        %v6661 = vpop.f32.mrb[0].mxu0
        %v6662 = vadd.f32 %v6425, %v6661
        %v6663 = vpop.f32.mrb[0].mxu0
        %v6664 = vpop.f32.mrb[0].mxu0
        %v6665 = vadd.f32 %v6425, %v6664
        %v6666 = vpop.f32.mrb[0].mxu0
        %6667 = vmatprep.mubr.bf16.mxu0 %v6329
        %6668 = vmatmul.mubr.bf16.gmra.mrb[0].mxu0 %v6328
        %v6669 = vpop.f32.mrb[0].mxu0
        %v6670 = vadd.f32 %v6425, %v6669
        %v6671 = vpop.f32.mrb[0].mxu0
        %v6672 = vpop.f32.mrb[0].mxu0
        %v6673 = vadd.f32 %v6425, %v6672
        %v6674 = vpop.f32.mrb[0].mxu0
        %6675 = vmatprep.mubr.bf16.mxu0 %v6333
        %6676 = vmatmul.mubr.bf16.gmra.mrb[0].mxu0 %v6332
        %v6677 = vpop.f32.mrb[0].mxu0
        %v6678 = vadd.f32 %v6425, %v6677
        %v6679 = vpop.f32.mrb[0].mxu0
        %v6680 = vpop.f32.mrb[0].mxu0
        %v6681 = vadd.f32 %v6425, %v6680
        %v6682 = vpop.f32.mrb[0].mxu0
        %6683 = vmatprep.mubr.bf16.mxu0 %v6337
        %6684 = vmatmul.mubr.bf16.gmra.mrb[0].mxu0 %v6336
        %v6685 = vpop.f32.mrb[0].mxu0
        %v6686 = vadd.f32 %v6425, %v6685
        %v6687 = vpop.f32.mrb[0].mxu0
        %v6688 = vpop.f32.mrb[0].mxu0
        %v6689 = vadd.f32 %v6425, %v6688
        %v6690 = vpop.f32.mrb[0].mxu0
        %6691 = vmatprep.mubr.bf16.mxu0 %v6341
        %6692 = vmatmul.mubr.bf16.gmra.mrb[0].mxu0 %v6340
        %v6693 = vpop.f32.mrb[0].mxu0
        %v6694 = vadd.f32 %v6425, %v6693
        %v6695 = vpop.f32.mrb[0].mxu0
        %v6696 = vpop.f32.mrb[0].mxu0
        %v6697 = vadd.f32 %v6425, %v6696
        %v6698 = vpop.f32.mrb[0].mxu0
        %6699 = vmatprep.mubr.bf16.mxu0 %v6345
        %6700 = vmatmul.mubr.bf16.gmra.mrb[0].mxu0 %v6344
        %v6701 = vpop.f32.mrb[0].mxu0
        %v6702 = vadd.f32 %v6425, %v6701
        %v6703 = vpop.f32.mrb[0].mxu0
        %v6704 = vpop.f32.mrb[0].mxu0
        %v6705 = vadd.f32 %v6425, %v6704
        %v6706 = vpop.f32.mrb[0].mxu0
        %6707 = vmatprep.mubr.bf16.mxu0 %v6349
        %6708 = vmatmul.mubr.bf16.gmra.mrb[0].mxu0 %v6348
        %v6709 = vpop.f32.mrb[0].mxu0
        %v6710 = vadd.f32 %v6425, %v6709
        %v6711 = vpop.f32.mrb[0].mxu0
        %v6712 = vpop.f32.mrb[0].mxu0
        %v6713 = vadd.f32 %v6425, %v6712
        %v6714 = vpop.f32.mrb[0].mxu0
        %6715 = vmatprep.mubr.bf16.mxu0 %v6353
        %6716 = vmatmul.mubr.bf16.gmra.mrb[0].mxu0 %v6352
        %v6717 = vpop.f32.mrb[0].mxu0
        %v6718 = vadd.f32 %v6425, %v6717
        %v6719 = vpop.f32.mrb[0].mxu0
        %v6720 = vpop.f32.mrb[0].mxu0
        %v6721 = vadd.f32 %v6425, %v6720
        %v6722 = vpop.f32.mrb[0].mxu0
        %6723 = vdwg.mxu0
        %6724 = vmatprep.subr.bf16.mxu0 0
        %6725 = vmatpush1.bf16.msra.mxu0 %v6571
        %6726 = vmatprep.subr.bf16.mxu0 0
        %6727 = vmatpush1.bf16.msra.mxu0 %v6572
        %6728 = vmatprep.subr.bf16.mxu0 0
        %6729 = vmatpush1.bf16.msra.mxu0 %v6573
        %6730 = vmatprep.subr.bf16.mxu0 0
        %6731 = vmatpush1.bf16.msra.mxu0 %v6574
        %6732 = vmatprep.subr.bf16.mxu0 0
        %6733 = vmatpush1.bf16.msra.mxu0 %v6575
        %6734 = vmatprep.subr.bf16.mxu0 0
        %6735 = vmatpush1.bf16.msra.mxu0 %v6576
        %6736 = vmatprep.subr.bf16.mxu0 0
        %6737 = vmatpush1.bf16.msra.mxu0 %v6577
        %6738 = vmatprep.subr.bf16.mxu0 0
        %6739 = vmatpush1.bf16.msra.mxu0 %v6578
        %6740 = vmatprep.subr.bf16.mxu0 0
        %6741 = vmatpush1.bf16.msra.mxu0 %v6579
        %6742 = vmatprep.subr.bf16.mxu0 0
        %6743 = vmatpush1.bf16.msra.mxu0 %v6580
        %6744 = vmatprep.subr.bf16.mxu0 0
        %6745 = vmatpush1.bf16.msra.mxu0 %v6581
        %6746 = vmatprep.subr.bf16.mxu0 0
        %6747 = vmatpush1.bf16.msra.mxu0 %v6582
        %6748 = vmatprep.subr.bf16.mxu0 0
        %6749 = vmatpush1.bf16.msra.mxu0 %v6583
        %6750 = vmatprep.subr.bf16.mxu0 0
        %6751 = vmatpush1.bf16.msra.mxu0 %v6584
        %6752 = vmatprep.subr.bf16.mxu0 0
        %6753 = vmatpush1.bf16.msra.mxu0 %v6585
        %6754 = vmatprep.subr.bf16.mxu0 0
        %6755 = vmatpush1.bf16.msra.mxu0 %v6586
        %6756 = vmatprep.mubr.bf16.mxu0 %v6323
        %6757 = vmatmul.mubr.bf16.gmra.mrb[0].mxu0 %v6322
        %v6758 = vpop.f32.mrb[0].mxu0
        %v6759 = vadd.f32 %v6654, %v6758
        %v6760 = vpop.f32.mrb[0].mxu0
        %v6761 = vpop.f32.mrb[0].mxu0
        %v6762 = vadd.f32 %v6657, %v6761
        %v6763 = vpop.f32.mrb[0].mxu0
        %6764 = vmatprep.mubr.bf16.mxu0 %v6327
        %6765 = vmatmul.mubr.bf16.gmra.mrb[0].mxu0 %v6326
        %v6766 = vpop.f32.mrb[0].mxu0
        %v6767 = vadd.f32 %v6662, %v6766
        %v6768 = vpop.f32.mrb[0].mxu0
        %v6769 = vpop.f32.mrb[0].mxu0
        %v6770 = vadd.f32 %v6665, %v6769
        %v6771 = vpop.f32.mrb[0].mxu0
        %6772 = vmatprep.mubr.bf16.mxu0 %v6331
        %6773 = vmatmul.mubr.bf16.gmra.mrb[0].mxu0 %v6330
        %v6774 = vpop.f32.mrb[0].mxu0
        %v6775 = vadd.f32 %v6670, %v6774
        %v6776 = vpop.f32.mrb[0].mxu0
        %v6777 = vpop.f32.mrb[0].mxu0
        %v6778 = vadd.f32 %v6673, %v6777
        %v6779 = vpop.f32.mrb[0].mxu0
        %6780 = vmatprep.mubr.bf16.mxu0 %v6335
        %6781 = vmatmul.mubr.bf16.gmra.mrb[0].mxu0 %v6334
        %v6782 = vpop.f32.mrb[0].mxu0
        %v6783 = vadd.f32 %v6678, %v6782
        %v6784 = vpop.f32.mrb[0].mxu0
        %v6785 = vpop.f32.mrb[0].mxu0
        %v6786 = vadd.f32 %v6681, %v6785
        %v6787 = vpop.f32.mrb[0].mxu0
        %6788 = vmatprep.mubr.bf16.mxu0 %v6339
        %6789 = vmatmul.mubr.bf16.gmra.mrb[0].mxu0 %v6338
        %v6790 = vpop.f32.mrb[0].mxu0
        %v6791 = vadd.f32 %v6686, %v6790
        %v6792 = vpop.f32.mrb[0].mxu0
        %v6793 = vpop.f32.mrb[0].mxu0
        %v6794 = vadd.f32 %v6689, %v6793
        %v6795 = vpop.f32.mrb[0].mxu0
        %6796 = vmatprep.mubr.bf16.mxu0 %v6343
        %6797 = vmatmul.mubr.bf16.gmra.mrb[0].mxu0 %v6342
        %v6798 = vpop.f32.mrb[0].mxu0
        %v6799 = vadd.f32 %v6694, %v6798
        %v6800 = vpop.f32.mrb[0].mxu0
        %v6801 = vpop.f32.mrb[0].mxu0
        %v6802 = vadd.f32 %v6697, %v6801
        %v6803 = vpop.f32.mrb[0].mxu0
        %6804 = vmatprep.mubr.bf16.mxu0 %v6347
        %6805 = vmatmul.mubr.bf16.gmra.mrb[0].mxu0 %v6346
        %v6806 = vpop.f32.mrb[0].mxu0
        %v6807 = vadd.f32 %v6702, %v6806
        %v6808 = vpop.f32.mrb[0].mxu0
        %v6809 = vpop.f32.mrb[0].mxu0
        %v6810 = vadd.f32 %v6705, %v6809
        %v6811 = vpop.f32.mrb[0].mxu0
        %6812 = vmatprep.mubr.bf16.mxu0 %v6351
        %6813 = vmatmul.mubr.bf16.gmra.mrb[0].mxu0 %v6350
        %v6814 = vpop.f32.mrb[0].mxu0
        %v6815 = vadd.f32 %v6710, %v6814
        %v6816 = vpop.f32.mrb[0].mxu0
        %v6817 = vpop.f32.mrb[0].mxu0
        %v6818 = vadd.f32 %v6713, %v6817
        %v6819 = vpop.f32.mrb[0].mxu0
        %6820 = vmatprep.mubr.bf16.mxu0 %v6355
        %6821 = vmatmul.mubr.bf16.gmra.mrb[0].mxu0 %v6354
        %v6822 = vpop.f32.mrb[0].mxu0
        %v6823 = vadd.f32 %v6718, %v6822
        %v6824 = vpop.f32.mrb[0].mxu0
        %v6825 = vpop.f32.mrb[0].mxu0
        %v6826 = vadd.f32 %v6721, %v6825
        %v6827 = vpop.f32.mrb[0].mxu0
        %6828 = vdwg.mxu0
        %v6829 = vadd.f32 %v6759, %v5225
        %v6830 = vadd.f32 %v6762, %v5226
        %v6831 = vadd.f32 %v6767, %v5227
        %v6832 = vadd.f32 %v6770, %v5228
        %v6833 = vadd.f32 %v6775, %v5229
        %v6834 = vadd.f32 %v6778, %v5230
        %v6835 = vadd.f32 %v6783, %v5231
        %v6836 = vadd.f32 %v6786, %v5232
        %v6837 = vadd.f32 %v6791, %v5233
        %v6838 = vadd.f32 %v6794, %v5234
        %v6839 = vadd.f32 %v6799, %v5235
        %v6840 = vadd.f32 %v6802, %v5236
        %v6841 = vadd.f32 %v6807, %v5237
        %v6842 = vadd.f32 %v6810, %v5238
        %v6843 = vadd.f32 %v6815, %v5239
        %v6844 = vadd.f32 %v6818, %v5240
        %v6845 = vadd.f32 %v6823, %v5241
        %v6846 = vadd.f32 %v6826, %v5242
        %6847 = vst [vmem:[%s577] sm:$0xff] %v6829
        %6848 = vst [vmem:[%s577 + $0x8] sm:$0xff] %v6830
        %6849 = vst [vmem:[%s577 + $0x10] sm:$0xff] %v6831
        %6850 = vst [vmem:[%s577 + $0x18] sm:$0xff] %v6832
        %6851 = vst [vmem:[%s577 + $0x20] sm:$0xff] %v6833
        %6852 = vst [vmem:[%s577 + $0x28] sm:$0xff] %v6834
        %6853 = vst [vmem:[%s577 + $0x30] sm:$0xff] %v6835
        %6854 = vst [vmem:[%s577 + $0x38] sm:$0xff] %v6836
        %6855 = vst [vmem:[%s577 + $0x40] sm:$0xff] %v6837
        %6856 = vst [vmem:[%s577 + $0x48] sm:$0xff] %v6838
        %6857 = vst [vmem:[%s577 + $0x50] sm:$0xff] %v6839
        %6858 = vst [vmem:[%s577 + $0x58] sm:$0xff] %v6840
        %6859 = vst [vmem:[%s577 + $0x60] sm:$0xff] %v6841
        %6860 = vst [vmem:[%s577 + $0x68] sm:$0xff] %v6842
        %6861 = vst [vmem:[%s577 + $0x70] sm:$0xff] %v6843
        %6862 = vst [vmem:[%s577 + $0x78] sm:$0xff] %v6844
        %6863 = vst [vmem:[%s577 + $0x80] sm:$0xff] %v6845
        %6864 = vst [vmem:[%s577 + $0x88] sm:$0xff] %v6846
        %s6865 = sand.u32 %s365, 1
        %s6866 = scalar_lea.sflag [#allocation5], %s6865
        %s6867 = sand.u32 %s365, 1
        %s6868 = smul.addr %s6867, 144
        %s6869 = scalar_lea.vmem [#allocation12], %s6868
        // Predicated region
        $region101: #{tpu_custom_call.1} parent=79 // pred_check
          %p6870 = pneg %p375
        $region102: #{tpu_custom_call.1} parent=79 // pred_check_branch
          %6872 = sbr.rel (%p6870) target = $region104
        $region103: #{tpu_custom_call.1} parent=79 // pred_region
          %s6873 = smul.u32 18, %s32
          %s6875 = ssub.s32 2304, 2304
          %6876 = vsyncadd %s6866, %s6875
          %s6877 = smul.addr %s6873, 128
          %s6878 = scalar_lea.hbm %s15, %s6877
          %s6879 = sshll.u32 %s6869, 4
          %s6880 = int_to_ptr.vmem [resolvable:$true] %s6879
          %6885 = dma.vmem_to_hbm [thread:$0]  %s6880, 2304, %s6878, %s6866, 128, 128, 8
        $region104: #{tpu_custom_call.1} parent=79 // pred_fallthru
          _
      $region80: #{tpu_custom_call.1} parent=5 // pred_fallthru
        _
      %p6886 = scmp.le.s32.totalorder 2, %s27
      // Predicated region
      $region105: #{tpu_custom_call.1} parent=5 // pred_check
        %p6887 = pneg %p6886
      $region106: #{tpu_custom_call.1} parent=5 // pred_check_branch
        %6889 = sbr.rel (%p6887) target = $region108
      $region107: #{tpu_custom_call.1} parent=5 // pred_region
        %s6890 = ssub.s32 %s27, 2
        // Predicated region
        $region109: #{tpu_custom_call.1} parent=107 // pred_check
          %p6891 = pneg %p381
        $region110: #{tpu_custom_call.1} parent=107 // pred_check_branch
          %6893 = sbr.rel (%p6891) target = $region112
        $region111: #{tpu_custom_call.1} parent=107 // pred_region
          %s6894 = sand.u32 %s366, 1
          %s6895 = scalar_lea.sflag [#allocation5], %s6894
          %s6896 = sand.u32 %s366, 1
          %s6897 = smul.addr %s6896, 144
          %s6898 = scalar_lea.vmem [#allocation12], %s6897
          %6899 = dma.done %s6895, 2304
        $region112: #{tpu_custom_call.1} parent=107 // pred_fallthru
          _
      $region108: #{tpu_custom_call.1} parent=5 // pred_fallthru
        _
    $region6: #{tpu_custom_call.1} parent=1 // loop_footer
      %s31 = sadd.s32 1, %s27
    $region7: #{tpu_custom_call.1} parent=1 // loop_footer_branch
      %26 = sbr.rel target = $region3
    $region8: #{tpu_custom_call.1} parent=1 // loop_exit
      _
    %6900 = vsyncpa [#allocation4], 1
    %s6901 = scalar_lea.sflag [#allocation4], 1
    %6902 = vsyncpa %s6901, 1
    %6903 = vsyncpa [#allocation7], 1
    %6904 = vsyncpa [#allocation10], 1
    %6905 = vsyncpa [#allocation5], 1
    %s6906 = scalar_lea.sflag [#allocation5], 1
    %6907 = vsyncpa %s6906, 1

</llo_original>
